<compile_context>
chip_gen: v7x
topology: tpu7x:2x2x1
jax: 0.10.0
libtpu: 0.0.40
codegen_flags: <defaults>
</compile_context>

<pallas_src>
import functools

import jax
import jax.numpy as jnp
from jax.experimental import pallas as pl
from jax.experimental.pallas import tpu as pltpu

# ---- synthetic config (config.configs() in the original script) -------------
ACTION_SIZE = 4
VECTOR_STATE_SIZE = 8
VISUAL_STATE_SIZE = (4, 32, 32)  # (C, H, W); smallest H/W that survives 3 convs

# conv hyper-parameters fixed by the PyTorch module
K1, S1 = 4, 4
K2, S2 = 4, 2
K3, S3 = 3, 1

BATCH_TILE = 8  # one sublane group -> all in-kernel row slices are 8-aligned


def _conv_dims():
    _, h, w = VISUAL_STATE_SIZE
    d1 = ((h - K1) // S1 + 1, (w - K1) // S1 + 1)
    d2 = ((d1[0] - K2) // S2 + 1, (d1[1] - K2) // S2 + 1)
    d3 = ((d2[0] - K3) // S3 + 1, (d2[1] - K3) // S3 + 1)
    return d1, d2, d3


def _resident_spec(shape):
    """Full-array block whose index_map is constant -> DMA'd once, stays in
    VMEM across every grid step (weight/bias tensors)."""
    nd = len(shape)
    return pl.BlockSpec(shape, lambda t, _nd=nd: (0,) * _nd)


# ---------------------------------------------------------------------------
# Single fused kernel: conv1 -> conv2 -> conv3 -> MLP head -> tanh
#
# Activation row layout for the conv trunk (per batch tile): rows are ordered
# (spatial position, batch-in-tile), i.e. row = (y * W + x) * BT + b, channels
# on lanes.  With BT == 8 every slice the kernel needs is a contiguous,
# sublane-aligned static slice.
# ---------------------------------------------------------------------------
def _actor_kernel(col_ref, vec_ref,
                  c1w_ref, c1b_ref, c2w_ref, c2b_ref, c3w_ref, c3b_ref,
                  wv_ref, bv_ref, ws_ref, bs_ref,
                  w1a_ref, w1b_ref, bf1_ref,
                  wf2_ref, bf2_ref, wmu_ref, bmu_ref,
                  o_ref, *, bt, d1, d2):
    f32 = jnp.float32
    bf16 = jnp.bfloat16
    h1, w1 = d1                 # conv1 output spatial (8, 8)
    h2, w2 = d2                 # conv2 output spatial (3, 3)
    ic2 = c1w_ref.shape[1]      # conv1 out-channels (32) = rows per conv2 tap
    ic3 = c2w_ref.shape[1]      # conv2 out-channels (64) = rows per conv3 tap

    # ---- conv1: one MXU matmul over all (spatial, batch) rows ----------------
    col = col_ref[0]                                             # [h1*w1*bt, 64]
    x1 = jnp.dot(col, c1w_ref[...], preferred_element_type=f32)
    x1 = jnp.maximum(x1 + c1b_ref[...], 0.0).astype(bf16)        # [h1*w1*bt, 32]

    # ---- conv2 (4x4, stride 2) -----------------------------------------------
    # For each of the 16 kernel taps multiply ALL conv1 rows by that tap's
    # [32, 64] weight block (big-M matmul), then sum, per output position, the
    # 16 contributing row slices.  Only static 8-aligned slices / adds / dots.
    c2w = c2w_ref[...]
    c2b = c2b_ref[...]
    pos_acc = [None] * (h2 * w2)
    for i in range(K2):
        for j in range(K2):
            t = i * K2 + j
            w_tap = c2w[t * ic2:(t + 1) * ic2, :]                        # [32, 64]
            full_t = jnp.dot(x1, w_tap, preferred_element_type=f32)     # [h1*w1*bt, 64]
            for oh in range(h2):
                for ow in range(w2):
                    p = oh * w2 + ow
                    sp = (S2 * oh + i) * w1 + (S2 * ow + j)   # conv1 spatial index
                    piece = full_t[sp * bt:(sp + 1) * bt, :]  # [bt, 64]
                    pos_acc[p] = piece if pos_acc[p] is None else pos_acc[p] + piece
    x2 = [jnp.maximum(a + c2b, 0.0).astype(bf16) for a in pos_acc]   # 9 x [bt, 64]

    # ---- conv3 (3x3 input -> 1x1 output): sum of per-position matmuls --------
    c3w = c3w_ref[...]
    y3 = None
    for p in range(h2 * w2):
        w_p = c3w[p * ic3:(p + 1) * ic3, :]                            # [64, 64]
        contrib = jnp.dot(x2[p], w_p, preferred_element_type=f32)
        y3 = contrib if y3 is None else y3 + contrib
    x3 = jnp.maximum(y3 + c3b_ref[...], 0.0).astype(bf16)   # [bt, 64] == Flatten()

    # ---- MLP head (torch.cat expressed as split fc1 matmul) ------------------
    vis_h = jnp.maximum(jnp.dot(x3, wv_ref[...], preferred_element_type=f32)
                        + bv_ref[...], 0.0).astype(bf16)
    vec_h = jnp.maximum(jnp.dot(vec_ref[...].astype(bf16), ws_ref[...],
                                preferred_element_type=f32)
                        + bs_ref[...], 0.0).astype(bf16)
    h = jnp.maximum(jnp.dot(vis_h, w1a_ref[...], preferred_element_type=f32)
                    + jnp.dot(vec_h, w1b_ref[...], preferred_element_type=f32)
                    + bf1_ref[...], 0.0).astype(bf16)
    h = jnp.maximum(jnp.dot(h, wf2_ref[...], preferred_element_type=f32)
                    + bf2_ref[...], 0.0).astype(bf16)
    mu = jnp.tanh(jnp.dot(h, wmu_ref[...], preferred_element_type=f32)
                  + bmu_ref[...])
    o_ref[...] = mu.astype(o_ref.dtype)


# ---------------------------------------------------------------------------
# Parameter init (deterministic, PyTorch-like uniform fan-in scaling).
# Conv weights in OIHW, Linear weights stored [in, out].
# ---------------------------------------------------------------------------
def init_params(key):
    c, _, _ = VISUAL_STATE_SIZE
    d1, d2, d3 = _conv_dims()
    assert d3 == (1, 1), "config must reduce to 1x1 so Flatten == channel vector"
    flat_dim = 64 * d3[0] * d3[1]

    def u(k, shape, fan_in):
        lim = 1.0 / jnp.sqrt(float(fan_in))
        return jax.random.uniform(k, shape, jnp.float32, -lim, lim)

    ks = jax.random.split(key, 16)
    # NOTE: fc2_vector exists in __init__ but is never used in forward(); omitted.
    return {
        "conv1_w": u(ks[0], (32, c, K1, K1), c * K1 * K1),
        "conv1_b": u(ks[1], (32,), c * K1 * K1),
        "conv2_w": u(ks[2], (64, 32, K2, K2), 32 * K2 * K2),
        "conv2_b": u(ks[3], (64,), 32 * K2 * K2),
        "conv3_w": u(ks[4], (64, 64, K3, K3), 64 * K3 * K3),
        "conv3_b": u(ks[5], (64,), 64 * K3 * K3),
        "fc1_visual_w": u(ks[6], (flat_dim, 128), flat_dim),
        "fc1_visual_b": u(ks[7], (128,), flat_dim),
        "fc1_vector_w": u(ks[8], (VECTOR_STATE_SIZE, 128), VECTOR_STATE_SIZE),
        "fc1_vector_b": u(ks[9], (128,), VECTOR_STATE_SIZE),
        "fc1_w": u(ks[10], (256, 128), 256),
        "fc1_b": u(ks[11], (128,), 256),
        "fc2_w": u(ks[12], (128, 128), 128),
        "fc2_b": u(ks[13], (128,), 128),
        "mu_w": u(ks[14], (128, ACTION_SIZE), 128),
        "mu_b": u(ks[15], (ACTION_SIZE,), 128),
    }


def prepare_kernel_params(p):
    """One-time repack: im2col-flattened bf16 conv weights, fc1 split, [1,N] f32
    biases — so no per-call slicing/reshaping feeds the fused kernel."""
    bf16 = jnp.bfloat16

    def conv_flat(w):  # [OC, IC, KH, KW] -> [(KH*KW*IC), OC], (kh, kw, c) order
        oc = w.shape[0]
        return jnp.transpose(w, (2, 3, 1, 0)).reshape(-1, oc).astype(bf16)

    def row(b):
        return b.reshape(1, -1).astype(jnp.float32)

    n_vis = p["fc1_visual_w"].shape[1]  # split point derived from param shape
    return {
        "c1w": conv_flat(p["conv1_w"]), "c1b": row(p["conv1_b"]),
        "c2w": conv_flat(p["conv2_w"]), "c2b": row(p["conv2_b"]),
        "c3w": conv_flat(p["conv3_w"]), "c3b": row(p["conv3_b"]),
        "wv": p["fc1_visual_w"].astype(bf16), "bv": row(p["fc1_visual_b"]),
        "ws": p["fc1_vector_w"].astype(bf16), "bs": row(p["fc1_vector_b"]),
        "w1a": p["fc1_w"][:n_vis].astype(bf16),
        "w1b": p["fc1_w"][n_vis:].astype(bf16),
        "b1": row(p["fc1_b"]),
        "wf2": p["fc2_w"].astype(bf16), "bf2": row(p["fc2_b"]),
        "wmu": p["mu_w"].astype(bf16), "bmu": row(p["mu_b"]),
    }


# ---------------------------------------------------------------------------
# Full Actor forward: one pallas_call with a batch-tiled "parallel" grid axis.
# ---------------------------------------------------------------------------
@jax.jit
def actor_forward(kp, visual_state, vector_state):
    d1, d2, d3 = _conv_dims()
    assert d3 == (1, 1)
    h1, w1 = d1
    B = visual_state.shape[0]
    C = visual_state.shape[-1]

    BT = BATCH_TILE
    n_tiles = -(-B // BT)
    Bp = n_tiles * BT

    vis = visual_state
    vec = vector_state
    if Bp != B:  # pad batch to a whole number of tiles (sliced off at the end)
        vis = jnp.pad(vis, ((0, Bp - B), (0, 0), (0, 0), (0, 0)))
        vec = jnp.pad(vec, ((0, Bp - B), (0, 0)))

    # conv1 has kernel == stride == 4 (non-overlapping): im2col is a pure patch
    # reshape on the raw input.  Within each batch tile, rows are ordered
    # (y, x, b) so every in-kernel conv2 row gather is a contiguous, 8-aligned
    # static slice.  Feature order is (kh, kw, c) to match the flattened weights.
    col = vis.reshape(n_tiles, BT, h1, K1, w1, K1, C)
    col = col.transpose(0, 2, 4, 1, 3, 5, 6)
    col = col.reshape(n_tiles, h1 * w1 * BT, K1 * K1 * C).astype(jnp.bfloat16)

    args = (col, vec,
            kp["c1w"], kp["c1b"], kp["c2w"], kp["c2b"], kp["c3w"], kp["c3b"],
            kp["wv"], kp["bv"], kp["ws"], kp["bs"],
            kp["w1a"], kp["w1b"], kp["b1"],
            kp["wf2"], kp["bf2"], kp["wmu"], kp["bmu"])

    rows = h1 * w1 * BT
    feat = K1 * K1 * C
    in_specs = [pl.BlockSpec((1, rows, feat), lambda t: (t, 0, 0)),
                pl.BlockSpec((BT, vec.shape[1]), lambda t: (t, 0))]
    in_specs += [_resident_spec(kp[k].shape) for k in
                 ("c1w", "c1b", "c2w", "c2b", "c3w", "c3b",
                  "wv", "bv", "ws", "bs", "w1a", "w1b", "b1",
                  "wf2", "bf2", "wmu", "bmu")]
    out_spec = pl.BlockSpec((BT, ACTION_SIZE), lambda t: (t, 0))

    kernel = functools.partial(_actor_kernel, bt=BT, d1=d1, d2=d2)
    out = pl.pallas_call(
        kernel,
        out_shape=jax.ShapeDtypeStruct((Bp, ACTION_SIZE), jnp.float32),
        grid_spec=pltpu.PrefetchScalarGridSpec(
            num_scalar_prefetch=0,
            grid=(n_tiles,),
            in_specs=in_specs,
            out_specs=out_spec),
        compiler_params=pltpu.CompilerParams(
            dimension_semantics=("parallel",)),
    )(*args)
    return out[:B]


# ---------------------------------------------------------------------------
# Pure-JAX reference (mirrors the PyTorch forward exactly) for validation.
# ---------------------------------------------------------------------------
def actor_forward_reference(p, visual_state, vector_state):
    x = jnp.transpose(visual_state, (0, 3, 1, 2))  # NHWC -> NCHW (permute)

    def conv(x, w, b, stride):
        y = jax.lax.conv_general_dilated(
            x, w, window_strides=(stride, stride), padding="VALID",
            dimension_numbers=("NCHW", "OIHW", "NCHW"))
        return jax.nn.relu(y + b[None, :, None, None])

    x = conv(x, p["conv1_w"], p["conv1_b"], S1)
    x = conv(x, p["conv2_w"], p["conv2_b"], S2)
    x = conv(x, p["conv3_w"], p["conv3_b"], S3)
    vis = x.reshape(x.shape[0], -1)
    vis_h = jax.nn.relu(vis @ p["fc1_visual_w"] + p["fc1_visual_b"])
    vec_h = jax.nn.relu(vector_state @ p["fc1_vector_w"] + p["fc1_vector_b"])
    h = jax.nn.relu(jnp.concatenate([vis_h, vec_h], -1) @ p["fc1_w"] + p["fc1_b"])
    h = jax.nn.relu(h @ p["fc2_w"] + p["fc2_b"])
    return jnp.tanh(h @ p["mu_w"] + p["mu_b"])


if __name__ == "__main__":
    key = jax.random.PRNGKey(0)
    kp_, kv_, ks_ = jax.random.split(key, 3)
    params = init_params(kp_)
    kparams = prepare_kernel_params(params)   # one-time repack (bf16, splits)

    B = 16  # two batch tiles -> exercises the "parallel" grid axis + resident weights
    C, H, W = VISUAL_STATE_SIZE
    visual_state = jax.random.normal(kv_, (B, H, W, C), jnp.float32)  # NHWC
    vector_state = jax.random.normal(ks_, (B, VECTOR_STATE_SIZE), jnp.float32)

    out = actor_forward(kparams, visual_state, vector_state)
    jax.block_until_ready(out)

    assert out.shape == (B, ACTION_SIZE)
    assert bool(jnp.all(jnp.abs(out) <= 1.0))  # tanh output range
    ref = actor_forward_reference(params, visual_state, vector_state)
    assert bool(jnp.allclose(out, ref, atol=7.5e-2))  # bf16-matmul tolerance
    print("KERNEL_OK")
</pallas_src>

<mosaic_0001>
module attributes {stable_mosaic.version = 11 : i64} {
  func.func @_actor_kernel(%arg0: i32, %arg1: memref<1x512x64xbf16, #tpu.memory_space<vmem>>, %arg2: memref<8x8xf32, #tpu.memory_space<vmem>>, %arg3: memref<64x32xbf16, #tpu.memory_space<vmem>>, %arg4: memref<1x32xf32, #tpu.memory_space<vmem>>, %arg5: memref<512x64xbf16, #tpu.memory_space<vmem>>, %arg6: memref<1x64xf32, #tpu.memory_space<vmem>>, %arg7: memref<576x64xbf16, #tpu.memory_space<vmem>>, %arg8: memref<1x64xf32, #tpu.memory_space<vmem>>, %arg9: memref<64x128xbf16, #tpu.memory_space<vmem>>, %arg10: memref<1x128xf32, #tpu.memory_space<vmem>>, %arg11: memref<8x128xbf16, #tpu.memory_space<vmem>>, %arg12: memref<1x128xf32, #tpu.memory_space<vmem>>, %arg13: memref<128x128xbf16, #tpu.memory_space<vmem>>, %arg14: memref<128x128xbf16, #tpu.memory_space<vmem>>, %arg15: memref<1x128xf32, #tpu.memory_space<vmem>>, %arg16: memref<128x128xbf16, #tpu.memory_space<vmem>>, %arg17: memref<1x128xf32, #tpu.memory_space<vmem>>, %arg18: memref<128x4xbf16, #tpu.memory_space<vmem>>, %arg19: memref<1x4xf32, #tpu.memory_space<vmem>>, %arg20: memref<8x4xf32, #tpu.memory_space<vmem>>) attributes {dimension_semantics = [#tpu.dimension_semantics<parallel>], iteration_bounds = array<i64: 2>, scalar_prefetch = 0 : i64, scratch_operands = 0 : i64, tpu.core_type = #tpu.core_type<tc>, window_params = [{transform_indices = @transform_0, window_bounds = array<i64: 1, 512, 64>}, {transform_indices = @transform_1, window_bounds = array<i64: 8, 8>}, {pipeline_mode = #tpu.pipeline_mode<synchronous>, transform_indices = @transform_2, window_bounds = array<i64: 64, 32>}, {pipeline_mode = #tpu.pipeline_mode<synchronous>, transform_indices = @transform_3, window_bounds = array<i64: 1, 32>}, {pipeline_mode = #tpu.pipeline_mode<synchronous>, transform_indices = @transform_4, window_bounds = array<i64: 512, 64>}, {pipeline_mode = #tpu.pipeline_mode<synchronous>, transform_indices = @transform_5, window_bounds = array<i64: 1, 64>}, {pipeline_mode = #tpu.pipeline_mode<synchronous>, transform_indices = @transform_6, window_bounds = array<i64: 576, 64>}, {pipeline_mode = #tpu.pipeline_mode<synchronous>, transform_indices = @transform_7, window_bounds = array<i64: 1, 64>}, {pipeline_mode = #tpu.pipeline_mode<synchronous>, transform_indices = @transform_8, window_bounds = array<i64: 64, 128>}, {pipeline_mode = #tpu.pipeline_mode<synchronous>, transform_indices = @transform_9, window_bounds = array<i64: 1, 128>}, {pipeline_mode = #tpu.pipeline_mode<synchronous>, transform_indices = @transform_10, window_bounds = array<i64: 8, 128>}, {pipeline_mode = #tpu.pipeline_mode<synchronous>, transform_indices = @transform_11, window_bounds = array<i64: 1, 128>}, {pipeline_mode = #tpu.pipeline_mode<synchronous>, transform_indices = @transform_12, window_bounds = array<i64: 128, 128>}, {pipeline_mode = #tpu.pipeline_mode<synchronous>, transform_indices = @transform_13, window_bounds = array<i64: 128, 128>}, {pipeline_mode = #tpu.pipeline_mode<synchronous>, transform_indices = @transform_14, window_bounds = array<i64: 1, 128>}, {pipeline_mode = #tpu.pipeline_mode<synchronous>, transform_indices = @transform_15, window_bounds = array<i64: 128, 128>}, {pipeline_mode = #tpu.pipeline_mode<synchronous>, transform_indices = @transform_16, window_bounds = array<i64: 1, 128>}, {pipeline_mode = #tpu.pipeline_mode<synchronous>, transform_indices = @transform_17, window_bounds = array<i64: 128, 4>}, {pipeline_mode = #tpu.pipeline_mode<synchronous>, transform_indices = @transform_18, window_bounds = array<i64: 1, 4>}, {transform_indices = @transform_19, window_bounds = array<i64: 8, 4>}]} {
    %c0 = arith.constant 0 : index
    %c0_0 = arith.constant 0 : index
    %c0_1 = arith.constant 0 : index
    %0 = vector.load %arg1[%c0, %c0_0, %c0_1] : memref<1x512x64xbf16, #tpu.memory_space<vmem>>, vector<1x512x64xbf16>
    %1 = vector.shape_cast %0 : vector<1x512x64xbf16> to vector<512x64xbf16>
    %c0_2 = arith.constant 0 : index
    %c0_3 = arith.constant 0 : index
    %2 = vector.load %arg3[%c0_2, %c0_3] : memref<64x32xbf16, #tpu.memory_space<vmem>>, vector<64x32xbf16>
    %cst = arith.constant dense<0.000000e+00> : vector<512x32xf32>
    %3 = tpu.matmul %1, %2, %cst {dimension_numbers = #tpu.dot_dimension_numbers<[1], [0], [0], [1], [0, 0, 1, 1], [], []>} : vector<512x64xbf16>, vector<64x32xbf16>, vector<512x32xf32> -> vector<512x32xf32>
    %c0_4 = arith.constant 0 : index
    %c0_5 = arith.constant 0 : index
    %4 = vector.load %arg4[%c0_4, %c0_5] : memref<1x32xf32, #tpu.memory_space<vmem>>, vector<1x32xf32>
    %5 = vector.broadcast %4 : vector<1x32xf32> to vector<512x32xf32>
    %6 = arith.addf %3, %5 : vector<512x32xf32>
    %cst_6 = arith.constant 0.000000e+00 : f32
    %7 = vector.broadcast %cst_6 : f32 to vector<512x32xf32>
    %8 = arith.maximumf %6, %7 : vector<512x32xf32>
    %9 = arith.truncf %8 : vector<512x32xf32> to vector<512x32xbf16>
    %c0_7 = arith.constant 0 : index
    %c0_8 = arith.constant 0 : index
    %10 = vector.load %arg5[%c0_7, %c0_8] : memref<512x64xbf16, #tpu.memory_space<vmem>>, vector<512x64xbf16>
    %c0_9 = arith.constant 0 : index
    %c0_10 = arith.constant 0 : index
    %11 = vector.load %arg6[%c0_9, %c0_10] : memref<1x64xf32, #tpu.memory_space<vmem>>, vector<1x64xf32>
    %12 = vector.extract_strided_slice %10 {offsets = [0, 0], sizes = [32, 64], strides = [1, 1]} : vector<512x64xbf16> to vector<32x64xbf16>
    %cst_11 = arith.constant dense<0.000000e+00> : vector<512x64xf32>
    %13 = tpu.matmul %9, %12, %cst_11 {dimension_numbers = #tpu.dot_dimension_numbers<[1], [0], [0], [1], [0, 0, 1, 1], [], []>} : vector<512x32xbf16>, vector<32x64xbf16>, vector<512x64xf32> -> vector<512x64xf32>
    %14 = vector.extract_strided_slice %13 {offsets = [0, 0], sizes = [8, 64], strides = [1, 1]} : vector<512x64xf32> to vector<8x64xf32>
    %15 = vector.extract_strided_slice %13 {offsets = [16, 0], sizes = [8, 64], strides = [1, 1]} : vector<512x64xf32> to vector<8x64xf32>
    %16 = vector.extract_strided_slice %13 {offsets = [32, 0], sizes = [8, 64], strides = [1, 1]} : vector<512x64xf32> to vector<8x64xf32>
    %17 = vector.extract_strided_slice %13 {offsets = [128, 0], sizes = [8, 64], strides = [1, 1]} : vector<512x64xf32> to vector<8x64xf32>
    %18 = vector.extract_strided_slice %13 {offsets = [144, 0], sizes = [8, 64], strides = [1, 1]} : vector<512x64xf32> to vector<8x64xf32>
    %19 = vector.extract_strided_slice %13 {offsets = [160, 0], sizes = [8, 64], strides = [1, 1]} : vector<512x64xf32> to vector<8x64xf32>
    %20 = vector.extract_strided_slice %13 {offsets = [256, 0], sizes = [8, 64], strides = [1, 1]} : vector<512x64xf32> to vector<8x64xf32>
    %21 = vector.extract_strided_slice %13 {offsets = [272, 0], sizes = [8, 64], strides = [1, 1]} : vector<512x64xf32> to vector<8x64xf32>
    %22 = vector.extract_strided_slice %13 {offsets = [288, 0], sizes = [8, 64], strides = [1, 1]} : vector<512x64xf32> to vector<8x64xf32>
    %23 = vector.extract_strided_slice %10 {offsets = [32, 0], sizes = [32, 64], strides = [1, 1]} : vector<512x64xbf16> to vector<32x64xbf16>
    %cst_12 = arith.constant dense<0.000000e+00> : vector<512x64xf32>
    %24 = tpu.matmul %9, %23, %cst_12 {dimension_numbers = #tpu.dot_dimension_numbers<[1], [0], [0], [1], [0, 0, 1, 1], [], []>} : vector<512x32xbf16>, vector<32x64xbf16>, vector<512x64xf32> -> vector<512x64xf32>
    %25 = vector.extract_strided_slice %24 {offsets = [8, 0], sizes = [8, 64], strides = [1, 1]} : vector<512x64xf32> to vector<8x64xf32>
    %26 = arith.addf %14, %25 : vector<8x64xf32>
    %27 = vector.extract_strided_slice %24 {offsets = [24, 0], sizes = [8, 64], strides = [1, 1]} : vector<512x64xf32> to vector<8x64xf32>
    %28 = arith.addf %15, %27 : vector<8x64xf32>
    %29 = vector.extract_strided_slice %24 {offsets = [40, 0], sizes = [8, 64], strides = [1, 1]} : vector<512x64xf32> to vector<8x64xf32>
    %30 = arith.addf %16, %29 : vector<8x64xf32>
    %31 = vector.extract_strided_slice %24 {offsets = [136, 0], sizes = [8, 64], strides = [1, 1]} : vector<512x64xf32> to vector<8x64xf32>
    %32 = arith.addf %17, %31 : vector<8x64xf32>
    %33 = vector.extract_strided_slice %24 {offsets = [152, 0], sizes = [8, 64], strides = [1, 1]} : vector<512x64xf32> to vector<8x64xf32>
    %34 = arith.addf %18, %33 : vector<8x64xf32>
    %35 = vector.extract_strided_slice %24 {offsets = [168, 0], sizes = [8, 64], strides = [1, 1]} : vector<512x64xf32> to vector<8x64xf32>
    %36 = arith.addf %19, %35 : vector<8x64xf32>
    %37 = vector.extract_strided_slice %24 {offsets = [264, 0], sizes = [8, 64], strides = [1, 1]} : vector<512x64xf32> to vector<8x64xf32>
    %38 = arith.addf %20, %37 : vector<8x64xf32>
    %39 = vector.extract_strided_slice %24 {offsets = [280, 0], sizes = [8, 64], strides = [1, 1]} : vector<512x64xf32> to vector<8x64xf32>
    %40 = arith.addf %21, %39 : vector<8x64xf32>
    %41 = vector.extract_strided_slice %24 {offsets = [296, 0], sizes = [8, 64], strides = [1, 1]} : vector<512x64xf32> to vector<8x64xf32>
    %42 = arith.addf %22, %41 : vector<8x64xf32>
    %43 = vector.extract_strided_slice %10 {offsets = [64, 0], sizes = [32, 64], strides = [1, 1]} : vector<512x64xbf16> to vector<32x64xbf16>
    %cst_13 = arith.constant dense<0.000000e+00> : vector<512x64xf32>
    %44 = tpu.matmul %9, %43, %cst_13 {dimension_numbers = #tpu.dot_dimension_numbers<[1], [0], [0], [1], [0, 0, 1, 1], [], []>} : vector<512x32xbf16>, vector<32x64xbf16>, vector<512x64xf32> -> vector<512x64xf32>
    %45 = vector.extract_strided_slice %44 {offsets = [16, 0], sizes = [8, 64], strides = [1, 1]} : vector<512x64xf32> to vector<8x64xf32>
    %46 = arith.addf %26, %45 : vector<8x64xf32>
    %47 = vector.extract_strided_slice %44 {offsets = [32, 0], sizes = [8, 64], strides = [1, 1]} : vector<512x64xf32> to vector<8x64xf32>
    %48 = arith.addf %28, %47 : vector<8x64xf32>
    %49 = vector.extract_strided_slice %44 {offsets = [48, 0], sizes = [8, 64], strides = [1, 1]} : vector<512x64xf32> to vector<8x64xf32>
    %50 = arith.addf %30, %49 : vector<8x64xf32>
    %51 = vector.extract_strided_slice %44 {offsets = [144, 0], sizes = [8, 64], strides = [1, 1]} : vector<512x64xf32> to vector<8x64xf32>
    %52 = arith.addf %32, %51 : vector<8x64xf32>
    %53 = vector.extract_strided_slice %44 {offsets = [160, 0], sizes = [8, 64], strides = [1, 1]} : vector<512x64xf32> to vector<8x64xf32>
    %54 = arith.addf %34, %53 : vector<8x64xf32>
    %55 = vector.extract_strided_slice %44 {offsets = [176, 0], sizes = [8, 64], strides = [1, 1]} : vector<512x64xf32> to vector<8x64xf32>
    %56 = arith.addf %36, %55 : vector<8x64xf32>
    %57 = vector.extract_strided_slice %44 {offsets = [272, 0], sizes = [8, 64], strides = [1, 1]} : vector<512x64xf32> to vector<8x64xf32>
    %58 = arith.addf %38, %57 : vector<8x64xf32>
    %59 = vector.extract_strided_slice %44 {offsets = [288, 0], sizes = [8, 64], strides = [1, 1]} : vector<512x64xf32> to vector<8x64xf32>
    %60 = arith.addf %40, %59 : vector<8x64xf32>
    %61 = vector.extract_strided_slice %44 {offsets = [304, 0], sizes = [8, 64], strides = [1, 1]} : vector<512x64xf32> to vector<8x64xf32>
    %62 = arith.addf %42, %61 : vector<8x64xf32>
    %63 = vector.extract_strided_slice %10 {offsets = [96, 0], sizes = [32, 64], strides = [1, 1]} : vector<512x64xbf16> to vector<32x64xbf16>
    %cst_14 = arith.constant dense<0.000000e+00> : vector<512x64xf32>
    %64 = tpu.matmul %9, %63, %cst_14 {dimension_numbers = #tpu.dot_dimension_numbers<[1], [0], [0], [1], [0, 0, 1, 1], [], []>} : vector<512x32xbf16>, vector<32x64xbf16>, vector<512x64xf32> -> vector<512x64xf32>
    %65 = vector.extract_strided_slice %64 {offsets = [24, 0], sizes = [8, 64], strides = [1, 1]} : vector<512x64xf32> to vector<8x64xf32>
    %66 = arith.addf %46, %65 : vector<8x64xf32>
    %67 = vector.extract_strided_slice %64 {offsets = [40, 0], sizes = [8, 64], strides = [1, 1]} : vector<512x64xf32> to vector<8x64xf32>
    %68 = arith.addf %48, %67 : vector<8x64xf32>
    %69 = vector.extract_strided_slice %64 {offsets = [56, 0], sizes = [8, 64], strides = [1, 1]} : vector<512x64xf32> to vector<8x64xf32>
    %70 = arith.addf %50, %69 : vector<8x64xf32>
    %71 = vector.extract_strided_slice %64 {offsets = [152, 0], sizes = [8, 64], strides = [1, 1]} : vector<512x64xf32> to vector<8x64xf32>
    %72 = arith.addf %52, %71 : vector<8x64xf32>
    %73 = vector.extract_strided_slice %64 {offsets = [168, 0], sizes = [8, 64], strides = [1, 1]} : vector<512x64xf32> to vector<8x64xf32>
    %74 = arith.addf %54, %73 : vector<8x64xf32>
    %75 = vector.extract_strided_slice %64 {offsets = [184, 0], sizes = [8, 64], strides = [1, 1]} : vector<512x64xf32> to vector<8x64xf32>
    %76 = arith.addf %56, %75 : vector<8x64xf32>
    %77 = vector.extract_strided_slice %64 {offsets = [280, 0], sizes = [8, 64], strides = [1, 1]} : vector<512x64xf32> to vector<8x64xf32>
    %78 = arith.addf %58, %77 : vector<8x64xf32>
    %79 = vector.extract_strided_slice %64 {offsets = [296, 0], sizes = [8, 64], strides = [1, 1]} : vector<512x64xf32> to vector<8x64xf32>
    %80 = arith.addf %60, %79 : vector<8x64xf32>
    %81 = vector.extract_strided_slice %64 {offsets = [312, 0], sizes = [8, 64], strides = [1, 1]} : vector<512x64xf32> to vector<8x64xf32>
    %82 = arith.addf %62, %81 : vector<8x64xf32>
    %83 = vector.extract_strided_slice %10 {offsets = [128, 0], sizes = [32, 64], strides = [1, 1]} : vector<512x64xbf16> to vector<32x64xbf16>
    %cst_15 = arith.constant dense<0.000000e+00> : vector<512x64xf32>
    %84 = tpu.matmul %9, %83, %cst_15 {dimension_numbers = #tpu.dot_dimension_numbers<[1], [0], [0], [1], [0, 0, 1, 1], [], []>} : vector<512x32xbf16>, vector<32x64xbf16>, vector<512x64xf32> -> vector<512x64xf32>
    %85 = vector.extract_strided_slice %84 {offsets = [64, 0], sizes = [8, 64], strides = [1, 1]} : vector<512x64xf32> to vector<8x64xf32>
    %86 = arith.addf %66, %85 : vector<8x64xf32>
    %87 = vector.extract_strided_slice %84 {offsets = [80, 0], sizes = [8, 64], strides = [1, 1]} : vector<512x64xf32> to vector<8x64xf32>
    %88 = arith.addf %68, %87 : vector<8x64xf32>
    %89 = vector.extract_strided_slice %84 {offsets = [96, 0], sizes = [8, 64], strides = [1, 1]} : vector<512x64xf32> to vector<8x64xf32>
    %90 = arith.addf %70, %89 : vector<8x64xf32>
    %91 = vector.extract_strided_slice %84 {offsets = [192, 0], sizes = [8, 64], strides = [1, 1]} : vector<512x64xf32> to vector<8x64xf32>
    %92 = arith.addf %72, %91 : vector<8x64xf32>
    %93 = vector.extract_strided_slice %84 {offsets = [208, 0], sizes = [8, 64], strides = [1, 1]} : vector<512x64xf32> to vector<8x64xf32>
    %94 = arith.addf %74, %93 : vector<8x64xf32>
    %95 = vector.extract_strided_slice %84 {offsets = [224, 0], sizes = [8, 64], strides = [1, 1]} : vector<512x64xf32> to vector<8x64xf32>
    %96 = arith.addf %76, %95 : vector<8x64xf32>
    %97 = vector.extract_strided_slice %84 {offsets = [320, 0], sizes = [8, 64], strides = [1, 1]} : vector<512x64xf32> to vector<8x64xf32>
    %98 = arith.addf %78, %97 : vector<8x64xf32>
    %99 = vector.extract_strided_slice %84 {offsets = [336, 0], sizes = [8, 64], strides = [1, 1]} : vector<512x64xf32> to vector<8x64xf32>
    %100 = arith.addf %80, %99 : vector<8x64xf32>
    %101 = vector.extract_strided_slice %84 {offsets = [352, 0], sizes = [8, 64], strides = [1, 1]} : vector<512x64xf32> to vector<8x64xf32>
    %102 = arith.addf %82, %101 : vector<8x64xf32>
    %103 = vector.extract_strided_slice %10 {offsets = [160, 0], sizes = [32, 64], strides = [1, 1]} : vector<512x64xbf16> to vector<32x64xbf16>
    %cst_16 = arith.constant dense<0.000000e+00> : vector<512x64xf32>
    %104 = tpu.matmul %9, %103, %cst_16 {dimension_numbers = #tpu.dot_dimension_numbers<[1], [0], [0], [1], [0, 0, 1, 1], [], []>} : vector<512x32xbf16>, vector<32x64xbf16>, vector<512x64xf32> -> vector<512x64xf32>
    %105 = vector.extract_strided_slice %104 {offsets = [72, 0], sizes = [8, 64], strides = [1, 1]} : vector<512x64xf32> to vector<8x64xf32>
    %106 = arith.addf %86, %105 : vector<8x64xf32>
    %107 = vector.extract_strided_slice %104 {offsets = [88, 0], sizes = [8, 64], strides = [1, 1]} : vector<512x64xf32> to vector<8x64xf32>
    %108 = arith.addf %88, %107 : vector<8x64xf32>
    %109 = vector.extract_strided_slice %104 {offsets = [104, 0], sizes = [8, 64], strides = [1, 1]} : vector<512x64xf32> to vector<8x64xf32>
    %110 = arith.addf %90, %109 : vector<8x64xf32>
    %111 = vector.extract_strided_slice %104 {offsets = [200, 0], sizes = [8, 64], strides = [1, 1]} : vector<512x64xf32> to vector<8x64xf32>
    %112 = arith.addf %92, %111 : vector<8x64xf32>
    %113 = vector.extract_strided_slice %104 {offsets = [216, 0], sizes = [8, 64], strides = [1, 1]} : vector<512x64xf32> to vector<8x64xf32>
    %114 = arith.addf %94, %113 : vector<8x64xf32>
    %115 = vector.extract_strided_slice %104 {offsets = [232, 0], sizes = [8, 64], strides = [1, 1]} : vector<512x64xf32> to vector<8x64xf32>
    %116 = arith.addf %96, %115 : vector<8x64xf32>
    %117 = vector.extract_strided_slice %104 {offsets = [328, 0], sizes = [8, 64], strides = [1, 1]} : vector<512x64xf32> to vector<8x64xf32>
    %118 = arith.addf %98, %117 : vector<8x64xf32>
    %119 = vector.extract_strided_slice %104 {offsets = [344, 0], sizes = [8, 64], strides = [1, 1]} : vector<512x64xf32> to vector<8x64xf32>
    %120 = arith.addf %100, %119 : vector<8x64xf32>
    %121 = vector.extract_strided_slice %104 {offsets = [360, 0], sizes = [8, 64], strides = [1, 1]} : vector<512x64xf32> to vector<8x64xf32>
    %122 = arith.addf %102, %121 : vector<8x64xf32>
    %123 = vector.extract_strided_slice %10 {offsets = [192, 0], sizes = [32, 64], strides = [1, 1]} : vector<512x64xbf16> to vector<32x64xbf16>
    %cst_17 = arith.constant dense<0.000000e+00> : vector<512x64xf32>
    %124 = tpu.matmul %9, %123, %cst_17 {dimension_numbers = #tpu.dot_dimension_numbers<[1], [0], [0], [1], [0, 0, 1, 1], [], []>} : vector<512x32xbf16>, vector<32x64xbf16>, vector<512x64xf32> -> vector<512x64xf32>
    %125 = vector.extract_strided_slice %124 {offsets = [80, 0], sizes = [8, 64], strides = [1, 1]} : vector<512x64xf32> to vector<8x64xf32>
    %126 = arith.addf %106, %125 : vector<8x64xf32>
    %127 = vector.extract_strided_slice %124 {offsets = [96, 0], sizes = [8, 64], strides = [1, 1]} : vector<512x64xf32> to vector<8x64xf32>
    %128 = arith.addf %108, %127 : vector<8x64xf32>
    %129 = vector.extract_strided_slice %124 {offsets = [112, 0], sizes = [8, 64], strides = [1, 1]} : vector<512x64xf32> to vector<8x64xf32>
    %130 = arith.addf %110, %129 : vector<8x64xf32>
    %131 = vector.extract_strided_slice %124 {offsets = [208, 0], sizes = [8, 64], strides = [1, 1]} : vector<512x64xf32> to vector<8x64xf32>
    %132 = arith.addf %112, %131 : vector<8x64xf32>
    %133 = vector.extract_strided_slice %124 {offsets = [224, 0], sizes = [8, 64], strides = [1, 1]} : vector<512x64xf32> to vector<8x64xf32>
    %134 = arith.addf %114, %133 : vector<8x64xf32>
    %135 = vector.extract_strided_slice %124 {offsets = [240, 0], sizes = [8, 64], strides = [1, 1]} : vector<512x64xf32> to vector<8x64xf32>
    %136 = arith.addf %116, %135 : vector<8x64xf32>
    %137 = vector.extract_strided_slice %124 {offsets = [336, 0], sizes = [8, 64], strides = [1, 1]} : vector<512x64xf32> to vector<8x64xf32>
    %138 = arith.addf %118, %137 : vector<8x64xf32>
    %139 = vector.extract_strided_slice %124 {offsets = [352, 0], sizes = [8, 64], strides = [1, 1]} : vector<512x64xf32> to vector<8x64xf32>
    %140 = arith.addf %120, %139 : vector<8x64xf32>
    %141 = vector.extract_strided_slice %124 {offsets = [368, 0], sizes = [8, 64], strides = [1, 1]} : vector<512x64xf32> to vector<8x64xf32>
    %142 = arith.addf %122, %141 : vector<8x64xf32>
    %143 = vector.extract_strided_slice %10 {offsets = [224, 0], sizes = [32, 64], strides = [1, 1]} : vector<512x64xbf16> to vector<32x64xbf16>
    %cst_18 = arith.constant dense<0.000000e+00> : vector<512x64xf32>
    %144 = tpu.matmul %9, %143, %cst_18 {dimension_numbers = #tpu.dot_dimension_numbers<[1], [0], [0], [1], [0, 0, 1, 1], [], []>} : vector<512x32xbf16>, vector<32x64xbf16>, vector<512x64xf32> -> vector<512x64xf32>
    %145 = vector.extract_strided_slice %144 {offsets = [88, 0], sizes = [8, 64], strides = [1, 1]} : vector<512x64xf32> to vector<8x64xf32>
    %146 = arith.addf %126, %145 : vector<8x64xf32>
    %147 = vector.extract_strided_slice %144 {offsets = [104, 0], sizes = [8, 64], strides = [1, 1]} : vector<512x64xf32> to vector<8x64xf32>
    %148 = arith.addf %128, %147 : vector<8x64xf32>
    %149 = vector.extract_strided_slice %144 {offsets = [120, 0], sizes = [8, 64], strides = [1, 1]} : vector<512x64xf32> to vector<8x64xf32>
    %150 = arith.addf %130, %149 : vector<8x64xf32>
    %151 = vector.extract_strided_slice %144 {offsets = [216, 0], sizes = [8, 64], strides = [1, 1]} : vector<512x64xf32> to vector<8x64xf32>
    %152 = arith.addf %132, %151 : vector<8x64xf32>
    %153 = vector.extract_strided_slice %144 {offsets = [232, 0], sizes = [8, 64], strides = [1, 1]} : vector<512x64xf32> to vector<8x64xf32>
    %154 = arith.addf %134, %153 : vector<8x64xf32>
    %155 = vector.extract_strided_slice %144 {offsets = [248, 0], sizes = [8, 64], strides = [1, 1]} : vector<512x64xf32> to vector<8x64xf32>
    %156 = arith.addf %136, %155 : vector<8x64xf32>
    %157 = vector.extract_strided_slice %144 {offsets = [344, 0], sizes = [8, 64], strides = [1, 1]} : vector<512x64xf32> to vector<8x64xf32>
    %158 = arith.addf %138, %157 : vector<8x64xf32>
    %159 = vector.extract_strided_slice %144 {offsets = [360, 0], sizes = [8, 64], strides = [1, 1]} : vector<512x64xf32> to vector<8x64xf32>
    %160 = arith.addf %140, %159 : vector<8x64xf32>
    %161 = vector.extract_strided_slice %144 {offsets = [376, 0], sizes = [8, 64], strides = [1, 1]} : vector<512x64xf32> to vector<8x64xf32>
    %162 = arith.addf %142, %161 : vector<8x64xf32>
    %163 = vector.extract_strided_slice %10 {offsets = [256, 0], sizes = [32, 64], strides = [1, 1]} : vector<512x64xbf16> to vector<32x64xbf16>
    %cst_19 = arith.constant dense<0.000000e+00> : vector<512x64xf32>
    %164 = tpu.matmul %9, %163, %cst_19 {dimension_numbers = #tpu.dot_dimension_numbers<[1], [0], [0], [1], [0, 0, 1, 1], [], []>} : vector<512x32xbf16>, vector<32x64xbf16>, vector<512x64xf32> -> vector<512x64xf32>
    %165 = vector.extract_strided_slice %164 {offsets = [128, 0], sizes = [8, 64], strides = [1, 1]} : vector<512x64xf32> to vector<8x64xf32>
    %166 = arith.addf %146, %165 : vector<8x64xf32>
    %167 = vector.extract_strided_slice %164 {offsets = [144, 0], sizes = [8, 64], strides = [1, 1]} : vector<512x64xf32> to vector<8x64xf32>
    %168 = arith.addf %148, %167 : vector<8x64xf32>
    %169 = vector.extract_strided_slice %164 {offsets = [160, 0], sizes = [8, 64], strides = [1, 1]} : vector<512x64xf32> to vector<8x64xf32>
    %170 = arith.addf %150, %169 : vector<8x64xf32>
    %171 = vector.extract_strided_slice %164 {offsets = [256, 0], sizes = [8, 64], strides = [1, 1]} : vector<512x64xf32> to vector<8x64xf32>
    %172 = arith.addf %152, %171 : vector<8x64xf32>
    %173 = vector.extract_strided_slice %164 {offsets = [272, 0], sizes = [8, 64], strides = [1, 1]} : vector<512x64xf32> to vector<8x64xf32>
    %174 = arith.addf %154, %173 : vector<8x64xf32>
    %175 = vector.extract_strided_slice %164 {offsets = [288, 0], sizes = [8, 64], strides = [1, 1]} : vector<512x64xf32> to vector<8x64xf32>
    %176 = arith.addf %156, %175 : vector<8x64xf32>
    %177 = vector.extract_strided_slice %164 {offsets = [384, 0], sizes = [8, 64], strides = [1, 1]} : vector<512x64xf32> to vector<8x64xf32>
    %178 = arith.addf %158, %177 : vector<8x64xf32>
    %179 = vector.extract_strided_slice %164 {offsets = [400, 0], sizes = [8, 64], strides = [1, 1]} : vector<512x64xf32> to vector<8x64xf32>
    %180 = arith.addf %160, %179 : vector<8x64xf32>
    %181 = vector.extract_strided_slice %164 {offsets = [416, 0], sizes = [8, 64], strides = [1, 1]} : vector<512x64xf32> to vector<8x64xf32>
    %182 = arith.addf %162, %181 : vector<8x64xf32>
    %183 = vector.extract_strided_slice %10 {offsets = [288, 0], sizes = [32, 64], strides = [1, 1]} : vector<512x64xbf16> to vector<32x64xbf16>
    %cst_20 = arith.constant dense<0.000000e+00> : vector<512x64xf32>
    %184 = tpu.matmul %9, %183, %cst_20 {dimension_numbers = #tpu.dot_dimension_numbers<[1], [0], [0], [1], [0, 0, 1, 1], [], []>} : vector<512x32xbf16>, vector<32x64xbf16>, vector<512x64xf32> -> vector<512x64xf32>
    %185 = vector.extract_strided_slice %184 {offsets = [136, 0], sizes = [8, 64], strides = [1, 1]} : vector<512x64xf32> to vector<8x64xf32>
    %186 = arith.addf %166, %185 : vector<8x64xf32>
    %187 = vector.extract_strided_slice %184 {offsets = [152, 0], sizes = [8, 64], strides = [1, 1]} : vector<512x64xf32> to vector<8x64xf32>
    %188 = arith.addf %168, %187 : vector<8x64xf32>
    %189 = vector.extract_strided_slice %184 {offsets = [168, 0], sizes = [8, 64], strides = [1, 1]} : vector<512x64xf32> to vector<8x64xf32>
    %190 = arith.addf %170, %189 : vector<8x64xf32>
    %191 = vector.extract_strided_slice %184 {offsets = [264, 0], sizes = [8, 64], strides = [1, 1]} : vector<512x64xf32> to vector<8x64xf32>
    %192 = arith.addf %172, %191 : vector<8x64xf32>
    %193 = vector.extract_strided_slice %184 {offsets = [280, 0], sizes = [8, 64], strides = [1, 1]} : vector<512x64xf32> to vector<8x64xf32>
    %194 = arith.addf %174, %193 : vector<8x64xf32>
    %195 = vector.extract_strided_slice %184 {offsets = [296, 0], sizes = [8, 64], strides = [1, 1]} : vector<512x64xf32> to vector<8x64xf32>
    %196 = arith.addf %176, %195 : vector<8x64xf32>
    %197 = vector.extract_strided_slice %184 {offsets = [392, 0], sizes = [8, 64], strides = [1, 1]} : vector<512x64xf32> to vector<8x64xf32>
    %198 = arith.addf %178, %197 : vector<8x64xf32>
    %199 = vector.extract_strided_slice %184 {offsets = [408, 0], sizes = [8, 64], strides = [1, 1]} : vector<512x64xf32> to vector<8x64xf32>
    %200 = arith.addf %180, %199 : vector<8x64xf32>
    %201 = vector.extract_strided_slice %184 {offsets = [424, 0], sizes = [8, 64], strides = [1, 1]} : vector<512x64xf32> to vector<8x64xf32>
    %202 = arith.addf %182, %201 : vector<8x64xf32>
    %203 = vector.extract_strided_slice %10 {offsets = [320, 0], sizes = [32, 64], strides = [1, 1]} : vector<512x64xbf16> to vector<32x64xbf16>
    %cst_21 = arith.constant dense<0.000000e+00> : vector<512x64xf32>
    %204 = tpu.matmul %9, %203, %cst_21 {dimension_numbers = #tpu.dot_dimension_numbers<[1], [0], [0], [1], [0, 0, 1, 1], [], []>} : vector<512x32xbf16>, vector<32x64xbf16>, vector<512x64xf32> -> vector<512x64xf32>
    %205 = vector.extract_strided_slice %204 {offsets = [144, 0], sizes = [8, 64], strides = [1, 1]} : vector<512x64xf32> to vector<8x64xf32>
    %206 = arith.addf %186, %205 : vector<8x64xf32>
    %207 = vector.extract_strided_slice %204 {offsets = [160, 0], sizes = [8, 64], strides = [1, 1]} : vector<512x64xf32> to vector<8x64xf32>
    %208 = arith.addf %188, %207 : vector<8x64xf32>
    %209 = vector.extract_strided_slice %204 {offsets = [176, 0], sizes = [8, 64], strides = [1, 1]} : vector<512x64xf32> to vector<8x64xf32>
    %210 = arith.addf %190, %209 : vector<8x64xf32>
    %211 = vector.extract_strided_slice %204 {offsets = [272, 0], sizes = [8, 64], strides = [1, 1]} : vector<512x64xf32> to vector<8x64xf32>
    %212 = arith.addf %192, %211 : vector<8x64xf32>
    %213 = vector.extract_strided_slice %204 {offsets = [288, 0], sizes = [8, 64], strides = [1, 1]} : vector<512x64xf32> to vector<8x64xf32>
    %214 = arith.addf %194, %213 : vector<8x64xf32>
    %215 = vector.extract_strided_slice %204 {offsets = [304, 0], sizes = [8, 64], strides = [1, 1]} : vector<512x64xf32> to vector<8x64xf32>
    %216 = arith.addf %196, %215 : vector<8x64xf32>
    %217 = vector.extract_strided_slice %204 {offsets = [400, 0], sizes = [8, 64], strides = [1, 1]} : vector<512x64xf32> to vector<8x64xf32>
    %218 = arith.addf %198, %217 : vector<8x64xf32>
    %219 = vector.extract_strided_slice %204 {offsets = [416, 0], sizes = [8, 64], strides = [1, 1]} : vector<512x64xf32> to vector<8x64xf32>
    %220 = arith.addf %200, %219 : vector<8x64xf32>
    %221 = vector.extract_strided_slice %204 {offsets = [432, 0], sizes = [8, 64], strides = [1, 1]} : vector<512x64xf32> to vector<8x64xf32>
    %222 = arith.addf %202, %221 : vector<8x64xf32>
    %223 = vector.extract_strided_slice %10 {offsets = [352, 0], sizes = [32, 64], strides = [1, 1]} : vector<512x64xbf16> to vector<32x64xbf16>
    %cst_22 = arith.constant dense<0.000000e+00> : vector<512x64xf32>
    %224 = tpu.matmul %9, %223, %cst_22 {dimension_numbers = #tpu.dot_dimension_numbers<[1], [0], [0], [1], [0, 0, 1, 1], [], []>} : vector<512x32xbf16>, vector<32x64xbf16>, vector<512x64xf32> -> vector<512x64xf32>
    %225 = vector.extract_strided_slice %224 {offsets = [152, 0], sizes = [8, 64], strides = [1, 1]} : vector<512x64xf32> to vector<8x64xf32>
    %226 = arith.addf %206, %225 : vector<8x64xf32>
    %227 = vector.extract_strided_slice %224 {offsets = [168, 0], sizes = [8, 64], strides = [1, 1]} : vector<512x64xf32> to vector<8x64xf32>
    %228 = arith.addf %208, %227 : vector<8x64xf32>
    %229 = vector.extract_strided_slice %224 {offsets = [184, 0], sizes = [8, 64], strides = [1, 1]} : vector<512x64xf32> to vector<8x64xf32>
    %230 = arith.addf %210, %229 : vector<8x64xf32>
    %231 = vector.extract_strided_slice %224 {offsets = [280, 0], sizes = [8, 64], strides = [1, 1]} : vector<512x64xf32> to vector<8x64xf32>
    %232 = arith.addf %212, %231 : vector<8x64xf32>
    %233 = vector.extract_strided_slice %224 {offsets = [296, 0], sizes = [8, 64], strides = [1, 1]} : vector<512x64xf32> to vector<8x64xf32>
    %234 = arith.addf %214, %233 : vector<8x64xf32>
    %235 = vector.extract_strided_slice %224 {offsets = [312, 0], sizes = [8, 64], strides = [1, 1]} : vector<512x64xf32> to vector<8x64xf32>
    %236 = arith.addf %216, %235 : vector<8x64xf32>
    %237 = vector.extract_strided_slice %224 {offsets = [408, 0], sizes = [8, 64], strides = [1, 1]} : vector<512x64xf32> to vector<8x64xf32>
    %238 = arith.addf %218, %237 : vector<8x64xf32>
    %239 = vector.extract_strided_slice %224 {offsets = [424, 0], sizes = [8, 64], strides = [1, 1]} : vector<512x64xf32> to vector<8x64xf32>
    %240 = arith.addf %220, %239 : vector<8x64xf32>
    %241 = vector.extract_strided_slice %224 {offsets = [440, 0], sizes = [8, 64], strides = [1, 1]} : vector<512x64xf32> to vector<8x64xf32>
    %242 = arith.addf %222, %241 : vector<8x64xf32>
    %243 = vector.extract_strided_slice %10 {offsets = [384, 0], sizes = [32, 64], strides = [1, 1]} : vector<512x64xbf16> to vector<32x64xbf16>
    %cst_23 = arith.constant dense<0.000000e+00> : vector<512x64xf32>
    %244 = tpu.matmul %9, %243, %cst_23 {dimension_numbers = #tpu.dot_dimension_numbers<[1], [0], [0], [1], [0, 0, 1, 1], [], []>} : vector<512x32xbf16>, vector<32x64xbf16>, vector<512x64xf32> -> vector<512x64xf32>
    %245 = vector.extract_strided_slice %244 {offsets = [192, 0], sizes = [8, 64], strides = [1, 1]} : vector<512x64xf32> to vector<8x64xf32>
    %246 = arith.addf %226, %245 : vector<8x64xf32>
    %247 = vector.extract_strided_slice %244 {offsets = [208, 0], sizes = [8, 64], strides = [1, 1]} : vector<512x64xf32> to vector<8x64xf32>
    %248 = arith.addf %228, %247 : vector<8x64xf32>
    %249 = vector.extract_strided_slice %244 {offsets = [224, 0], sizes = [8, 64], strides = [1, 1]} : vector<512x64xf32> to vector<8x64xf32>
    %250 = arith.addf %230, %249 : vector<8x64xf32>
    %251 = vector.extract_strided_slice %244 {offsets = [320, 0], sizes = [8, 64], strides = [1, 1]} : vector<512x64xf32> to vector<8x64xf32>
    %252 = arith.addf %232, %251 : vector<8x64xf32>
    %253 = vector.extract_strided_slice %244 {offsets = [336, 0], sizes = [8, 64], strides = [1, 1]} : vector<512x64xf32> to vector<8x64xf32>
    %254 = arith.addf %234, %253 : vector<8x64xf32>
    %255 = vector.extract_strided_slice %244 {offsets = [352, 0], sizes = [8, 64], strides = [1, 1]} : vector<512x64xf32> to vector<8x64xf32>
    %256 = arith.addf %236, %255 : vector<8x64xf32>
    %257 = vector.extract_strided_slice %244 {offsets = [448, 0], sizes = [8, 64], strides = [1, 1]} : vector<512x64xf32> to vector<8x64xf32>
    %258 = arith.addf %238, %257 : vector<8x64xf32>
    %259 = vector.extract_strided_slice %244 {offsets = [464, 0], sizes = [8, 64], strides = [1, 1]} : vector<512x64xf32> to vector<8x64xf32>
    %260 = arith.addf %240, %259 : vector<8x64xf32>
    %261 = vector.extract_strided_slice %244 {offsets = [480, 0], sizes = [8, 64], strides = [1, 1]} : vector<512x64xf32> to vector<8x64xf32>
    %262 = arith.addf %242, %261 : vector<8x64xf32>
    %263 = vector.extract_strided_slice %10 {offsets = [416, 0], sizes = [32, 64], strides = [1, 1]} : vector<512x64xbf16> to vector<32x64xbf16>
    %cst_24 = arith.constant dense<0.000000e+00> : vector<512x64xf32>
    %264 = tpu.matmul %9, %263, %cst_24 {dimension_numbers = #tpu.dot_dimension_numbers<[1], [0], [0], [1], [0, 0, 1, 1], [], []>} : vector<512x32xbf16>, vector<32x64xbf16>, vector<512x64xf32> -> vector<512x64xf32>
    %265 = vector.extract_strided_slice %264 {offsets = [200, 0], sizes = [8, 64], strides = [1, 1]} : vector<512x64xf32> to vector<8x64xf32>
    %266 = arith.addf %246, %265 : vector<8x64xf32>
    %267 = vector.extract_strided_slice %264 {offsets = [216, 0], sizes = [8, 64], strides = [1, 1]} : vector<512x64xf32> to vector<8x64xf32>
    %268 = arith.addf %248, %267 : vector<8x64xf32>
    %269 = vector.extract_strided_slice %264 {offsets = [232, 0], sizes = [8, 64], strides = [1, 1]} : vector<512x64xf32> to vector<8x64xf32>
    %270 = arith.addf %250, %269 : vector<8x64xf32>
    %271 = vector.extract_strided_slice %264 {offsets = [328, 0], sizes = [8, 64], strides = [1, 1]} : vector<512x64xf32> to vector<8x64xf32>
    %272 = arith.addf %252, %271 : vector<8x64xf32>
    %273 = vector.extract_strided_slice %264 {offsets = [344, 0], sizes = [8, 64], strides = [1, 1]} : vector<512x64xf32> to vector<8x64xf32>
    %274 = arith.addf %254, %273 : vector<8x64xf32>
    %275 = vector.extract_strided_slice %264 {offsets = [360, 0], sizes = [8, 64], strides = [1, 1]} : vector<512x64xf32> to vector<8x64xf32>
    %276 = arith.addf %256, %275 : vector<8x64xf32>
    %277 = vector.extract_strided_slice %264 {offsets = [456, 0], sizes = [8, 64], strides = [1, 1]} : vector<512x64xf32> to vector<8x64xf32>
    %278 = arith.addf %258, %277 : vector<8x64xf32>
    %279 = vector.extract_strided_slice %264 {offsets = [472, 0], sizes = [8, 64], strides = [1, 1]} : vector<512x64xf32> to vector<8x64xf32>
    %280 = arith.addf %260, %279 : vector<8x64xf32>
    %281 = vector.extract_strided_slice %264 {offsets = [488, 0], sizes = [8, 64], strides = [1, 1]} : vector<512x64xf32> to vector<8x64xf32>
    %282 = arith.addf %262, %281 : vector<8x64xf32>
    %283 = vector.extract_strided_slice %10 {offsets = [448, 0], sizes = [32, 64], strides = [1, 1]} : vector<512x64xbf16> to vector<32x64xbf16>
    %cst_25 = arith.constant dense<0.000000e+00> : vector<512x64xf32>
    %284 = tpu.matmul %9, %283, %cst_25 {dimension_numbers = #tpu.dot_dimension_numbers<[1], [0], [0], [1], [0, 0, 1, 1], [], []>} : vector<512x32xbf16>, vector<32x64xbf16>, vector<512x64xf32> -> vector<512x64xf32>
    %285 = vector.extract_strided_slice %284 {offsets = [208, 0], sizes = [8, 64], strides = [1, 1]} : vector<512x64xf32> to vector<8x64xf32>
    %286 = arith.addf %266, %285 : vector<8x64xf32>
    %287 = vector.extract_strided_slice %284 {offsets = [224, 0], sizes = [8, 64], strides = [1, 1]} : vector<512x64xf32> to vector<8x64xf32>
    %288 = arith.addf %268, %287 : vector<8x64xf32>
    %289 = vector.extract_strided_slice %284 {offsets = [240, 0], sizes = [8, 64], strides = [1, 1]} : vector<512x64xf32> to vector<8x64xf32>
    %290 = arith.addf %270, %289 : vector<8x64xf32>
    %291 = vector.extract_strided_slice %284 {offsets = [336, 0], sizes = [8, 64], strides = [1, 1]} : vector<512x64xf32> to vector<8x64xf32>
    %292 = arith.addf %272, %291 : vector<8x64xf32>
    %293 = vector.extract_strided_slice %284 {offsets = [352, 0], sizes = [8, 64], strides = [1, 1]} : vector<512x64xf32> to vector<8x64xf32>
    %294 = arith.addf %274, %293 : vector<8x64xf32>
    %295 = vector.extract_strided_slice %284 {offsets = [368, 0], sizes = [8, 64], strides = [1, 1]} : vector<512x64xf32> to vector<8x64xf32>
    %296 = arith.addf %276, %295 : vector<8x64xf32>
    %297 = vector.extract_strided_slice %284 {offsets = [464, 0], sizes = [8, 64], strides = [1, 1]} : vector<512x64xf32> to vector<8x64xf32>
    %298 = arith.addf %278, %297 : vector<8x64xf32>
    %299 = vector.extract_strided_slice %284 {offsets = [480, 0], sizes = [8, 64], strides = [1, 1]} : vector<512x64xf32> to vector<8x64xf32>
    %300 = arith.addf %280, %299 : vector<8x64xf32>
    %301 = vector.extract_strided_slice %284 {offsets = [496, 0], sizes = [8, 64], strides = [1, 1]} : vector<512x64xf32> to vector<8x64xf32>
    %302 = arith.addf %282, %301 : vector<8x64xf32>
    %303 = vector.extract_strided_slice %10 {offsets = [480, 0], sizes = [32, 64], strides = [1, 1]} : vector<512x64xbf16> to vector<32x64xbf16>
    %cst_26 = arith.constant dense<0.000000e+00> : vector<512x64xf32>
    %304 = tpu.matmul %9, %303, %cst_26 {dimension_numbers = #tpu.dot_dimension_numbers<[1], [0], [0], [1], [0, 0, 1, 1], [], []>} : vector<512x32xbf16>, vector<32x64xbf16>, vector<512x64xf32> -> vector<512x64xf32>
    %305 = vector.extract_strided_slice %304 {offsets = [216, 0], sizes = [8, 64], strides = [1, 1]} : vector<512x64xf32> to vector<8x64xf32>
    %306 = arith.addf %286, %305 : vector<8x64xf32>
    %307 = vector.extract_strided_slice %304 {offsets = [232, 0], sizes = [8, 64], strides = [1, 1]} : vector<512x64xf32> to vector<8x64xf32>
    %308 = arith.addf %288, %307 : vector<8x64xf32>
    %309 = vector.extract_strided_slice %304 {offsets = [248, 0], sizes = [8, 64], strides = [1, 1]} : vector<512x64xf32> to vector<8x64xf32>
    %310 = arith.addf %290, %309 : vector<8x64xf32>
    %311 = vector.extract_strided_slice %304 {offsets = [344, 0], sizes = [8, 64], strides = [1, 1]} : vector<512x64xf32> to vector<8x64xf32>
    %312 = arith.addf %292, %311 : vector<8x64xf32>
    %313 = vector.extract_strided_slice %304 {offsets = [360, 0], sizes = [8, 64], strides = [1, 1]} : vector<512x64xf32> to vector<8x64xf32>
    %314 = arith.addf %294, %313 : vector<8x64xf32>
    %315 = vector.extract_strided_slice %304 {offsets = [376, 0], sizes = [8, 64], strides = [1, 1]} : vector<512x64xf32> to vector<8x64xf32>
    %316 = arith.addf %296, %315 : vector<8x64xf32>
    %317 = vector.extract_strided_slice %304 {offsets = [472, 0], sizes = [8, 64], strides = [1, 1]} : vector<512x64xf32> to vector<8x64xf32>
    %318 = arith.addf %298, %317 : vector<8x64xf32>
    %319 = vector.extract_strided_slice %304 {offsets = [488, 0], sizes = [8, 64], strides = [1, 1]} : vector<512x64xf32> to vector<8x64xf32>
    %320 = arith.addf %300, %319 : vector<8x64xf32>
    %321 = vector.extract_strided_slice %304 {offsets = [504, 0], sizes = [8, 64], strides = [1, 1]} : vector<512x64xf32> to vector<8x64xf32>
    %322 = arith.addf %302, %321 : vector<8x64xf32>
    %323 = vector.broadcast %11 : vector<1x64xf32> to vector<8x64xf32>
    %324 = arith.addf %306, %323 : vector<8x64xf32>
    %cst_27 = arith.constant 0.000000e+00 : f32
    %325 = vector.broadcast %cst_27 : f32 to vector<8x64xf32>
    %326 = arith.maximumf %324, %325 : vector<8x64xf32>
    %327 = arith.truncf %326 : vector<8x64xf32> to vector<8x64xbf16>
    %328 = vector.broadcast %11 : vector<1x64xf32> to vector<8x64xf32>
    %329 = arith.addf %308, %328 : vector<8x64xf32>
    %cst_28 = arith.constant 0.000000e+00 : f32
    %330 = vector.broadcast %cst_28 : f32 to vector<8x64xf32>
    %331 = arith.maximumf %329, %330 : vector<8x64xf32>
    %332 = arith.truncf %331 : vector<8x64xf32> to vector<8x64xbf16>
    %333 = vector.broadcast %11 : vector<1x64xf32> to vector<8x64xf32>
    %334 = arith.addf %310, %333 : vector<8x64xf32>
    %cst_29 = arith.constant 0.000000e+00 : f32
    %335 = vector.broadcast %cst_29 : f32 to vector<8x64xf32>
    %336 = arith.maximumf %334, %335 : vector<8x64xf32>
    %337 = arith.truncf %336 : vector<8x64xf32> to vector<8x64xbf16>
    %338 = vector.broadcast %11 : vector<1x64xf32> to vector<8x64xf32>
    %339 = arith.addf %312, %338 : vector<8x64xf32>
    %cst_30 = arith.constant 0.000000e+00 : f32
    %340 = vector.broadcast %cst_30 : f32 to vector<8x64xf32>
    %341 = arith.maximumf %339, %340 : vector<8x64xf32>
    %342 = arith.truncf %341 : vector<8x64xf32> to vector<8x64xbf16>
    %343 = vector.broadcast %11 : vector<1x64xf32> to vector<8x64xf32>
    %344 = arith.addf %314, %343 : vector<8x64xf32>
    %cst_31 = arith.constant 0.000000e+00 : f32
    %345 = vector.broadcast %cst_31 : f32 to vector<8x64xf32>
    %346 = arith.maximumf %344, %345 : vector<8x64xf32>
    %347 = arith.truncf %346 : vector<8x64xf32> to vector<8x64xbf16>
    %348 = vector.broadcast %11 : vector<1x64xf32> to vector<8x64xf32>
    %349 = arith.addf %316, %348 : vector<8x64xf32>
    %cst_32 = arith.constant 0.000000e+00 : f32
    %350 = vector.broadcast %cst_32 : f32 to vector<8x64xf32>
    %351 = arith.maximumf %349, %350 : vector<8x64xf32>
    %352 = arith.truncf %351 : vector<8x64xf32> to vector<8x64xbf16>
    %353 = vector.broadcast %11 : vector<1x64xf32> to vector<8x64xf32>
    %354 = arith.addf %318, %353 : vector<8x64xf32>
    %cst_33 = arith.constant 0.000000e+00 : f32
    %355 = vector.broadcast %cst_33 : f32 to vector<8x64xf32>
    %356 = arith.maximumf %354, %355 : vector<8x64xf32>
    %357 = arith.truncf %356 : vector<8x64xf32> to vector<8x64xbf16>
    %358 = vector.broadcast %11 : vector<1x64xf32> to vector<8x64xf32>
    %359 = arith.addf %320, %358 : vector<8x64xf32>
    %cst_34 = arith.constant 0.000000e+00 : f32
    %360 = vector.broadcast %cst_34 : f32 to vector<8x64xf32>
    %361 = arith.maximumf %359, %360 : vector<8x64xf32>
    %362 = arith.truncf %361 : vector<8x64xf32> to vector<8x64xbf16>
    %363 = vector.broadcast %11 : vector<1x64xf32> to vector<8x64xf32>
    %364 = arith.addf %322, %363 : vector<8x64xf32>
    %cst_35 = arith.constant 0.000000e+00 : f32
    %365 = vector.broadcast %cst_35 : f32 to vector<8x64xf32>
    %366 = arith.maximumf %364, %365 : vector<8x64xf32>
    %367 = arith.truncf %366 : vector<8x64xf32> to vector<8x64xbf16>
    %c0_36 = arith.constant 0 : index
    %c0_37 = arith.constant 0 : index
    %368 = vector.load %arg7[%c0_36, %c0_37] : memref<576x64xbf16, #tpu.memory_space<vmem>>, vector<576x64xbf16>
    %369 = vector.extract_strided_slice %368 {offsets = [0, 0], sizes = [64, 64], strides = [1, 1]} : vector<576x64xbf16> to vector<64x64xbf16>
    %cst_38 = arith.constant dense<0.000000e+00> : vector<8x64xf32>
    %370 = tpu.matmul %327, %369, %cst_38 {dimension_numbers = #tpu.dot_dimension_numbers<[1], [0], [0], [1], [0, 0, 1, 1], [], []>} : vector<8x64xbf16>, vector<64x64xbf16>, vector<8x64xf32> -> vector<8x64xf32>
    %371 = vector.extract_strided_slice %368 {offsets = [64, 0], sizes = [64, 64], strides = [1, 1]} : vector<576x64xbf16> to vector<64x64xbf16>
    %cst_39 = arith.constant dense<0.000000e+00> : vector<8x64xf32>
    %372 = tpu.matmul %332, %371, %cst_39 {dimension_numbers = #tpu.dot_dimension_numbers<[1], [0], [0], [1], [0, 0, 1, 1], [], []>} : vector<8x64xbf16>, vector<64x64xbf16>, vector<8x64xf32> -> vector<8x64xf32>
    %373 = arith.addf %370, %372 : vector<8x64xf32>
    %374 = vector.extract_strided_slice %368 {offsets = [128, 0], sizes = [64, 64], strides = [1, 1]} : vector<576x64xbf16> to vector<64x64xbf16>
    %cst_40 = arith.constant dense<0.000000e+00> : vector<8x64xf32>
    %375 = tpu.matmul %337, %374, %cst_40 {dimension_numbers = #tpu.dot_dimension_numbers<[1], [0], [0], [1], [0, 0, 1, 1], [], []>} : vector<8x64xbf16>, vector<64x64xbf16>, vector<8x64xf32> -> vector<8x64xf32>
    %376 = arith.addf %373, %375 : vector<8x64xf32>
    %377 = vector.extract_strided_slice %368 {offsets = [192, 0], sizes = [64, 64], strides = [1, 1]} : vector<576x64xbf16> to vector<64x64xbf16>
    %cst_41 = arith.constant dense<0.000000e+00> : vector<8x64xf32>
    %378 = tpu.matmul %342, %377, %cst_41 {dimension_numbers = #tpu.dot_dimension_numbers<[1], [0], [0], [1], [0, 0, 1, 1], [], []>} : vector<8x64xbf16>, vector<64x64xbf16>, vector<8x64xf32> -> vector<8x64xf32>
    %379 = arith.addf %376, %378 : vector<8x64xf32>
    %380 = vector.extract_strided_slice %368 {offsets = [256, 0], sizes = [64, 64], strides = [1, 1]} : vector<576x64xbf16> to vector<64x64xbf16>
    %cst_42 = arith.constant dense<0.000000e+00> : vector<8x64xf32>
    %381 = tpu.matmul %347, %380, %cst_42 {dimension_numbers = #tpu.dot_dimension_numbers<[1], [0], [0], [1], [0, 0, 1, 1], [], []>} : vector<8x64xbf16>, vector<64x64xbf16>, vector<8x64xf32> -> vector<8x64xf32>
    %382 = arith.addf %379, %381 : vector<8x64xf32>
    %383 = vector.extract_strided_slice %368 {offsets = [320, 0], sizes = [64, 64], strides = [1, 1]} : vector<576x64xbf16> to vector<64x64xbf16>
    %cst_43 = arith.constant dense<0.000000e+00> : vector<8x64xf32>
    %384 = tpu.matmul %352, %383, %cst_43 {dimension_numbers = #tpu.dot_dimension_numbers<[1], [0], [0], [1], [0, 0, 1, 1], [], []>} : vector<8x64xbf16>, vector<64x64xbf16>, vector<8x64xf32> -> vector<8x64xf32>
    %385 = arith.addf %382, %384 : vector<8x64xf32>
    %386 = vector.extract_strided_slice %368 {offsets = [384, 0], sizes = [64, 64], strides = [1, 1]} : vector<576x64xbf16> to vector<64x64xbf16>
    %cst_44 = arith.constant dense<0.000000e+00> : vector<8x64xf32>
    %387 = tpu.matmul %357, %386, %cst_44 {dimension_numbers = #tpu.dot_dimension_numbers<[1], [0], [0], [1], [0, 0, 1, 1], [], []>} : vector<8x64xbf16>, vector<64x64xbf16>, vector<8x64xf32> -> vector<8x64xf32>
    %388 = arith.addf %385, %387 : vector<8x64xf32>
    %389 = vector.extract_strided_slice %368 {offsets = [448, 0], sizes = [64, 64], strides = [1, 1]} : vector<576x64xbf16> to vector<64x64xbf16>
    %cst_45 = arith.constant dense<0.000000e+00> : vector<8x64xf32>
    %390 = tpu.matmul %362, %389, %cst_45 {dimension_numbers = #tpu.dot_dimension_numbers<[1], [0], [0], [1], [0, 0, 1, 1], [], []>} : vector<8x64xbf16>, vector<64x64xbf16>, vector<8x64xf32> -> vector<8x64xf32>
    %391 = arith.addf %388, %390 : vector<8x64xf32>
    %392 = vector.extract_strided_slice %368 {offsets = [512, 0], sizes = [64, 64], strides = [1, 1]} : vector<576x64xbf16> to vector<64x64xbf16>
    %cst_46 = arith.constant dense<0.000000e+00> : vector<8x64xf32>
    %393 = tpu.matmul %367, %392, %cst_46 {dimension_numbers = #tpu.dot_dimension_numbers<[1], [0], [0], [1], [0, 0, 1, 1], [], []>} : vector<8x64xbf16>, vector<64x64xbf16>, vector<8x64xf32> -> vector<8x64xf32>
    %394 = arith.addf %391, %393 : vector<8x64xf32>
    %c0_47 = arith.constant 0 : index
    %c0_48 = arith.constant 0 : index
    %395 = vector.load %arg8[%c0_47, %c0_48] : memref<1x64xf32, #tpu.memory_space<vmem>>, vector<1x64xf32>
    %396 = vector.broadcast %395 : vector<1x64xf32> to vector<8x64xf32>
    %397 = arith.addf %394, %396 : vector<8x64xf32>
    %cst_49 = arith.constant 0.000000e+00 : f32
    %398 = vector.broadcast %cst_49 : f32 to vector<8x64xf32>
    %399 = arith.maximumf %397, %398 : vector<8x64xf32>
    %400 = arith.truncf %399 : vector<8x64xf32> to vector<8x64xbf16>
    %c0_50 = arith.constant 0 : index
    %c0_51 = arith.constant 0 : index
    %401 = vector.load %arg9[%c0_50, %c0_51] : memref<64x128xbf16, #tpu.memory_space<vmem>>, vector<64x128xbf16>
    %cst_52 = arith.constant dense<0.000000e+00> : vector<8x128xf32>
    %402 = tpu.matmul %400, %401, %cst_52 {dimension_numbers = #tpu.dot_dimension_numbers<[1], [0], [0], [1], [0, 0, 1, 1], [], []>} : vector<8x64xbf16>, vector<64x128xbf16>, vector<8x128xf32> -> vector<8x128xf32>
    %c0_53 = arith.constant 0 : index
    %c0_54 = arith.constant 0 : index
    %403 = vector.load %arg10[%c0_53, %c0_54] : memref<1x128xf32, #tpu.memory_space<vmem>>, vector<1x128xf32>
    %404 = vector.broadcast %403 : vector<1x128xf32> to vector<8x128xf32>
    %405 = arith.addf %402, %404 : vector<8x128xf32>
    %cst_55 = arith.constant 0.000000e+00 : f32
    %406 = vector.broadcast %cst_55 : f32 to vector<8x128xf32>
    %407 = arith.maximumf %405, %406 : vector<8x128xf32>
    %408 = arith.truncf %407 : vector<8x128xf32> to vector<8x128xbf16>
    %c0_56 = arith.constant 0 : index
    %c0_57 = arith.constant 0 : index
    %409 = vector.load %arg2[%c0_56, %c0_57] : memref<8x8xf32, #tpu.memory_space<vmem>>, vector<8x8xf32>
    %410 = arith.truncf %409 : vector<8x8xf32> to vector<8x8xbf16>
    %c0_58 = arith.constant 0 : index
    %c0_59 = arith.constant 0 : index
    %411 = vector.load %arg11[%c0_58, %c0_59] : memref<8x128xbf16, #tpu.memory_space<vmem>>, vector<8x128xbf16>
    %cst_60 = arith.constant dense<0.000000e+00> : vector<8x128xf32>
    %412 = tpu.matmul %410, %411, %cst_60 {dimension_numbers = #tpu.dot_dimension_numbers<[1], [0], [0], [1], [0, 0, 1, 1], [], []>} : vector<8x8xbf16>, vector<8x128xbf16>, vector<8x128xf32> -> vector<8x128xf32>
    %c0_61 = arith.constant 0 : index
    %c0_62 = arith.constant 0 : index
    %413 = vector.load %arg12[%c0_61, %c0_62] : memref<1x128xf32, #tpu.memory_space<vmem>>, vector<1x128xf32>
    %414 = vector.broadcast %413 : vector<1x128xf32> to vector<8x128xf32>
    %415 = arith.addf %412, %414 : vector<8x128xf32>
    %cst_63 = arith.constant 0.000000e+00 : f32
    %416 = vector.broadcast %cst_63 : f32 to vector<8x128xf32>
    %417 = arith.maximumf %415, %416 : vector<8x128xf32>
    %418 = arith.truncf %417 : vector<8x128xf32> to vector<8x128xbf16>
    %c0_64 = arith.constant 0 : index
    %c0_65 = arith.constant 0 : index
    %419 = vector.load %arg13[%c0_64, %c0_65] : memref<128x128xbf16, #tpu.memory_space<vmem>>, vector<128x128xbf16>
    %cst_66 = arith.constant dense<0.000000e+00> : vector<8x128xf32>
    %420 = tpu.matmul %408, %419, %cst_66 {dimension_numbers = #tpu.dot_dimension_numbers<[1], [0], [0], [1], [0, 0, 1, 1], [], []>} : vector<8x128xbf16>, vector<128x128xbf16>, vector<8x128xf32> -> vector<8x128xf32>
    %c0_67 = arith.constant 0 : index
    %c0_68 = arith.constant 0 : index
    %421 = vector.load %arg14[%c0_67, %c0_68] : memref<128x128xbf16, #tpu.memory_space<vmem>>, vector<128x128xbf16>
    %cst_69 = arith.constant dense<0.000000e+00> : vector<8x128xf32>
    %422 = tpu.matmul %418, %421, %cst_69 {dimension_numbers = #tpu.dot_dimension_numbers<[1], [0], [0], [1], [0, 0, 1, 1], [], []>} : vector<8x128xbf16>, vector<128x128xbf16>, vector<8x128xf32> -> vector<8x128xf32>
    %423 = arith.addf %420, %422 : vector<8x128xf32>
    %c0_70 = arith.constant 0 : index
    %c0_71 = arith.constant 0 : index
    %424 = vector.load %arg15[%c0_70, %c0_71] : memref<1x128xf32, #tpu.memory_space<vmem>>, vector<1x128xf32>
    %425 = vector.broadcast %424 : vector<1x128xf32> to vector<8x128xf32>
    %426 = arith.addf %423, %425 : vector<8x128xf32>
    %cst_72 = arith.constant 0.000000e+00 : f32
    %427 = vector.broadcast %cst_72 : f32 to vector<8x128xf32>
    %428 = arith.maximumf %426, %427 : vector<8x128xf32>
    %429 = arith.truncf %428 : vector<8x128xf32> to vector<8x128xbf16>
    %c0_73 = arith.constant 0 : index
    %c0_74 = arith.constant 0 : index
    %430 = vector.load %arg16[%c0_73, %c0_74] : memref<128x128xbf16, #tpu.memory_space<vmem>>, vector<128x128xbf16>
    %cst_75 = arith.constant dense<0.000000e+00> : vector<8x128xf32>
    %431 = tpu.matmul %429, %430, %cst_75 {dimension_numbers = #tpu.dot_dimension_numbers<[1], [0], [0], [1], [0, 0, 1, 1], [], []>} : vector<8x128xbf16>, vector<128x128xbf16>, vector<8x128xf32> -> vector<8x128xf32>
    %c0_76 = arith.constant 0 : index
    %c0_77 = arith.constant 0 : index
    %432 = vector.load %arg17[%c0_76, %c0_77] : memref<1x128xf32, #tpu.memory_space<vmem>>, vector<1x128xf32>
    %433 = vector.broadcast %432 : vector<1x128xf32> to vector<8x128xf32>
    %434 = arith.addf %431, %433 : vector<8x128xf32>
    %cst_78 = arith.constant 0.000000e+00 : f32
    %435 = vector.broadcast %cst_78 : f32 to vector<8x128xf32>
    %436 = arith.maximumf %434, %435 : vector<8x128xf32>
    %437 = arith.truncf %436 : vector<8x128xf32> to vector<8x128xbf16>
    %c0_79 = arith.constant 0 : index
    %c0_80 = arith.constant 0 : index
    %438 = vector.load %arg18[%c0_79, %c0_80] : memref<128x4xbf16, #tpu.memory_space<vmem>>, vector<128x4xbf16>
    %cst_81 = arith.constant dense<0.000000e+00> : vector<8x4xf32>
    %439 = tpu.matmul %437, %438, %cst_81 {dimension_numbers = #tpu.dot_dimension_numbers<[1], [0], [0], [1], [0, 0, 1, 1], [], []>} : vector<8x128xbf16>, vector<128x4xbf16>, vector<8x4xf32> -> vector<8x4xf32>
    %c0_82 = arith.constant 0 : index
    %c0_83 = arith.constant 0 : index
    %440 = vector.load %arg19[%c0_82, %c0_83] : memref<1x4xf32, #tpu.memory_space<vmem>>, vector<1x4xf32>
    %441 = vector.broadcast %440 : vector<1x4xf32> to vector<8x4xf32>
    %442 = arith.addf %439, %441 : vector<8x4xf32>
    %443 = math.tanh %442 : vector<8x4xf32>
    %c0_84 = arith.constant 0 : index
    %c0_85 = arith.constant 0 : index
    %444 = vector.load %arg20[%c0_84, %c0_85] : memref<8x4xf32, #tpu.memory_space<vmem>>, vector<8x4xf32>
    tpu.vector_store %arg20[%c0_84, %c0_85], %443 {strides = array<i32>} : memref<8x4xf32, #tpu.memory_space<vmem>>, vector<8x4xf32>,
    return
  }
  func.func @transform_0(%arg0: i32) -> (i32, i32, i32) {
    %c0_i32 = arith.constant 0 : i32
    %c0_i32_0 = arith.constant 0 : i32
    %c0_i32_1 = arith.constant 0 : i32
    return %arg0, %c0_i32, %c0_i32_0 : i32, i32, i32
  }
  func.func @transform_1(%arg0: i32) -> (i32, i32) {
    %c0_i32 = arith.constant 0 : i32
    %c0_i32_0 = arith.constant 0 : i32
    return %arg0, %c0_i32 : i32, i32
  }
  func.func @transform_2(%arg0: i32) -> (i32, i32) {
    %c0_i32 = arith.constant 0 : i32
    %c0_i32_0 = arith.constant 0 : i32
    %c0_i32_1 = arith.constant 0 : i32
    return %c0_i32, %c0_i32_0 : i32, i32
  }
  func.func @transform_3(%arg0: i32) -> (i32, i32) {
    %c0_i32 = arith.constant 0 : i32
    %c0_i32_0 = arith.constant 0 : i32
    %c0_i32_1 = arith.constant 0 : i32
    return %c0_i32, %c0_i32_0 : i32, i32
  }
  func.func @transform_4(%arg0: i32) -> (i32, i32) {
    %c0_i32 = arith.constant 0 : i32
    %c0_i32_0 = arith.constant 0 : i32
    %c0_i32_1 = arith.constant 0 : i32
    return %c0_i32, %c0_i32_0 : i32, i32
  }
  func.func @transform_5(%arg0: i32) -> (i32, i32) {
    %c0_i32 = arith.constant 0 : i32
    %c0_i32_0 = arith.constant 0 : i32
    %c0_i32_1 = arith.constant 0 : i32
    return %c0_i32, %c0_i32_0 : i32, i32
  }
  func.func @transform_6(%arg0: i32) -> (i32, i32) {
    %c0_i32 = arith.constant 0 : i32
    %c0_i32_0 = arith.constant 0 : i32
    %c0_i32_1 = arith.constant 0 : i32
    return %c0_i32, %c0_i32_0 : i32, i32
  }
  func.func @transform_7(%arg0: i32) -> (i32, i32) {
    %c0_i32 = arith.constant 0 : i32
    %c0_i32_0 = arith.constant 0 : i32
    %c0_i32_1 = arith.constant 0 : i32
    return %c0_i32, %c0_i32_0 : i32, i32
  }
  func.func @transform_8(%arg0: i32) -> (i32, i32) {
    %c0_i32 = arith.constant 0 : i32
    %c0_i32_0 = arith.constant 0 : i32
    %c0_i32_1 = arith.constant 0 : i32
    return %c0_i32, %c0_i32_0 : i32, i32
  }
  func.func @transform_9(%arg0: i32) -> (i32, i32) {
    %c0_i32 = arith.constant 0 : i32
    %c0_i32_0 = arith.constant 0 : i32
    %c0_i32_1 = arith.constant 0 : i32
    return %c0_i32, %c0_i32_0 : i32, i32
  }
  func.func @transform_10(%arg0: i32) -> (i32, i32) {
    %c0_i32 = arith.constant 0 : i32
    %c0_i32_0 = arith.constant 0 : i32
    %c0_i32_1 = arith.constant 0 : i32
    return %c0_i32, %c0_i32_0 : i32, i32
  }
  func.func @transform_11(%arg0: i32) -> (i32, i32) {
    %c0_i32 = arith.constant 0 : i32
    %c0_i32_0 = arith.constant 0 : i32
    %c0_i32_1 = arith.constant 0 : i32
    return %c0_i32, %c0_i32_0 : i32, i32
  }
  func.func @transform_12(%arg0: i32) -> (i32, i32) {
    %c0_i32 = arith.constant 0 : i32
    %c0_i32_0 = arith.constant 0 : i32
    %c0_i32_1 = arith.constant 0 : i32
    return %c0_i32, %c0_i32_0 : i32, i32
  }
  func.func @transform_13(%arg0: i32) -> (i32, i32) {
    %c0_i32 = arith.constant 0 : i32
    %c0_i32_0 = arith.constant 0 : i32
    %c0_i32_1 = arith.constant 0 : i32
    return %c0_i32, %c0_i32_0 : i32, i32
  }
  func.func @transform_14(%arg0: i32) -> (i32, i32) {
    %c0_i32 = arith.constant 0 : i32
    %c0_i32_0 = arith.constant 0 : i32
    %c0_i32_1 = arith.constant 0 : i32
    return %c0_i32, %c0_i32_0 : i32, i32
  }
  func.func @transform_15(%arg0: i32) -> (i32, i32) {
    %c0_i32 = arith.constant 0 : i32
    %c0_i32_0 = arith.constant 0 : i32
    %c0_i32_1 = arith.constant 0 : i32
    return %c0_i32, %c0_i32_0 : i32, i32
  }
  func.func @transform_16(%arg0: i32) -> (i32, i32) {
    %c0_i32 = arith.constant 0 : i32
    %c0_i32_0 = arith.constant 0 : i32
    %c0_i32_1 = arith.constant 0 : i32
    return %c0_i32, %c0_i32_0 : i32, i32
  }
  func.func @transform_17(%arg0: i32) -> (i32, i32) {
    %c0_i32 = arith.constant 0 : i32
    %c0_i32_0 = arith.constant 0 : i32
    %c0_i32_1 = arith.constant 0 : i32
    return %c0_i32, %c0_i32_0 : i32, i32
  }
  func.func @transform_18(%arg0: i32) -> (i32, i32) {
    %c0_i32 = arith.constant 0 : i32
    %c0_i32_0 = arith.constant 0 : i32
    %c0_i32_1 = arith.constant 0 : i32
    return %c0_i32, %c0_i32_0 : i32, i32
  }
  func.func @transform_19(%arg0: i32) -> (i32, i32) {
    %c0_i32 = arith.constant 0 : i32
    %c0_i32_0 = arith.constant 0 : i32
    return %arg0, %c0_i32 : i32, i32
  }
}

</mosaic_0001>

<llo_original>
// kernel: actor_forward.1
$region0: #{actor_forward.1}
  #allocation0 [shape = 'u32[]', space=smem, size = 0x4, offset = 0x4, fixed_abs, tag = 'smem constant byte address 0x4 - core index']
  #allocation1 [shape = 'u32[144,128]{1,0:T(1,128)}', space=vmem, size = 0x12000, scoped, tag = 'internal scratch']
  %s0 = inlined_call_operand.vmem [shape: bf16[2,512,64], index: 0, kind: input, shape index: {}]
  %s1 = inlined_call_operand.vmem [shape: f32[16,8], index: 1, kind: input, shape index: {}]
  %s2 = inlined_call_operand.vmem [shape: bf16[64,32], index: 2, kind: input, shape index: {}]
  %s3 = inlined_call_operand.vmem [shape: f32[1,32], index: 3, kind: input, shape index: {}]
  %s4 = inlined_call_operand.vmem [shape: bf16[512,64], index: 4, kind: input, shape index: {}]
  %s5 = inlined_call_operand.vmem [shape: f32[1,64], index: 5, kind: input, shape index: {}]
  %s6 = inlined_call_operand.vmem [shape: bf16[576,64], index: 6, kind: input, shape index: {}]
  %s7 = inlined_call_operand.vmem [shape: f32[1,64], index: 7, kind: input, shape index: {}]
  %s8 = inlined_call_operand.vmem [shape: bf16[64,128], index: 8, kind: input, shape index: {}]
  %s9 = inlined_call_operand.vmem [shape: f32[1,128], index: 9, kind: input, shape index: {}]
  %s10 = inlined_call_operand.vmem [shape: bf16[8,128], index: 10, kind: input, shape index: {}]
  %s11 = inlined_call_operand.vmem [shape: f32[1,128], index: 11, kind: input, shape index: {}]
  %s12 = inlined_call_operand.vmem [shape: bf16[128,128], index: 12, kind: input, shape index: {}]
  %s13 = inlined_call_operand.vmem [shape: bf16[128,128], index: 13, kind: input, shape index: {}]
  %s14 = inlined_call_operand.vmem [shape: f32[1,128], index: 14, kind: input, shape index: {}]
  %s15 = inlined_call_operand.vmem [shape: bf16[128,128], index: 15, kind: input, shape index: {}]
  %s16 = inlined_call_operand.vmem [shape: f32[1,128], index: 16, kind: input, shape index: {}]
  %s17 = inlined_call_operand.vmem [shape: bf16[128,4], index: 17, kind: input, shape index: {}]
  %s18 = inlined_call_operand.vmem [shape: f32[1,4], index: 18, kind: input, shape index: {}]
  %s19 = inlined_call_operand.vmem [shape: f32[16,4], index: 19, kind: output, shape index: {}]
  %s20 = sld [smem:[#allocation0]]
  $region109: #{actor_forward.1} parent=0
    _
  %s22 = ssub.s32 1, %s20
  %s23 = scalar_select 0, %s22, %s20
  loop: start=0, step=1, limit=4
  $region2: #{actor_forward.1} parent=0 // loop_pre_header
    _
  $region3: #{actor_forward.1} parent=0 // loop_header
    %s25 = sphi 0, %s29
    %p26 = scmp.ge.s32.totalorder %s25, 4
    %s35 = sphi 0, %s37
    %s38 = sphi 0, %s35
    %s39 = sphi 0, %s38
    %s55 = sphi 0, %s39
    %s61 = sphi 0, %s63
    %s64 = sphi 0, %s61
    %s65 = sphi 0, %s64
    %s81 = sphi 0, %s65
    %s85 = sphi 0, %s85
    %s87 = sphi 0, %s85
    %s88 = sphi 0, %s87
    %s102 = sphi 0, %s88
    %s106 = sphi 0, %s106
    %s108 = sphi 0, %s106
    %s109 = sphi 0, %s108
    %s123 = sphi 0, %s109
    %s127 = sphi 0, %s127
    %s129 = sphi 0, %s127
    %s130 = sphi 0, %s129
    %s144 = sphi 0, %s130
    %s148 = sphi 0, %s148
    %s150 = sphi 0, %s148
    %s151 = sphi 0, %s150
    %s165 = sphi 0, %s151
    %s169 = sphi 0, %s169
    %s171 = sphi 0, %s169
    %s172 = sphi 0, %s171
    %s186 = sphi 0, %s172
    %s190 = sphi 0, %s190
    %s192 = sphi 0, %s190
    %s193 = sphi 0, %s192
    %s207 = sphi 0, %s193
    %s211 = sphi 0, %s211
    %s213 = sphi 0, %s211
    %s214 = sphi 0, %s213
    %s228 = sphi 0, %s214
    %s232 = sphi 0, %s232
    %s234 = sphi 0, %s232
    %s235 = sphi 0, %s234
    %s249 = sphi 0, %s235
    %s253 = sphi 0, %s253
    %s255 = sphi 0, %s253
    %s256 = sphi 0, %s255
    %s270 = sphi 0, %s256
    %s274 = sphi 0, %s274
    %s276 = sphi 0, %s274
    %s277 = sphi 0, %s276
    %s291 = sphi 0, %s277
    %s295 = sphi 0, %s295
    %s297 = sphi 0, %s295
    %s298 = sphi 0, %s297
    %s312 = sphi 0, %s298
    %s316 = sphi 0, %s316
    %s318 = sphi 0, %s316
    %s319 = sphi 0, %s318
    %s333 = sphi 0, %s319
    %s337 = sphi 0, %s337
    %s339 = sphi 0, %s337
    %s340 = sphi 0, %s339
    %s354 = sphi 0, %s340
    %s358 = sphi 0, %s358
    %s360 = sphi 0, %s358
    %s361 = sphi 0, %s360
    %s375 = sphi 0, %s361
    %s379 = sphi 0, %s379
    %s381 = sphi 0, %s379
    %s382 = sphi 0, %s381
    %s396 = sphi 0, %s382
    %s400 = sphi 0, %s400
    %s402 = sphi 0, %s400
    %s403 = sphi 0, %s402
    %s417 = sphi 0, %s403
    %s421 = sphi 0, %s421
    %s423 = sphi 0, %s421
    %s424 = sphi 0, %s423
    %s438 = sphi 0, %s424
    %s444 = sphi 0, %s446
    %s447 = sphi 0, %s444
    %s448 = sphi 0, %s447
    %s464 = sphi 0, %s448
  $region4: #{actor_forward.1} parent=0 // loop_header_branch
    %28 = sbr.rel (%p26) target = $region8
  $region5: #{actor_forward.1} parent=0 // loop_body
    %s30 = ssub.s32 %s25, 1
    %s31 = ssub.s32 %s25, 2
    %s32 = sadd.s32 %s25, 1
    %s33 = ssub.s32 %s25, %s32
    %p34 = scmp.eq.s32.totalorder %s33, 0
    %s36 = sadd.s32 %s35, 1
    %s37 = scalar_select %p34, %s35, %s36
    %p40 = pneg %p34
    %p41 = scmp.eq.s32.totalorder %s25, 1
    %p42 = por %p40, %p41
    %p43 = scmp.ne.s32.totalorder %s35, %s38
    %p44 = scmp.eq.s32.totalorder %s25, 0
    %p45 = por %p43, %p44
    %p46 = scmp.ne.s32.totalorder %s35, %s38
    %p47 = scmp.eq.s32.totalorder %s30, 1
    %p48 = por %p46, %p47
    %p49 = scmp.ne.s32.totalorder %s38, %s39
    %p50 = scmp.eq.s32.totalorder %s30, 0
    %p51 = por %p49, %p50
    %p52 = scmp.ne.s32.totalorder %s38, %s39
    %p53 = scmp.eq.s32.totalorder %s31, 1
    %p54 = por %p52, %p53
    %p56 = scmp.ne.s32.totalorder %s39, %s55
    %p57 = scmp.eq.s32.totalorder %s31, 0
    %p58 = por %p56, %p57
    %s59 = ssub.s32 %s25, %s32
    %p60 = scmp.eq.s32.totalorder %s59, 0
    %s62 = sadd.s32 %s61, 1
    %s63 = scalar_select %p60, %s61, %s62
    %p66 = pneg %p60
    %p67 = scmp.eq.s32.totalorder %s25, 1
    %p68 = por %p66, %p67
    %p69 = scmp.ne.s32.totalorder %s61, %s64
    %p70 = scmp.eq.s32.totalorder %s25, 0
    %p71 = por %p69, %p70
    %p72 = scmp.ne.s32.totalorder %s61, %s64
    %p73 = scmp.eq.s32.totalorder %s30, 1
    %p74 = por %p72, %p73
    %p75 = scmp.ne.s32.totalorder %s64, %s65
    %p76 = scmp.eq.s32.totalorder %s30, 0
    %p77 = por %p75, %p76
    %p78 = scmp.ne.s32.totalorder %s64, %s65
    %p79 = scmp.eq.s32.totalorder %s31, 1
    %p80 = por %p78, %p79
    %p82 = scmp.ne.s32.totalorder %s65, %s81
    %p83 = scmp.eq.s32.totalorder %s31, 0
    %p84 = por %p82, %p83
    %s86 = sadd.s32 %s85, 1
    %p89 = scmp.eq.s32.totalorder %s25, 1
    %p90 = scmp.ne.s32.totalorder %s85, %s87
    %p91 = scmp.eq.s32.totalorder %s25, 0
    %p92 = por %p90, %p91
    %p93 = scmp.ne.s32.totalorder %s85, %s87
    %p94 = scmp.eq.s32.totalorder %s30, 1
    %p95 = por %p93, %p94
    %p96 = scmp.ne.s32.totalorder %s87, %s88
    %p97 = scmp.eq.s32.totalorder %s30, 0
    %p98 = por %p96, %p97
    %p99 = scmp.ne.s32.totalorder %s87, %s88
    %p100 = scmp.eq.s32.totalorder %s31, 1
    %p101 = por %p99, %p100
    %p103 = scmp.ne.s32.totalorder %s88, %s102
    %p104 = scmp.eq.s32.totalorder %s31, 0
    %p105 = por %p103, %p104
    %s107 = sadd.s32 %s106, 1
    %p110 = scmp.eq.s32.totalorder %s25, 1
    %p111 = scmp.ne.s32.totalorder %s106, %s108
    %p112 = scmp.eq.s32.totalorder %s25, 0
    %p113 = por %p111, %p112
    %p114 = scmp.ne.s32.totalorder %s106, %s108
    %p115 = scmp.eq.s32.totalorder %s30, 1
    %p116 = por %p114, %p115
    %p117 = scmp.ne.s32.totalorder %s108, %s109
    %p118 = scmp.eq.s32.totalorder %s30, 0
    %p119 = por %p117, %p118
    %p120 = scmp.ne.s32.totalorder %s108, %s109
    %p121 = scmp.eq.s32.totalorder %s31, 1
    %p122 = por %p120, %p121
    %p124 = scmp.ne.s32.totalorder %s109, %s123
    %p125 = scmp.eq.s32.totalorder %s31, 0
    %p126 = por %p124, %p125
    %s128 = sadd.s32 %s127, 1
    %p131 = scmp.eq.s32.totalorder %s25, 1
    %p132 = scmp.ne.s32.totalorder %s127, %s129
    %p133 = scmp.eq.s32.totalorder %s25, 0
    %p134 = por %p132, %p133
    %p135 = scmp.ne.s32.totalorder %s127, %s129
    %p136 = scmp.eq.s32.totalorder %s30, 1
    %p137 = por %p135, %p136
    %p138 = scmp.ne.s32.totalorder %s129, %s130
    %p139 = scmp.eq.s32.totalorder %s30, 0
    %p140 = por %p138, %p139
    %p141 = scmp.ne.s32.totalorder %s129, %s130
    %p142 = scmp.eq.s32.totalorder %s31, 1
    %p143 = por %p141, %p142
    %p145 = scmp.ne.s32.totalorder %s130, %s144
    %p146 = scmp.eq.s32.totalorder %s31, 0
    %p147 = por %p145, %p146
    %s149 = sadd.s32 %s148, 1
    %p152 = scmp.eq.s32.totalorder %s25, 1
    %p153 = scmp.ne.s32.totalorder %s148, %s150
    %p154 = scmp.eq.s32.totalorder %s25, 0
    %p155 = por %p153, %p154
    %p156 = scmp.ne.s32.totalorder %s148, %s150
    %p157 = scmp.eq.s32.totalorder %s30, 1
    %p158 = por %p156, %p157
    %p159 = scmp.ne.s32.totalorder %s150, %s151
    %p160 = scmp.eq.s32.totalorder %s30, 0
    %p161 = por %p159, %p160
    %p162 = scmp.ne.s32.totalorder %s150, %s151
    %p163 = scmp.eq.s32.totalorder %s31, 1
    %p164 = por %p162, %p163
    %p166 = scmp.ne.s32.totalorder %s151, %s165
    %p167 = scmp.eq.s32.totalorder %s31, 0
    %p168 = por %p166, %p167
    %s170 = sadd.s32 %s169, 1
    %p173 = scmp.eq.s32.totalorder %s25, 1
    %p174 = scmp.ne.s32.totalorder %s169, %s171
    %p175 = scmp.eq.s32.totalorder %s25, 0
    %p176 = por %p174, %p175
    %p177 = scmp.ne.s32.totalorder %s169, %s171
    %p178 = scmp.eq.s32.totalorder %s30, 1
    %p179 = por %p177, %p178
    %p180 = scmp.ne.s32.totalorder %s171, %s172
    %p181 = scmp.eq.s32.totalorder %s30, 0
    %p182 = por %p180, %p181
    %p183 = scmp.ne.s32.totalorder %s171, %s172
    %p184 = scmp.eq.s32.totalorder %s31, 1
    %p185 = por %p183, %p184
    %p187 = scmp.ne.s32.totalorder %s172, %s186
    %p188 = scmp.eq.s32.totalorder %s31, 0
    %p189 = por %p187, %p188
    %s191 = sadd.s32 %s190, 1
    %p194 = scmp.eq.s32.totalorder %s25, 1
    %p195 = scmp.ne.s32.totalorder %s190, %s192
    %p196 = scmp.eq.s32.totalorder %s25, 0
    %p197 = por %p195, %p196
    %p198 = scmp.ne.s32.totalorder %s190, %s192
    %p199 = scmp.eq.s32.totalorder %s30, 1
    %p200 = por %p198, %p199
    %p201 = scmp.ne.s32.totalorder %s192, %s193
    %p202 = scmp.eq.s32.totalorder %s30, 0
    %p203 = por %p201, %p202
    %p204 = scmp.ne.s32.totalorder %s192, %s193
    %p205 = scmp.eq.s32.totalorder %s31, 1
    %p206 = por %p204, %p205
    %p208 = scmp.ne.s32.totalorder %s193, %s207
    %p209 = scmp.eq.s32.totalorder %s31, 0
    %p210 = por %p208, %p209
    %s212 = sadd.s32 %s211, 1
    %p215 = scmp.eq.s32.totalorder %s25, 1
    %p216 = scmp.ne.s32.totalorder %s211, %s213
    %p217 = scmp.eq.s32.totalorder %s25, 0
    %p218 = por %p216, %p217
    %p219 = scmp.ne.s32.totalorder %s211, %s213
    %p220 = scmp.eq.s32.totalorder %s30, 1
    %p221 = por %p219, %p220
    %p222 = scmp.ne.s32.totalorder %s213, %s214
    %p223 = scmp.eq.s32.totalorder %s30, 0
    %p224 = por %p222, %p223
    %p225 = scmp.ne.s32.totalorder %s213, %s214
    %p226 = scmp.eq.s32.totalorder %s31, 1
    %p227 = por %p225, %p226
    %p229 = scmp.ne.s32.totalorder %s214, %s228
    %p230 = scmp.eq.s32.totalorder %s31, 0
    %p231 = por %p229, %p230
    %s233 = sadd.s32 %s232, 1
    %p236 = scmp.eq.s32.totalorder %s25, 1
    %p237 = scmp.ne.s32.totalorder %s232, %s234
    %p238 = scmp.eq.s32.totalorder %s25, 0
    %p239 = por %p237, %p238
    %p240 = scmp.ne.s32.totalorder %s232, %s234
    %p241 = scmp.eq.s32.totalorder %s30, 1
    %p242 = por %p240, %p241
    %p243 = scmp.ne.s32.totalorder %s234, %s235
    %p244 = scmp.eq.s32.totalorder %s30, 0
    %p245 = por %p243, %p244
    %p246 = scmp.ne.s32.totalorder %s234, %s235
    %p247 = scmp.eq.s32.totalorder %s31, 1
    %p248 = por %p246, %p247
    %p250 = scmp.ne.s32.totalorder %s235, %s249
    %p251 = scmp.eq.s32.totalorder %s31, 0
    %p252 = por %p250, %p251
    %s254 = sadd.s32 %s253, 1
    %p257 = scmp.eq.s32.totalorder %s25, 1
    %p258 = scmp.ne.s32.totalorder %s253, %s255
    %p259 = scmp.eq.s32.totalorder %s25, 0
    %p260 = por %p258, %p259
    %p261 = scmp.ne.s32.totalorder %s253, %s255
    %p262 = scmp.eq.s32.totalorder %s30, 1
    %p263 = por %p261, %p262
    %p264 = scmp.ne.s32.totalorder %s255, %s256
    %p265 = scmp.eq.s32.totalorder %s30, 0
    %p266 = por %p264, %p265
    %p267 = scmp.ne.s32.totalorder %s255, %s256
    %p268 = scmp.eq.s32.totalorder %s31, 1
    %p269 = por %p267, %p268
    %p271 = scmp.ne.s32.totalorder %s256, %s270
    %p272 = scmp.eq.s32.totalorder %s31, 0
    %p273 = por %p271, %p272
    %s275 = sadd.s32 %s274, 1
    %p278 = scmp.eq.s32.totalorder %s25, 1
    %p279 = scmp.ne.s32.totalorder %s274, %s276
    %p280 = scmp.eq.s32.totalorder %s25, 0
    %p281 = por %p279, %p280
    %p282 = scmp.ne.s32.totalorder %s274, %s276
    %p283 = scmp.eq.s32.totalorder %s30, 1
    %p284 = por %p282, %p283
    %p285 = scmp.ne.s32.totalorder %s276, %s277
    %p286 = scmp.eq.s32.totalorder %s30, 0
    %p287 = por %p285, %p286
    %p288 = scmp.ne.s32.totalorder %s276, %s277
    %p289 = scmp.eq.s32.totalorder %s31, 1
    %p290 = por %p288, %p289
    %p292 = scmp.ne.s32.totalorder %s277, %s291
    %p293 = scmp.eq.s32.totalorder %s31, 0
    %p294 = por %p292, %p293
    %s296 = sadd.s32 %s295, 1
    %p299 = scmp.eq.s32.totalorder %s25, 1
    %p300 = scmp.ne.s32.totalorder %s295, %s297
    %p301 = scmp.eq.s32.totalorder %s25, 0
    %p302 = por %p300, %p301
    %p303 = scmp.ne.s32.totalorder %s295, %s297
    %p304 = scmp.eq.s32.totalorder %s30, 1
    %p305 = por %p303, %p304
    %p306 = scmp.ne.s32.totalorder %s297, %s298
    %p307 = scmp.eq.s32.totalorder %s30, 0
    %p308 = por %p306, %p307
    %p309 = scmp.ne.s32.totalorder %s297, %s298
    %p310 = scmp.eq.s32.totalorder %s31, 1
    %p311 = por %p309, %p310
    %p313 = scmp.ne.s32.totalorder %s298, %s312
    %p314 = scmp.eq.s32.totalorder %s31, 0
    %p315 = por %p313, %p314
    %s317 = sadd.s32 %s316, 1
    %p320 = scmp.eq.s32.totalorder %s25, 1
    %p321 = scmp.ne.s32.totalorder %s316, %s318
    %p322 = scmp.eq.s32.totalorder %s25, 0
    %p323 = por %p321, %p322
    %p324 = scmp.ne.s32.totalorder %s316, %s318
    %p325 = scmp.eq.s32.totalorder %s30, 1
    %p326 = por %p324, %p325
    %p327 = scmp.ne.s32.totalorder %s318, %s319
    %p328 = scmp.eq.s32.totalorder %s30, 0
    %p329 = por %p327, %p328
    %p330 = scmp.ne.s32.totalorder %s318, %s319
    %p331 = scmp.eq.s32.totalorder %s31, 1
    %p332 = por %p330, %p331
    %p334 = scmp.ne.s32.totalorder %s319, %s333
    %p335 = scmp.eq.s32.totalorder %s31, 0
    %p336 = por %p334, %p335
    %s338 = sadd.s32 %s337, 1
    %p341 = scmp.eq.s32.totalorder %s25, 1
    %p342 = scmp.ne.s32.totalorder %s337, %s339
    %p343 = scmp.eq.s32.totalorder %s25, 0
    %p344 = por %p342, %p343
    %p345 = scmp.ne.s32.totalorder %s337, %s339
    %p346 = scmp.eq.s32.totalorder %s30, 1
    %p347 = por %p345, %p346
    %p348 = scmp.ne.s32.totalorder %s339, %s340
    %p349 = scmp.eq.s32.totalorder %s30, 0
    %p350 = por %p348, %p349
    %p351 = scmp.ne.s32.totalorder %s339, %s340
    %p352 = scmp.eq.s32.totalorder %s31, 1
    %p353 = por %p351, %p352
    %p355 = scmp.ne.s32.totalorder %s340, %s354
    %p356 = scmp.eq.s32.totalorder %s31, 0
    %p357 = por %p355, %p356
    %s359 = sadd.s32 %s358, 1
    %p362 = scmp.eq.s32.totalorder %s25, 1
    %p363 = scmp.ne.s32.totalorder %s358, %s360
    %p364 = scmp.eq.s32.totalorder %s25, 0
    %p365 = por %p363, %p364
    %p366 = scmp.ne.s32.totalorder %s358, %s360
    %p367 = scmp.eq.s32.totalorder %s30, 1
    %p368 = por %p366, %p367
    %p369 = scmp.ne.s32.totalorder %s360, %s361
    %p370 = scmp.eq.s32.totalorder %s30, 0
    %p371 = por %p369, %p370
    %p372 = scmp.ne.s32.totalorder %s360, %s361
    %p373 = scmp.eq.s32.totalorder %s31, 1
    %p374 = por %p372, %p373
    %p376 = scmp.ne.s32.totalorder %s361, %s375
    %p377 = scmp.eq.s32.totalorder %s31, 0
    %p378 = por %p376, %p377
    %s380 = sadd.s32 %s379, 1
    %p383 = scmp.eq.s32.totalorder %s25, 1
    %p384 = scmp.ne.s32.totalorder %s379, %s381
    %p385 = scmp.eq.s32.totalorder %s25, 0
    %p386 = por %p384, %p385
    %p387 = scmp.ne.s32.totalorder %s379, %s381
    %p388 = scmp.eq.s32.totalorder %s30, 1
    %p389 = por %p387, %p388
    %p390 = scmp.ne.s32.totalorder %s381, %s382
    %p391 = scmp.eq.s32.totalorder %s30, 0
    %p392 = por %p390, %p391
    %p393 = scmp.ne.s32.totalorder %s381, %s382
    %p394 = scmp.eq.s32.totalorder %s31, 1
    %p395 = por %p393, %p394
    %p397 = scmp.ne.s32.totalorder %s382, %s396
    %p398 = scmp.eq.s32.totalorder %s31, 0
    %p399 = por %p397, %p398
    %s401 = sadd.s32 %s400, 1
    %p404 = scmp.eq.s32.totalorder %s25, 1
    %p405 = scmp.ne.s32.totalorder %s400, %s402
    %p406 = scmp.eq.s32.totalorder %s25, 0
    %p407 = por %p405, %p406
    %p408 = scmp.ne.s32.totalorder %s400, %s402
    %p409 = scmp.eq.s32.totalorder %s30, 1
    %p410 = por %p408, %p409
    %p411 = scmp.ne.s32.totalorder %s402, %s403
    %p412 = scmp.eq.s32.totalorder %s30, 0
    %p413 = por %p411, %p412
    %p414 = scmp.ne.s32.totalorder %s402, %s403
    %p415 = scmp.eq.s32.totalorder %s31, 1
    %p416 = por %p414, %p415
    %p418 = scmp.ne.s32.totalorder %s403, %s417
    %p419 = scmp.eq.s32.totalorder %s31, 0
    %p420 = por %p418, %p419
    %s422 = sadd.s32 %s421, 1
    %p425 = scmp.eq.s32.totalorder %s25, 1
    %p426 = scmp.ne.s32.totalorder %s421, %s423
    %p427 = scmp.eq.s32.totalorder %s25, 0
    %p428 = por %p426, %p427
    %p429 = scmp.ne.s32.totalorder %s421, %s423
    %p430 = scmp.eq.s32.totalorder %s30, 1
    %p431 = por %p429, %p430
    %p432 = scmp.ne.s32.totalorder %s423, %s424
    %p433 = scmp.eq.s32.totalorder %s30, 0
    %p434 = por %p432, %p433
    %p435 = scmp.ne.s32.totalorder %s423, %s424
    %p436 = scmp.eq.s32.totalorder %s31, 1
    %p437 = por %p435, %p436
    %p439 = scmp.ne.s32.totalorder %s424, %s438
    %p440 = scmp.eq.s32.totalorder %s31, 0
    %p441 = por %p439, %p440
    %s442 = ssub.s32 %s25, %s32
    %p443 = scmp.eq.s32.totalorder %s442, 0
    %s445 = sadd.s32 %s444, 1
    %s446 = scalar_select %p443, %s444, %s445
    %p449 = pneg %p443
    %p450 = scmp.eq.s32.totalorder %s25, 1
    %p451 = por %p449, %p450
    %p452 = scmp.ne.s32.totalorder %s444, %s447
    %p453 = scmp.eq.s32.totalorder %s25, 0
    %p454 = por %p452, %p453
    %p455 = scmp.ne.s32.totalorder %s444, %s447
    %p456 = scmp.eq.s32.totalorder %s30, 1
    %p457 = por %p455, %p456
    %p458 = scmp.ne.s32.totalorder %s447, %s448
    %p459 = scmp.eq.s32.totalorder %s30, 0
    %p460 = por %p458, %p459
    %p461 = scmp.ne.s32.totalorder %s447, %s448
    %p462 = scmp.eq.s32.totalorder %s31, 1
    %p463 = por %p461, %p462
    %p465 = scmp.ne.s32.totalorder %s448, %s464
    %p466 = scmp.eq.s32.totalorder %s31, 0
    %p467 = por %p465, %p466
    %p468 = scmp.le.s32.totalorder 1, %s25
    %p469 = scmp.lt.s32.totalorder %s25, 3
    %p470 = pnand %p468, %p469
    %p471 = pneg %p470
    // Predicated region
    $region9: #{actor_forward.1} parent=5 // pred_check
      _
    $region10: #{actor_forward.1} parent=5 // pred_check_branch
      %473 = sbr.rel (%p470) target = $region12
    $region11: #{actor_forward.1} parent=5 // pred_region
      %s474 = ssub.s32 %s25, 1
      // Predicated region
      $region13: #{actor_forward.1} parent=11 // pred_check
        %p475 = pneg %p98
      $region14: #{actor_forward.1} parent=11 // pred_check_branch
        %477 = sbr.rel (%p475) target = $region16
      $region15: #{actor_forward.1} parent=11 // pred_region
        _
      $region16: #{actor_forward.1} parent=11 // pred_fallthru
        _
      // Predicated region
      $region17: #{actor_forward.1} parent=11 // pred_check
        %p478 = pneg %p119
      $region18: #{actor_forward.1} parent=11 // pred_check_branch
        %480 = sbr.rel (%p478) target = $region20
      $region19: #{actor_forward.1} parent=11 // pred_region
        _
      $region20: #{actor_forward.1} parent=11 // pred_fallthru
        _
      // Predicated region
      $region21: #{actor_forward.1} parent=11 // pred_check
        %p481 = pneg %p140
      $region22: #{actor_forward.1} parent=11 // pred_check_branch
        %483 = sbr.rel (%p481) target = $region24
      $region23: #{actor_forward.1} parent=11 // pred_region
        _
      $region24: #{actor_forward.1} parent=11 // pred_fallthru
        _
      // Predicated region
      $region25: #{actor_forward.1} parent=11 // pred_check
        %p484 = pneg %p161
      $region26: #{actor_forward.1} parent=11 // pred_check_branch
        %486 = sbr.rel (%p484) target = $region28
      $region27: #{actor_forward.1} parent=11 // pred_region
        _
      $region28: #{actor_forward.1} parent=11 // pred_fallthru
        _
      // Predicated region
      $region29: #{actor_forward.1} parent=11 // pred_check
        %p487 = pneg %p182
      $region30: #{actor_forward.1} parent=11 // pred_check_branch
        %489 = sbr.rel (%p487) target = $region32
      $region31: #{actor_forward.1} parent=11 // pred_region
        _
      $region32: #{actor_forward.1} parent=11 // pred_fallthru
        _
      // Predicated region
      $region33: #{actor_forward.1} parent=11 // pred_check
        %p490 = pneg %p203
      $region34: #{actor_forward.1} parent=11 // pred_check_branch
        %492 = sbr.rel (%p490) target = $region36
      $region35: #{actor_forward.1} parent=11 // pred_region
        _
      $region36: #{actor_forward.1} parent=11 // pred_fallthru
        _
      // Predicated region
      $region37: #{actor_forward.1} parent=11 // pred_check
        %p493 = pneg %p224
      $region38: #{actor_forward.1} parent=11 // pred_check_branch
        %495 = sbr.rel (%p493) target = $region40
      $region39: #{actor_forward.1} parent=11 // pred_region
        _
      $region40: #{actor_forward.1} parent=11 // pred_fallthru
        _
      // Predicated region
      $region41: #{actor_forward.1} parent=11 // pred_check
        %p496 = pneg %p245
      $region42: #{actor_forward.1} parent=11 // pred_check_branch
        %498 = sbr.rel (%p496) target = $region44
      $region43: #{actor_forward.1} parent=11 // pred_region
        _
      $region44: #{actor_forward.1} parent=11 // pred_fallthru
        _
      // Predicated region
      $region45: #{actor_forward.1} parent=11 // pred_check
        %p499 = pneg %p266
      $region46: #{actor_forward.1} parent=11 // pred_check_branch
        %501 = sbr.rel (%p499) target = $region48
      $region47: #{actor_forward.1} parent=11 // pred_region
        _
      $region48: #{actor_forward.1} parent=11 // pred_fallthru
        _
      // Predicated region
      $region49: #{actor_forward.1} parent=11 // pred_check
        %p502 = pneg %p287
      $region50: #{actor_forward.1} parent=11 // pred_check_branch
        %504 = sbr.rel (%p502) target = $region52
      $region51: #{actor_forward.1} parent=11 // pred_region
        _
      $region52: #{actor_forward.1} parent=11 // pred_fallthru
        _
      // Predicated region
      $region53: #{actor_forward.1} parent=11 // pred_check
        %p505 = pneg %p308
      $region54: #{actor_forward.1} parent=11 // pred_check_branch
        %507 = sbr.rel (%p505) target = $region56
      $region55: #{actor_forward.1} parent=11 // pred_region
        _
      $region56: #{actor_forward.1} parent=11 // pred_fallthru
        _
      // Predicated region
      $region57: #{actor_forward.1} parent=11 // pred_check
        %p508 = pneg %p329
      $region58: #{actor_forward.1} parent=11 // pred_check_branch
        %510 = sbr.rel (%p508) target = $region60
      $region59: #{actor_forward.1} parent=11 // pred_region
        _
      $region60: #{actor_forward.1} parent=11 // pred_fallthru
        _
      // Predicated region
      $region61: #{actor_forward.1} parent=11 // pred_check
        %p511 = pneg %p350
      $region62: #{actor_forward.1} parent=11 // pred_check_branch
        %513 = sbr.rel (%p511) target = $region64
      $region63: #{actor_forward.1} parent=11 // pred_region
        _
      $region64: #{actor_forward.1} parent=11 // pred_fallthru
        _
      // Predicated region
      $region65: #{actor_forward.1} parent=11 // pred_check
        %p514 = pneg %p371
      $region66: #{actor_forward.1} parent=11 // pred_check_branch
        %516 = sbr.rel (%p514) target = $region68
      $region67: #{actor_forward.1} parent=11 // pred_region
        _
      $region68: #{actor_forward.1} parent=11 // pred_fallthru
        _
      // Predicated region
      $region69: #{actor_forward.1} parent=11 // pred_check
        %p517 = pneg %p392
      $region70: #{actor_forward.1} parent=11 // pred_check_branch
        %519 = sbr.rel (%p517) target = $region72
      $region71: #{actor_forward.1} parent=11 // pred_region
        _
      $region72: #{actor_forward.1} parent=11 // pred_fallthru
        _
      // Predicated region
      $region73: #{actor_forward.1} parent=11 // pred_check
        %p520 = pneg %p413
      $region74: #{actor_forward.1} parent=11 // pred_check_branch
        %522 = sbr.rel (%p520) target = $region76
      $region75: #{actor_forward.1} parent=11 // pred_region
        _
      $region76: #{actor_forward.1} parent=11 // pred_fallthru
        _
      // Predicated region
      $region77: #{actor_forward.1} parent=11 // pred_check
        %p523 = pneg %p434
      $region78: #{actor_forward.1} parent=11 // pred_check_branch
        %525 = sbr.rel (%p523) target = $region80
      $region79: #{actor_forward.1} parent=11 // pred_region
        _
      $region80: #{actor_forward.1} parent=11 // pred_fallthru
        _
    $region12: #{actor_forward.1} parent=5 // pred_fallthru
      _
    %p526 = scmp.lt.s32.totalorder %s25, 2
    // Predicated region
    $region81: #{actor_forward.1} parent=5 // pred_check
      %p527 = pneg %p526
    $region82: #{actor_forward.1} parent=5 // pred_check_branch
      %529 = sbr.rel (%p527) target = $region84
    $region83: #{actor_forward.1} parent=5 // pred_region
      // Predicated region
      $region85: #{actor_forward.1} parent=83 // pred_check
        %p530 = pneg %p45
      $region86: #{actor_forward.1} parent=83 // pred_check_branch
        %532 = sbr.rel (%p530) target = $region88
      $region87: #{actor_forward.1} parent=83 // pred_region
        %p533 = scmp.lt.s32.totalorder %s25, 1
        %s534 = scalar_select %p533, %s25, 1
        %s535 = smul.addr %s534, 64
        %s536 = smul.addr %s535, 4
        %s537 = scalar_lea.vmem %s0, %s536
      $region88: #{actor_forward.1} parent=83 // pred_fallthru
        _
      // Predicated region
      $region89: #{actor_forward.1} parent=83 // pred_check
        %p538 = pneg %p71
      $region90: #{actor_forward.1} parent=83 // pred_check_branch
        %540 = sbr.rel (%p538) target = $region92
      $region91: #{actor_forward.1} parent=83 // pred_region
        %p541 = scmp.lt.s32.totalorder %s25, 1
        %s542 = scalar_select %p541, %s25, 1
        %s543 = smul.addr %s542, 8
        %s544 = scalar_lea.vmem %s1, %s543
      $region92: #{actor_forward.1} parent=83 // pred_fallthru
        _
    $region84: #{actor_forward.1} parent=5 // pred_fallthru
      _
    %p545 = scmp.le.s32.totalorder 1, %s25
    %p546 = scmp.lt.s32.totalorder %s25, 3
    %p547 = pnand %p545, %p546
    %p548 = pneg %p547
    // Predicated region
    $region93: #{actor_forward.1} parent=5 // pred_check
      _
    $region94: #{actor_forward.1} parent=5 // pred_check_branch
      %550 = sbr.rel (%p547) target = $region96
    $region95: #{actor_forward.1} parent=5 // pred_region
      %s551 = ssub.s32 %s25, 1
      %p552 = scmp.lt.s32.totalorder %s30, 1
      %s553 = scalar_select %p552, %s30, 1
      %s554 = smul.addr %s553, 64
      %s555 = smul.addr %s554, 4
      %s556 = scalar_lea.vmem %s0, %s555
      %p557 = pneg %p51
      %p558 = pneg %p48
      %p559 = scmp.lt.s32.totalorder %s30, 1
      %s560 = scalar_select %p559, %s30, 1
      %s561 = smul.addr %s560, 8
      %s562 = scalar_lea.vmem %s1, %s561
      %p563 = pneg %p77
      %p564 = pneg %p74
      %p565 = pneg %p98
      %p566 = pneg %p95
      %p567 = pneg %p119
      %p568 = pneg %p116
      %p569 = pneg %p140
      %p570 = pneg %p137
      %p571 = pneg %p161
      %p572 = pneg %p158
      %p573 = pneg %p182
      %p574 = pneg %p179
      %p575 = pneg %p203
      %p576 = pneg %p200
      %p577 = pneg %p224
      %p578 = pneg %p221
      %p579 = pneg %p245
      %p580 = pneg %p242
      %p581 = pneg %p266
      %p582 = pneg %p263
      %p583 = pneg %p287
      %p584 = pneg %p284
      %p585 = pneg %p308
      %p586 = pneg %p305
      %p587 = pneg %p329
      %p588 = pneg %p326
      %p589 = pneg %p350
      %p590 = pneg %p347
      %p591 = pneg %p371
      %p592 = pneg %p368
      %p593 = pneg %p392
      %p594 = pneg %p389
      %p595 = pneg %p413
      %p596 = pneg %p410
      %p597 = pneg %p434
      %p598 = pneg %p431
      %p599 = pneg %p460
      %p600 = pneg %p457
      %p601 = scmp.lt.s32.totalorder %s30, 1
      %s602 = scalar_select %p601, %s30, 1
      %s603 = smul.addr %s602, 8
      %s604 = scalar_lea.vmem %s19, %s603
      %p605 = scmp.lt.s32.totalorder %s30, 1
      %s606 = scalar_select %p605, %s30, 1
      %s607 = smul.addr %s606, 64
      %s608 = smul.addr %s607, 4
      %s609 = scalar_lea.vmem %s0, %s608
      %p610 = scmp.lt.s32.totalorder %s30, 1
      %s611 = scalar_select %p610, %s30, 1
      %s612 = smul.addr %s611, 8
      %s613 = scalar_lea.vmem %s1, %s612
      %p614 = scmp.lt.s32.totalorder %s30, 1
      %s615 = scalar_select %p614, %s30, 1
      %s616 = smul.addr %s615, 8
      %s617 = scalar_lea.vmem %s19, %s616
      %v619 = vld [vmem:[%s609] sm:$0xf]
      %v620 = vld [vmem:[%s609 + $0x4] sm:$0xf]
      %v621 = vld [vmem:[%s609 + $0x8] sm:$0xf]
      %v622 = vld [vmem:[%s609 + $0xc] sm:$0xf]
      %v623 = vld [vmem:[%s609 + $0x10] sm:$0xf]
      %v624 = vld [vmem:[%s609 + $0x14] sm:$0xf]
      %v625 = vld [vmem:[%s609 + $0x18] sm:$0xf]
      %v626 = vld [vmem:[%s609 + $0x1c] sm:$0xf]
      %v627 = vld [vmem:[%s609 + $0x20] sm:$0xf]
      %v628 = vld [vmem:[%s609 + $0x24] sm:$0xf]
      %v629 = vld [vmem:[%s609 + $0x28] sm:$0xf]
      %v630 = vld [vmem:[%s609 + $0x2c] sm:$0xf]
      %v631 = vld [vmem:[%s609 + $0x30] sm:$0xf]
      %v632 = vld [vmem:[%s609 + $0x34] sm:$0xf]
      %v633 = vld [vmem:[%s609 + $0x38] sm:$0xf]
      %v634 = vld [vmem:[%s609 + $0x3c] sm:$0xf]
      %v635 = vld [vmem:[%s609 + $0x40] sm:$0xf]
      %v636 = vld [vmem:[%s609 + $0x44] sm:$0xf]
      %v637 = vld [vmem:[%s609 + $0x48] sm:$0xf]
      %v638 = vld [vmem:[%s609 + $0x4c] sm:$0xf]
      %v639 = vld [vmem:[%s609 + $0x50] sm:$0xf]
      %v640 = vld [vmem:[%s609 + $0x54] sm:$0xf]
      %v641 = vld [vmem:[%s609 + $0x58] sm:$0xf]
      %v642 = vld [vmem:[%s609 + $0x5c] sm:$0xf]
      %v643 = vld [vmem:[%s609 + $0x60] sm:$0xf]
      %v644 = vld [vmem:[%s609 + $0x64] sm:$0xf]
      %v645 = vld [vmem:[%s609 + $0x68] sm:$0xf]
      %v646 = vld [vmem:[%s609 + $0x6c] sm:$0xf]
      %v647 = vld [vmem:[%s609 + $0x70] sm:$0xf]
      %v648 = vld [vmem:[%s609 + $0x74] sm:$0xf]
      %v649 = vld [vmem:[%s609 + $0x78] sm:$0xf]
      %v650 = vld [vmem:[%s609 + $0x7c] sm:$0xf]
      %v651 = vld [vmem:[%s609 + $0x80] sm:$0xf]
      %v652 = vld [vmem:[%s609 + $0x84] sm:$0xf]
      %v653 = vld [vmem:[%s609 + $0x88] sm:$0xf]
      %v654 = vld [vmem:[%s609 + $0x8c] sm:$0xf]
      %v655 = vld [vmem:[%s609 + $0x90] sm:$0xf]
      %v656 = vld [vmem:[%s609 + $0x94] sm:$0xf]
      %v657 = vld [vmem:[%s609 + $0x98] sm:$0xf]
      %v658 = vld [vmem:[%s609 + $0x9c] sm:$0xf]
      %v659 = vld [vmem:[%s609 + $0xa0] sm:$0xf]
      %v660 = vld [vmem:[%s609 + $0xa4] sm:$0xf]
      %v661 = vld [vmem:[%s609 + $0xa8] sm:$0xf]
      %v662 = vld [vmem:[%s609 + $0xac] sm:$0xf]
      %v663 = vld [vmem:[%s609 + $0xb0] sm:$0xf]
      %v664 = vld [vmem:[%s609 + $0xb4] sm:$0xf]
      %v665 = vld [vmem:[%s609 + $0xb8] sm:$0xf]
      %v666 = vld [vmem:[%s609 + $0xbc] sm:$0xf]
      %v667 = vld [vmem:[%s609 + $0xc0] sm:$0xf]
      %v668 = vld [vmem:[%s609 + $0xc4] sm:$0xf]
      %v669 = vld [vmem:[%s609 + $0xc8] sm:$0xf]
      %v670 = vld [vmem:[%s609 + $0xcc] sm:$0xf]
      %v671 = vld [vmem:[%s609 + $0xd0] sm:$0xf]
      %v672 = vld [vmem:[%s609 + $0xd4] sm:$0xf]
      %v673 = vld [vmem:[%s609 + $0xd8] sm:$0xf]
      %v674 = vld [vmem:[%s609 + $0xdc] sm:$0xf]
      %v675 = vld [vmem:[%s609 + $0xe0] sm:$0xf]
      %v676 = vld [vmem:[%s609 + $0xe4] sm:$0xf]
      %v677 = vld [vmem:[%s609 + $0xe8] sm:$0xf]
      %v678 = vld [vmem:[%s609 + $0xec] sm:$0xf]
      %v679 = vld [vmem:[%s609 + $0xf0] sm:$0xf]
      %v680 = vld [vmem:[%s609 + $0xf4] sm:$0xf]
      %v681 = vld [vmem:[%s609 + $0xf8] sm:$0xf]
      %v682 = vld [vmem:[%s609 + $0xfc] sm:$0xf]
      %v683 = vld [vmem:[%s2] sm:$0xf]
      %v684 = vld [vmem:[%s2 + $0x4] sm:$0xf]
      %v685 = vld [vmem:[%s2 + $0x8] sm:$0xf]
      %v686 = vld [vmem:[%s2 + $0xc] sm:$0xf]
      %v687 = vld [vmem:[%s2 + $0x10] sm:$0xf]
      %v688 = vld [vmem:[%s2 + $0x14] sm:$0xf]
      %v689 = vld [vmem:[%s2 + $0x18] sm:$0xf]
      %v690 = vld [vmem:[%s2 + $0x1c] sm:$0xf]
      %v691 = vld [vmem:[%s3] sm:$0x1]
      %v693 = vlaneseq
      %v694 = vshrl.u32 %v693, 7
      %v695 = vsub.s32 0, %v694
      %v696 = vrot.slane %v691, %v695
      %v762 = vunpack.c.l.b16 %v619
      %v763 = vunpack.c.l.b16 %v620
      %v764 = vunpack.c.l.b16 %v621
      %v765 = vunpack.c.l.b16 %v622
      %v766 = vunpack.c.l.b16 %v623
      %v767 = vunpack.c.l.b16 %v624
      %v768 = vunpack.c.l.b16 %v625
      %v769 = vunpack.c.l.b16 %v626
      %v770 = vunpack.c.l.b16 %v627
      %v771 = vunpack.c.l.b16 %v628
      %v772 = vunpack.c.l.b16 %v629
      %v773 = vunpack.c.l.b16 %v630
      %v774 = vunpack.c.l.b16 %v631
      %v775 = vunpack.c.l.b16 %v632
      %v776 = vunpack.c.l.b16 %v633
      %v777 = vunpack.c.l.b16 %v634
      %v778 = vunpack.c.l.b16 %v635
      %v779 = vunpack.c.l.b16 %v636
      %v780 = vunpack.c.l.b16 %v637
      %v781 = vunpack.c.l.b16 %v638
      %v782 = vunpack.c.l.b16 %v639
      %v783 = vunpack.c.l.b16 %v640
      %v784 = vunpack.c.l.b16 %v641
      %v785 = vunpack.c.l.b16 %v642
      %v786 = vunpack.c.l.b16 %v643
      %v787 = vunpack.c.l.b16 %v644
      %v788 = vunpack.c.l.b16 %v645
      %v789 = vunpack.c.l.b16 %v646
      %v790 = vunpack.c.l.b16 %v647
      %v791 = vunpack.c.l.b16 %v648
      %v792 = vunpack.c.l.b16 %v649
      %v793 = vunpack.c.l.b16 %v650
      %v794 = vunpack.c.l.b16 %v651
      %v795 = vunpack.c.l.b16 %v652
      %v796 = vunpack.c.l.b16 %v653
      %v797 = vunpack.c.l.b16 %v654
      %v798 = vunpack.c.l.b16 %v655
      %v799 = vunpack.c.l.b16 %v656
      %v800 = vunpack.c.l.b16 %v657
      %v801 = vunpack.c.l.b16 %v658
      %v802 = vunpack.c.l.b16 %v659
      %v803 = vunpack.c.l.b16 %v660
      %v804 = vunpack.c.l.b16 %v661
      %v805 = vunpack.c.l.b16 %v662
      %v806 = vunpack.c.l.b16 %v663
      %v807 = vunpack.c.l.b16 %v664
      %v808 = vunpack.c.l.b16 %v665
      %v809 = vunpack.c.l.b16 %v666
      %v810 = vunpack.c.l.b16 %v667
      %v811 = vunpack.c.l.b16 %v668
      %v812 = vunpack.c.l.b16 %v669
      %v813 = vunpack.c.l.b16 %v670
      %v814 = vunpack.c.l.b16 %v671
      %v815 = vunpack.c.l.b16 %v672
      %v816 = vunpack.c.l.b16 %v673
      %v817 = vunpack.c.l.b16 %v674
      %v818 = vunpack.c.l.b16 %v675
      %v819 = vunpack.c.l.b16 %v676
      %v820 = vunpack.c.l.b16 %v677
      %v821 = vunpack.c.l.b16 %v678
      %v822 = vunpack.c.l.b16 %v679
      %v823 = vunpack.c.l.b16 %v680
      %v824 = vunpack.c.l.b16 %v681
      %v825 = vunpack.c.l.b16 %v682
      %v826 = vpack.c.b16 %v763, %v762
      %v827 = vpack.c.b16 %v765, %v764
      %v828 = vpack.c.b16 %v767, %v766
      %v829 = vpack.c.b16 %v769, %v768
      %v830 = vpack.c.b16 %v771, %v770
      %v831 = vpack.c.b16 %v773, %v772
      %v832 = vpack.c.b16 %v775, %v774
      %v833 = vpack.c.b16 %v777, %v776
      %v834 = vpack.c.b16 %v779, %v778
      %v835 = vpack.c.b16 %v781, %v780
      %v836 = vpack.c.b16 %v783, %v782
      %v837 = vpack.c.b16 %v785, %v784
      %v838 = vpack.c.b16 %v787, %v786
      %v839 = vpack.c.b16 %v789, %v788
      %v840 = vpack.c.b16 %v791, %v790
      %v841 = vpack.c.b16 %v793, %v792
      %v842 = vpack.c.b16 %v795, %v794
      %v843 = vpack.c.b16 %v797, %v796
      %v844 = vpack.c.b16 %v799, %v798
      %v845 = vpack.c.b16 %v801, %v800
      %v846 = vpack.c.b16 %v803, %v802
      %v847 = vpack.c.b16 %v805, %v804
      %v848 = vpack.c.b16 %v807, %v806
      %v849 = vpack.c.b16 %v809, %v808
      %v850 = vpack.c.b16 %v811, %v810
      %v851 = vpack.c.b16 %v813, %v812
      %v852 = vpack.c.b16 %v815, %v814
      %v853 = vpack.c.b16 %v817, %v816
      %v854 = vpack.c.b16 %v819, %v818
      %v855 = vpack.c.b16 %v821, %v820
      %v856 = vpack.c.b16 %v823, %v822
      %v857 = vpack.c.b16 %v825, %v824
      %v866 = vunpack.c.l.b16 %v683
      %v867 = vunpack.c.l.b16 %v684
      %v868 = vunpack.c.l.b16 %v685
      %v869 = vunpack.c.l.b16 %v686
      %v870 = vunpack.c.l.b16 %v687
      %v871 = vunpack.c.l.b16 %v688
      %v872 = vunpack.c.l.b16 %v689
      %v873 = vunpack.c.l.b16 %v690
      %v874 = vpack.c.b16 %v867, %v866
      %v875 = vpack.c.b16 %v869, %v868
      %v876 = vpack.c.b16 %v871, %v870
      %v877 = vpack.c.b16 %v873, %v872
      %vm882 = vcmask 523264
      %v884 = vsel %vm882, %v826, 0
      %v887 = vsel %vm882, %v827, 0
      %v890 = vsel %vm882, %v828, 0
      %v893 = vsel %vm882, %v829, 0
      %v896 = vsel %vm882, %v830, 0
      %v899 = vsel %vm882, %v831, 0
      %v902 = vsel %vm882, %v832, 0
      %v905 = vsel %vm882, %v833, 0
      %v908 = vsel %vm882, %v834, 0
      %v911 = vsel %vm882, %v835, 0
      %v914 = vsel %vm882, %v836, 0
      %v917 = vsel %vm882, %v837, 0
      %v920 = vsel %vm882, %v838, 0
      %v923 = vsel %vm882, %v839, 0
      %v926 = vsel %vm882, %v840, 0
      %v929 = vsel %vm882, %v841, 0
      %v932 = vsel %vm882, %v842, 0
      %v935 = vsel %vm882, %v843, 0
      %v938 = vsel %vm882, %v844, 0
      %v941 = vsel %vm882, %v845, 0
      %v944 = vsel %vm882, %v846, 0
      %v947 = vsel %vm882, %v847, 0
      %v950 = vsel %vm882, %v848, 0
      %v953 = vsel %vm882, %v849, 0
      %v956 = vsel %vm882, %v850, 0
      %v959 = vsel %vm882, %v851, 0
      %v962 = vsel %vm882, %v852, 0
      %v965 = vsel %vm882, %v853, 0
      %v968 = vsel %vm882, %v854, 0
      %v971 = vsel %vm882, %v855, 0
      %v974 = vsel %vm882, %v856, 0
      %v977 = vsel %vm882, %v857, 0
      %979 = vmatprep.subr.bf16.mxu0 0
      %980 = vmatpush1.bf16.msra.mxu0 %v874
      %981 = vmatprep.subr.bf16.mxu0 0
      %982 = vmatpush1.bf16.msra.mxu0 %v875
      %983 = vmatprep.subr.bf16.mxu0 0
      %984 = vmatpush1.bf16.msra.mxu0 %v876
      %985 = vmatprep.subr.bf16.mxu0 0
      %986 = vmatpush1.bf16.msra.mxu0 %v877
      %987 = vmatprep.subr.bf16.mxu0 0
      %988 = vmatpush1.bf16.msra.mxu0 0
      %989 = vmatprep.subr.bf16.mxu0 0
      %990 = vmatpush1.bf16.msra.mxu0 0
      %991 = vmatprep.subr.bf16.mxu0 0
      %992 = vmatpush1.bf16.msra.mxu0 0
      %993 = vmatprep.subr.bf16.mxu0 0
      %994 = vmatpush1.bf16.msra.mxu0 0
      %995 = vmatprep.subr.bf16.mxu0 0
      %996 = vmatpush1.bf16.msra.mxu0 0
      %997 = vmatprep.subr.bf16.mxu0 0
      %998 = vmatpush1.bf16.msra.mxu0 0
      %999 = vmatprep.subr.bf16.mxu0 0
      %1000 = vmatpush1.bf16.msra.mxu0 0
      %1001 = vmatprep.subr.bf16.mxu0 0
      %1002 = vmatpush1.bf16.msra.mxu0 0
      %1003 = vmatprep.subr.bf16.mxu0 0
      %1004 = vmatpush1.bf16.msra.mxu0 0
      %1005 = vmatprep.subr.bf16.mxu0 0
      %1006 = vmatpush1.bf16.msra.mxu0 0
      %1007 = vmatprep.subr.bf16.mxu0 0
      %1008 = vmatpush1.bf16.msra.mxu0 0
      %1009 = vmatprep.subr.bf16.mxu0 0
      %1010 = vmatpush1.bf16.msra.mxu0 0
      %1011 = vmatprep.mubr.bf16.mxu0 0
      %1012 = vmatmul.mubr.bf16.gmra.mrb[0].mxu0 %v884
      %v1013 = vpop.f32.mrb[0].mxu0
      %v1014 = vadd.f32 %v696, %v1013
      %v1015 = vpop.f32.mrb[0].mxu0
      %v1016 = vpop.f32.mrb[0].mxu0
      %v1017 = vadd.f32 %v696, %v1016
      %v1018 = vpop.f32.mrb[0].mxu0
      %1019 = vmatprep.mubr.bf16.mxu0 0
      %1020 = vmatmul.mubr.bf16.gmra.mrb[0].mxu0 %v887
      %v1021 = vpop.f32.mrb[0].mxu0
      %v1022 = vadd.f32 %v696, %v1021
      %v1023 = vpop.f32.mrb[0].mxu0
      %v1024 = vpop.f32.mrb[0].mxu0
      %v1025 = vadd.f32 %v696, %v1024
      %v1026 = vpop.f32.mrb[0].mxu0
      %1027 = vmatprep.mubr.bf16.mxu0 0
      %1028 = vmatmul.mubr.bf16.gmra.mrb[0].mxu0 %v890
      %v1029 = vpop.f32.mrb[0].mxu0
      %v1030 = vadd.f32 %v696, %v1029
      %v1031 = vpop.f32.mrb[0].mxu0
      %v1032 = vpop.f32.mrb[0].mxu0
      %v1033 = vadd.f32 %v696, %v1032
      %v1034 = vpop.f32.mrb[0].mxu0
      %1035 = vmatprep.mubr.bf16.mxu0 0
      %1036 = vmatmul.mubr.bf16.gmra.mrb[0].mxu0 %v893
      %v1037 = vpop.f32.mrb[0].mxu0
      %v1038 = vadd.f32 %v696, %v1037
      %v1039 = vpop.f32.mrb[0].mxu0
      %v1040 = vpop.f32.mrb[0].mxu0
      %v1041 = vadd.f32 %v696, %v1040
      %v1042 = vpop.f32.mrb[0].mxu0
      %1043 = vmatprep.mubr.bf16.mxu0 0
      %1044 = vmatmul.mubr.bf16.gmra.mrb[0].mxu0 %v896
      %v1045 = vpop.f32.mrb[0].mxu0
      %v1046 = vadd.f32 %v696, %v1045
      %v1047 = vpop.f32.mrb[0].mxu0
      %v1048 = vpop.f32.mrb[0].mxu0
      %v1049 = vadd.f32 %v696, %v1048
      %v1050 = vpop.f32.mrb[0].mxu0
      %1051 = vmatprep.mubr.bf16.mxu0 0
      %1052 = vmatmul.mubr.bf16.gmra.mrb[0].mxu0 %v899
      %v1053 = vpop.f32.mrb[0].mxu0
      %v1054 = vadd.f32 %v696, %v1053
      %v1055 = vpop.f32.mrb[0].mxu0
      %v1056 = vpop.f32.mrb[0].mxu0
      %v1057 = vadd.f32 %v696, %v1056
      %v1058 = vpop.f32.mrb[0].mxu0
      %1059 = vmatprep.mubr.bf16.mxu0 0
      %1060 = vmatmul.mubr.bf16.gmra.mrb[0].mxu0 %v902
      %v1061 = vpop.f32.mrb[0].mxu0
      %v1062 = vadd.f32 %v696, %v1061
      %v1063 = vpop.f32.mrb[0].mxu0
      %v1064 = vpop.f32.mrb[0].mxu0
      %v1065 = vadd.f32 %v696, %v1064
      %v1066 = vpop.f32.mrb[0].mxu0
      %1067 = vmatprep.mubr.bf16.mxu0 0
      %1068 = vmatmul.mubr.bf16.gmra.mrb[0].mxu0 %v905
      %v1069 = vpop.f32.mrb[0].mxu0
      %v1070 = vadd.f32 %v696, %v1069
      %v1071 = vpop.f32.mrb[0].mxu0
      %v1072 = vpop.f32.mrb[0].mxu0
      %v1073 = vadd.f32 %v696, %v1072
      %v1074 = vpop.f32.mrb[0].mxu0
      %1075 = vmatprep.mubr.bf16.mxu0 0
      %1076 = vmatmul.mubr.bf16.gmra.mrb[0].mxu0 %v908
      %v1077 = vpop.f32.mrb[0].mxu0
      %v1078 = vadd.f32 %v696, %v1077
      %v1079 = vpop.f32.mrb[0].mxu0
      %v1080 = vpop.f32.mrb[0].mxu0
      %v1081 = vadd.f32 %v696, %v1080
      %v1082 = vpop.f32.mrb[0].mxu0
      %1083 = vmatprep.mubr.bf16.mxu0 0
      %1084 = vmatmul.mubr.bf16.gmra.mrb[0].mxu0 %v911
      %v1085 = vpop.f32.mrb[0].mxu0
      %v1086 = vadd.f32 %v696, %v1085
      %v1087 = vpop.f32.mrb[0].mxu0
      %v1088 = vpop.f32.mrb[0].mxu0
      %v1089 = vadd.f32 %v696, %v1088
      %v1090 = vpop.f32.mrb[0].mxu0
      %1091 = vmatprep.mubr.bf16.mxu0 0
      %1092 = vmatmul.mubr.bf16.gmra.mrb[0].mxu0 %v914
      %v1093 = vpop.f32.mrb[0].mxu0
      %v1094 = vadd.f32 %v696, %v1093
      %v1095 = vpop.f32.mrb[0].mxu0
      %v1096 = vpop.f32.mrb[0].mxu0
      %v1097 = vadd.f32 %v696, %v1096
      %v1098 = vpop.f32.mrb[0].mxu0
      %1099 = vmatprep.mubr.bf16.mxu0 0
      %1100 = vmatmul.mubr.bf16.gmra.mrb[0].mxu0 %v917
      %v1101 = vpop.f32.mrb[0].mxu0
      %v1102 = vadd.f32 %v696, %v1101
      %v1103 = vpop.f32.mrb[0].mxu0
      %v1104 = vpop.f32.mrb[0].mxu0
      %v1105 = vadd.f32 %v696, %v1104
      %v1106 = vpop.f32.mrb[0].mxu0
      %1107 = vmatprep.mubr.bf16.mxu0 0
      %1108 = vmatmul.mubr.bf16.gmra.mrb[0].mxu0 %v920
      %v1109 = vpop.f32.mrb[0].mxu0
      %v1110 = vadd.f32 %v696, %v1109
      %v1111 = vpop.f32.mrb[0].mxu0
      %v1112 = vpop.f32.mrb[0].mxu0
      %v1113 = vadd.f32 %v696, %v1112
      %v1114 = vpop.f32.mrb[0].mxu0
      %1115 = vmatprep.mubr.bf16.mxu0 0
      %1116 = vmatmul.mubr.bf16.gmra.mrb[0].mxu0 %v923
      %v1117 = vpop.f32.mrb[0].mxu0
      %v1118 = vadd.f32 %v696, %v1117
      %v1119 = vpop.f32.mrb[0].mxu0
      %v1120 = vpop.f32.mrb[0].mxu0
      %v1121 = vadd.f32 %v696, %v1120
      %v1122 = vpop.f32.mrb[0].mxu0
      %1123 = vmatprep.mubr.bf16.mxu0 0
      %1124 = vmatmul.mubr.bf16.gmra.mrb[0].mxu0 %v926
      %v1125 = vpop.f32.mrb[0].mxu0
      %v1126 = vadd.f32 %v696, %v1125
      %v1127 = vpop.f32.mrb[0].mxu0
      %v1128 = vpop.f32.mrb[0].mxu0
      %v1129 = vadd.f32 %v696, %v1128
      %v1130 = vpop.f32.mrb[0].mxu0
      %1131 = vmatprep.mubr.bf16.mxu0 0
      %1132 = vmatmul.mubr.bf16.gmra.mrb[0].mxu0 %v929
      %v1133 = vpop.f32.mrb[0].mxu0
      %v1134 = vadd.f32 %v696, %v1133
      %v1135 = vpop.f32.mrb[0].mxu0
      %v1136 = vpop.f32.mrb[0].mxu0
      %v1137 = vadd.f32 %v696, %v1136
      %v1138 = vpop.f32.mrb[0].mxu0
      %1139 = vmatprep.mubr.bf16.mxu0 0
      %1140 = vmatmul.mubr.bf16.gmra.mrb[0].mxu0 %v932
      %v1141 = vpop.f32.mrb[0].mxu0
      %v1142 = vadd.f32 %v696, %v1141
      %v1143 = vpop.f32.mrb[0].mxu0
      %v1144 = vpop.f32.mrb[0].mxu0
      %v1145 = vadd.f32 %v696, %v1144
      %v1146 = vpop.f32.mrb[0].mxu0
      %1147 = vmatprep.mubr.bf16.mxu0 0
      %1148 = vmatmul.mubr.bf16.gmra.mrb[0].mxu0 %v935
      %v1149 = vpop.f32.mrb[0].mxu0
      %v1150 = vadd.f32 %v696, %v1149
      %v1151 = vpop.f32.mrb[0].mxu0
      %v1152 = vpop.f32.mrb[0].mxu0
      %v1153 = vadd.f32 %v696, %v1152
      %v1154 = vpop.f32.mrb[0].mxu0
      %1155 = vmatprep.mubr.bf16.mxu0 0
      %1156 = vmatmul.mubr.bf16.gmra.mrb[0].mxu0 %v938
      %v1157 = vpop.f32.mrb[0].mxu0
      %v1158 = vadd.f32 %v696, %v1157
      %v1159 = vpop.f32.mrb[0].mxu0
      %v1160 = vpop.f32.mrb[0].mxu0
      %v1161 = vadd.f32 %v696, %v1160
      %v1162 = vpop.f32.mrb[0].mxu0
      %1163 = vmatprep.mubr.bf16.mxu0 0
      %1164 = vmatmul.mubr.bf16.gmra.mrb[0].mxu0 %v941
      %v1165 = vpop.f32.mrb[0].mxu0
      %v1166 = vadd.f32 %v696, %v1165
      %v1167 = vpop.f32.mrb[0].mxu0
      %v1168 = vpop.f32.mrb[0].mxu0
      %v1169 = vadd.f32 %v696, %v1168
      %v1170 = vpop.f32.mrb[0].mxu0
      %1171 = vmatprep.mubr.bf16.mxu0 0
      %1172 = vmatmul.mubr.bf16.gmra.mrb[0].mxu0 %v944
      %v1173 = vpop.f32.mrb[0].mxu0
      %v1174 = vadd.f32 %v696, %v1173
      %v1175 = vpop.f32.mrb[0].mxu0
      %v1176 = vpop.f32.mrb[0].mxu0
      %v1177 = vadd.f32 %v696, %v1176
      %v1178 = vpop.f32.mrb[0].mxu0
      %1179 = vmatprep.mubr.bf16.mxu0 0
      %1180 = vmatmul.mubr.bf16.gmra.mrb[0].mxu0 %v947
      %v1181 = vpop.f32.mrb[0].mxu0
      %v1182 = vadd.f32 %v696, %v1181
      %v1183 = vpop.f32.mrb[0].mxu0
      %v1184 = vpop.f32.mrb[0].mxu0
      %v1185 = vadd.f32 %v696, %v1184
      %v1186 = vpop.f32.mrb[0].mxu0
      %1187 = vmatprep.mubr.bf16.mxu0 0
      %1188 = vmatmul.mubr.bf16.gmra.mrb[0].mxu0 %v950
      %v1189 = vpop.f32.mrb[0].mxu0
      %v1190 = vadd.f32 %v696, %v1189
      %v1191 = vpop.f32.mrb[0].mxu0
      %v1192 = vpop.f32.mrb[0].mxu0
      %v1193 = vadd.f32 %v696, %v1192
      %v1194 = vpop.f32.mrb[0].mxu0
      %1195 = vmatprep.mubr.bf16.mxu0 0
      %1196 = vmatmul.mubr.bf16.gmra.mrb[0].mxu0 %v953
      %v1197 = vpop.f32.mrb[0].mxu0
      %v1198 = vadd.f32 %v696, %v1197
      %v1199 = vpop.f32.mrb[0].mxu0
      %v1200 = vpop.f32.mrb[0].mxu0
      %v1201 = vadd.f32 %v696, %v1200
      %v1202 = vpop.f32.mrb[0].mxu0
      %1203 = vmatprep.mubr.bf16.mxu0 0
      %1204 = vmatmul.mubr.bf16.gmra.mrb[0].mxu0 %v956
      %v1205 = vpop.f32.mrb[0].mxu0
      %v1206 = vadd.f32 %v696, %v1205
      %v1207 = vpop.f32.mrb[0].mxu0
      %v1208 = vpop.f32.mrb[0].mxu0
      %v1209 = vadd.f32 %v696, %v1208
      %v1210 = vpop.f32.mrb[0].mxu0
      %1211 = vmatprep.mubr.bf16.mxu0 0
      %1212 = vmatmul.mubr.bf16.gmra.mrb[0].mxu0 %v959
      %v1213 = vpop.f32.mrb[0].mxu0
      %v1214 = vadd.f32 %v696, %v1213
      %v1215 = vpop.f32.mrb[0].mxu0
      %v1216 = vpop.f32.mrb[0].mxu0
      %v1217 = vadd.f32 %v696, %v1216
      %v1218 = vpop.f32.mrb[0].mxu0
      %1219 = vmatprep.mubr.bf16.mxu0 0
      %1220 = vmatmul.mubr.bf16.gmra.mrb[0].mxu0 %v962
      %v1221 = vpop.f32.mrb[0].mxu0
      %v1222 = vadd.f32 %v696, %v1221
      %v1223 = vpop.f32.mrb[0].mxu0
      %v1224 = vpop.f32.mrb[0].mxu0
      %v1225 = vadd.f32 %v696, %v1224
      %v1226 = vpop.f32.mrb[0].mxu0
      %1227 = vmatprep.mubr.bf16.mxu0 0
      %1228 = vmatmul.mubr.bf16.gmra.mrb[0].mxu0 %v965
      %v1229 = vpop.f32.mrb[0].mxu0
      %v1230 = vadd.f32 %v696, %v1229
      %v1231 = vpop.f32.mrb[0].mxu0
      %v1232 = vpop.f32.mrb[0].mxu0
      %v1233 = vadd.f32 %v696, %v1232
      %v1234 = vpop.f32.mrb[0].mxu0
      %1235 = vmatprep.mubr.bf16.mxu0 0
      %1236 = vmatmul.mubr.bf16.gmra.mrb[0].mxu0 %v968
      %v1237 = vpop.f32.mrb[0].mxu0
      %v1238 = vadd.f32 %v696, %v1237
      %v1239 = vpop.f32.mrb[0].mxu0
      %v1240 = vpop.f32.mrb[0].mxu0
      %v1241 = vadd.f32 %v696, %v1240
      %v1242 = vpop.f32.mrb[0].mxu0
      %1243 = vmatprep.mubr.bf16.mxu0 0
      %1244 = vmatmul.mubr.bf16.gmra.mrb[0].mxu0 %v971
      %v1245 = vpop.f32.mrb[0].mxu0
      %v1246 = vadd.f32 %v696, %v1245
      %v1247 = vpop.f32.mrb[0].mxu0
      %v1248 = vpop.f32.mrb[0].mxu0
      %v1249 = vadd.f32 %v696, %v1248
      %v1250 = vpop.f32.mrb[0].mxu0
      %1251 = vmatprep.mubr.bf16.mxu0 0
      %1252 = vmatmul.mubr.bf16.gmra.mrb[0].mxu0 %v974
      %v1253 = vpop.f32.mrb[0].mxu0
      %v1254 = vadd.f32 %v696, %v1253
      %v1255 = vpop.f32.mrb[0].mxu0
      %v1256 = vpop.f32.mrb[0].mxu0
      %v1257 = vadd.f32 %v696, %v1256
      %v1258 = vpop.f32.mrb[0].mxu0
      %1259 = vmatprep.mubr.bf16.mxu0 0
      %1260 = vmatmul.mubr.bf16.gmra.mrb[0].mxu0 %v977
      %v1261 = vpop.f32.mrb[0].mxu0
      %v1262 = vadd.f32 %v696, %v1261
      %v1263 = vpop.f32.mrb[0].mxu0
      %v1264 = vpop.f32.mrb[0].mxu0
      %v1265 = vadd.f32 %v696, %v1264
      %v1266 = vpop.f32.mrb[0].mxu0
      %1267 = vdwg.mxu0
      %v1268 = vmax.f32 %v1014, 0.0
      %v1269 = vmax.f32 %v1017, 0.0
      %v1270 = vmax.f32 %v1022, 0.0
      %v1271 = vmax.f32 %v1025, 0.0
      %v1272 = vmax.f32 %v1030, 0.0
      %v1273 = vmax.f32 %v1033, 0.0
      %v1274 = vmax.f32 %v1038, 0.0
      %v1275 = vmax.f32 %v1041, 0.0
      %v1276 = vmax.f32 %v1046, 0.0
      %v1277 = vmax.f32 %v1049, 0.0
      %v1278 = vmax.f32 %v1054, 0.0
      %v1279 = vmax.f32 %v1057, 0.0
      %v1280 = vmax.f32 %v1062, 0.0
      %v1281 = vmax.f32 %v1065, 0.0
      %v1282 = vmax.f32 %v1070, 0.0
      %v1283 = vmax.f32 %v1073, 0.0
      %v1284 = vmax.f32 %v1078, 0.0
      %v1285 = vmax.f32 %v1081, 0.0
      %v1286 = vmax.f32 %v1086, 0.0
      %v1287 = vmax.f32 %v1089, 0.0
      %v1288 = vmax.f32 %v1094, 0.0
      %v1289 = vmax.f32 %v1097, 0.0
      %v1290 = vmax.f32 %v1102, 0.0
      %v1291 = vmax.f32 %v1105, 0.0
      %v1292 = vmax.f32 %v1110, 0.0
      %v1293 = vmax.f32 %v1113, 0.0
      %v1294 = vmax.f32 %v1118, 0.0
      %v1295 = vmax.f32 %v1121, 0.0
      %v1296 = vmax.f32 %v1126, 0.0
      %v1297 = vmax.f32 %v1129, 0.0
      %v1298 = vmax.f32 %v1134, 0.0
      %v1299 = vmax.f32 %v1137, 0.0
      %v1300 = vmax.f32 %v1142, 0.0
      %v1301 = vmax.f32 %v1145, 0.0
      %v1302 = vmax.f32 %v1150, 0.0
      %v1303 = vmax.f32 %v1153, 0.0
      %v1304 = vmax.f32 %v1158, 0.0
      %v1305 = vmax.f32 %v1161, 0.0
      %v1306 = vmax.f32 %v1166, 0.0
      %v1307 = vmax.f32 %v1169, 0.0
      %v1308 = vmax.f32 %v1174, 0.0
      %v1309 = vmax.f32 %v1177, 0.0
      %v1310 = vmax.f32 %v1182, 0.0
      %v1311 = vmax.f32 %v1185, 0.0
      %v1312 = vmax.f32 %v1190, 0.0
      %v1313 = vmax.f32 %v1193, 0.0
      %v1314 = vmax.f32 %v1198, 0.0
      %v1315 = vmax.f32 %v1201, 0.0
      %v1316 = vmax.f32 %v1206, 0.0
      %v1317 = vmax.f32 %v1209, 0.0
      %v1318 = vmax.f32 %v1214, 0.0
      %v1319 = vmax.f32 %v1217, 0.0
      %v1320 = vmax.f32 %v1222, 0.0
      %v1321 = vmax.f32 %v1225, 0.0
      %v1322 = vmax.f32 %v1230, 0.0
      %v1323 = vmax.f32 %v1233, 0.0
      %v1324 = vmax.f32 %v1238, 0.0
      %v1325 = vmax.f32 %v1241, 0.0
      %v1326 = vmax.f32 %v1246, 0.0
      %v1327 = vmax.f32 %v1249, 0.0
      %v1328 = vmax.f32 %v1254, 0.0
      %v1329 = vmax.f32 %v1257, 0.0
      %v1330 = vmax.f32 %v1262, 0.0
      %v1331 = vmax.f32 %v1265, 0.0
      %v1332 = vpack.c.bf16 %v1269, %v1268
      %v1333 = vpack.c.bf16 %v1271, %v1270
      %v1334 = vpack.c.bf16 %v1273, %v1272
      %v1335 = vpack.c.bf16 %v1275, %v1274
      %v1336 = vpack.c.bf16 %v1277, %v1276
      %v1337 = vpack.c.bf16 %v1279, %v1278
      %v1338 = vpack.c.bf16 %v1281, %v1280
      %v1339 = vpack.c.bf16 %v1283, %v1282
      %v1340 = vpack.c.bf16 %v1285, %v1284
      %v1341 = vpack.c.bf16 %v1287, %v1286
      %v1342 = vpack.c.bf16 %v1289, %v1288
      %v1343 = vpack.c.bf16 %v1291, %v1290
      %v1344 = vpack.c.bf16 %v1293, %v1292
      %v1345 = vpack.c.bf16 %v1295, %v1294
      %v1346 = vpack.c.bf16 %v1297, %v1296
      %v1347 = vpack.c.bf16 %v1299, %v1298
      %v1348 = vpack.c.bf16 %v1301, %v1300
      %v1349 = vpack.c.bf16 %v1303, %v1302
      %v1350 = vpack.c.bf16 %v1305, %v1304
      %v1351 = vpack.c.bf16 %v1307, %v1306
      %v1352 = vpack.c.bf16 %v1309, %v1308
      %v1353 = vpack.c.bf16 %v1311, %v1310
      %v1354 = vpack.c.bf16 %v1313, %v1312
      %v1355 = vpack.c.bf16 %v1315, %v1314
      %v1356 = vpack.c.bf16 %v1317, %v1316
      %v1357 = vpack.c.bf16 %v1319, %v1318
      %v1358 = vpack.c.bf16 %v1321, %v1320
      %v1359 = vpack.c.bf16 %v1323, %v1322
      %v1360 = vpack.c.bf16 %v1325, %v1324
      %v1361 = vpack.c.bf16 %v1327, %v1326
      %v1362 = vpack.c.bf16 %v1329, %v1328
      %v1363 = vpack.c.bf16 %v1331, %v1330
      %v1364 = vld [vmem:[%s4] sm:$0xf]
      %v1365 = vld [vmem:[%s4 + $0x4] sm:$0xf]
      %v1366 = vld [vmem:[%s4 + $0x8] sm:$0xf]
      %v1367 = vld [vmem:[%s4 + $0xc] sm:$0xf]
      %v1368 = vld [vmem:[%s4 + $0x10] sm:$0xf]
      %v1369 = vld [vmem:[%s4 + $0x14] sm:$0xf]
      %v1370 = vld [vmem:[%s4 + $0x18] sm:$0xf]
      %v1371 = vld [vmem:[%s4 + $0x1c] sm:$0xf]
      %v1372 = vld [vmem:[%s4 + $0x20] sm:$0xf]
      %v1373 = vld [vmem:[%s4 + $0x24] sm:$0xf]
      %v1374 = vld [vmem:[%s4 + $0x28] sm:$0xf]
      %v1375 = vld [vmem:[%s4 + $0x2c] sm:$0xf]
      %v1376 = vld [vmem:[%s4 + $0x30] sm:$0xf]
      %v1377 = vld [vmem:[%s4 + $0x34] sm:$0xf]
      %v1378 = vld [vmem:[%s4 + $0x38] sm:$0xf]
      %v1379 = vld [vmem:[%s4 + $0x3c] sm:$0xf]
      %v1380 = vld [vmem:[%s4 + $0x40] sm:$0xf]
      %v1381 = vld [vmem:[%s4 + $0x44] sm:$0xf]
      %v1382 = vld [vmem:[%s4 + $0x48] sm:$0xf]
      %v1383 = vld [vmem:[%s4 + $0x4c] sm:$0xf]
      %v1384 = vld [vmem:[%s4 + $0x50] sm:$0xf]
      %v1385 = vld [vmem:[%s4 + $0x54] sm:$0xf]
      %v1386 = vld [vmem:[%s4 + $0x58] sm:$0xf]
      %v1387 = vld [vmem:[%s4 + $0x5c] sm:$0xf]
      %v1388 = vld [vmem:[%s4 + $0x60] sm:$0xf]
      %v1389 = vld [vmem:[%s4 + $0x64] sm:$0xf]
      %v1390 = vld [vmem:[%s4 + $0x68] sm:$0xf]
      %v1391 = vld [vmem:[%s4 + $0x6c] sm:$0xf]
      %v1392 = vld [vmem:[%s4 + $0x70] sm:$0xf]
      %v1393 = vld [vmem:[%s4 + $0x74] sm:$0xf]
      %v1394 = vld [vmem:[%s4 + $0x78] sm:$0xf]
      %v1395 = vld [vmem:[%s4 + $0x7c] sm:$0xf]
      %v1396 = vld [vmem:[%s4 + $0x80] sm:$0xf]
      %v1397 = vld [vmem:[%s4 + $0x84] sm:$0xf]
      %v1398 = vld [vmem:[%s4 + $0x88] sm:$0xf]
      %v1399 = vld [vmem:[%s4 + $0x8c] sm:$0xf]
      %v1400 = vld [vmem:[%s4 + $0x90] sm:$0xf]
      %v1401 = vld [vmem:[%s4 + $0x94] sm:$0xf]
      %v1402 = vld [vmem:[%s4 + $0x98] sm:$0xf]
      %v1403 = vld [vmem:[%s4 + $0x9c] sm:$0xf]
      %v1404 = vld [vmem:[%s4 + $0xa0] sm:$0xf]
      %v1405 = vld [vmem:[%s4 + $0xa4] sm:$0xf]
      %v1406 = vld [vmem:[%s4 + $0xa8] sm:$0xf]
      %v1407 = vld [vmem:[%s4 + $0xac] sm:$0xf]
      %v1408 = vld [vmem:[%s4 + $0xb0] sm:$0xf]
      %v1409 = vld [vmem:[%s4 + $0xb4] sm:$0xf]
      %v1410 = vld [vmem:[%s4 + $0xb8] sm:$0xf]
      %v1411 = vld [vmem:[%s4 + $0xbc] sm:$0xf]
      %v1412 = vld [vmem:[%s4 + $0xc0] sm:$0xf]
      %v1413 = vld [vmem:[%s4 + $0xc4] sm:$0xf]
      %v1414 = vld [vmem:[%s4 + $0xc8] sm:$0xf]
      %v1415 = vld [vmem:[%s4 + $0xcc] sm:$0xf]
      %v1416 = vld [vmem:[%s4 + $0xd0] sm:$0xf]
      %v1417 = vld [vmem:[%s4 + $0xd4] sm:$0xf]
      %v1418 = vld [vmem:[%s4 + $0xd8] sm:$0xf]
      %v1419 = vld [vmem:[%s4 + $0xdc] sm:$0xf]
      %v1420 = vld [vmem:[%s4 + $0xe0] sm:$0xf]
      %v1421 = vld [vmem:[%s4 + $0xe4] sm:$0xf]
      %v1422 = vld [vmem:[%s4 + $0xe8] sm:$0xf]
      %v1423 = vld [vmem:[%s4 + $0xec] sm:$0xf]
      %v1424 = vld [vmem:[%s4 + $0xf0] sm:$0xf]
      %v1425 = vld [vmem:[%s4 + $0xf4] sm:$0xf]
      %v1426 = vld [vmem:[%s4 + $0xf8] sm:$0xf]
      %v1427 = vld [vmem:[%s4 + $0xfc] sm:$0xf]
      %v1428 = vld [vmem:[%s5] sm:$0x1]
      %v1433 = vunpack.c.l.b16 %v1364
      %v1434 = vunpack.c.l.b16 %v1365
      %v1435 = vunpack.c.l.b16 %v1366
      %v1436 = vunpack.c.l.b16 %v1367
      %v1437 = vpack.c.b16 %v1434, %v1433
      %v1438 = vpack.c.b16 %v1436, %v1435
      %vm1441 = vcmask 261120
      %v1443 = vsel %vm1441, %v1332, 0
      %v1446 = vsel %vm1441, %v1333, 0
      %v1449 = vsel %vm1441, %v1334, 0
      %v1452 = vsel %vm1441, %v1335, 0
      %v1455 = vsel %vm1441, %v1336, 0
      %v1458 = vsel %vm1441, %v1337, 0
      %v1461 = vsel %vm1441, %v1338, 0
      %v1464 = vsel %vm1441, %v1339, 0
      %v1467 = vsel %vm1441, %v1340, 0
      %v1470 = vsel %vm1441, %v1341, 0
      %v1473 = vsel %vm1441, %v1342, 0
      %v1476 = vsel %vm1441, %v1343, 0
      %v1479 = vsel %vm1441, %v1344, 0
      %v1482 = vsel %vm1441, %v1345, 0
      %v1485 = vsel %vm1441, %v1346, 0
      %v1488 = vsel %vm1441, %v1347, 0
      %v1491 = vsel %vm1441, %v1348, 0
      %v1494 = vsel %vm1441, %v1349, 0
      %v1497 = vsel %vm1441, %v1350, 0
      %v1500 = vsel %vm1441, %v1351, 0
      %v1503 = vsel %vm1441, %v1352, 0
      %v1506 = vsel %vm1441, %v1353, 0
      %v1509 = vsel %vm1441, %v1354, 0
      %v1512 = vsel %vm1441, %v1355, 0
      %v1515 = vsel %vm1441, %v1356, 0
      %v1518 = vsel %vm1441, %v1357, 0
      %v1521 = vsel %vm1441, %v1358, 0
      %v1524 = vsel %vm1441, %v1359, 0
      %v1527 = vsel %vm1441, %v1360, 0
      %v1530 = vsel %vm1441, %v1361, 0
      %v1533 = vsel %vm1441, %v1362, 0
      %v1536 = vsel %vm1441, %v1363, 0
      %1538 = vmatprep.subr.bf16.mxu0 0
      %1539 = vmatpush1.bf16.msra.mxu0 %v1437
      %1540 = vmatprep.subr.bf16.mxu0 0
      %1541 = vmatpush1.bf16.msra.mxu0 %v1438
      %1542 = vmatprep.subr.bf16.mxu0 0
      %1543 = vmatpush1.bf16.msra.mxu0 0
      %1544 = vmatprep.subr.bf16.mxu0 0
      %1545 = vmatpush1.bf16.msra.mxu0 0
      %1546 = vmatprep.subr.bf16.mxu0 0
      %1547 = vmatpush1.bf16.msra.mxu0 0
      %1548 = vmatprep.subr.bf16.mxu0 0
      %1549 = vmatpush1.bf16.msra.mxu0 0
      %1550 = vmatprep.subr.bf16.mxu0 0
      %1551 = vmatpush1.bf16.msra.mxu0 0
      %1552 = vmatprep.subr.bf16.mxu0 0
      %1553 = vmatpush1.bf16.msra.mxu0 0
      %1554 = vmatprep.subr.bf16.mxu0 0
      %1555 = vmatpush1.bf16.msra.mxu0 0
      %1556 = vmatprep.subr.bf16.mxu0 0
      %1557 = vmatpush1.bf16.msra.mxu0 0
      %1558 = vmatprep.subr.bf16.mxu0 0
      %1559 = vmatpush1.bf16.msra.mxu0 0
      %1560 = vmatprep.subr.bf16.mxu0 0
      %1561 = vmatpush1.bf16.msra.mxu0 0
      %1562 = vmatprep.subr.bf16.mxu0 0
      %1563 = vmatpush1.bf16.msra.mxu0 0
      %1564 = vmatprep.subr.bf16.mxu0 0
      %1565 = vmatpush1.bf16.msra.mxu0 0
      %1566 = vmatprep.subr.bf16.mxu0 0
      %1567 = vmatpush1.bf16.msra.mxu0 0
      %1568 = vmatprep.subr.bf16.mxu0 0
      %1569 = vmatpush1.bf16.msra.mxu0 0
      %1570 = vmatprep.mubr.bf16.mxu0 0
      %1571 = vmatmul.mubr.bf16.gmra.mrb[0].mxu0 %v1443
      %v1572 = vpop.f32.mrb[0].mxu0
      %v1573 = vadd.f32 0.0, %v1572
      %v1574 = vpop.f32.mrb[0].mxu0
      %v1575 = vpop.f32.mrb[0].mxu0
      %v1576 = vpop.f32.mrb[0].mxu0
      %1577 = vmatprep.mubr.bf16.mxu0 0
      %1578 = vmatmul.mubr.bf16.gmra.mrb[0].mxu0 %v1446
      %v1579 = vpop.f32.mrb[0].mxu0
      %v1580 = vadd.f32 0.0, %v1579
      %v1581 = vpop.f32.mrb[0].mxu0
      %v1582 = vpop.f32.mrb[0].mxu0
      %v1583 = vpop.f32.mrb[0].mxu0
      %1584 = vmatprep.mubr.bf16.mxu0 0
      %1585 = vmatmul.mubr.bf16.gmra.mrb[0].mxu0 %v1449
      %v1586 = vpop.f32.mrb[0].mxu0
      %v1587 = vadd.f32 0.0, %v1586
      %v1588 = vpop.f32.mrb[0].mxu0
      %v1589 = vpop.f32.mrb[0].mxu0
      %v1590 = vpop.f32.mrb[0].mxu0
      %1591 = vmatprep.mubr.bf16.mxu0 0
      %1592 = vmatmul.mubr.bf16.gmra.mrb[0].mxu0 %v1452
      %v1593 = vpop.f32.mrb[0].mxu0
      %v1594 = vpop.f32.mrb[0].mxu0
      %v1595 = vpop.f32.mrb[0].mxu0
      %v1596 = vpop.f32.mrb[0].mxu0
      %1597 = vmatprep.mubr.bf16.mxu0 0
      %1598 = vmatmul.mubr.bf16.gmra.mrb[0].mxu0 %v1455
      %v1599 = vpop.f32.mrb[0].mxu0
      %v1600 = vpop.f32.mrb[0].mxu0
      %v1601 = vpop.f32.mrb[0].mxu0
      %v1602 = vpop.f32.mrb[0].mxu0
      %1603 = vmatprep.mubr.bf16.mxu0 0
      %1604 = vmatmul.mubr.bf16.gmra.mrb[0].mxu0 %v1458
      %v1605 = vpop.f32.mrb[0].mxu0
      %v1606 = vpop.f32.mrb[0].mxu0
      %v1607 = vpop.f32.mrb[0].mxu0
      %v1608 = vpop.f32.mrb[0].mxu0
      %1609 = vmatprep.mubr.bf16.mxu0 0
      %1610 = vmatmul.mubr.bf16.gmra.mrb[0].mxu0 %v1461
      %v1611 = vpop.f32.mrb[0].mxu0
      %v1612 = vpop.f32.mrb[0].mxu0
      %v1613 = vpop.f32.mrb[0].mxu0
      %v1614 = vpop.f32.mrb[0].mxu0
      %1615 = vmatprep.mubr.bf16.mxu0 0
      %1616 = vmatmul.mubr.bf16.gmra.mrb[0].mxu0 %v1464
      %v1617 = vpop.f32.mrb[0].mxu0
      %v1618 = vpop.f32.mrb[0].mxu0
      %v1619 = vpop.f32.mrb[0].mxu0
      %v1620 = vpop.f32.mrb[0].mxu0
      %1621 = vmatprep.mubr.bf16.mxu0 0
      %1622 = vmatmul.mubr.bf16.gmra.mrb[0].mxu0 %v1467
      %v1623 = vpop.f32.mrb[0].mxu0
      %v1624 = vadd.f32 0.0, %v1623
      %v1625 = vpop.f32.mrb[0].mxu0
      %v1626 = vpop.f32.mrb[0].mxu0
      %v1627 = vpop.f32.mrb[0].mxu0
      %1628 = vmatprep.mubr.bf16.mxu0 0
      %1629 = vmatmul.mubr.bf16.gmra.mrb[0].mxu0 %v1470
      %v1630 = vpop.f32.mrb[0].mxu0
      %v1631 = vadd.f32 0.0, %v1630
      %v1632 = vpop.f32.mrb[0].mxu0
      %v1633 = vpop.f32.mrb[0].mxu0
      %v1634 = vpop.f32.mrb[0].mxu0
      %1635 = vmatprep.mubr.bf16.mxu0 0
      %1636 = vmatmul.mubr.bf16.gmra.mrb[0].mxu0 %v1473
      %v1637 = vpop.f32.mrb[0].mxu0
      %v1638 = vadd.f32 0.0, %v1637
      %v1639 = vpop.f32.mrb[0].mxu0
      %v1640 = vpop.f32.mrb[0].mxu0
      %v1641 = vpop.f32.mrb[0].mxu0
      %1642 = vmatprep.mubr.bf16.mxu0 0
      %1643 = vmatmul.mubr.bf16.gmra.mrb[0].mxu0 %v1476
      %v1644 = vpop.f32.mrb[0].mxu0
      %v1645 = vpop.f32.mrb[0].mxu0
      %v1646 = vpop.f32.mrb[0].mxu0
      %v1647 = vpop.f32.mrb[0].mxu0
      %1648 = vmatprep.mubr.bf16.mxu0 0
      %1649 = vmatmul.mubr.bf16.gmra.mrb[0].mxu0 %v1479
      %v1650 = vpop.f32.mrb[0].mxu0
      %v1651 = vpop.f32.mrb[0].mxu0
      %v1652 = vpop.f32.mrb[0].mxu0
      %v1653 = vpop.f32.mrb[0].mxu0
      %1654 = vmatprep.mubr.bf16.mxu0 0
      %1655 = vmatmul.mubr.bf16.gmra.mrb[0].mxu0 %v1482
      %v1656 = vpop.f32.mrb[0].mxu0
      %v1657 = vpop.f32.mrb[0].mxu0
      %v1658 = vpop.f32.mrb[0].mxu0
      %v1659 = vpop.f32.mrb[0].mxu0
      %1660 = vmatprep.mubr.bf16.mxu0 0
      %1661 = vmatmul.mubr.bf16.gmra.mrb[0].mxu0 %v1485
      %v1662 = vpop.f32.mrb[0].mxu0
      %v1663 = vpop.f32.mrb[0].mxu0
      %v1664 = vpop.f32.mrb[0].mxu0
      %v1665 = vpop.f32.mrb[0].mxu0
      %1666 = vmatprep.mubr.bf16.mxu0 0
      %1667 = vmatmul.mubr.bf16.gmra.mrb[0].mxu0 %v1488
      %v1668 = vpop.f32.mrb[0].mxu0
      %v1669 = vpop.f32.mrb[0].mxu0
      %v1670 = vpop.f32.mrb[0].mxu0
      %v1671 = vpop.f32.mrb[0].mxu0
      %1672 = vmatprep.mubr.bf16.mxu0 0
      %1673 = vmatmul.mubr.bf16.gmra.mrb[0].mxu0 %v1491
      %v1674 = vpop.f32.mrb[0].mxu0
      %v1675 = vadd.f32 0.0, %v1674
      %v1676 = vpop.f32.mrb[0].mxu0
      %v1677 = vpop.f32.mrb[0].mxu0
      %v1678 = vpop.f32.mrb[0].mxu0
      %1679 = vmatprep.mubr.bf16.mxu0 0
      %1680 = vmatmul.mubr.bf16.gmra.mrb[0].mxu0 %v1494
      %v1681 = vpop.f32.mrb[0].mxu0
      %v1682 = vadd.f32 0.0, %v1681
      %v1683 = vpop.f32.mrb[0].mxu0
      %v1684 = vpop.f32.mrb[0].mxu0
      %v1685 = vpop.f32.mrb[0].mxu0
      %1686 = vmatprep.mubr.bf16.mxu0 0
      %1687 = vmatmul.mubr.bf16.gmra.mrb[0].mxu0 %v1497
      %v1688 = vpop.f32.mrb[0].mxu0
      %v1689 = vadd.f32 0.0, %v1688
      %v1690 = vpop.f32.mrb[0].mxu0
      %v1691 = vpop.f32.mrb[0].mxu0
      %v1692 = vpop.f32.mrb[0].mxu0
      %1693 = vmatprep.mubr.bf16.mxu0 0
      %1694 = vmatmul.mubr.bf16.gmra.mrb[0].mxu0 %v1500
      %v1695 = vpop.f32.mrb[0].mxu0
      %v1696 = vpop.f32.mrb[0].mxu0
      %v1697 = vpop.f32.mrb[0].mxu0
      %v1698 = vpop.f32.mrb[0].mxu0
      %1699 = vmatprep.mubr.bf16.mxu0 0
      %1700 = vmatmul.mubr.bf16.gmra.mrb[0].mxu0 %v1503
      %v1701 = vpop.f32.mrb[0].mxu0
      %v1702 = vpop.f32.mrb[0].mxu0
      %v1703 = vpop.f32.mrb[0].mxu0
      %v1704 = vpop.f32.mrb[0].mxu0
      %1705 = vmatprep.mubr.bf16.mxu0 0
      %1706 = vmatmul.mubr.bf16.gmra.mrb[0].mxu0 %v1506
      %v1707 = vpop.f32.mrb[0].mxu0
      %v1708 = vpop.f32.mrb[0].mxu0
      %v1709 = vpop.f32.mrb[0].mxu0
      %v1710 = vpop.f32.mrb[0].mxu0
      %1711 = vmatprep.mubr.bf16.mxu0 0
      %1712 = vmatmul.mubr.bf16.gmra.mrb[0].mxu0 %v1509
      %v1713 = vpop.f32.mrb[0].mxu0
      %v1714 = vpop.f32.mrb[0].mxu0
      %v1715 = vpop.f32.mrb[0].mxu0
      %v1716 = vpop.f32.mrb[0].mxu0
      %1717 = vmatprep.mubr.bf16.mxu0 0
      %1718 = vmatmul.mubr.bf16.gmra.mrb[0].mxu0 %v1512
      %v1719 = vpop.f32.mrb[0].mxu0
      %v1720 = vpop.f32.mrb[0].mxu0
      %v1721 = vpop.f32.mrb[0].mxu0
      %v1722 = vpop.f32.mrb[0].mxu0
      %1723 = vmatprep.mubr.bf16.mxu0 0
      %1724 = vmatmul.mubr.bf16.gmra.mrb[0].mxu0 %v1515
      %v1725 = vpop.f32.mrb[0].mxu0
      %v1726 = vpop.f32.mrb[0].mxu0
      %v1727 = vpop.f32.mrb[0].mxu0
      %v1728 = vpop.f32.mrb[0].mxu0
      %1729 = vmatprep.mubr.bf16.mxu0 0
      %1730 = vmatmul.mubr.bf16.gmra.mrb[0].mxu0 %v1518
      %v1731 = vpop.f32.mrb[0].mxu0
      %v1732 = vpop.f32.mrb[0].mxu0
      %v1733 = vpop.f32.mrb[0].mxu0
      %v1734 = vpop.f32.mrb[0].mxu0
      %1735 = vmatprep.mubr.bf16.mxu0 0
      %1736 = vmatmul.mubr.bf16.gmra.mrb[0].mxu0 %v1521
      %v1737 = vpop.f32.mrb[0].mxu0
      %v1738 = vpop.f32.mrb[0].mxu0
      %v1739 = vpop.f32.mrb[0].mxu0
      %v1740 = vpop.f32.mrb[0].mxu0
      %1741 = vmatprep.mubr.bf16.mxu0 0
      %1742 = vmatmul.mubr.bf16.gmra.mrb[0].mxu0 %v1524
      %v1743 = vpop.f32.mrb[0].mxu0
      %v1744 = vpop.f32.mrb[0].mxu0
      %v1745 = vpop.f32.mrb[0].mxu0
      %v1746 = vpop.f32.mrb[0].mxu0
      %1747 = vmatprep.mubr.bf16.mxu0 0
      %1748 = vmatmul.mubr.bf16.gmra.mrb[0].mxu0 %v1527
      %v1749 = vpop.f32.mrb[0].mxu0
      %v1750 = vpop.f32.mrb[0].mxu0
      %v1751 = vpop.f32.mrb[0].mxu0
      %v1752 = vpop.f32.mrb[0].mxu0
      %1753 = vmatprep.mubr.bf16.mxu0 0
      %1754 = vmatmul.mubr.bf16.gmra.mrb[0].mxu0 %v1530
      %v1755 = vpop.f32.mrb[0].mxu0
      %v1756 = vpop.f32.mrb[0].mxu0
      %v1757 = vpop.f32.mrb[0].mxu0
      %v1758 = vpop.f32.mrb[0].mxu0
      %1759 = vmatprep.mubr.bf16.mxu0 0
      %1760 = vmatmul.mubr.bf16.gmra.mrb[0].mxu0 %v1533
      %v1761 = vpop.f32.mrb[0].mxu0
      %v1762 = vpop.f32.mrb[0].mxu0
      %v1763 = vpop.f32.mrb[0].mxu0
      %v1764 = vpop.f32.mrb[0].mxu0
      %1765 = vmatprep.mubr.bf16.mxu0 0
      %1766 = vmatmul.mubr.bf16.gmra.mrb[0].mxu0 %v1536
      %v1767 = vpop.f32.mrb[0].mxu0
      %v1768 = vpop.f32.mrb[0].mxu0
      %v1769 = vpop.f32.mrb[0].mxu0
      %v1770 = vpop.f32.mrb[0].mxu0
      %1771 = vdwg.mxu0
      %v1776 = vunpack.c.l.b16 %v1368
      %v1777 = vunpack.c.l.b16 %v1369
      %v1778 = vunpack.c.l.b16 %v1370
      %v1779 = vunpack.c.l.b16 %v1371
      %v1780 = vpack.c.b16 %v1777, %v1776
      %v1781 = vpack.c.b16 %v1779, %v1778
      %1784 = vmatprep.subr.bf16.mxu0 0
      %1785 = vmatpush1.bf16.msra.mxu0 %v1780
      %1786 = vmatprep.subr.bf16.mxu0 0
      %1787 = vmatpush1.bf16.msra.mxu0 %v1781
      %1788 = vmatprep.subr.bf16.mxu0 0
      %1789 = vmatpush1.bf16.msra.mxu0 0
      %1790 = vmatprep.subr.bf16.mxu0 0
      %1791 = vmatpush1.bf16.msra.mxu0 0
      %1792 = vmatprep.subr.bf16.mxu0 0
      %1793 = vmatpush1.bf16.msra.mxu0 0
      %1794 = vmatprep.subr.bf16.mxu0 0
      %1795 = vmatpush1.bf16.msra.mxu0 0
      %1796 = vmatprep.subr.bf16.mxu0 0
      %1797 = vmatpush1.bf16.msra.mxu0 0
      %1798 = vmatprep.subr.bf16.mxu0 0
      %1799 = vmatpush1.bf16.msra.mxu0 0
      %1800 = vmatprep.subr.bf16.mxu0 0
      %1801 = vmatpush1.bf16.msra.mxu0 0
      %1802 = vmatprep.subr.bf16.mxu0 0
      %1803 = vmatpush1.bf16.msra.mxu0 0
      %1804 = vmatprep.subr.bf16.mxu0 0
      %1805 = vmatpush1.bf16.msra.mxu0 0
      %1806 = vmatprep.subr.bf16.mxu0 0
      %1807 = vmatpush1.bf16.msra.mxu0 0
      %1808 = vmatprep.subr.bf16.mxu0 0
      %1809 = vmatpush1.bf16.msra.mxu0 0
      %1810 = vmatprep.subr.bf16.mxu0 0
      %1811 = vmatpush1.bf16.msra.mxu0 0
      %1812 = vmatprep.subr.bf16.mxu0 0
      %1813 = vmatpush1.bf16.msra.mxu0 0
      %1814 = vmatprep.subr.bf16.mxu0 0
      %1815 = vmatpush1.bf16.msra.mxu0 0
      %1816 = vmatprep.mubr.bf16.mxu0 0
      %1817 = vmatmul.mubr.bf16.gmra.mrb[0].mxu0 %v1443
      %v1818 = vpop.f32.mrb[0].mxu0
      %v1819 = vpop.f32.mrb[0].mxu0
      %v1820 = vpop.f32.mrb[0].mxu0
      %v1821 = vadd.f32 0.0, %v1820
      %v1822 = vpop.f32.mrb[0].mxu0
      %1823 = vmatprep.mubr.bf16.mxu0 0
      %1824 = vmatmul.mubr.bf16.gmra.mrb[0].mxu0 %v1446
      %v1825 = vpop.f32.mrb[0].mxu0
      %v1826 = vpop.f32.mrb[0].mxu0
      %v1827 = vpop.f32.mrb[0].mxu0
      %v1828 = vadd.f32 0.0, %v1827
      %v1829 = vpop.f32.mrb[0].mxu0
      %1830 = vmatprep.mubr.bf16.mxu0 0
      %1831 = vmatmul.mubr.bf16.gmra.mrb[0].mxu0 %v1449
      %v1832 = vpop.f32.mrb[0].mxu0
      %v1833 = vpop.f32.mrb[0].mxu0
      %v1834 = vpop.f32.mrb[0].mxu0
      %v1835 = vadd.f32 0.0, %v1834
      %v1836 = vpop.f32.mrb[0].mxu0
      %1837 = vmatprep.mubr.bf16.mxu0 0
      %1838 = vmatmul.mubr.bf16.gmra.mrb[0].mxu0 %v1452
      %v1839 = vpop.f32.mrb[0].mxu0
      %v1840 = vpop.f32.mrb[0].mxu0
      %v1841 = vpop.f32.mrb[0].mxu0
      %v1842 = vpop.f32.mrb[0].mxu0
      %1843 = vmatprep.mubr.bf16.mxu0 0
      %1844 = vmatmul.mubr.bf16.gmra.mrb[0].mxu0 %v1455
      %v1845 = vpop.f32.mrb[0].mxu0
      %v1846 = vpop.f32.mrb[0].mxu0
      %v1847 = vpop.f32.mrb[0].mxu0
      %v1848 = vpop.f32.mrb[0].mxu0
      %1849 = vmatprep.mubr.bf16.mxu0 0
      %1850 = vmatmul.mubr.bf16.gmra.mrb[0].mxu0 %v1458
      %v1851 = vpop.f32.mrb[0].mxu0
      %v1852 = vpop.f32.mrb[0].mxu0
      %v1853 = vpop.f32.mrb[0].mxu0
      %v1854 = vpop.f32.mrb[0].mxu0
      %1855 = vmatprep.mubr.bf16.mxu0 0
      %1856 = vmatmul.mubr.bf16.gmra.mrb[0].mxu0 %v1461
      %v1857 = vpop.f32.mrb[0].mxu0
      %v1858 = vpop.f32.mrb[0].mxu0
      %v1859 = vpop.f32.mrb[0].mxu0
      %v1860 = vpop.f32.mrb[0].mxu0
      %1861 = vmatprep.mubr.bf16.mxu0 0
      %1862 = vmatmul.mubr.bf16.gmra.mrb[0].mxu0 %v1464
      %v1863 = vpop.f32.mrb[0].mxu0
      %v1864 = vpop.f32.mrb[0].mxu0
      %v1865 = vpop.f32.mrb[0].mxu0
      %v1866 = vpop.f32.mrb[0].mxu0
      %1867 = vmatprep.mubr.bf16.mxu0 0
      %1868 = vmatmul.mubr.bf16.gmra.mrb[0].mxu0 %v1467
      %v1869 = vpop.f32.mrb[0].mxu0
      %v1870 = vpop.f32.mrb[0].mxu0
      %v1871 = vpop.f32.mrb[0].mxu0
      %v1872 = vadd.f32 0.0, %v1871
      %v1873 = vpop.f32.mrb[0].mxu0
      %1874 = vmatprep.mubr.bf16.mxu0 0
      %1875 = vmatmul.mubr.bf16.gmra.mrb[0].mxu0 %v1470
      %v1876 = vpop.f32.mrb[0].mxu0
      %v1877 = vpop.f32.mrb[0].mxu0
      %v1878 = vpop.f32.mrb[0].mxu0
      %v1879 = vadd.f32 0.0, %v1878
      %v1880 = vpop.f32.mrb[0].mxu0
      %1881 = vmatprep.mubr.bf16.mxu0 0
      %1882 = vmatmul.mubr.bf16.gmra.mrb[0].mxu0 %v1473
      %v1883 = vpop.f32.mrb[0].mxu0
      %v1884 = vpop.f32.mrb[0].mxu0
      %v1885 = vpop.f32.mrb[0].mxu0
      %v1886 = vadd.f32 0.0, %v1885
      %v1887 = vpop.f32.mrb[0].mxu0
      %1888 = vmatprep.mubr.bf16.mxu0 0
      %1889 = vmatmul.mubr.bf16.gmra.mrb[0].mxu0 %v1476
      %v1890 = vpop.f32.mrb[0].mxu0
      %v1891 = vpop.f32.mrb[0].mxu0
      %v1892 = vpop.f32.mrb[0].mxu0
      %v1893 = vpop.f32.mrb[0].mxu0
      %1894 = vmatprep.mubr.bf16.mxu0 0
      %1895 = vmatmul.mubr.bf16.gmra.mrb[0].mxu0 %v1479
      %v1896 = vpop.f32.mrb[0].mxu0
      %v1897 = vpop.f32.mrb[0].mxu0
      %v1898 = vpop.f32.mrb[0].mxu0
      %v1899 = vpop.f32.mrb[0].mxu0
      %1900 = vmatprep.mubr.bf16.mxu0 0
      %1901 = vmatmul.mubr.bf16.gmra.mrb[0].mxu0 %v1482
      %v1902 = vpop.f32.mrb[0].mxu0
      %v1903 = vpop.f32.mrb[0].mxu0
      %v1904 = vpop.f32.mrb[0].mxu0
      %v1905 = vpop.f32.mrb[0].mxu0
      %1906 = vmatprep.mubr.bf16.mxu0 0
      %1907 = vmatmul.mubr.bf16.gmra.mrb[0].mxu0 %v1485
      %v1908 = vpop.f32.mrb[0].mxu0
      %v1909 = vpop.f32.mrb[0].mxu0
      %v1910 = vpop.f32.mrb[0].mxu0
      %v1911 = vpop.f32.mrb[0].mxu0
      %1912 = vmatprep.mubr.bf16.mxu0 0
      %1913 = vmatmul.mubr.bf16.gmra.mrb[0].mxu0 %v1488
      %v1914 = vpop.f32.mrb[0].mxu0
      %v1915 = vpop.f32.mrb[0].mxu0
      %v1916 = vpop.f32.mrb[0].mxu0
      %v1917 = vpop.f32.mrb[0].mxu0
      %1918 = vmatprep.mubr.bf16.mxu0 0
      %1919 = vmatmul.mubr.bf16.gmra.mrb[0].mxu0 %v1491
      %v1920 = vpop.f32.mrb[0].mxu0
      %v1921 = vpop.f32.mrb[0].mxu0
      %v1922 = vpop.f32.mrb[0].mxu0
      %v1923 = vadd.f32 0.0, %v1922
      %v1924 = vpop.f32.mrb[0].mxu0
      %1925 = vmatprep.mubr.bf16.mxu0 0
      %1926 = vmatmul.mubr.bf16.gmra.mrb[0].mxu0 %v1494
      %v1927 = vpop.f32.mrb[0].mxu0
      %v1928 = vpop.f32.mrb[0].mxu0
      %v1929 = vpop.f32.mrb[0].mxu0
      %v1930 = vadd.f32 0.0, %v1929
      %v1931 = vpop.f32.mrb[0].mxu0
      %1932 = vmatprep.mubr.bf16.mxu0 0
      %1933 = vmatmul.mubr.bf16.gmra.mrb[0].mxu0 %v1497
      %v1934 = vpop.f32.mrb[0].mxu0
      %v1935 = vpop.f32.mrb[0].mxu0
      %v1936 = vpop.f32.mrb[0].mxu0
      %v1937 = vadd.f32 0.0, %v1936
      %v1938 = vpop.f32.mrb[0].mxu0
      %1939 = vmatprep.mubr.bf16.mxu0 0
      %1940 = vmatmul.mubr.bf16.gmra.mrb[0].mxu0 %v1500
      %v1941 = vpop.f32.mrb[0].mxu0
      %v1942 = vpop.f32.mrb[0].mxu0
      %v1943 = vpop.f32.mrb[0].mxu0
      %v1944 = vpop.f32.mrb[0].mxu0
      %1945 = vmatprep.mubr.bf16.mxu0 0
      %1946 = vmatmul.mubr.bf16.gmra.mrb[0].mxu0 %v1503
      %v1947 = vpop.f32.mrb[0].mxu0
      %v1948 = vpop.f32.mrb[0].mxu0
      %v1949 = vpop.f32.mrb[0].mxu0
      %v1950 = vpop.f32.mrb[0].mxu0
      %1951 = vmatprep.mubr.bf16.mxu0 0
      %1952 = vmatmul.mubr.bf16.gmra.mrb[0].mxu0 %v1506
      %v1953 = vpop.f32.mrb[0].mxu0
      %v1954 = vpop.f32.mrb[0].mxu0
      %v1955 = vpop.f32.mrb[0].mxu0
      %v1956 = vpop.f32.mrb[0].mxu0
      %1957 = vmatprep.mubr.bf16.mxu0 0
      %1958 = vmatmul.mubr.bf16.gmra.mrb[0].mxu0 %v1509
      %v1959 = vpop.f32.mrb[0].mxu0
      %v1960 = vpop.f32.mrb[0].mxu0
      %v1961 = vpop.f32.mrb[0].mxu0
      %v1962 = vpop.f32.mrb[0].mxu0
      %1963 = vmatprep.mubr.bf16.mxu0 0
      %1964 = vmatmul.mubr.bf16.gmra.mrb[0].mxu0 %v1512
      %v1965 = vpop.f32.mrb[0].mxu0
      %v1966 = vpop.f32.mrb[0].mxu0
      %v1967 = vpop.f32.mrb[0].mxu0
      %v1968 = vpop.f32.mrb[0].mxu0
      %1969 = vmatprep.mubr.bf16.mxu0 0
      %1970 = vmatmul.mubr.bf16.gmra.mrb[0].mxu0 %v1515
      %v1971 = vpop.f32.mrb[0].mxu0
      %v1972 = vpop.f32.mrb[0].mxu0
      %v1973 = vpop.f32.mrb[0].mxu0
      %v1974 = vpop.f32.mrb[0].mxu0
      %1975 = vmatprep.mubr.bf16.mxu0 0
      %1976 = vmatmul.mubr.bf16.gmra.mrb[0].mxu0 %v1518
      %v1977 = vpop.f32.mrb[0].mxu0
      %v1978 = vpop.f32.mrb[0].mxu0
      %v1979 = vpop.f32.mrb[0].mxu0
      %v1980 = vpop.f32.mrb[0].mxu0
      %1981 = vmatprep.mubr.bf16.mxu0 0
      %1982 = vmatmul.mubr.bf16.gmra.mrb[0].mxu0 %v1521
      %v1983 = vpop.f32.mrb[0].mxu0
      %v1984 = vpop.f32.mrb[0].mxu0
      %v1985 = vpop.f32.mrb[0].mxu0
      %v1986 = vpop.f32.mrb[0].mxu0
      %1987 = vmatprep.mubr.bf16.mxu0 0
      %1988 = vmatmul.mubr.bf16.gmra.mrb[0].mxu0 %v1524
      %v1989 = vpop.f32.mrb[0].mxu0
      %v1990 = vpop.f32.mrb[0].mxu0
      %v1991 = vpop.f32.mrb[0].mxu0
      %v1992 = vpop.f32.mrb[0].mxu0
      %1993 = vmatprep.mubr.bf16.mxu0 0
      %1994 = vmatmul.mubr.bf16.gmra.mrb[0].mxu0 %v1527
      %v1995 = vpop.f32.mrb[0].mxu0
      %v1996 = vpop.f32.mrb[0].mxu0
      %v1997 = vpop.f32.mrb[0].mxu0
      %v1998 = vpop.f32.mrb[0].mxu0
      %1999 = vmatprep.mubr.bf16.mxu0 0
      %2000 = vmatmul.mubr.bf16.gmra.mrb[0].mxu0 %v1530
      %v2001 = vpop.f32.mrb[0].mxu0
      %v2002 = vpop.f32.mrb[0].mxu0
      %v2003 = vpop.f32.mrb[0].mxu0
      %v2004 = vpop.f32.mrb[0].mxu0
      %2005 = vmatprep.mubr.bf16.mxu0 0
      %2006 = vmatmul.mubr.bf16.gmra.mrb[0].mxu0 %v1533
      %v2007 = vpop.f32.mrb[0].mxu0
      %v2008 = vpop.f32.mrb[0].mxu0
      %v2009 = vpop.f32.mrb[0].mxu0
      %v2010 = vpop.f32.mrb[0].mxu0
      %2011 = vmatprep.mubr.bf16.mxu0 0
      %2012 = vmatmul.mubr.bf16.gmra.mrb[0].mxu0 %v1536
      %v2013 = vpop.f32.mrb[0].mxu0
      %v2014 = vpop.f32.mrb[0].mxu0
      %v2015 = vpop.f32.mrb[0].mxu0
      %v2016 = vpop.f32.mrb[0].mxu0
      %2017 = vdwg.mxu0
      %v2018 = vadd.f32 %v1573, %v1821
      %v2019 = vadd.f32 %v1580, %v1828
      %v2020 = vadd.f32 %v1587, %v1835
      %v2021 = vadd.f32 %v1624, %v1872
      %v2022 = vadd.f32 %v1631, %v1879
      %v2023 = vadd.f32 %v1638, %v1886
      %v2024 = vadd.f32 %v1675, %v1923
      %v2025 = vadd.f32 %v1682, %v1930
      %v2026 = vadd.f32 %v1689, %v1937
      %v2031 = vunpack.c.l.b16 %v1372
      %v2032 = vunpack.c.l.b16 %v1373
      %v2033 = vunpack.c.l.b16 %v1374
      %v2034 = vunpack.c.l.b16 %v1375
      %v2035 = vpack.c.b16 %v2032, %v2031
      %v2036 = vpack.c.b16 %v2034, %v2033
      %2039 = vmatprep.subr.bf16.mxu0 0
      %2040 = vmatpush1.bf16.msra.mxu0 %v2035
      %2041 = vmatprep.subr.bf16.mxu0 0
      %2042 = vmatpush1.bf16.msra.mxu0 %v2036
      %2043 = vmatprep.subr.bf16.mxu0 0
      %2044 = vmatpush1.bf16.msra.mxu0 0
      %2045 = vmatprep.subr.bf16.mxu0 0
      %2046 = vmatpush1.bf16.msra.mxu0 0
      %2047 = vmatprep.subr.bf16.mxu0 0
      %2048 = vmatpush1.bf16.msra.mxu0 0
      %2049 = vmatprep.subr.bf16.mxu0 0
      %2050 = vmatpush1.bf16.msra.mxu0 0
      %2051 = vmatprep.subr.bf16.mxu0 0
      %2052 = vmatpush1.bf16.msra.mxu0 0
      %2053 = vmatprep.subr.bf16.mxu0 0
      %2054 = vmatpush1.bf16.msra.mxu0 0
      %2055 = vmatprep.subr.bf16.mxu0 0
      %2056 = vmatpush1.bf16.msra.mxu0 0
      %2057 = vmatprep.subr.bf16.mxu0 0
      %2058 = vmatpush1.bf16.msra.mxu0 0
      %2059 = vmatprep.subr.bf16.mxu0 0
      %2060 = vmatpush1.bf16.msra.mxu0 0
      %2061 = vmatprep.subr.bf16.mxu0 0
      %2062 = vmatpush1.bf16.msra.mxu0 0
      %2063 = vmatprep.subr.bf16.mxu0 0
      %2064 = vmatpush1.bf16.msra.mxu0 0
      %2065 = vmatprep.subr.bf16.mxu0 0
      %2066 = vmatpush1.bf16.msra.mxu0 0
      %2067 = vmatprep.subr.bf16.mxu0 0
      %2068 = vmatpush1.bf16.msra.mxu0 0
      %2069 = vmatprep.subr.bf16.mxu0 0
      %2070 = vmatpush1.bf16.msra.mxu0 0
      %2071 = vmatprep.mubr.bf16.mxu0 0
      %2072 = vmatmul.mubr.bf16.gmra.mrb[0].mxu0 %v1443
      %v2073 = vpop.f32.mrb[0].mxu0
      %v2074 = vpop.f32.mrb[0].mxu0
      %v2075 = vpop.f32.mrb[0].mxu0
      %v2076 = vpop.f32.mrb[0].mxu0
      %2077 = vmatprep.mubr.bf16.mxu0 0
      %2078 = vmatmul.mubr.bf16.gmra.mrb[0].mxu0 %v1446
      %v2079 = vpop.f32.mrb[0].mxu0
      %v2080 = vadd.f32 0.0, %v2079
      %v2081 = vpop.f32.mrb[0].mxu0
      %v2082 = vpop.f32.mrb[0].mxu0
      %v2083 = vpop.f32.mrb[0].mxu0
      %2084 = vmatprep.mubr.bf16.mxu0 0
      %2085 = vmatmul.mubr.bf16.gmra.mrb[0].mxu0 %v1449
      %v2086 = vpop.f32.mrb[0].mxu0
      %v2087 = vadd.f32 0.0, %v2086
      %v2088 = vpop.f32.mrb[0].mxu0
      %v2089 = vpop.f32.mrb[0].mxu0
      %v2090 = vpop.f32.mrb[0].mxu0
      %2091 = vmatprep.mubr.bf16.mxu0 0
      %2092 = vmatmul.mubr.bf16.gmra.mrb[0].mxu0 %v1452
      %v2093 = vpop.f32.mrb[0].mxu0
      %v2094 = vadd.f32 0.0, %v2093
      %v2095 = vpop.f32.mrb[0].mxu0
      %v2096 = vpop.f32.mrb[0].mxu0
      %v2097 = vpop.f32.mrb[0].mxu0
      %2098 = vmatprep.mubr.bf16.mxu0 0
      %2099 = vmatmul.mubr.bf16.gmra.mrb[0].mxu0 %v1455
      %v2100 = vpop.f32.mrb[0].mxu0
      %v2101 = vpop.f32.mrb[0].mxu0
      %v2102 = vpop.f32.mrb[0].mxu0
      %v2103 = vpop.f32.mrb[0].mxu0
      %2104 = vmatprep.mubr.bf16.mxu0 0
      %2105 = vmatmul.mubr.bf16.gmra.mrb[0].mxu0 %v1458
      %v2106 = vpop.f32.mrb[0].mxu0
      %v2107 = vpop.f32.mrb[0].mxu0
      %v2108 = vpop.f32.mrb[0].mxu0
      %v2109 = vpop.f32.mrb[0].mxu0
      %2110 = vmatprep.mubr.bf16.mxu0 0
      %2111 = vmatmul.mubr.bf16.gmra.mrb[0].mxu0 %v1461
      %v2112 = vpop.f32.mrb[0].mxu0
      %v2113 = vpop.f32.mrb[0].mxu0
      %v2114 = vpop.f32.mrb[0].mxu0
      %v2115 = vpop.f32.mrb[0].mxu0
      %2116 = vmatprep.mubr.bf16.mxu0 0
      %2117 = vmatmul.mubr.bf16.gmra.mrb[0].mxu0 %v1464
      %v2118 = vpop.f32.mrb[0].mxu0
      %v2119 = vpop.f32.mrb[0].mxu0
      %v2120 = vpop.f32.mrb[0].mxu0
      %v2121 = vpop.f32.mrb[0].mxu0
      %2122 = vmatprep.mubr.bf16.mxu0 0
      %2123 = vmatmul.mubr.bf16.gmra.mrb[0].mxu0 %v1467
      %v2124 = vpop.f32.mrb[0].mxu0
      %v2125 = vpop.f32.mrb[0].mxu0
      %v2126 = vpop.f32.mrb[0].mxu0
      %v2127 = vpop.f32.mrb[0].mxu0
      %2128 = vmatprep.mubr.bf16.mxu0 0
      %2129 = vmatmul.mubr.bf16.gmra.mrb[0].mxu0 %v1470
      %v2130 = vpop.f32.mrb[0].mxu0
      %v2131 = vadd.f32 0.0, %v2130
      %v2132 = vpop.f32.mrb[0].mxu0
      %v2133 = vpop.f32.mrb[0].mxu0
      %v2134 = vpop.f32.mrb[0].mxu0
      %2135 = vmatprep.mubr.bf16.mxu0 0
      %2136 = vmatmul.mubr.bf16.gmra.mrb[0].mxu0 %v1473
      %v2137 = vpop.f32.mrb[0].mxu0
      %v2138 = vadd.f32 0.0, %v2137
      %v2139 = vpop.f32.mrb[0].mxu0
      %v2140 = vpop.f32.mrb[0].mxu0
      %v2141 = vpop.f32.mrb[0].mxu0
      %2142 = vmatprep.mubr.bf16.mxu0 0
      %2143 = vmatmul.mubr.bf16.gmra.mrb[0].mxu0 %v1476
      %v2144 = vpop.f32.mrb[0].mxu0
      %v2145 = vadd.f32 0.0, %v2144
      %v2146 = vpop.f32.mrb[0].mxu0
      %v2147 = vpop.f32.mrb[0].mxu0
      %v2148 = vpop.f32.mrb[0].mxu0
      %2149 = vmatprep.mubr.bf16.mxu0 0
      %2150 = vmatmul.mubr.bf16.gmra.mrb[0].mxu0 %v1479
      %v2151 = vpop.f32.mrb[0].mxu0
      %v2152 = vpop.f32.mrb[0].mxu0
      %v2153 = vpop.f32.mrb[0].mxu0
      %v2154 = vpop.f32.mrb[0].mxu0
      %2155 = vmatprep.mubr.bf16.mxu0 0
      %2156 = vmatmul.mubr.bf16.gmra.mrb[0].mxu0 %v1482
      %v2157 = vpop.f32.mrb[0].mxu0
      %v2158 = vpop.f32.mrb[0].mxu0
      %v2159 = vpop.f32.mrb[0].mxu0
      %v2160 = vpop.f32.mrb[0].mxu0
      %2161 = vmatprep.mubr.bf16.mxu0 0
      %2162 = vmatmul.mubr.bf16.gmra.mrb[0].mxu0 %v1485
      %v2163 = vpop.f32.mrb[0].mxu0
      %v2164 = vpop.f32.mrb[0].mxu0
      %v2165 = vpop.f32.mrb[0].mxu0
      %v2166 = vpop.f32.mrb[0].mxu0
      %2167 = vmatprep.mubr.bf16.mxu0 0
      %2168 = vmatmul.mubr.bf16.gmra.mrb[0].mxu0 %v1488
      %v2169 = vpop.f32.mrb[0].mxu0
      %v2170 = vpop.f32.mrb[0].mxu0
      %v2171 = vpop.f32.mrb[0].mxu0
      %v2172 = vpop.f32.mrb[0].mxu0
      %2173 = vmatprep.mubr.bf16.mxu0 0
      %2174 = vmatmul.mubr.bf16.gmra.mrb[0].mxu0 %v1491
      %v2175 = vpop.f32.mrb[0].mxu0
      %v2176 = vpop.f32.mrb[0].mxu0
      %v2177 = vpop.f32.mrb[0].mxu0
      %v2178 = vpop.f32.mrb[0].mxu0
      %2179 = vmatprep.mubr.bf16.mxu0 0
      %2180 = vmatmul.mubr.bf16.gmra.mrb[0].mxu0 %v1494
      %v2181 = vpop.f32.mrb[0].mxu0
      %v2182 = vadd.f32 0.0, %v2181
      %v2183 = vpop.f32.mrb[0].mxu0
      %v2184 = vpop.f32.mrb[0].mxu0
      %v2185 = vpop.f32.mrb[0].mxu0
      %2186 = vmatprep.mubr.bf16.mxu0 0
      %2187 = vmatmul.mubr.bf16.gmra.mrb[0].mxu0 %v1497
      %v2188 = vpop.f32.mrb[0].mxu0
      %v2189 = vadd.f32 0.0, %v2188
      %v2190 = vpop.f32.mrb[0].mxu0
      %v2191 = vpop.f32.mrb[0].mxu0
      %v2192 = vpop.f32.mrb[0].mxu0
      %2193 = vmatprep.mubr.bf16.mxu0 0
      %2194 = vmatmul.mubr.bf16.gmra.mrb[0].mxu0 %v1500
      %v2195 = vpop.f32.mrb[0].mxu0
      %v2196 = vadd.f32 0.0, %v2195
      %v2197 = vpop.f32.mrb[0].mxu0
      %v2198 = vpop.f32.mrb[0].mxu0
      %v2199 = vpop.f32.mrb[0].mxu0
      %2200 = vmatprep.mubr.bf16.mxu0 0
      %2201 = vmatmul.mubr.bf16.gmra.mrb[0].mxu0 %v1503
      %v2202 = vpop.f32.mrb[0].mxu0
      %v2203 = vpop.f32.mrb[0].mxu0
      %v2204 = vpop.f32.mrb[0].mxu0
      %v2205 = vpop.f32.mrb[0].mxu0
      %2206 = vmatprep.mubr.bf16.mxu0 0
      %2207 = vmatmul.mubr.bf16.gmra.mrb[0].mxu0 %v1506
      %v2208 = vpop.f32.mrb[0].mxu0
      %v2209 = vpop.f32.mrb[0].mxu0
      %v2210 = vpop.f32.mrb[0].mxu0
      %v2211 = vpop.f32.mrb[0].mxu0
      %2212 = vmatprep.mubr.bf16.mxu0 0
      %2213 = vmatmul.mubr.bf16.gmra.mrb[0].mxu0 %v1509
      %v2214 = vpop.f32.mrb[0].mxu0
      %v2215 = vpop.f32.mrb[0].mxu0
      %v2216 = vpop.f32.mrb[0].mxu0
      %v2217 = vpop.f32.mrb[0].mxu0
      %2218 = vmatprep.mubr.bf16.mxu0 0
      %2219 = vmatmul.mubr.bf16.gmra.mrb[0].mxu0 %v1512
      %v2220 = vpop.f32.mrb[0].mxu0
      %v2221 = vpop.f32.mrb[0].mxu0
      %v2222 = vpop.f32.mrb[0].mxu0
      %v2223 = vpop.f32.mrb[0].mxu0
      %2224 = vmatprep.mubr.bf16.mxu0 0
      %2225 = vmatmul.mubr.bf16.gmra.mrb[0].mxu0 %v1515
      %v2226 = vpop.f32.mrb[0].mxu0
      %v2227 = vpop.f32.mrb[0].mxu0
      %v2228 = vpop.f32.mrb[0].mxu0
      %v2229 = vpop.f32.mrb[0].mxu0
      %2230 = vmatprep.mubr.bf16.mxu0 0
      %2231 = vmatmul.mubr.bf16.gmra.mrb[0].mxu0 %v1518
      %v2232 = vpop.f32.mrb[0].mxu0
      %v2233 = vpop.f32.mrb[0].mxu0
      %v2234 = vpop.f32.mrb[0].mxu0
      %v2235 = vpop.f32.mrb[0].mxu0
      %2236 = vmatprep.mubr.bf16.mxu0 0
      %2237 = vmatmul.mubr.bf16.gmra.mrb[0].mxu0 %v1521
      %v2238 = vpop.f32.mrb[0].mxu0
      %v2239 = vpop.f32.mrb[0].mxu0
      %v2240 = vpop.f32.mrb[0].mxu0
      %v2241 = vpop.f32.mrb[0].mxu0
      %2242 = vmatprep.mubr.bf16.mxu0 0
      %2243 = vmatmul.mubr.bf16.gmra.mrb[0].mxu0 %v1524
      %v2244 = vpop.f32.mrb[0].mxu0
      %v2245 = vpop.f32.mrb[0].mxu0
      %v2246 = vpop.f32.mrb[0].mxu0
      %v2247 = vpop.f32.mrb[0].mxu0
      %2248 = vmatprep.mubr.bf16.mxu0 0
      %2249 = vmatmul.mubr.bf16.gmra.mrb[0].mxu0 %v1527
      %v2250 = vpop.f32.mrb[0].mxu0
      %v2251 = vpop.f32.mrb[0].mxu0
      %v2252 = vpop.f32.mrb[0].mxu0
      %v2253 = vpop.f32.mrb[0].mxu0
      %2254 = vmatprep.mubr.bf16.mxu0 0
      %2255 = vmatmul.mubr.bf16.gmra.mrb[0].mxu0 %v1530
      %v2256 = vpop.f32.mrb[0].mxu0
      %v2257 = vpop.f32.mrb[0].mxu0
      %v2258 = vpop.f32.mrb[0].mxu0
      %v2259 = vpop.f32.mrb[0].mxu0
      %2260 = vmatprep.mubr.bf16.mxu0 0
      %2261 = vmatmul.mubr.bf16.gmra.mrb[0].mxu0 %v1533
      %v2262 = vpop.f32.mrb[0].mxu0
      %v2263 = vpop.f32.mrb[0].mxu0
      %v2264 = vpop.f32.mrb[0].mxu0
      %v2265 = vpop.f32.mrb[0].mxu0
      %2266 = vmatprep.mubr.bf16.mxu0 0
      %2267 = vmatmul.mubr.bf16.gmra.mrb[0].mxu0 %v1536
      %v2268 = vpop.f32.mrb[0].mxu0
      %v2269 = vpop.f32.mrb[0].mxu0
      %v2270 = vpop.f32.mrb[0].mxu0
      %v2271 = vpop.f32.mrb[0].mxu0
      %2272 = vdwg.mxu0
      %v2273 = vadd.f32 %v2018, %v2080
      %v2274 = vadd.f32 %v2019, %v2087
      %v2275 = vadd.f32 %v2020, %v2094
      %v2276 = vadd.f32 %v2021, %v2131
      %v2277 = vadd.f32 %v2022, %v2138
      %v2278 = vadd.f32 %v2023, %v2145
      %v2279 = vadd.f32 %v2024, %v2182
      %v2280 = vadd.f32 %v2025, %v2189
      %v2281 = vadd.f32 %v2026, %v2196
      %v2286 = vunpack.c.l.b16 %v1376
      %v2287 = vunpack.c.l.b16 %v1377
      %v2288 = vunpack.c.l.b16 %v1378
      %v2289 = vunpack.c.l.b16 %v1379
      %v2290 = vpack.c.b16 %v2287, %v2286
      %v2291 = vpack.c.b16 %v2289, %v2288
      %2294 = vmatprep.subr.bf16.mxu0 0
      %2295 = vmatpush1.bf16.msra.mxu0 %v2290
      %2296 = vmatprep.subr.bf16.mxu0 0
      %2297 = vmatpush1.bf16.msra.mxu0 %v2291
      %2298 = vmatprep.subr.bf16.mxu0 0
      %2299 = vmatpush1.bf16.msra.mxu0 0
      %2300 = vmatprep.subr.bf16.mxu0 0
      %2301 = vmatpush1.bf16.msra.mxu0 0
      %2302 = vmatprep.subr.bf16.mxu0 0
      %2303 = vmatpush1.bf16.msra.mxu0 0
      %2304 = vmatprep.subr.bf16.mxu0 0
      %2305 = vmatpush1.bf16.msra.mxu0 0
      %2306 = vmatprep.subr.bf16.mxu0 0
      %2307 = vmatpush1.bf16.msra.mxu0 0
      %2308 = vmatprep.subr.bf16.mxu0 0
      %2309 = vmatpush1.bf16.msra.mxu0 0
      %2310 = vmatprep.subr.bf16.mxu0 0
      %2311 = vmatpush1.bf16.msra.mxu0 0
      %2312 = vmatprep.subr.bf16.mxu0 0
      %2313 = vmatpush1.bf16.msra.mxu0 0
      %2314 = vmatprep.subr.bf16.mxu0 0
      %2315 = vmatpush1.bf16.msra.mxu0 0
      %2316 = vmatprep.subr.bf16.mxu0 0
      %2317 = vmatpush1.bf16.msra.mxu0 0
      %2318 = vmatprep.subr.bf16.mxu0 0
      %2319 = vmatpush1.bf16.msra.mxu0 0
      %2320 = vmatprep.subr.bf16.mxu0 0
      %2321 = vmatpush1.bf16.msra.mxu0 0
      %2322 = vmatprep.subr.bf16.mxu0 0
      %2323 = vmatpush1.bf16.msra.mxu0 0
      %2324 = vmatprep.subr.bf16.mxu0 0
      %2325 = vmatpush1.bf16.msra.mxu0 0
      %2326 = vmatprep.mubr.bf16.mxu0 0
      %2327 = vmatmul.mubr.bf16.gmra.mrb[0].mxu0 %v1443
      %v2328 = vpop.f32.mrb[0].mxu0
      %v2329 = vpop.f32.mrb[0].mxu0
      %v2330 = vpop.f32.mrb[0].mxu0
      %v2331 = vpop.f32.mrb[0].mxu0
      %2332 = vmatprep.mubr.bf16.mxu0 0
      %2333 = vmatmul.mubr.bf16.gmra.mrb[0].mxu0 %v1446
      %v2334 = vpop.f32.mrb[0].mxu0
      %v2335 = vpop.f32.mrb[0].mxu0
      %v2336 = vpop.f32.mrb[0].mxu0
      %v2337 = vadd.f32 0.0, %v2336
      %v2338 = vpop.f32.mrb[0].mxu0
      %2339 = vmatprep.mubr.bf16.mxu0 0
      %2340 = vmatmul.mubr.bf16.gmra.mrb[0].mxu0 %v1449
      %v2341 = vpop.f32.mrb[0].mxu0
      %v2342 = vpop.f32.mrb[0].mxu0
      %v2343 = vpop.f32.mrb[0].mxu0
      %v2344 = vadd.f32 0.0, %v2343
      %v2345 = vpop.f32.mrb[0].mxu0
      %2346 = vmatprep.mubr.bf16.mxu0 0
      %2347 = vmatmul.mubr.bf16.gmra.mrb[0].mxu0 %v1452
      %v2348 = vpop.f32.mrb[0].mxu0
      %v2349 = vpop.f32.mrb[0].mxu0
      %v2350 = vpop.f32.mrb[0].mxu0
      %v2351 = vadd.f32 0.0, %v2350
      %v2352 = vpop.f32.mrb[0].mxu0
      %2353 = vmatprep.mubr.bf16.mxu0 0
      %2354 = vmatmul.mubr.bf16.gmra.mrb[0].mxu0 %v1455
      %v2355 = vpop.f32.mrb[0].mxu0
      %v2356 = vpop.f32.mrb[0].mxu0
      %v2357 = vpop.f32.mrb[0].mxu0
      %v2358 = vpop.f32.mrb[0].mxu0
      %2359 = vmatprep.mubr.bf16.mxu0 0
      %2360 = vmatmul.mubr.bf16.gmra.mrb[0].mxu0 %v1458
      %v2361 = vpop.f32.mrb[0].mxu0
      %v2362 = vpop.f32.mrb[0].mxu0
      %v2363 = vpop.f32.mrb[0].mxu0
      %v2364 = vpop.f32.mrb[0].mxu0
      %2365 = vmatprep.mubr.bf16.mxu0 0
      %2366 = vmatmul.mubr.bf16.gmra.mrb[0].mxu0 %v1461
      %v2367 = vpop.f32.mrb[0].mxu0
      %v2368 = vpop.f32.mrb[0].mxu0
      %v2369 = vpop.f32.mrb[0].mxu0
      %v2370 = vpop.f32.mrb[0].mxu0
      %2371 = vmatprep.mubr.bf16.mxu0 0
      %2372 = vmatmul.mubr.bf16.gmra.mrb[0].mxu0 %v1464
      %v2373 = vpop.f32.mrb[0].mxu0
      %v2374 = vpop.f32.mrb[0].mxu0
      %v2375 = vpop.f32.mrb[0].mxu0
      %v2376 = vpop.f32.mrb[0].mxu0
      %2377 = vmatprep.mubr.bf16.mxu0 0
      %2378 = vmatmul.mubr.bf16.gmra.mrb[0].mxu0 %v1467
      %v2379 = vpop.f32.mrb[0].mxu0
      %v2380 = vpop.f32.mrb[0].mxu0
      %v2381 = vpop.f32.mrb[0].mxu0
      %v2382 = vpop.f32.mrb[0].mxu0
      %2383 = vmatprep.mubr.bf16.mxu0 0
      %2384 = vmatmul.mubr.bf16.gmra.mrb[0].mxu0 %v1470
      %v2385 = vpop.f32.mrb[0].mxu0
      %v2386 = vpop.f32.mrb[0].mxu0
      %v2387 = vpop.f32.mrb[0].mxu0
      %v2388 = vadd.f32 0.0, %v2387
      %v2389 = vpop.f32.mrb[0].mxu0
      %2390 = vmatprep.mubr.bf16.mxu0 0
      %2391 = vmatmul.mubr.bf16.gmra.mrb[0].mxu0 %v1473
      %v2392 = vpop.f32.mrb[0].mxu0
      %v2393 = vpop.f32.mrb[0].mxu0
      %v2394 = vpop.f32.mrb[0].mxu0
      %v2395 = vadd.f32 0.0, %v2394
      %v2396 = vpop.f32.mrb[0].mxu0
      %2397 = vmatprep.mubr.bf16.mxu0 0
      %2398 = vmatmul.mubr.bf16.gmra.mrb[0].mxu0 %v1476
      %v2399 = vpop.f32.mrb[0].mxu0
      %v2400 = vpop.f32.mrb[0].mxu0
      %v2401 = vpop.f32.mrb[0].mxu0
      %v2402 = vadd.f32 0.0, %v2401
      %v2403 = vpop.f32.mrb[0].mxu0
      %2404 = vmatprep.mubr.bf16.mxu0 0
      %2405 = vmatmul.mubr.bf16.gmra.mrb[0].mxu0 %v1479
      %v2406 = vpop.f32.mrb[0].mxu0
      %v2407 = vpop.f32.mrb[0].mxu0
      %v2408 = vpop.f32.mrb[0].mxu0
      %v2409 = vpop.f32.mrb[0].mxu0
      %2410 = vmatprep.mubr.bf16.mxu0 0
      %2411 = vmatmul.mubr.bf16.gmra.mrb[0].mxu0 %v1482
      %v2412 = vpop.f32.mrb[0].mxu0
      %v2413 = vpop.f32.mrb[0].mxu0
      %v2414 = vpop.f32.mrb[0].mxu0
      %v2415 = vpop.f32.mrb[0].mxu0
      %2416 = vmatprep.mubr.bf16.mxu0 0
      %2417 = vmatmul.mubr.bf16.gmra.mrb[0].mxu0 %v1485
      %v2418 = vpop.f32.mrb[0].mxu0
      %v2419 = vpop.f32.mrb[0].mxu0
      %v2420 = vpop.f32.mrb[0].mxu0
      %v2421 = vpop.f32.mrb[0].mxu0
      %2422 = vmatprep.mubr.bf16.mxu0 0
      %2423 = vmatmul.mubr.bf16.gmra.mrb[0].mxu0 %v1488
      %v2424 = vpop.f32.mrb[0].mxu0
      %v2425 = vpop.f32.mrb[0].mxu0
      %v2426 = vpop.f32.mrb[0].mxu0
      %v2427 = vpop.f32.mrb[0].mxu0
      %2428 = vmatprep.mubr.bf16.mxu0 0
      %2429 = vmatmul.mubr.bf16.gmra.mrb[0].mxu0 %v1491
      %v2430 = vpop.f32.mrb[0].mxu0
      %v2431 = vpop.f32.mrb[0].mxu0
      %v2432 = vpop.f32.mrb[0].mxu0
      %v2433 = vpop.f32.mrb[0].mxu0
      %2434 = vmatprep.mubr.bf16.mxu0 0
      %2435 = vmatmul.mubr.bf16.gmra.mrb[0].mxu0 %v1494
      %v2436 = vpop.f32.mrb[0].mxu0
      %v2437 = vpop.f32.mrb[0].mxu0
      %v2438 = vpop.f32.mrb[0].mxu0
      %v2439 = vadd.f32 0.0, %v2438
      %v2440 = vpop.f32.mrb[0].mxu0
      %2441 = vmatprep.mubr.bf16.mxu0 0
      %2442 = vmatmul.mubr.bf16.gmra.mrb[0].mxu0 %v1497
      %v2443 = vpop.f32.mrb[0].mxu0
      %v2444 = vpop.f32.mrb[0].mxu0
      %v2445 = vpop.f32.mrb[0].mxu0
      %v2446 = vadd.f32 0.0, %v2445
      %v2447 = vpop.f32.mrb[0].mxu0
      %2448 = vmatprep.mubr.bf16.mxu0 0
      %2449 = vmatmul.mubr.bf16.gmra.mrb[0].mxu0 %v1500
      %v2450 = vpop.f32.mrb[0].mxu0
      %v2451 = vpop.f32.mrb[0].mxu0
      %v2452 = vpop.f32.mrb[0].mxu0
      %v2453 = vadd.f32 0.0, %v2452
      %v2454 = vpop.f32.mrb[0].mxu0
      %2455 = vmatprep.mubr.bf16.mxu0 0
      %2456 = vmatmul.mubr.bf16.gmra.mrb[0].mxu0 %v1503
      %v2457 = vpop.f32.mrb[0].mxu0
      %v2458 = vpop.f32.mrb[0].mxu0
      %v2459 = vpop.f32.mrb[0].mxu0
      %v2460 = vpop.f32.mrb[0].mxu0
      %2461 = vmatprep.mubr.bf16.mxu0 0
      %2462 = vmatmul.mubr.bf16.gmra.mrb[0].mxu0 %v1506
      %v2463 = vpop.f32.mrb[0].mxu0
      %v2464 = vpop.f32.mrb[0].mxu0
      %v2465 = vpop.f32.mrb[0].mxu0
      %v2466 = vpop.f32.mrb[0].mxu0
      %2467 = vmatprep.mubr.bf16.mxu0 0
      %2468 = vmatmul.mubr.bf16.gmra.mrb[0].mxu0 %v1509
      %v2469 = vpop.f32.mrb[0].mxu0
      %v2470 = vpop.f32.mrb[0].mxu0
      %v2471 = vpop.f32.mrb[0].mxu0
      %v2472 = vpop.f32.mrb[0].mxu0
      %2473 = vmatprep.mubr.bf16.mxu0 0
      %2474 = vmatmul.mubr.bf16.gmra.mrb[0].mxu0 %v1512
      %v2475 = vpop.f32.mrb[0].mxu0
      %v2476 = vpop.f32.mrb[0].mxu0
      %v2477 = vpop.f32.mrb[0].mxu0
      %v2478 = vpop.f32.mrb[0].mxu0
      %2479 = vmatprep.mubr.bf16.mxu0 0
      %2480 = vmatmul.mubr.bf16.gmra.mrb[0].mxu0 %v1515
      %v2481 = vpop.f32.mrb[0].mxu0
      %v2482 = vpop.f32.mrb[0].mxu0
      %v2483 = vpop.f32.mrb[0].mxu0
      %v2484 = vpop.f32.mrb[0].mxu0
      %2485 = vmatprep.mubr.bf16.mxu0 0
      %2486 = vmatmul.mubr.bf16.gmra.mrb[0].mxu0 %v1518
      %v2487 = vpop.f32.mrb[0].mxu0
      %v2488 = vpop.f32.mrb[0].mxu0
      %v2489 = vpop.f32.mrb[0].mxu0
      %v2490 = vpop.f32.mrb[0].mxu0
      %2491 = vmatprep.mubr.bf16.mxu0 0
      %2492 = vmatmul.mubr.bf16.gmra.mrb[0].mxu0 %v1521
      %v2493 = vpop.f32.mrb[0].mxu0
      %v2494 = vpop.f32.mrb[0].mxu0
      %v2495 = vpop.f32.mrb[0].mxu0
      %v2496 = vpop.f32.mrb[0].mxu0
      %2497 = vmatprep.mubr.bf16.mxu0 0
      %2498 = vmatmul.mubr.bf16.gmra.mrb[0].mxu0 %v1524
      %v2499 = vpop.f32.mrb[0].mxu0
      %v2500 = vpop.f32.mrb[0].mxu0
      %v2501 = vpop.f32.mrb[0].mxu0
      %v2502 = vpop.f32.mrb[0].mxu0
      %2503 = vmatprep.mubr.bf16.mxu0 0
      %2504 = vmatmul.mubr.bf16.gmra.mrb[0].mxu0 %v1527
      %v2505 = vpop.f32.mrb[0].mxu0
      %v2506 = vpop.f32.mrb[0].mxu0
      %v2507 = vpop.f32.mrb[0].mxu0
      %v2508 = vpop.f32.mrb[0].mxu0
      %2509 = vmatprep.mubr.bf16.mxu0 0
      %2510 = vmatmul.mubr.bf16.gmra.mrb[0].mxu0 %v1530
      %v2511 = vpop.f32.mrb[0].mxu0
      %v2512 = vpop.f32.mrb[0].mxu0
      %v2513 = vpop.f32.mrb[0].mxu0
      %v2514 = vpop.f32.mrb[0].mxu0
      %2515 = vmatprep.mubr.bf16.mxu0 0
      %2516 = vmatmul.mubr.bf16.gmra.mrb[0].mxu0 %v1533
      %v2517 = vpop.f32.mrb[0].mxu0
      %v2518 = vpop.f32.mrb[0].mxu0
      %v2519 = vpop.f32.mrb[0].mxu0
      %v2520 = vpop.f32.mrb[0].mxu0
      %2521 = vmatprep.mubr.bf16.mxu0 0
      %2522 = vmatmul.mubr.bf16.gmra.mrb[0].mxu0 %v1536
      %v2523 = vpop.f32.mrb[0].mxu0
      %v2524 = vpop.f32.mrb[0].mxu0
      %v2525 = vpop.f32.mrb[0].mxu0
      %v2526 = vpop.f32.mrb[0].mxu0
      %2527 = vdwg.mxu0
      %v2528 = vadd.f32 %v2273, %v2337
      %v2529 = vadd.f32 %v2274, %v2344
      %v2530 = vadd.f32 %v2275, %v2351
      %v2531 = vadd.f32 %v2276, %v2388
      %v2532 = vadd.f32 %v2277, %v2395
      %v2533 = vadd.f32 %v2278, %v2402
      %v2534 = vadd.f32 %v2279, %v2439
      %v2535 = vadd.f32 %v2280, %v2446
      %v2536 = vadd.f32 %v2281, %v2453
      %v2541 = vunpack.c.l.b16 %v1380
      %v2542 = vunpack.c.l.b16 %v1381
      %v2543 = vunpack.c.l.b16 %v1382
      %v2544 = vunpack.c.l.b16 %v1383
      %v2545 = vpack.c.b16 %v2542, %v2541
      %v2546 = vpack.c.b16 %v2544, %v2543
      %2549 = vmatprep.subr.bf16.mxu0 0
      %2550 = vmatpush1.bf16.msra.mxu0 %v2545
      %2551 = vmatprep.subr.bf16.mxu0 0
      %2552 = vmatpush1.bf16.msra.mxu0 %v2546
      %2553 = vmatprep.subr.bf16.mxu0 0
      %2554 = vmatpush1.bf16.msra.mxu0 0
      %2555 = vmatprep.subr.bf16.mxu0 0
      %2556 = vmatpush1.bf16.msra.mxu0 0
      %2557 = vmatprep.subr.bf16.mxu0 0
      %2558 = vmatpush1.bf16.msra.mxu0 0
      %2559 = vmatprep.subr.bf16.mxu0 0
      %2560 = vmatpush1.bf16.msra.mxu0 0
      %2561 = vmatprep.subr.bf16.mxu0 0
      %2562 = vmatpush1.bf16.msra.mxu0 0
      %2563 = vmatprep.subr.bf16.mxu0 0
      %2564 = vmatpush1.bf16.msra.mxu0 0
      %2565 = vmatprep.subr.bf16.mxu0 0
      %2566 = vmatpush1.bf16.msra.mxu0 0
      %2567 = vmatprep.subr.bf16.mxu0 0
      %2568 = vmatpush1.bf16.msra.mxu0 0
      %2569 = vmatprep.subr.bf16.mxu0 0
      %2570 = vmatpush1.bf16.msra.mxu0 0
      %2571 = vmatprep.subr.bf16.mxu0 0
      %2572 = vmatpush1.bf16.msra.mxu0 0
      %2573 = vmatprep.subr.bf16.mxu0 0
      %2574 = vmatpush1.bf16.msra.mxu0 0
      %2575 = vmatprep.subr.bf16.mxu0 0
      %2576 = vmatpush1.bf16.msra.mxu0 0
      %2577 = vmatprep.subr.bf16.mxu0 0
      %2578 = vmatpush1.bf16.msra.mxu0 0
      %2579 = vmatprep.subr.bf16.mxu0 0
      %2580 = vmatpush1.bf16.msra.mxu0 0
      %2581 = vmatprep.mubr.bf16.mxu0 0
      %2582 = vmatmul.mubr.bf16.gmra.mrb[0].mxu0 %v1443
      %v2583 = vpop.f32.mrb[0].mxu0
      %v2584 = vpop.f32.mrb[0].mxu0
      %v2585 = vpop.f32.mrb[0].mxu0
      %v2586 = vpop.f32.mrb[0].mxu0
      %2587 = vmatprep.mubr.bf16.mxu0 0
      %2588 = vmatmul.mubr.bf16.gmra.mrb[0].mxu0 %v1446
      %v2589 = vpop.f32.mrb[0].mxu0
      %v2590 = vpop.f32.mrb[0].mxu0
      %v2591 = vpop.f32.mrb[0].mxu0
      %v2592 = vpop.f32.mrb[0].mxu0
      %2593 = vmatprep.mubr.bf16.mxu0 0
      %2594 = vmatmul.mubr.bf16.gmra.mrb[0].mxu0 %v1449
      %v2595 = vpop.f32.mrb[0].mxu0
      %v2596 = vpop.f32.mrb[0].mxu0
      %v2597 = vpop.f32.mrb[0].mxu0
      %v2598 = vpop.f32.mrb[0].mxu0
      %2599 = vmatprep.mubr.bf16.mxu0 0
      %2600 = vmatmul.mubr.bf16.gmra.mrb[0].mxu0 %v1452
      %v2601 = vpop.f32.mrb[0].mxu0
      %v2602 = vpop.f32.mrb[0].mxu0
      %v2603 = vpop.f32.mrb[0].mxu0
      %v2604 = vpop.f32.mrb[0].mxu0
      %2605 = vmatprep.mubr.bf16.mxu0 0
      %2606 = vmatmul.mubr.bf16.gmra.mrb[0].mxu0 %v1455
      %v2607 = vpop.f32.mrb[0].mxu0
      %v2608 = vadd.f32 0.0, %v2607
      %v2609 = vpop.f32.mrb[0].mxu0
      %v2610 = vpop.f32.mrb[0].mxu0
      %v2611 = vpop.f32.mrb[0].mxu0
      %2612 = vmatprep.mubr.bf16.mxu0 0
      %2613 = vmatmul.mubr.bf16.gmra.mrb[0].mxu0 %v1458
      %v2614 = vpop.f32.mrb[0].mxu0
      %v2615 = vadd.f32 0.0, %v2614
      %v2616 = vpop.f32.mrb[0].mxu0
      %v2617 = vpop.f32.mrb[0].mxu0
      %v2618 = vpop.f32.mrb[0].mxu0
      %2619 = vmatprep.mubr.bf16.mxu0 0
      %2620 = vmatmul.mubr.bf16.gmra.mrb[0].mxu0 %v1461
      %v2621 = vpop.f32.mrb[0].mxu0
      %v2622 = vadd.f32 0.0, %v2621
      %v2623 = vpop.f32.mrb[0].mxu0
      %v2624 = vpop.f32.mrb[0].mxu0
      %v2625 = vpop.f32.mrb[0].mxu0
      %2626 = vmatprep.mubr.bf16.mxu0 0
      %2627 = vmatmul.mubr.bf16.gmra.mrb[0].mxu0 %v1464
      %v2628 = vpop.f32.mrb[0].mxu0
      %v2629 = vpop.f32.mrb[0].mxu0
      %v2630 = vpop.f32.mrb[0].mxu0
      %v2631 = vpop.f32.mrb[0].mxu0
      %2632 = vmatprep.mubr.bf16.mxu0 0
      %2633 = vmatmul.mubr.bf16.gmra.mrb[0].mxu0 %v1467
      %v2634 = vpop.f32.mrb[0].mxu0
      %v2635 = vpop.f32.mrb[0].mxu0
      %v2636 = vpop.f32.mrb[0].mxu0
      %v2637 = vpop.f32.mrb[0].mxu0
      %2638 = vmatprep.mubr.bf16.mxu0 0
      %2639 = vmatmul.mubr.bf16.gmra.mrb[0].mxu0 %v1470
      %v2640 = vpop.f32.mrb[0].mxu0
      %v2641 = vpop.f32.mrb[0].mxu0
      %v2642 = vpop.f32.mrb[0].mxu0
      %v2643 = vpop.f32.mrb[0].mxu0
      %2644 = vmatprep.mubr.bf16.mxu0 0
      %2645 = vmatmul.mubr.bf16.gmra.mrb[0].mxu0 %v1473
      %v2646 = vpop.f32.mrb[0].mxu0
      %v2647 = vpop.f32.mrb[0].mxu0
      %v2648 = vpop.f32.mrb[0].mxu0
      %v2649 = vpop.f32.mrb[0].mxu0
      %2650 = vmatprep.mubr.bf16.mxu0 0
      %2651 = vmatmul.mubr.bf16.gmra.mrb[0].mxu0 %v1476
      %v2652 = vpop.f32.mrb[0].mxu0
      %v2653 = vpop.f32.mrb[0].mxu0
      %v2654 = vpop.f32.mrb[0].mxu0
      %v2655 = vpop.f32.mrb[0].mxu0
      %2656 = vmatprep.mubr.bf16.mxu0 0
      %2657 = vmatmul.mubr.bf16.gmra.mrb[0].mxu0 %v1479
      %v2658 = vpop.f32.mrb[0].mxu0
      %v2659 = vadd.f32 0.0, %v2658
      %v2660 = vpop.f32.mrb[0].mxu0
      %v2661 = vpop.f32.mrb[0].mxu0
      %v2662 = vpop.f32.mrb[0].mxu0
      %2663 = vmatprep.mubr.bf16.mxu0 0
      %2664 = vmatmul.mubr.bf16.gmra.mrb[0].mxu0 %v1482
      %v2665 = vpop.f32.mrb[0].mxu0
      %v2666 = vadd.f32 0.0, %v2665
      %v2667 = vpop.f32.mrb[0].mxu0
      %v2668 = vpop.f32.mrb[0].mxu0
      %v2669 = vpop.f32.mrb[0].mxu0
      %2670 = vmatprep.mubr.bf16.mxu0 0
      %2671 = vmatmul.mubr.bf16.gmra.mrb[0].mxu0 %v1485
      %v2672 = vpop.f32.mrb[0].mxu0
      %v2673 = vadd.f32 0.0, %v2672
      %v2674 = vpop.f32.mrb[0].mxu0
      %v2675 = vpop.f32.mrb[0].mxu0
      %v2676 = vpop.f32.mrb[0].mxu0
      %2677 = vmatprep.mubr.bf16.mxu0 0
      %2678 = vmatmul.mubr.bf16.gmra.mrb[0].mxu0 %v1488
      %v2679 = vpop.f32.mrb[0].mxu0
      %v2680 = vpop.f32.mrb[0].mxu0
      %v2681 = vpop.f32.mrb[0].mxu0
      %v2682 = vpop.f32.mrb[0].mxu0
      %2683 = vmatprep.mubr.bf16.mxu0 0
      %2684 = vmatmul.mubr.bf16.gmra.mrb[0].mxu0 %v1491
      %v2685 = vpop.f32.mrb[0].mxu0
      %v2686 = vpop.f32.mrb[0].mxu0
      %v2687 = vpop.f32.mrb[0].mxu0
      %v2688 = vpop.f32.mrb[0].mxu0
      %2689 = vmatprep.mubr.bf16.mxu0 0
      %2690 = vmatmul.mubr.bf16.gmra.mrb[0].mxu0 %v1494
      %v2691 = vpop.f32.mrb[0].mxu0
      %v2692 = vpop.f32.mrb[0].mxu0
      %v2693 = vpop.f32.mrb[0].mxu0
      %v2694 = vpop.f32.mrb[0].mxu0
      %2695 = vmatprep.mubr.bf16.mxu0 0
      %2696 = vmatmul.mubr.bf16.gmra.mrb[0].mxu0 %v1497
      %v2697 = vpop.f32.mrb[0].mxu0
      %v2698 = vpop.f32.mrb[0].mxu0
      %v2699 = vpop.f32.mrb[0].mxu0
      %v2700 = vpop.f32.mrb[0].mxu0
      %2701 = vmatprep.mubr.bf16.mxu0 0
      %2702 = vmatmul.mubr.bf16.gmra.mrb[0].mxu0 %v1500
      %v2703 = vpop.f32.mrb[0].mxu0
      %v2704 = vpop.f32.mrb[0].mxu0
      %v2705 = vpop.f32.mrb[0].mxu0
      %v2706 = vpop.f32.mrb[0].mxu0
      %2707 = vmatprep.mubr.bf16.mxu0 0
      %2708 = vmatmul.mubr.bf16.gmra.mrb[0].mxu0 %v1503
      %v2709 = vpop.f32.mrb[0].mxu0
      %v2710 = vadd.f32 0.0, %v2709
      %v2711 = vpop.f32.mrb[0].mxu0
      %v2712 = vpop.f32.mrb[0].mxu0
      %v2713 = vpop.f32.mrb[0].mxu0
      %2714 = vmatprep.mubr.bf16.mxu0 0
      %2715 = vmatmul.mubr.bf16.gmra.mrb[0].mxu0 %v1506
      %v2716 = vpop.f32.mrb[0].mxu0
      %v2717 = vadd.f32 0.0, %v2716
      %v2718 = vpop.f32.mrb[0].mxu0
      %v2719 = vpop.f32.mrb[0].mxu0
      %v2720 = vpop.f32.mrb[0].mxu0
      %2721 = vmatprep.mubr.bf16.mxu0 0
      %2722 = vmatmul.mubr.bf16.gmra.mrb[0].mxu0 %v1509
      %v2723 = vpop.f32.mrb[0].mxu0
      %v2724 = vadd.f32 0.0, %v2723
      %v2725 = vpop.f32.mrb[0].mxu0
      %v2726 = vpop.f32.mrb[0].mxu0
      %v2727 = vpop.f32.mrb[0].mxu0
      %2728 = vmatprep.mubr.bf16.mxu0 0
      %2729 = vmatmul.mubr.bf16.gmra.mrb[0].mxu0 %v1512
      %v2730 = vpop.f32.mrb[0].mxu0
      %v2731 = vpop.f32.mrb[0].mxu0
      %v2732 = vpop.f32.mrb[0].mxu0
      %v2733 = vpop.f32.mrb[0].mxu0
      %2734 = vmatprep.mubr.bf16.mxu0 0
      %2735 = vmatmul.mubr.bf16.gmra.mrb[0].mxu0 %v1515
      %v2736 = vpop.f32.mrb[0].mxu0
      %v2737 = vpop.f32.mrb[0].mxu0
      %v2738 = vpop.f32.mrb[0].mxu0
      %v2739 = vpop.f32.mrb[0].mxu0
      %2740 = vmatprep.mubr.bf16.mxu0 0
      %2741 = vmatmul.mubr.bf16.gmra.mrb[0].mxu0 %v1518
      %v2742 = vpop.f32.mrb[0].mxu0
      %v2743 = vpop.f32.mrb[0].mxu0
      %v2744 = vpop.f32.mrb[0].mxu0
      %v2745 = vpop.f32.mrb[0].mxu0
      %2746 = vmatprep.mubr.bf16.mxu0 0
      %2747 = vmatmul.mubr.bf16.gmra.mrb[0].mxu0 %v1521
      %v2748 = vpop.f32.mrb[0].mxu0
      %v2749 = vpop.f32.mrb[0].mxu0
      %v2750 = vpop.f32.mrb[0].mxu0
      %v2751 = vpop.f32.mrb[0].mxu0
      %2752 = vmatprep.mubr.bf16.mxu0 0
      %2753 = vmatmul.mubr.bf16.gmra.mrb[0].mxu0 %v1524
      %v2754 = vpop.f32.mrb[0].mxu0
      %v2755 = vpop.f32.mrb[0].mxu0
      %v2756 = vpop.f32.mrb[0].mxu0
      %v2757 = vpop.f32.mrb[0].mxu0
      %2758 = vmatprep.mubr.bf16.mxu0 0
      %2759 = vmatmul.mubr.bf16.gmra.mrb[0].mxu0 %v1527
      %v2760 = vpop.f32.mrb[0].mxu0
      %v2761 = vpop.f32.mrb[0].mxu0
      %v2762 = vpop.f32.mrb[0].mxu0
      %v2763 = vpop.f32.mrb[0].mxu0
      %2764 = vmatprep.mubr.bf16.mxu0 0
      %2765 = vmatmul.mubr.bf16.gmra.mrb[0].mxu0 %v1530
      %v2766 = vpop.f32.mrb[0].mxu0
      %v2767 = vpop.f32.mrb[0].mxu0
      %v2768 = vpop.f32.mrb[0].mxu0
      %v2769 = vpop.f32.mrb[0].mxu0
      %2770 = vmatprep.mubr.bf16.mxu0 0
      %2771 = vmatmul.mubr.bf16.gmra.mrb[0].mxu0 %v1533
      %v2772 = vpop.f32.mrb[0].mxu0
      %v2773 = vpop.f32.mrb[0].mxu0
      %v2774 = vpop.f32.mrb[0].mxu0
      %v2775 = vpop.f32.mrb[0].mxu0
      %2776 = vmatprep.mubr.bf16.mxu0 0
      %2777 = vmatmul.mubr.bf16.gmra.mrb[0].mxu0 %v1536
      %v2778 = vpop.f32.mrb[0].mxu0
      %v2779 = vpop.f32.mrb[0].mxu0
      %v2780 = vpop.f32.mrb[0].mxu0
      %v2781 = vpop.f32.mrb[0].mxu0
      %2782 = vdwg.mxu0
      %v2783 = vadd.f32 %v2528, %v2608
      %v2784 = vadd.f32 %v2529, %v2615
      %v2785 = vadd.f32 %v2530, %v2622
      %v2786 = vadd.f32 %v2531, %v2659
      %v2787 = vadd.f32 %v2532, %v2666
      %v2788 = vadd.f32 %v2533, %v2673
      %v2789 = vadd.f32 %v2534, %v2710
      %v2790 = vadd.f32 %v2535, %v2717
      %v2791 = vadd.f32 %v2536, %v2724
      %v2796 = vunpack.c.l.b16 %v1384
      %v2797 = vunpack.c.l.b16 %v1385
      %v2798 = vunpack.c.l.b16 %v1386
      %v2799 = vunpack.c.l.b16 %v1387
      %v2800 = vpack.c.b16 %v2797, %v2796
      %v2801 = vpack.c.b16 %v2799, %v2798
      %2804 = vmatprep.subr.bf16.mxu0 0
      %2805 = vmatpush1.bf16.msra.mxu0 %v2800
      %2806 = vmatprep.subr.bf16.mxu0 0
      %2807 = vmatpush1.bf16.msra.mxu0 %v2801
      %2808 = vmatprep.subr.bf16.mxu0 0
      %2809 = vmatpush1.bf16.msra.mxu0 0
      %2810 = vmatprep.subr.bf16.mxu0 0
      %2811 = vmatpush1.bf16.msra.mxu0 0
      %2812 = vmatprep.subr.bf16.mxu0 0
      %2813 = vmatpush1.bf16.msra.mxu0 0
      %2814 = vmatprep.subr.bf16.mxu0 0
      %2815 = vmatpush1.bf16.msra.mxu0 0
      %2816 = vmatprep.subr.bf16.mxu0 0
      %2817 = vmatpush1.bf16.msra.mxu0 0
      %2818 = vmatprep.subr.bf16.mxu0 0
      %2819 = vmatpush1.bf16.msra.mxu0 0
      %2820 = vmatprep.subr.bf16.mxu0 0
      %2821 = vmatpush1.bf16.msra.mxu0 0
      %2822 = vmatprep.subr.bf16.mxu0 0
      %2823 = vmatpush1.bf16.msra.mxu0 0
      %2824 = vmatprep.subr.bf16.mxu0 0
      %2825 = vmatpush1.bf16.msra.mxu0 0
      %2826 = vmatprep.subr.bf16.mxu0 0
      %2827 = vmatpush1.bf16.msra.mxu0 0
      %2828 = vmatprep.subr.bf16.mxu0 0
      %2829 = vmatpush1.bf16.msra.mxu0 0
      %2830 = vmatprep.subr.bf16.mxu0 0
      %2831 = vmatpush1.bf16.msra.mxu0 0
      %2832 = vmatprep.subr.bf16.mxu0 0
      %2833 = vmatpush1.bf16.msra.mxu0 0
      %2834 = vmatprep.subr.bf16.mxu0 0
      %2835 = vmatpush1.bf16.msra.mxu0 0
      %2836 = vmatprep.mubr.bf16.mxu0 0
      %2837 = vmatmul.mubr.bf16.gmra.mrb[0].mxu0 %v1443
      %v2838 = vpop.f32.mrb[0].mxu0
      %v2839 = vpop.f32.mrb[0].mxu0
      %v2840 = vpop.f32.mrb[0].mxu0
      %v2841 = vpop.f32.mrb[0].mxu0
      %2842 = vmatprep.mubr.bf16.mxu0 0
      %2843 = vmatmul.mubr.bf16.gmra.mrb[0].mxu0 %v1446
      %v2844 = vpop.f32.mrb[0].mxu0
      %v2845 = vpop.f32.mrb[0].mxu0
      %v2846 = vpop.f32.mrb[0].mxu0
      %v2847 = vpop.f32.mrb[0].mxu0
      %2848 = vmatprep.mubr.bf16.mxu0 0
      %2849 = vmatmul.mubr.bf16.gmra.mrb[0].mxu0 %v1449
      %v2850 = vpop.f32.mrb[0].mxu0
      %v2851 = vpop.f32.mrb[0].mxu0
      %v2852 = vpop.f32.mrb[0].mxu0
      %v2853 = vpop.f32.mrb[0].mxu0
      %2854 = vmatprep.mubr.bf16.mxu0 0
      %2855 = vmatmul.mubr.bf16.gmra.mrb[0].mxu0 %v1452
      %v2856 = vpop.f32.mrb[0].mxu0
      %v2857 = vpop.f32.mrb[0].mxu0
      %v2858 = vpop.f32.mrb[0].mxu0
      %v2859 = vpop.f32.mrb[0].mxu0
      %2860 = vmatprep.mubr.bf16.mxu0 0
      %2861 = vmatmul.mubr.bf16.gmra.mrb[0].mxu0 %v1455
      %v2862 = vpop.f32.mrb[0].mxu0
      %v2863 = vpop.f32.mrb[0].mxu0
      %v2864 = vpop.f32.mrb[0].mxu0
      %v2865 = vadd.f32 0.0, %v2864
      %v2866 = vpop.f32.mrb[0].mxu0
      %2867 = vmatprep.mubr.bf16.mxu0 0
      %2868 = vmatmul.mubr.bf16.gmra.mrb[0].mxu0 %v1458
      %v2869 = vpop.f32.mrb[0].mxu0
      %v2870 = vpop.f32.mrb[0].mxu0
      %v2871 = vpop.f32.mrb[0].mxu0
      %v2872 = vadd.f32 0.0, %v2871
      %v2873 = vpop.f32.mrb[0].mxu0
      %2874 = vmatprep.mubr.bf16.mxu0 0
      %2875 = vmatmul.mubr.bf16.gmra.mrb[0].mxu0 %v1461
      %v2876 = vpop.f32.mrb[0].mxu0
      %v2877 = vpop.f32.mrb[0].mxu0
      %v2878 = vpop.f32.mrb[0].mxu0
      %v2879 = vadd.f32 0.0, %v2878
      %v2880 = vpop.f32.mrb[0].mxu0
      %2881 = vmatprep.mubr.bf16.mxu0 0
      %2882 = vmatmul.mubr.bf16.gmra.mrb[0].mxu0 %v1464
      %v2883 = vpop.f32.mrb[0].mxu0
      %v2884 = vpop.f32.mrb[0].mxu0
      %v2885 = vpop.f32.mrb[0].mxu0
      %v2886 = vpop.f32.mrb[0].mxu0
      %2887 = vmatprep.mubr.bf16.mxu0 0
      %2888 = vmatmul.mubr.bf16.gmra.mrb[0].mxu0 %v1467
      %v2889 = vpop.f32.mrb[0].mxu0
      %v2890 = vpop.f32.mrb[0].mxu0
      %v2891 = vpop.f32.mrb[0].mxu0
      %v2892 = vpop.f32.mrb[0].mxu0
      %2893 = vmatprep.mubr.bf16.mxu0 0
      %2894 = vmatmul.mubr.bf16.gmra.mrb[0].mxu0 %v1470
      %v2895 = vpop.f32.mrb[0].mxu0
      %v2896 = vpop.f32.mrb[0].mxu0
      %v2897 = vpop.f32.mrb[0].mxu0
      %v2898 = vpop.f32.mrb[0].mxu0
      %2899 = vmatprep.mubr.bf16.mxu0 0
      %2900 = vmatmul.mubr.bf16.gmra.mrb[0].mxu0 %v1473
      %v2901 = vpop.f32.mrb[0].mxu0
      %v2902 = vpop.f32.mrb[0].mxu0
      %v2903 = vpop.f32.mrb[0].mxu0
      %v2904 = vpop.f32.mrb[0].mxu0
      %2905 = vmatprep.mubr.bf16.mxu0 0
      %2906 = vmatmul.mubr.bf16.gmra.mrb[0].mxu0 %v1476
      %v2907 = vpop.f32.mrb[0].mxu0
      %v2908 = vpop.f32.mrb[0].mxu0
      %v2909 = vpop.f32.mrb[0].mxu0
      %v2910 = vpop.f32.mrb[0].mxu0
      %2911 = vmatprep.mubr.bf16.mxu0 0
      %2912 = vmatmul.mubr.bf16.gmra.mrb[0].mxu0 %v1479
      %v2913 = vpop.f32.mrb[0].mxu0
      %v2914 = vpop.f32.mrb[0].mxu0
      %v2915 = vpop.f32.mrb[0].mxu0
      %v2916 = vadd.f32 0.0, %v2915
      %v2917 = vpop.f32.mrb[0].mxu0
      %2918 = vmatprep.mubr.bf16.mxu0 0
      %2919 = vmatmul.mubr.bf16.gmra.mrb[0].mxu0 %v1482
      %v2920 = vpop.f32.mrb[0].mxu0
      %v2921 = vpop.f32.mrb[0].mxu0
      %v2922 = vpop.f32.mrb[0].mxu0
      %v2923 = vadd.f32 0.0, %v2922
      %v2924 = vpop.f32.mrb[0].mxu0
      %2925 = vmatprep.mubr.bf16.mxu0 0
      %2926 = vmatmul.mubr.bf16.gmra.mrb[0].mxu0 %v1485
      %v2927 = vpop.f32.mrb[0].mxu0
      %v2928 = vpop.f32.mrb[0].mxu0
      %v2929 = vpop.f32.mrb[0].mxu0
      %v2930 = vadd.f32 0.0, %v2929
      %v2931 = vpop.f32.mrb[0].mxu0
      %2932 = vmatprep.mubr.bf16.mxu0 0
      %2933 = vmatmul.mubr.bf16.gmra.mrb[0].mxu0 %v1488
      %v2934 = vpop.f32.mrb[0].mxu0
      %v2935 = vpop.f32.mrb[0].mxu0
      %v2936 = vpop.f32.mrb[0].mxu0
      %v2937 = vpop.f32.mrb[0].mxu0
      %2938 = vmatprep.mubr.bf16.mxu0 0
      %2939 = vmatmul.mubr.bf16.gmra.mrb[0].mxu0 %v1491
      %v2940 = vpop.f32.mrb[0].mxu0
      %v2941 = vpop.f32.mrb[0].mxu0
      %v2942 = vpop.f32.mrb[0].mxu0
      %v2943 = vpop.f32.mrb[0].mxu0
      %2944 = vmatprep.mubr.bf16.mxu0 0
      %2945 = vmatmul.mubr.bf16.gmra.mrb[0].mxu0 %v1494
      %v2946 = vpop.f32.mrb[0].mxu0
      %v2947 = vpop.f32.mrb[0].mxu0
      %v2948 = vpop.f32.mrb[0].mxu0
      %v2949 = vpop.f32.mrb[0].mxu0
      %2950 = vmatprep.mubr.bf16.mxu0 0
      %2951 = vmatmul.mubr.bf16.gmra.mrb[0].mxu0 %v1497
      %v2952 = vpop.f32.mrb[0].mxu0
      %v2953 = vpop.f32.mrb[0].mxu0
      %v2954 = vpop.f32.mrb[0].mxu0
      %v2955 = vpop.f32.mrb[0].mxu0
      %2956 = vmatprep.mubr.bf16.mxu0 0
      %2957 = vmatmul.mubr.bf16.gmra.mrb[0].mxu0 %v1500
      %v2958 = vpop.f32.mrb[0].mxu0
      %v2959 = vpop.f32.mrb[0].mxu0
      %v2960 = vpop.f32.mrb[0].mxu0
      %v2961 = vpop.f32.mrb[0].mxu0
      %2962 = vmatprep.mubr.bf16.mxu0 0
      %2963 = vmatmul.mubr.bf16.gmra.mrb[0].mxu0 %v1503
      %v2964 = vpop.f32.mrb[0].mxu0
      %v2965 = vpop.f32.mrb[0].mxu0
      %v2966 = vpop.f32.mrb[0].mxu0
      %v2967 = vadd.f32 0.0, %v2966
      %v2968 = vpop.f32.mrb[0].mxu0
      %2969 = vmatprep.mubr.bf16.mxu0 0
      %2970 = vmatmul.mubr.bf16.gmra.mrb[0].mxu0 %v1506
      %v2971 = vpop.f32.mrb[0].mxu0
      %v2972 = vpop.f32.mrb[0].mxu0
      %v2973 = vpop.f32.mrb[0].mxu0
      %v2974 = vadd.f32 0.0, %v2973
      %v2975 = vpop.f32.mrb[0].mxu0
      %2976 = vmatprep.mubr.bf16.mxu0 0
      %2977 = vmatmul.mubr.bf16.gmra.mrb[0].mxu0 %v1509
      %v2978 = vpop.f32.mrb[0].mxu0
      %v2979 = vpop.f32.mrb[0].mxu0
      %v2980 = vpop.f32.mrb[0].mxu0
      %v2981 = vadd.f32 0.0, %v2980
      %v2982 = vpop.f32.mrb[0].mxu0
      %2983 = vmatprep.mubr.bf16.mxu0 0
      %2984 = vmatmul.mubr.bf16.gmra.mrb[0].mxu0 %v1512
      %v2985 = vpop.f32.mrb[0].mxu0
      %v2986 = vpop.f32.mrb[0].mxu0
      %v2987 = vpop.f32.mrb[0].mxu0
      %v2988 = vpop.f32.mrb[0].mxu0
      %2989 = vmatprep.mubr.bf16.mxu0 0
      %2990 = vmatmul.mubr.bf16.gmra.mrb[0].mxu0 %v1515
      %v2991 = vpop.f32.mrb[0].mxu0
      %v2992 = vpop.f32.mrb[0].mxu0
      %v2993 = vpop.f32.mrb[0].mxu0
      %v2994 = vpop.f32.mrb[0].mxu0
      %2995 = vmatprep.mubr.bf16.mxu0 0
      %2996 = vmatmul.mubr.bf16.gmra.mrb[0].mxu0 %v1518
      %v2997 = vpop.f32.mrb[0].mxu0
      %v2998 = vpop.f32.mrb[0].mxu0
      %v2999 = vpop.f32.mrb[0].mxu0
      %v3000 = vpop.f32.mrb[0].mxu0
      %3001 = vmatprep.mubr.bf16.mxu0 0
      %3002 = vmatmul.mubr.bf16.gmra.mrb[0].mxu0 %v1521
      %v3003 = vpop.f32.mrb[0].mxu0
      %v3004 = vpop.f32.mrb[0].mxu0
      %v3005 = vpop.f32.mrb[0].mxu0
      %v3006 = vpop.f32.mrb[0].mxu0
      %3007 = vmatprep.mubr.bf16.mxu0 0
      %3008 = vmatmul.mubr.bf16.gmra.mrb[0].mxu0 %v1524
      %v3009 = vpop.f32.mrb[0].mxu0
      %v3010 = vpop.f32.mrb[0].mxu0
      %v3011 = vpop.f32.mrb[0].mxu0
      %v3012 = vpop.f32.mrb[0].mxu0
      %3013 = vmatprep.mubr.bf16.mxu0 0
      %3014 = vmatmul.mubr.bf16.gmra.mrb[0].mxu0 %v1527
      %v3015 = vpop.f32.mrb[0].mxu0
      %v3016 = vpop.f32.mrb[0].mxu0
      %v3017 = vpop.f32.mrb[0].mxu0
      %v3018 = vpop.f32.mrb[0].mxu0
      %3019 = vmatprep.mubr.bf16.mxu0 0
      %3020 = vmatmul.mubr.bf16.gmra.mrb[0].mxu0 %v1530
      %v3021 = vpop.f32.mrb[0].mxu0
      %v3022 = vpop.f32.mrb[0].mxu0
      %v3023 = vpop.f32.mrb[0].mxu0
      %v3024 = vpop.f32.mrb[0].mxu0
      %3025 = vmatprep.mubr.bf16.mxu0 0
      %3026 = vmatmul.mubr.bf16.gmra.mrb[0].mxu0 %v1533
      %v3027 = vpop.f32.mrb[0].mxu0
      %v3028 = vpop.f32.mrb[0].mxu0
      %v3029 = vpop.f32.mrb[0].mxu0
      %v3030 = vpop.f32.mrb[0].mxu0
      %3031 = vmatprep.mubr.bf16.mxu0 0
      %3032 = vmatmul.mubr.bf16.gmra.mrb[0].mxu0 %v1536
      %v3033 = vpop.f32.mrb[0].mxu0
      %v3034 = vpop.f32.mrb[0].mxu0
      %v3035 = vpop.f32.mrb[0].mxu0
      %v3036 = vpop.f32.mrb[0].mxu0
      %3037 = vdwg.mxu0
      %v3038 = vadd.f32 %v2783, %v2865
      %v3039 = vadd.f32 %v2784, %v2872
      %v3040 = vadd.f32 %v2785, %v2879
      %v3041 = vadd.f32 %v2786, %v2916
      %v3042 = vadd.f32 %v2787, %v2923
      %v3043 = vadd.f32 %v2788, %v2930
      %v3044 = vadd.f32 %v2789, %v2967
      %v3045 = vadd.f32 %v2790, %v2974
      %v3046 = vadd.f32 %v2791, %v2981
      %v3051 = vunpack.c.l.b16 %v1388
      %v3052 = vunpack.c.l.b16 %v1389
      %v3053 = vunpack.c.l.b16 %v1390
      %v3054 = vunpack.c.l.b16 %v1391
      %v3055 = vpack.c.b16 %v3052, %v3051
      %v3056 = vpack.c.b16 %v3054, %v3053
      %3059 = vmatprep.subr.bf16.mxu0 0
      %3060 = vmatpush1.bf16.msra.mxu0 %v3055
      %3061 = vmatprep.subr.bf16.mxu0 0
      %3062 = vmatpush1.bf16.msra.mxu0 %v3056
      %3063 = vmatprep.subr.bf16.mxu0 0
      %3064 = vmatpush1.bf16.msra.mxu0 0
      %3065 = vmatprep.subr.bf16.mxu0 0
      %3066 = vmatpush1.bf16.msra.mxu0 0
      %3067 = vmatprep.subr.bf16.mxu0 0
      %3068 = vmatpush1.bf16.msra.mxu0 0
      %3069 = vmatprep.subr.bf16.mxu0 0
      %3070 = vmatpush1.bf16.msra.mxu0 0
      %3071 = vmatprep.subr.bf16.mxu0 0
      %3072 = vmatpush1.bf16.msra.mxu0 0
      %3073 = vmatprep.subr.bf16.mxu0 0
      %3074 = vmatpush1.bf16.msra.mxu0 0
      %3075 = vmatprep.subr.bf16.mxu0 0
      %3076 = vmatpush1.bf16.msra.mxu0 0
      %3077 = vmatprep.subr.bf16.mxu0 0
      %3078 = vmatpush1.bf16.msra.mxu0 0
      %3079 = vmatprep.subr.bf16.mxu0 0
      %3080 = vmatpush1.bf16.msra.mxu0 0
      %3081 = vmatprep.subr.bf16.mxu0 0
      %3082 = vmatpush1.bf16.msra.mxu0 0
      %3083 = vmatprep.subr.bf16.mxu0 0
      %3084 = vmatpush1.bf16.msra.mxu0 0
      %3085 = vmatprep.subr.bf16.mxu0 0
      %3086 = vmatpush1.bf16.msra.mxu0 0
      %3087 = vmatprep.subr.bf16.mxu0 0
      %3088 = vmatpush1.bf16.msra.mxu0 0
      %3089 = vmatprep.subr.bf16.mxu0 0
      %3090 = vmatpush1.bf16.msra.mxu0 0
      %3091 = vmatprep.mubr.bf16.mxu0 0
      %3092 = vmatmul.mubr.bf16.gmra.mrb[0].mxu0 %v1443
      %v3093 = vpop.f32.mrb[0].mxu0
      %v3094 = vpop.f32.mrb[0].mxu0
      %v3095 = vpop.f32.mrb[0].mxu0
      %v3096 = vpop.f32.mrb[0].mxu0
      %3097 = vmatprep.mubr.bf16.mxu0 0
      %3098 = vmatmul.mubr.bf16.gmra.mrb[0].mxu0 %v1446
      %v3099 = vpop.f32.mrb[0].mxu0
      %v3100 = vpop.f32.mrb[0].mxu0
      %v3101 = vpop.f32.mrb[0].mxu0
      %v3102 = vpop.f32.mrb[0].mxu0
      %3103 = vmatprep.mubr.bf16.mxu0 0
      %3104 = vmatmul.mubr.bf16.gmra.mrb[0].mxu0 %v1449
      %v3105 = vpop.f32.mrb[0].mxu0
      %v3106 = vpop.f32.mrb[0].mxu0
      %v3107 = vpop.f32.mrb[0].mxu0
      %v3108 = vpop.f32.mrb[0].mxu0
      %3109 = vmatprep.mubr.bf16.mxu0 0
      %3110 = vmatmul.mubr.bf16.gmra.mrb[0].mxu0 %v1452
      %v3111 = vpop.f32.mrb[0].mxu0
      %v3112 = vpop.f32.mrb[0].mxu0
      %v3113 = vpop.f32.mrb[0].mxu0
      %v3114 = vpop.f32.mrb[0].mxu0
      %3115 = vmatprep.mubr.bf16.mxu0 0
      %3116 = vmatmul.mubr.bf16.gmra.mrb[0].mxu0 %v1455
      %v3117 = vpop.f32.mrb[0].mxu0
      %v3118 = vpop.f32.mrb[0].mxu0
      %v3119 = vpop.f32.mrb[0].mxu0
      %v3120 = vpop.f32.mrb[0].mxu0
      %3121 = vmatprep.mubr.bf16.mxu0 0
      %3122 = vmatmul.mubr.bf16.gmra.mrb[0].mxu0 %v1458
      %v3123 = vpop.f32.mrb[0].mxu0
      %v3124 = vadd.f32 0.0, %v3123
      %v3125 = vpop.f32.mrb[0].mxu0
      %v3126 = vpop.f32.mrb[0].mxu0
      %v3127 = vpop.f32.mrb[0].mxu0
      %3128 = vmatprep.mubr.bf16.mxu0 0
      %3129 = vmatmul.mubr.bf16.gmra.mrb[0].mxu0 %v1461
      %v3130 = vpop.f32.mrb[0].mxu0
      %v3131 = vadd.f32 0.0, %v3130
      %v3132 = vpop.f32.mrb[0].mxu0
      %v3133 = vpop.f32.mrb[0].mxu0
      %v3134 = vpop.f32.mrb[0].mxu0
      %3135 = vmatprep.mubr.bf16.mxu0 0
      %3136 = vmatmul.mubr.bf16.gmra.mrb[0].mxu0 %v1464
      %v3137 = vpop.f32.mrb[0].mxu0
      %v3138 = vadd.f32 0.0, %v3137
      %v3139 = vpop.f32.mrb[0].mxu0
      %v3140 = vpop.f32.mrb[0].mxu0
      %v3141 = vpop.f32.mrb[0].mxu0
      %3142 = vmatprep.mubr.bf16.mxu0 0
      %3143 = vmatmul.mubr.bf16.gmra.mrb[0].mxu0 %v1467
      %v3144 = vpop.f32.mrb[0].mxu0
      %v3145 = vpop.f32.mrb[0].mxu0
      %v3146 = vpop.f32.mrb[0].mxu0
      %v3147 = vpop.f32.mrb[0].mxu0
      %3148 = vmatprep.mubr.bf16.mxu0 0
      %3149 = vmatmul.mubr.bf16.gmra.mrb[0].mxu0 %v1470
      %v3150 = vpop.f32.mrb[0].mxu0
      %v3151 = vpop.f32.mrb[0].mxu0
      %v3152 = vpop.f32.mrb[0].mxu0
      %v3153 = vpop.f32.mrb[0].mxu0
      %3154 = vmatprep.mubr.bf16.mxu0 0
      %3155 = vmatmul.mubr.bf16.gmra.mrb[0].mxu0 %v1473
      %v3156 = vpop.f32.mrb[0].mxu0
      %v3157 = vpop.f32.mrb[0].mxu0
      %v3158 = vpop.f32.mrb[0].mxu0
      %v3159 = vpop.f32.mrb[0].mxu0
      %3160 = vmatprep.mubr.bf16.mxu0 0
      %3161 = vmatmul.mubr.bf16.gmra.mrb[0].mxu0 %v1476
      %v3162 = vpop.f32.mrb[0].mxu0
      %v3163 = vpop.f32.mrb[0].mxu0
      %v3164 = vpop.f32.mrb[0].mxu0
      %v3165 = vpop.f32.mrb[0].mxu0
      %3166 = vmatprep.mubr.bf16.mxu0 0
      %3167 = vmatmul.mubr.bf16.gmra.mrb[0].mxu0 %v1479
      %v3168 = vpop.f32.mrb[0].mxu0
      %v3169 = vpop.f32.mrb[0].mxu0
      %v3170 = vpop.f32.mrb[0].mxu0
      %v3171 = vpop.f32.mrb[0].mxu0
      %3172 = vmatprep.mubr.bf16.mxu0 0
      %3173 = vmatmul.mubr.bf16.gmra.mrb[0].mxu0 %v1482
      %v3174 = vpop.f32.mrb[0].mxu0
      %v3175 = vadd.f32 0.0, %v3174
      %v3176 = vpop.f32.mrb[0].mxu0
      %v3177 = vpop.f32.mrb[0].mxu0
      %v3178 = vpop.f32.mrb[0].mxu0
      %3179 = vmatprep.mubr.bf16.mxu0 0
      %3180 = vmatmul.mubr.bf16.gmra.mrb[0].mxu0 %v1485
      %v3181 = vpop.f32.mrb[0].mxu0
      %v3182 = vadd.f32 0.0, %v3181
      %v3183 = vpop.f32.mrb[0].mxu0
      %v3184 = vpop.f32.mrb[0].mxu0
      %v3185 = vpop.f32.mrb[0].mxu0
      %3186 = vmatprep.mubr.bf16.mxu0 0
      %3187 = vmatmul.mubr.bf16.gmra.mrb[0].mxu0 %v1488
      %v3188 = vpop.f32.mrb[0].mxu0
      %v3189 = vadd.f32 0.0, %v3188
      %v3190 = vpop.f32.mrb[0].mxu0
      %v3191 = vpop.f32.mrb[0].mxu0
      %v3192 = vpop.f32.mrb[0].mxu0
      %3193 = vmatprep.mubr.bf16.mxu0 0
      %3194 = vmatmul.mubr.bf16.gmra.mrb[0].mxu0 %v1491
      %v3195 = vpop.f32.mrb[0].mxu0
      %v3196 = vpop.f32.mrb[0].mxu0
      %v3197 = vpop.f32.mrb[0].mxu0
      %v3198 = vpop.f32.mrb[0].mxu0
      %3199 = vmatprep.mubr.bf16.mxu0 0
      %3200 = vmatmul.mubr.bf16.gmra.mrb[0].mxu0 %v1494
      %v3201 = vpop.f32.mrb[0].mxu0
      %v3202 = vpop.f32.mrb[0].mxu0
      %v3203 = vpop.f32.mrb[0].mxu0
      %v3204 = vpop.f32.mrb[0].mxu0
      %3205 = vmatprep.mubr.bf16.mxu0 0
      %3206 = vmatmul.mubr.bf16.gmra.mrb[0].mxu0 %v1497
      %v3207 = vpop.f32.mrb[0].mxu0
      %v3208 = vpop.f32.mrb[0].mxu0
      %v3209 = vpop.f32.mrb[0].mxu0
      %v3210 = vpop.f32.mrb[0].mxu0
      %3211 = vmatprep.mubr.bf16.mxu0 0
      %3212 = vmatmul.mubr.bf16.gmra.mrb[0].mxu0 %v1500
      %v3213 = vpop.f32.mrb[0].mxu0
      %v3214 = vpop.f32.mrb[0].mxu0
      %v3215 = vpop.f32.mrb[0].mxu0
      %v3216 = vpop.f32.mrb[0].mxu0
      %3217 = vmatprep.mubr.bf16.mxu0 0
      %3218 = vmatmul.mubr.bf16.gmra.mrb[0].mxu0 %v1503
      %v3219 = vpop.f32.mrb[0].mxu0
      %v3220 = vpop.f32.mrb[0].mxu0
      %v3221 = vpop.f32.mrb[0].mxu0
      %v3222 = vpop.f32.mrb[0].mxu0
      %3223 = vmatprep.mubr.bf16.mxu0 0
      %3224 = vmatmul.mubr.bf16.gmra.mrb[0].mxu0 %v1506
      %v3225 = vpop.f32.mrb[0].mxu0
      %v3226 = vadd.f32 0.0, %v3225
      %v3227 = vpop.f32.mrb[0].mxu0
      %v3228 = vpop.f32.mrb[0].mxu0
      %v3229 = vpop.f32.mrb[0].mxu0
      %3230 = vmatprep.mubr.bf16.mxu0 0
      %3231 = vmatmul.mubr.bf16.gmra.mrb[0].mxu0 %v1509
      %v3232 = vpop.f32.mrb[0].mxu0
      %v3233 = vadd.f32 0.0, %v3232
      %v3234 = vpop.f32.mrb[0].mxu0
      %v3235 = vpop.f32.mrb[0].mxu0
      %v3236 = vpop.f32.mrb[0].mxu0
      %3237 = vmatprep.mubr.bf16.mxu0 0
      %3238 = vmatmul.mubr.bf16.gmra.mrb[0].mxu0 %v1512
      %v3239 = vpop.f32.mrb[0].mxu0
      %v3240 = vadd.f32 0.0, %v3239
      %v3241 = vpop.f32.mrb[0].mxu0
      %v3242 = vpop.f32.mrb[0].mxu0
      %v3243 = vpop.f32.mrb[0].mxu0
      %3244 = vmatprep.mubr.bf16.mxu0 0
      %3245 = vmatmul.mubr.bf16.gmra.mrb[0].mxu0 %v1515
      %v3246 = vpop.f32.mrb[0].mxu0
      %v3247 = vpop.f32.mrb[0].mxu0
      %v3248 = vpop.f32.mrb[0].mxu0
      %v3249 = vpop.f32.mrb[0].mxu0
      %3250 = vmatprep.mubr.bf16.mxu0 0
      %3251 = vmatmul.mubr.bf16.gmra.mrb[0].mxu0 %v1518
      %v3252 = vpop.f32.mrb[0].mxu0
      %v3253 = vpop.f32.mrb[0].mxu0
      %v3254 = vpop.f32.mrb[0].mxu0
      %v3255 = vpop.f32.mrb[0].mxu0
      %3256 = vmatprep.mubr.bf16.mxu0 0
      %3257 = vmatmul.mubr.bf16.gmra.mrb[0].mxu0 %v1521
      %v3258 = vpop.f32.mrb[0].mxu0
      %v3259 = vpop.f32.mrb[0].mxu0
      %v3260 = vpop.f32.mrb[0].mxu0
      %v3261 = vpop.f32.mrb[0].mxu0
      %3262 = vmatprep.mubr.bf16.mxu0 0
      %3263 = vmatmul.mubr.bf16.gmra.mrb[0].mxu0 %v1524
      %v3264 = vpop.f32.mrb[0].mxu0
      %v3265 = vpop.f32.mrb[0].mxu0
      %v3266 = vpop.f32.mrb[0].mxu0
      %v3267 = vpop.f32.mrb[0].mxu0
      %3268 = vmatprep.mubr.bf16.mxu0 0
      %3269 = vmatmul.mubr.bf16.gmra.mrb[0].mxu0 %v1527
      %v3270 = vpop.f32.mrb[0].mxu0
      %v3271 = vpop.f32.mrb[0].mxu0
      %v3272 = vpop.f32.mrb[0].mxu0
      %v3273 = vpop.f32.mrb[0].mxu0
      %3274 = vmatprep.mubr.bf16.mxu0 0
      %3275 = vmatmul.mubr.bf16.gmra.mrb[0].mxu0 %v1530
      %v3276 = vpop.f32.mrb[0].mxu0
      %v3277 = vpop.f32.mrb[0].mxu0
      %v3278 = vpop.f32.mrb[0].mxu0
      %v3279 = vpop.f32.mrb[0].mxu0
      %3280 = vmatprep.mubr.bf16.mxu0 0
      %3281 = vmatmul.mubr.bf16.gmra.mrb[0].mxu0 %v1533
      %v3282 = vpop.f32.mrb[0].mxu0
      %v3283 = vpop.f32.mrb[0].mxu0
      %v3284 = vpop.f32.mrb[0].mxu0
      %v3285 = vpop.f32.mrb[0].mxu0
      %3286 = vmatprep.mubr.bf16.mxu0 0
      %3287 = vmatmul.mubr.bf16.gmra.mrb[0].mxu0 %v1536
      %v3288 = vpop.f32.mrb[0].mxu0
      %v3289 = vpop.f32.mrb[0].mxu0
      %v3290 = vpop.f32.mrb[0].mxu0
      %v3291 = vpop.f32.mrb[0].mxu0
      %3292 = vdwg.mxu0
      %v3293 = vadd.f32 %v3038, %v3124
      %v3294 = vadd.f32 %v3039, %v3131
      %v3295 = vadd.f32 %v3040, %v3138
      %v3296 = vadd.f32 %v3041, %v3175
      %v3297 = vadd.f32 %v3042, %v3182
      %v3298 = vadd.f32 %v3043, %v3189
      %v3299 = vadd.f32 %v3044, %v3226
      %v3300 = vadd.f32 %v3045, %v3233
      %v3301 = vadd.f32 %v3046, %v3240
      %v3306 = vunpack.c.l.b16 %v1392
      %v3307 = vunpack.c.l.b16 %v1393
      %v3308 = vunpack.c.l.b16 %v1394
      %v3309 = vunpack.c.l.b16 %v1395
      %v3310 = vpack.c.b16 %v3307, %v3306
      %v3311 = vpack.c.b16 %v3309, %v3308
      %3314 = vmatprep.subr.bf16.mxu0 0
      %3315 = vmatpush1.bf16.msra.mxu0 %v3310
      %3316 = vmatprep.subr.bf16.mxu0 0
      %3317 = vmatpush1.bf16.msra.mxu0 %v3311
      %3318 = vmatprep.subr.bf16.mxu0 0
      %3319 = vmatpush1.bf16.msra.mxu0 0
      %3320 = vmatprep.subr.bf16.mxu0 0
      %3321 = vmatpush1.bf16.msra.mxu0 0
      %3322 = vmatprep.subr.bf16.mxu0 0
      %3323 = vmatpush1.bf16.msra.mxu0 0
      %3324 = vmatprep.subr.bf16.mxu0 0
      %3325 = vmatpush1.bf16.msra.mxu0 0
      %3326 = vmatprep.subr.bf16.mxu0 0
      %3327 = vmatpush1.bf16.msra.mxu0 0
      %3328 = vmatprep.subr.bf16.mxu0 0
      %3329 = vmatpush1.bf16.msra.mxu0 0
      %3330 = vmatprep.subr.bf16.mxu0 0
      %3331 = vmatpush1.bf16.msra.mxu0 0
      %3332 = vmatprep.subr.bf16.mxu0 0
      %3333 = vmatpush1.bf16.msra.mxu0 0
      %3334 = vmatprep.subr.bf16.mxu0 0
      %3335 = vmatpush1.bf16.msra.mxu0 0
      %3336 = vmatprep.subr.bf16.mxu0 0
      %3337 = vmatpush1.bf16.msra.mxu0 0
      %3338 = vmatprep.subr.bf16.mxu0 0
      %3339 = vmatpush1.bf16.msra.mxu0 0
      %3340 = vmatprep.subr.bf16.mxu0 0
      %3341 = vmatpush1.bf16.msra.mxu0 0
      %3342 = vmatprep.subr.bf16.mxu0 0
      %3343 = vmatpush1.bf16.msra.mxu0 0
      %3344 = vmatprep.subr.bf16.mxu0 0
      %3345 = vmatpush1.bf16.msra.mxu0 0
      %3346 = vmatprep.mubr.bf16.mxu0 0
      %3347 = vmatmul.mubr.bf16.gmra.mrb[0].mxu0 %v1443
      %v3348 = vpop.f32.mrb[0].mxu0
      %v3349 = vpop.f32.mrb[0].mxu0
      %v3350 = vpop.f32.mrb[0].mxu0
      %v3351 = vpop.f32.mrb[0].mxu0
      %3352 = vmatprep.mubr.bf16.mxu0 0
      %3353 = vmatmul.mubr.bf16.gmra.mrb[0].mxu0 %v1446
      %v3354 = vpop.f32.mrb[0].mxu0
      %v3355 = vpop.f32.mrb[0].mxu0
      %v3356 = vpop.f32.mrb[0].mxu0
      %v3357 = vpop.f32.mrb[0].mxu0
      %3358 = vmatprep.mubr.bf16.mxu0 0
      %3359 = vmatmul.mubr.bf16.gmra.mrb[0].mxu0 %v1449
      %v3360 = vpop.f32.mrb[0].mxu0
      %v3361 = vpop.f32.mrb[0].mxu0
      %v3362 = vpop.f32.mrb[0].mxu0
      %v3363 = vpop.f32.mrb[0].mxu0
      %3364 = vmatprep.mubr.bf16.mxu0 0
      %3365 = vmatmul.mubr.bf16.gmra.mrb[0].mxu0 %v1452
      %v3366 = vpop.f32.mrb[0].mxu0
      %v3367 = vpop.f32.mrb[0].mxu0
      %v3368 = vpop.f32.mrb[0].mxu0
      %v3369 = vpop.f32.mrb[0].mxu0
      %3370 = vmatprep.mubr.bf16.mxu0 0
      %3371 = vmatmul.mubr.bf16.gmra.mrb[0].mxu0 %v1455
      %v3372 = vpop.f32.mrb[0].mxu0
      %v3373 = vpop.f32.mrb[0].mxu0
      %v3374 = vpop.f32.mrb[0].mxu0
      %v3375 = vpop.f32.mrb[0].mxu0
      %3376 = vmatprep.mubr.bf16.mxu0 0
      %3377 = vmatmul.mubr.bf16.gmra.mrb[0].mxu0 %v1458
      %v3378 = vpop.f32.mrb[0].mxu0
      %v3379 = vpop.f32.mrb[0].mxu0
      %v3380 = vpop.f32.mrb[0].mxu0
      %v3381 = vadd.f32 0.0, %v3380
      %v3382 = vpop.f32.mrb[0].mxu0
      %3383 = vmatprep.mubr.bf16.mxu0 0
      %3384 = vmatmul.mubr.bf16.gmra.mrb[0].mxu0 %v1461
      %v3385 = vpop.f32.mrb[0].mxu0
      %v3386 = vpop.f32.mrb[0].mxu0
      %v3387 = vpop.f32.mrb[0].mxu0
      %v3388 = vadd.f32 0.0, %v3387
      %v3389 = vpop.f32.mrb[0].mxu0
      %3390 = vmatprep.mubr.bf16.mxu0 0
      %3391 = vmatmul.mubr.bf16.gmra.mrb[0].mxu0 %v1464
      %v3392 = vpop.f32.mrb[0].mxu0
      %v3393 = vpop.f32.mrb[0].mxu0
      %v3394 = vpop.f32.mrb[0].mxu0
      %v3395 = vadd.f32 0.0, %v3394
      %v3396 = vpop.f32.mrb[0].mxu0
      %3397 = vmatprep.mubr.bf16.mxu0 0
      %3398 = vmatmul.mubr.bf16.gmra.mrb[0].mxu0 %v1467
      %v3399 = vpop.f32.mrb[0].mxu0
      %v3400 = vpop.f32.mrb[0].mxu0
      %v3401 = vpop.f32.mrb[0].mxu0
      %v3402 = vpop.f32.mrb[0].mxu0
      %3403 = vmatprep.mubr.bf16.mxu0 0
      %3404 = vmatmul.mubr.bf16.gmra.mrb[0].mxu0 %v1470
      %v3405 = vpop.f32.mrb[0].mxu0
      %v3406 = vpop.f32.mrb[0].mxu0
      %v3407 = vpop.f32.mrb[0].mxu0
      %v3408 = vpop.f32.mrb[0].mxu0
      %3409 = vmatprep.mubr.bf16.mxu0 0
      %3410 = vmatmul.mubr.bf16.gmra.mrb[0].mxu0 %v1473
      %v3411 = vpop.f32.mrb[0].mxu0
      %v3412 = vpop.f32.mrb[0].mxu0
      %v3413 = vpop.f32.mrb[0].mxu0
      %v3414 = vpop.f32.mrb[0].mxu0
      %3415 = vmatprep.mubr.bf16.mxu0 0
      %3416 = vmatmul.mubr.bf16.gmra.mrb[0].mxu0 %v1476
      %v3417 = vpop.f32.mrb[0].mxu0
      %v3418 = vpop.f32.mrb[0].mxu0
      %v3419 = vpop.f32.mrb[0].mxu0
      %v3420 = vpop.f32.mrb[0].mxu0
      %3421 = vmatprep.mubr.bf16.mxu0 0
      %3422 = vmatmul.mubr.bf16.gmra.mrb[0].mxu0 %v1479
      %v3423 = vpop.f32.mrb[0].mxu0
      %v3424 = vpop.f32.mrb[0].mxu0
      %v3425 = vpop.f32.mrb[0].mxu0
      %v3426 = vpop.f32.mrb[0].mxu0
      %3427 = vmatprep.mubr.bf16.mxu0 0
      %3428 = vmatmul.mubr.bf16.gmra.mrb[0].mxu0 %v1482
      %v3429 = vpop.f32.mrb[0].mxu0
      %v3430 = vpop.f32.mrb[0].mxu0
      %v3431 = vpop.f32.mrb[0].mxu0
      %v3432 = vadd.f32 0.0, %v3431
      %v3433 = vpop.f32.mrb[0].mxu0
      %3434 = vmatprep.mubr.bf16.mxu0 0
      %3435 = vmatmul.mubr.bf16.gmra.mrb[0].mxu0 %v1485
      %v3436 = vpop.f32.mrb[0].mxu0
      %v3437 = vpop.f32.mrb[0].mxu0
      %v3438 = vpop.f32.mrb[0].mxu0
      %v3439 = vadd.f32 0.0, %v3438
      %v3440 = vpop.f32.mrb[0].mxu0
      %3441 = vmatprep.mubr.bf16.mxu0 0
      %3442 = vmatmul.mubr.bf16.gmra.mrb[0].mxu0 %v1488
      %v3443 = vpop.f32.mrb[0].mxu0
      %v3444 = vpop.f32.mrb[0].mxu0
      %v3445 = vpop.f32.mrb[0].mxu0
      %v3446 = vadd.f32 0.0, %v3445
      %v3447 = vpop.f32.mrb[0].mxu0
      %3448 = vmatprep.mubr.bf16.mxu0 0
      %3449 = vmatmul.mubr.bf16.gmra.mrb[0].mxu0 %v1491
      %v3450 = vpop.f32.mrb[0].mxu0
      %v3451 = vpop.f32.mrb[0].mxu0
      %v3452 = vpop.f32.mrb[0].mxu0
      %v3453 = vpop.f32.mrb[0].mxu0
      %3454 = vmatprep.mubr.bf16.mxu0 0
      %3455 = vmatmul.mubr.bf16.gmra.mrb[0].mxu0 %v1494
      %v3456 = vpop.f32.mrb[0].mxu0
      %v3457 = vpop.f32.mrb[0].mxu0
      %v3458 = vpop.f32.mrb[0].mxu0
      %v3459 = vpop.f32.mrb[0].mxu0
      %3460 = vmatprep.mubr.bf16.mxu0 0
      %3461 = vmatmul.mubr.bf16.gmra.mrb[0].mxu0 %v1497
      %v3462 = vpop.f32.mrb[0].mxu0
      %v3463 = vpop.f32.mrb[0].mxu0
      %v3464 = vpop.f32.mrb[0].mxu0
      %v3465 = vpop.f32.mrb[0].mxu0
      %3466 = vmatprep.mubr.bf16.mxu0 0
      %3467 = vmatmul.mubr.bf16.gmra.mrb[0].mxu0 %v1500
      %v3468 = vpop.f32.mrb[0].mxu0
      %v3469 = vpop.f32.mrb[0].mxu0
      %v3470 = vpop.f32.mrb[0].mxu0
      %v3471 = vpop.f32.mrb[0].mxu0
      %3472 = vmatprep.mubr.bf16.mxu0 0
      %3473 = vmatmul.mubr.bf16.gmra.mrb[0].mxu0 %v1503
      %v3474 = vpop.f32.mrb[0].mxu0
      %v3475 = vpop.f32.mrb[0].mxu0
      %v3476 = vpop.f32.mrb[0].mxu0
      %v3477 = vpop.f32.mrb[0].mxu0
      %3478 = vmatprep.mubr.bf16.mxu0 0
      %3479 = vmatmul.mubr.bf16.gmra.mrb[0].mxu0 %v1506
      %v3480 = vpop.f32.mrb[0].mxu0
      %v3481 = vpop.f32.mrb[0].mxu0
      %v3482 = vpop.f32.mrb[0].mxu0
      %v3483 = vadd.f32 0.0, %v3482
      %v3484 = vpop.f32.mrb[0].mxu0
      %3485 = vmatprep.mubr.bf16.mxu0 0
      %3486 = vmatmul.mubr.bf16.gmra.mrb[0].mxu0 %v1509
      %v3487 = vpop.f32.mrb[0].mxu0
      %v3488 = vpop.f32.mrb[0].mxu0
      %v3489 = vpop.f32.mrb[0].mxu0
      %v3490 = vadd.f32 0.0, %v3489
      %v3491 = vpop.f32.mrb[0].mxu0
      %3492 = vmatprep.mubr.bf16.mxu0 0
      %3493 = vmatmul.mubr.bf16.gmra.mrb[0].mxu0 %v1512
      %v3494 = vpop.f32.mrb[0].mxu0
      %v3495 = vpop.f32.mrb[0].mxu0
      %v3496 = vpop.f32.mrb[0].mxu0
      %v3497 = vadd.f32 0.0, %v3496
      %v3498 = vpop.f32.mrb[0].mxu0
      %3499 = vmatprep.mubr.bf16.mxu0 0
      %3500 = vmatmul.mubr.bf16.gmra.mrb[0].mxu0 %v1515
      %v3501 = vpop.f32.mrb[0].mxu0
      %v3502 = vpop.f32.mrb[0].mxu0
      %v3503 = vpop.f32.mrb[0].mxu0
      %v3504 = vpop.f32.mrb[0].mxu0
      %3505 = vmatprep.mubr.bf16.mxu0 0
      %3506 = vmatmul.mubr.bf16.gmra.mrb[0].mxu0 %v1518
      %v3507 = vpop.f32.mrb[0].mxu0
      %v3508 = vpop.f32.mrb[0].mxu0
      %v3509 = vpop.f32.mrb[0].mxu0
      %v3510 = vpop.f32.mrb[0].mxu0
      %3511 = vmatprep.mubr.bf16.mxu0 0
      %3512 = vmatmul.mubr.bf16.gmra.mrb[0].mxu0 %v1521
      %v3513 = vpop.f32.mrb[0].mxu0
      %v3514 = vpop.f32.mrb[0].mxu0
      %v3515 = vpop.f32.mrb[0].mxu0
      %v3516 = vpop.f32.mrb[0].mxu0
      %3517 = vmatprep.mubr.bf16.mxu0 0
      %3518 = vmatmul.mubr.bf16.gmra.mrb[0].mxu0 %v1524
      %v3519 = vpop.f32.mrb[0].mxu0
      %v3520 = vpop.f32.mrb[0].mxu0
      %v3521 = vpop.f32.mrb[0].mxu0
      %v3522 = vpop.f32.mrb[0].mxu0
      %3523 = vmatprep.mubr.bf16.mxu0 0
      %3524 = vmatmul.mubr.bf16.gmra.mrb[0].mxu0 %v1527
      %v3525 = vpop.f32.mrb[0].mxu0
      %v3526 = vpop.f32.mrb[0].mxu0
      %v3527 = vpop.f32.mrb[0].mxu0
      %v3528 = vpop.f32.mrb[0].mxu0
      %3529 = vmatprep.mubr.bf16.mxu0 0
      %3530 = vmatmul.mubr.bf16.gmra.mrb[0].mxu0 %v1530
      %v3531 = vpop.f32.mrb[0].mxu0
      %v3532 = vpop.f32.mrb[0].mxu0
      %v3533 = vpop.f32.mrb[0].mxu0
      %v3534 = vpop.f32.mrb[0].mxu0
      %3535 = vmatprep.mubr.bf16.mxu0 0
      %3536 = vmatmul.mubr.bf16.gmra.mrb[0].mxu0 %v1533
      %v3537 = vpop.f32.mrb[0].mxu0
      %v3538 = vpop.f32.mrb[0].mxu0
      %v3539 = vpop.f32.mrb[0].mxu0
      %v3540 = vpop.f32.mrb[0].mxu0
      %3541 = vmatprep.mubr.bf16.mxu0 0
      %3542 = vmatmul.mubr.bf16.gmra.mrb[0].mxu0 %v1536
      %v3543 = vpop.f32.mrb[0].mxu0
      %v3544 = vpop.f32.mrb[0].mxu0
      %v3545 = vpop.f32.mrb[0].mxu0
      %v3546 = vpop.f32.mrb[0].mxu0
      %3547 = vdwg.mxu0
      %v3548 = vadd.f32 %v3293, %v3381
      %v3549 = vadd.f32 %v3294, %v3388
      %v3550 = vadd.f32 %v3295, %v3395
      %v3551 = vadd.f32 %v3296, %v3432
      %v3552 = vadd.f32 %v3297, %v3439
      %v3553 = vadd.f32 %v3298, %v3446
      %v3554 = vadd.f32 %v3299, %v3483
      %v3555 = vadd.f32 %v3300, %v3490
      %v3556 = vadd.f32 %v3301, %v3497
      %v3561 = vunpack.c.l.b16 %v1396
      %v3562 = vunpack.c.l.b16 %v1397
      %v3563 = vunpack.c.l.b16 %v1398
      %v3564 = vunpack.c.l.b16 %v1399
      %v3565 = vpack.c.b16 %v3562, %v3561
      %v3566 = vpack.c.b16 %v3564, %v3563
      %3569 = vmatprep.subr.bf16.mxu0 0
      %3570 = vmatpush1.bf16.msra.mxu0 %v3565
      %3571 = vmatprep.subr.bf16.mxu0 0
      %3572 = vmatpush1.bf16.msra.mxu0 %v3566
      %3573 = vmatprep.subr.bf16.mxu0 0
      %3574 = vmatpush1.bf16.msra.mxu0 0
      %3575 = vmatprep.subr.bf16.mxu0 0
      %3576 = vmatpush1.bf16.msra.mxu0 0
      %3577 = vmatprep.subr.bf16.mxu0 0
      %3578 = vmatpush1.bf16.msra.mxu0 0
      %3579 = vmatprep.subr.bf16.mxu0 0
      %3580 = vmatpush1.bf16.msra.mxu0 0
      %3581 = vmatprep.subr.bf16.mxu0 0
      %3582 = vmatpush1.bf16.msra.mxu0 0
      %3583 = vmatprep.subr.bf16.mxu0 0
      %3584 = vmatpush1.bf16.msra.mxu0 0
      %3585 = vmatprep.subr.bf16.mxu0 0
      %3586 = vmatpush1.bf16.msra.mxu0 0
      %3587 = vmatprep.subr.bf16.mxu0 0
      %3588 = vmatpush1.bf16.msra.mxu0 0
      %3589 = vmatprep.subr.bf16.mxu0 0
      %3590 = vmatpush1.bf16.msra.mxu0 0
      %3591 = vmatprep.subr.bf16.mxu0 0
      %3592 = vmatpush1.bf16.msra.mxu0 0
      %3593 = vmatprep.subr.bf16.mxu0 0
      %3594 = vmatpush1.bf16.msra.mxu0 0
      %3595 = vmatprep.subr.bf16.mxu0 0
      %3596 = vmatpush1.bf16.msra.mxu0 0
      %3597 = vmatprep.subr.bf16.mxu0 0
      %3598 = vmatpush1.bf16.msra.mxu0 0
      %3599 = vmatprep.subr.bf16.mxu0 0
      %3600 = vmatpush1.bf16.msra.mxu0 0
      %3601 = vmatprep.mubr.bf16.mxu0 0
      %3602 = vmatmul.mubr.bf16.gmra.mrb[0].mxu0 %v1443
      %v3603 = vpop.f32.mrb[0].mxu0
      %v3604 = vpop.f32.mrb[0].mxu0
      %v3605 = vpop.f32.mrb[0].mxu0
      %v3606 = vpop.f32.mrb[0].mxu0
      %3607 = vmatprep.mubr.bf16.mxu0 0
      %3608 = vmatmul.mubr.bf16.gmra.mrb[0].mxu0 %v1446
      %v3609 = vpop.f32.mrb[0].mxu0
      %v3610 = vpop.f32.mrb[0].mxu0
      %v3611 = vpop.f32.mrb[0].mxu0
      %v3612 = vpop.f32.mrb[0].mxu0
      %3613 = vmatprep.mubr.bf16.mxu0 0
      %3614 = vmatmul.mubr.bf16.gmra.mrb[0].mxu0 %v1449
      %v3615 = vpop.f32.mrb[0].mxu0
      %v3616 = vpop.f32.mrb[0].mxu0
      %v3617 = vpop.f32.mrb[0].mxu0
      %v3618 = vpop.f32.mrb[0].mxu0
      %3619 = vmatprep.mubr.bf16.mxu0 0
      %3620 = vmatmul.mubr.bf16.gmra.mrb[0].mxu0 %v1452
      %v3621 = vpop.f32.mrb[0].mxu0
      %v3622 = vpop.f32.mrb[0].mxu0
      %v3623 = vpop.f32.mrb[0].mxu0
      %v3624 = vpop.f32.mrb[0].mxu0
      %3625 = vmatprep.mubr.bf16.mxu0 0
      %3626 = vmatmul.mubr.bf16.gmra.mrb[0].mxu0 %v1455
      %v3627 = vpop.f32.mrb[0].mxu0
      %v3628 = vpop.f32.mrb[0].mxu0
      %v3629 = vpop.f32.mrb[0].mxu0
      %v3630 = vpop.f32.mrb[0].mxu0
      %3631 = vmatprep.mubr.bf16.mxu0 0
      %3632 = vmatmul.mubr.bf16.gmra.mrb[0].mxu0 %v1458
      %v3633 = vpop.f32.mrb[0].mxu0
      %v3634 = vpop.f32.mrb[0].mxu0
      %v3635 = vpop.f32.mrb[0].mxu0
      %v3636 = vpop.f32.mrb[0].mxu0
      %3637 = vmatprep.mubr.bf16.mxu0 0
      %3638 = vmatmul.mubr.bf16.gmra.mrb[0].mxu0 %v1461
      %v3639 = vpop.f32.mrb[0].mxu0
      %v3640 = vpop.f32.mrb[0].mxu0
      %v3641 = vpop.f32.mrb[0].mxu0
      %v3642 = vpop.f32.mrb[0].mxu0
      %3643 = vmatprep.mubr.bf16.mxu0 0
      %3644 = vmatmul.mubr.bf16.gmra.mrb[0].mxu0 %v1464
      %v3645 = vpop.f32.mrb[0].mxu0
      %v3646 = vpop.f32.mrb[0].mxu0
      %v3647 = vpop.f32.mrb[0].mxu0
      %v3648 = vpop.f32.mrb[0].mxu0
      %3649 = vmatprep.mubr.bf16.mxu0 0
      %3650 = vmatmul.mubr.bf16.gmra.mrb[0].mxu0 %v1467
      %v3651 = vpop.f32.mrb[0].mxu0
      %v3652 = vadd.f32 0.0, %v3651
      %v3653 = vpop.f32.mrb[0].mxu0
      %v3654 = vpop.f32.mrb[0].mxu0
      %v3655 = vpop.f32.mrb[0].mxu0
      %3656 = vmatprep.mubr.bf16.mxu0 0
      %3657 = vmatmul.mubr.bf16.gmra.mrb[0].mxu0 %v1470
      %v3658 = vpop.f32.mrb[0].mxu0
      %v3659 = vadd.f32 0.0, %v3658
      %v3660 = vpop.f32.mrb[0].mxu0
      %v3661 = vpop.f32.mrb[0].mxu0
      %v3662 = vpop.f32.mrb[0].mxu0
      %3663 = vmatprep.mubr.bf16.mxu0 0
      %3664 = vmatmul.mubr.bf16.gmra.mrb[0].mxu0 %v1473
      %v3665 = vpop.f32.mrb[0].mxu0
      %v3666 = vadd.f32 0.0, %v3665
      %v3667 = vpop.f32.mrb[0].mxu0
      %v3668 = vpop.f32.mrb[0].mxu0
      %v3669 = vpop.f32.mrb[0].mxu0
      %3670 = vmatprep.mubr.bf16.mxu0 0
      %3671 = vmatmul.mubr.bf16.gmra.mrb[0].mxu0 %v1476
      %v3672 = vpop.f32.mrb[0].mxu0
      %v3673 = vpop.f32.mrb[0].mxu0
      %v3674 = vpop.f32.mrb[0].mxu0
      %v3675 = vpop.f32.mrb[0].mxu0
      %3676 = vmatprep.mubr.bf16.mxu0 0
      %3677 = vmatmul.mubr.bf16.gmra.mrb[0].mxu0 %v1479
      %v3678 = vpop.f32.mrb[0].mxu0
      %v3679 = vpop.f32.mrb[0].mxu0
      %v3680 = vpop.f32.mrb[0].mxu0
      %v3681 = vpop.f32.mrb[0].mxu0
      %3682 = vmatprep.mubr.bf16.mxu0 0
      %3683 = vmatmul.mubr.bf16.gmra.mrb[0].mxu0 %v1482
      %v3684 = vpop.f32.mrb[0].mxu0
      %v3685 = vpop.f32.mrb[0].mxu0
      %v3686 = vpop.f32.mrb[0].mxu0
      %v3687 = vpop.f32.mrb[0].mxu0
      %3688 = vmatprep.mubr.bf16.mxu0 0
      %3689 = vmatmul.mubr.bf16.gmra.mrb[0].mxu0 %v1485
      %v3690 = vpop.f32.mrb[0].mxu0
      %v3691 = vpop.f32.mrb[0].mxu0
      %v3692 = vpop.f32.mrb[0].mxu0
      %v3693 = vpop.f32.mrb[0].mxu0
      %3694 = vmatprep.mubr.bf16.mxu0 0
      %3695 = vmatmul.mubr.bf16.gmra.mrb[0].mxu0 %v1488
      %v3696 = vpop.f32.mrb[0].mxu0
      %v3697 = vpop.f32.mrb[0].mxu0
      %v3698 = vpop.f32.mrb[0].mxu0
      %v3699 = vpop.f32.mrb[0].mxu0
      %3700 = vmatprep.mubr.bf16.mxu0 0
      %3701 = vmatmul.mubr.bf16.gmra.mrb[0].mxu0 %v1491
      %v3702 = vpop.f32.mrb[0].mxu0
      %v3703 = vadd.f32 0.0, %v3702
      %v3704 = vpop.f32.mrb[0].mxu0
      %v3705 = vpop.f32.mrb[0].mxu0
      %v3706 = vpop.f32.mrb[0].mxu0
      %3707 = vmatprep.mubr.bf16.mxu0 0
      %3708 = vmatmul.mubr.bf16.gmra.mrb[0].mxu0 %v1494
      %v3709 = vpop.f32.mrb[0].mxu0
      %v3710 = vadd.f32 0.0, %v3709
      %v3711 = vpop.f32.mrb[0].mxu0
      %v3712 = vpop.f32.mrb[0].mxu0
      %v3713 = vpop.f32.mrb[0].mxu0
      %3714 = vmatprep.mubr.bf16.mxu0 0
      %3715 = vmatmul.mubr.bf16.gmra.mrb[0].mxu0 %v1497
      %v3716 = vpop.f32.mrb[0].mxu0
      %v3717 = vadd.f32 0.0, %v3716
      %v3718 = vpop.f32.mrb[0].mxu0
      %v3719 = vpop.f32.mrb[0].mxu0
      %v3720 = vpop.f32.mrb[0].mxu0
      %3721 = vmatprep.mubr.bf16.mxu0 0
      %3722 = vmatmul.mubr.bf16.gmra.mrb[0].mxu0 %v1500
      %v3723 = vpop.f32.mrb[0].mxu0
      %v3724 = vpop.f32.mrb[0].mxu0
      %v3725 = vpop.f32.mrb[0].mxu0
      %v3726 = vpop.f32.mrb[0].mxu0
      %3727 = vmatprep.mubr.bf16.mxu0 0
      %3728 = vmatmul.mubr.bf16.gmra.mrb[0].mxu0 %v1503
      %v3729 = vpop.f32.mrb[0].mxu0
      %v3730 = vpop.f32.mrb[0].mxu0
      %v3731 = vpop.f32.mrb[0].mxu0
      %v3732 = vpop.f32.mrb[0].mxu0
      %3733 = vmatprep.mubr.bf16.mxu0 0
      %3734 = vmatmul.mubr.bf16.gmra.mrb[0].mxu0 %v1506
      %v3735 = vpop.f32.mrb[0].mxu0
      %v3736 = vpop.f32.mrb[0].mxu0
      %v3737 = vpop.f32.mrb[0].mxu0
      %v3738 = vpop.f32.mrb[0].mxu0
      %3739 = vmatprep.mubr.bf16.mxu0 0
      %3740 = vmatmul.mubr.bf16.gmra.mrb[0].mxu0 %v1509
      %v3741 = vpop.f32.mrb[0].mxu0
      %v3742 = vpop.f32.mrb[0].mxu0
      %v3743 = vpop.f32.mrb[0].mxu0
      %v3744 = vpop.f32.mrb[0].mxu0
      %3745 = vmatprep.mubr.bf16.mxu0 0
      %3746 = vmatmul.mubr.bf16.gmra.mrb[0].mxu0 %v1512
      %v3747 = vpop.f32.mrb[0].mxu0
      %v3748 = vpop.f32.mrb[0].mxu0
      %v3749 = vpop.f32.mrb[0].mxu0
      %v3750 = vpop.f32.mrb[0].mxu0
      %3751 = vmatprep.mubr.bf16.mxu0 0
      %3752 = vmatmul.mubr.bf16.gmra.mrb[0].mxu0 %v1515
      %v3753 = vpop.f32.mrb[0].mxu0
      %v3754 = vadd.f32 0.0, %v3753
      %v3755 = vpop.f32.mrb[0].mxu0
      %v3756 = vpop.f32.mrb[0].mxu0
      %v3757 = vpop.f32.mrb[0].mxu0
      %3758 = vmatprep.mubr.bf16.mxu0 0
      %3759 = vmatmul.mubr.bf16.gmra.mrb[0].mxu0 %v1518
      %v3760 = vpop.f32.mrb[0].mxu0
      %v3761 = vadd.f32 0.0, %v3760
      %v3762 = vpop.f32.mrb[0].mxu0
      %v3763 = vpop.f32.mrb[0].mxu0
      %v3764 = vpop.f32.mrb[0].mxu0
      %3765 = vmatprep.mubr.bf16.mxu0 0
      %3766 = vmatmul.mubr.bf16.gmra.mrb[0].mxu0 %v1521
      %v3767 = vpop.f32.mrb[0].mxu0
      %v3768 = vadd.f32 0.0, %v3767
      %v3769 = vpop.f32.mrb[0].mxu0
      %v3770 = vpop.f32.mrb[0].mxu0
      %v3771 = vpop.f32.mrb[0].mxu0
      %3772 = vmatprep.mubr.bf16.mxu0 0
      %3773 = vmatmul.mubr.bf16.gmra.mrb[0].mxu0 %v1524
      %v3774 = vpop.f32.mrb[0].mxu0
      %v3775 = vpop.f32.mrb[0].mxu0
      %v3776 = vpop.f32.mrb[0].mxu0
      %v3777 = vpop.f32.mrb[0].mxu0
      %3778 = vmatprep.mubr.bf16.mxu0 0
      %3779 = vmatmul.mubr.bf16.gmra.mrb[0].mxu0 %v1527
      %v3780 = vpop.f32.mrb[0].mxu0
      %v3781 = vpop.f32.mrb[0].mxu0
      %v3782 = vpop.f32.mrb[0].mxu0
      %v3783 = vpop.f32.mrb[0].mxu0
      %3784 = vmatprep.mubr.bf16.mxu0 0
      %3785 = vmatmul.mubr.bf16.gmra.mrb[0].mxu0 %v1530
      %v3786 = vpop.f32.mrb[0].mxu0
      %v3787 = vpop.f32.mrb[0].mxu0
      %v3788 = vpop.f32.mrb[0].mxu0
      %v3789 = vpop.f32.mrb[0].mxu0
      %3790 = vmatprep.mubr.bf16.mxu0 0
      %3791 = vmatmul.mubr.bf16.gmra.mrb[0].mxu0 %v1533
      %v3792 = vpop.f32.mrb[0].mxu0
      %v3793 = vpop.f32.mrb[0].mxu0
      %v3794 = vpop.f32.mrb[0].mxu0
      %v3795 = vpop.f32.mrb[0].mxu0
      %3796 = vmatprep.mubr.bf16.mxu0 0
      %3797 = vmatmul.mubr.bf16.gmra.mrb[0].mxu0 %v1536
      %v3798 = vpop.f32.mrb[0].mxu0
      %v3799 = vpop.f32.mrb[0].mxu0
      %v3800 = vpop.f32.mrb[0].mxu0
      %v3801 = vpop.f32.mrb[0].mxu0
      %3802 = vdwg.mxu0
      %v3803 = vadd.f32 %v3548, %v3652
      %v3804 = vadd.f32 %v3549, %v3659
      %v3805 = vadd.f32 %v3550, %v3666
      %v3806 = vadd.f32 %v3551, %v3703
      %v3807 = vadd.f32 %v3552, %v3710
      %v3808 = vadd.f32 %v3553, %v3717
      %v3809 = vadd.f32 %v3554, %v3754
      %v3810 = vadd.f32 %v3555, %v3761
      %v3811 = vadd.f32 %v3556, %v3768
      %v3816 = vunpack.c.l.b16 %v1400
      %v3817 = vunpack.c.l.b16 %v1401
      %v3818 = vunpack.c.l.b16 %v1402
      %v3819 = vunpack.c.l.b16 %v1403
      %v3820 = vpack.c.b16 %v3817, %v3816
      %v3821 = vpack.c.b16 %v3819, %v3818
      %3824 = vmatprep.subr.bf16.mxu0 0
      %3825 = vmatpush1.bf16.msra.mxu0 %v3820
      %3826 = vmatprep.subr.bf16.mxu0 0
      %3827 = vmatpush1.bf16.msra.mxu0 %v3821
      %3828 = vmatprep.subr.bf16.mxu0 0
      %3829 = vmatpush1.bf16.msra.mxu0 0
      %3830 = vmatprep.subr.bf16.mxu0 0
      %3831 = vmatpush1.bf16.msra.mxu0 0
      %3832 = vmatprep.subr.bf16.mxu0 0
      %3833 = vmatpush1.bf16.msra.mxu0 0
      %3834 = vmatprep.subr.bf16.mxu0 0
      %3835 = vmatpush1.bf16.msra.mxu0 0
      %3836 = vmatprep.subr.bf16.mxu0 0
      %3837 = vmatpush1.bf16.msra.mxu0 0
      %3838 = vmatprep.subr.bf16.mxu0 0
      %3839 = vmatpush1.bf16.msra.mxu0 0
      %3840 = vmatprep.subr.bf16.mxu0 0
      %3841 = vmatpush1.bf16.msra.mxu0 0
      %3842 = vmatprep.subr.bf16.mxu0 0
      %3843 = vmatpush1.bf16.msra.mxu0 0
      %3844 = vmatprep.subr.bf16.mxu0 0
      %3845 = vmatpush1.bf16.msra.mxu0 0
      %3846 = vmatprep.subr.bf16.mxu0 0
      %3847 = vmatpush1.bf16.msra.mxu0 0
      %3848 = vmatprep.subr.bf16.mxu0 0
      %3849 = vmatpush1.bf16.msra.mxu0 0
      %3850 = vmatprep.subr.bf16.mxu0 0
      %3851 = vmatpush1.bf16.msra.mxu0 0
      %3852 = vmatprep.subr.bf16.mxu0 0
      %3853 = vmatpush1.bf16.msra.mxu0 0
      %3854 = vmatprep.subr.bf16.mxu0 0
      %3855 = vmatpush1.bf16.msra.mxu0 0
      %3856 = vmatprep.mubr.bf16.mxu0 0
      %3857 = vmatmul.mubr.bf16.gmra.mrb[0].mxu0 %v1443
      %v3858 = vpop.f32.mrb[0].mxu0
      %v3859 = vpop.f32.mrb[0].mxu0
      %v3860 = vpop.f32.mrb[0].mxu0
      %v3861 = vpop.f32.mrb[0].mxu0
      %3862 = vmatprep.mubr.bf16.mxu0 0
      %3863 = vmatmul.mubr.bf16.gmra.mrb[0].mxu0 %v1446
      %v3864 = vpop.f32.mrb[0].mxu0
      %v3865 = vpop.f32.mrb[0].mxu0
      %v3866 = vpop.f32.mrb[0].mxu0
      %v3867 = vpop.f32.mrb[0].mxu0
      %3868 = vmatprep.mubr.bf16.mxu0 0
      %3869 = vmatmul.mubr.bf16.gmra.mrb[0].mxu0 %v1449
      %v3870 = vpop.f32.mrb[0].mxu0
      %v3871 = vpop.f32.mrb[0].mxu0
      %v3872 = vpop.f32.mrb[0].mxu0
      %v3873 = vpop.f32.mrb[0].mxu0
      %3874 = vmatprep.mubr.bf16.mxu0 0
      %3875 = vmatmul.mubr.bf16.gmra.mrb[0].mxu0 %v1452
      %v3876 = vpop.f32.mrb[0].mxu0
      %v3877 = vpop.f32.mrb[0].mxu0
      %v3878 = vpop.f32.mrb[0].mxu0
      %v3879 = vpop.f32.mrb[0].mxu0
      %3880 = vmatprep.mubr.bf16.mxu0 0
      %3881 = vmatmul.mubr.bf16.gmra.mrb[0].mxu0 %v1455
      %v3882 = vpop.f32.mrb[0].mxu0
      %v3883 = vpop.f32.mrb[0].mxu0
      %v3884 = vpop.f32.mrb[0].mxu0
      %v3885 = vpop.f32.mrb[0].mxu0
      %3886 = vmatprep.mubr.bf16.mxu0 0
      %3887 = vmatmul.mubr.bf16.gmra.mrb[0].mxu0 %v1458
      %v3888 = vpop.f32.mrb[0].mxu0
      %v3889 = vpop.f32.mrb[0].mxu0
      %v3890 = vpop.f32.mrb[0].mxu0
      %v3891 = vpop.f32.mrb[0].mxu0
      %3892 = vmatprep.mubr.bf16.mxu0 0
      %3893 = vmatmul.mubr.bf16.gmra.mrb[0].mxu0 %v1461
      %v3894 = vpop.f32.mrb[0].mxu0
      %v3895 = vpop.f32.mrb[0].mxu0
      %v3896 = vpop.f32.mrb[0].mxu0
      %v3897 = vpop.f32.mrb[0].mxu0
      %3898 = vmatprep.mubr.bf16.mxu0 0
      %3899 = vmatmul.mubr.bf16.gmra.mrb[0].mxu0 %v1464
      %v3900 = vpop.f32.mrb[0].mxu0
      %v3901 = vpop.f32.mrb[0].mxu0
      %v3902 = vpop.f32.mrb[0].mxu0
      %v3903 = vpop.f32.mrb[0].mxu0
      %3904 = vmatprep.mubr.bf16.mxu0 0
      %3905 = vmatmul.mubr.bf16.gmra.mrb[0].mxu0 %v1467
      %v3906 = vpop.f32.mrb[0].mxu0
      %v3907 = vpop.f32.mrb[0].mxu0
      %v3908 = vpop.f32.mrb[0].mxu0
      %v3909 = vadd.f32 0.0, %v3908
      %v3910 = vpop.f32.mrb[0].mxu0
      %3911 = vmatprep.mubr.bf16.mxu0 0
      %3912 = vmatmul.mubr.bf16.gmra.mrb[0].mxu0 %v1470
      %v3913 = vpop.f32.mrb[0].mxu0
      %v3914 = vpop.f32.mrb[0].mxu0
      %v3915 = vpop.f32.mrb[0].mxu0
      %v3916 = vadd.f32 0.0, %v3915
      %v3917 = vpop.f32.mrb[0].mxu0
      %3918 = vmatprep.mubr.bf16.mxu0 0
      %3919 = vmatmul.mubr.bf16.gmra.mrb[0].mxu0 %v1473
      %v3920 = vpop.f32.mrb[0].mxu0
      %v3921 = vpop.f32.mrb[0].mxu0
      %v3922 = vpop.f32.mrb[0].mxu0
      %v3923 = vadd.f32 0.0, %v3922
      %v3924 = vpop.f32.mrb[0].mxu0
      %3925 = vmatprep.mubr.bf16.mxu0 0
      %3926 = vmatmul.mubr.bf16.gmra.mrb[0].mxu0 %v1476
      %v3927 = vpop.f32.mrb[0].mxu0
      %v3928 = vpop.f32.mrb[0].mxu0
      %v3929 = vpop.f32.mrb[0].mxu0
      %v3930 = vpop.f32.mrb[0].mxu0
      %3931 = vmatprep.mubr.bf16.mxu0 0
      %3932 = vmatmul.mubr.bf16.gmra.mrb[0].mxu0 %v1479
      %v3933 = vpop.f32.mrb[0].mxu0
      %v3934 = vpop.f32.mrb[0].mxu0
      %v3935 = vpop.f32.mrb[0].mxu0
      %v3936 = vpop.f32.mrb[0].mxu0
      %3937 = vmatprep.mubr.bf16.mxu0 0
      %3938 = vmatmul.mubr.bf16.gmra.mrb[0].mxu0 %v1482
      %v3939 = vpop.f32.mrb[0].mxu0
      %v3940 = vpop.f32.mrb[0].mxu0
      %v3941 = vpop.f32.mrb[0].mxu0
      %v3942 = vpop.f32.mrb[0].mxu0
      %3943 = vmatprep.mubr.bf16.mxu0 0
      %3944 = vmatmul.mubr.bf16.gmra.mrb[0].mxu0 %v1485
      %v3945 = vpop.f32.mrb[0].mxu0
      %v3946 = vpop.f32.mrb[0].mxu0
      %v3947 = vpop.f32.mrb[0].mxu0
      %v3948 = vpop.f32.mrb[0].mxu0
      %3949 = vmatprep.mubr.bf16.mxu0 0
      %3950 = vmatmul.mubr.bf16.gmra.mrb[0].mxu0 %v1488
      %v3951 = vpop.f32.mrb[0].mxu0
      %v3952 = vpop.f32.mrb[0].mxu0
      %v3953 = vpop.f32.mrb[0].mxu0
      %v3954 = vpop.f32.mrb[0].mxu0
      %3955 = vmatprep.mubr.bf16.mxu0 0
      %3956 = vmatmul.mubr.bf16.gmra.mrb[0].mxu0 %v1491
      %v3957 = vpop.f32.mrb[0].mxu0
      %v3958 = vpop.f32.mrb[0].mxu0
      %v3959 = vpop.f32.mrb[0].mxu0
      %v3960 = vadd.f32 0.0, %v3959
      %v3961 = vpop.f32.mrb[0].mxu0
      %3962 = vmatprep.mubr.bf16.mxu0 0
      %3963 = vmatmul.mubr.bf16.gmra.mrb[0].mxu0 %v1494
      %v3964 = vpop.f32.mrb[0].mxu0
      %v3965 = vpop.f32.mrb[0].mxu0
      %v3966 = vpop.f32.mrb[0].mxu0
      %v3967 = vadd.f32 0.0, %v3966
      %v3968 = vpop.f32.mrb[0].mxu0
      %3969 = vmatprep.mubr.bf16.mxu0 0
      %3970 = vmatmul.mubr.bf16.gmra.mrb[0].mxu0 %v1497
      %v3971 = vpop.f32.mrb[0].mxu0
      %v3972 = vpop.f32.mrb[0].mxu0
      %v3973 = vpop.f32.mrb[0].mxu0
      %v3974 = vadd.f32 0.0, %v3973
      %v3975 = vpop.f32.mrb[0].mxu0
      %3976 = vmatprep.mubr.bf16.mxu0 0
      %3977 = vmatmul.mubr.bf16.gmra.mrb[0].mxu0 %v1500
      %v3978 = vpop.f32.mrb[0].mxu0
      %v3979 = vpop.f32.mrb[0].mxu0
      %v3980 = vpop.f32.mrb[0].mxu0
      %v3981 = vpop.f32.mrb[0].mxu0
      %3982 = vmatprep.mubr.bf16.mxu0 0
      %3983 = vmatmul.mubr.bf16.gmra.mrb[0].mxu0 %v1503
      %v3984 = vpop.f32.mrb[0].mxu0
      %v3985 = vpop.f32.mrb[0].mxu0
      %v3986 = vpop.f32.mrb[0].mxu0
      %v3987 = vpop.f32.mrb[0].mxu0
      %3988 = vmatprep.mubr.bf16.mxu0 0
      %3989 = vmatmul.mubr.bf16.gmra.mrb[0].mxu0 %v1506
      %v3990 = vpop.f32.mrb[0].mxu0
      %v3991 = vpop.f32.mrb[0].mxu0
      %v3992 = vpop.f32.mrb[0].mxu0
      %v3993 = vpop.f32.mrb[0].mxu0
      %3994 = vmatprep.mubr.bf16.mxu0 0
      %3995 = vmatmul.mubr.bf16.gmra.mrb[0].mxu0 %v1509
      %v3996 = vpop.f32.mrb[0].mxu0
      %v3997 = vpop.f32.mrb[0].mxu0
      %v3998 = vpop.f32.mrb[0].mxu0
      %v3999 = vpop.f32.mrb[0].mxu0
      %4000 = vmatprep.mubr.bf16.mxu0 0
      %4001 = vmatmul.mubr.bf16.gmra.mrb[0].mxu0 %v1512
      %v4002 = vpop.f32.mrb[0].mxu0
      %v4003 = vpop.f32.mrb[0].mxu0
      %v4004 = vpop.f32.mrb[0].mxu0
      %v4005 = vpop.f32.mrb[0].mxu0
      %4006 = vmatprep.mubr.bf16.mxu0 0
      %4007 = vmatmul.mubr.bf16.gmra.mrb[0].mxu0 %v1515
      %v4008 = vpop.f32.mrb[0].mxu0
      %v4009 = vpop.f32.mrb[0].mxu0
      %v4010 = vpop.f32.mrb[0].mxu0
      %v4011 = vadd.f32 0.0, %v4010
      %v4012 = vpop.f32.mrb[0].mxu0
      %4013 = vmatprep.mubr.bf16.mxu0 0
      %4014 = vmatmul.mubr.bf16.gmra.mrb[0].mxu0 %v1518
      %v4015 = vpop.f32.mrb[0].mxu0
      %v4016 = vpop.f32.mrb[0].mxu0
      %v4017 = vpop.f32.mrb[0].mxu0
      %v4018 = vadd.f32 0.0, %v4017
      %v4019 = vpop.f32.mrb[0].mxu0
      %4020 = vmatprep.mubr.bf16.mxu0 0
      %4021 = vmatmul.mubr.bf16.gmra.mrb[0].mxu0 %v1521
      %v4022 = vpop.f32.mrb[0].mxu0
      %v4023 = vpop.f32.mrb[0].mxu0
      %v4024 = vpop.f32.mrb[0].mxu0
      %v4025 = vadd.f32 0.0, %v4024
      %v4026 = vpop.f32.mrb[0].mxu0
      %4027 = vmatprep.mubr.bf16.mxu0 0
      %4028 = vmatmul.mubr.bf16.gmra.mrb[0].mxu0 %v1524
      %v4029 = vpop.f32.mrb[0].mxu0
      %v4030 = vpop.f32.mrb[0].mxu0
      %v4031 = vpop.f32.mrb[0].mxu0
      %v4032 = vpop.f32.mrb[0].mxu0
      %4033 = vmatprep.mubr.bf16.mxu0 0
      %4034 = vmatmul.mubr.bf16.gmra.mrb[0].mxu0 %v1527
      %v4035 = vpop.f32.mrb[0].mxu0
      %v4036 = vpop.f32.mrb[0].mxu0
      %v4037 = vpop.f32.mrb[0].mxu0
      %v4038 = vpop.f32.mrb[0].mxu0
      %4039 = vmatprep.mubr.bf16.mxu0 0
      %4040 = vmatmul.mubr.bf16.gmra.mrb[0].mxu0 %v1530
      %v4041 = vpop.f32.mrb[0].mxu0
      %v4042 = vpop.f32.mrb[0].mxu0
      %v4043 = vpop.f32.mrb[0].mxu0
      %v4044 = vpop.f32.mrb[0].mxu0
      %4045 = vmatprep.mubr.bf16.mxu0 0
      %4046 = vmatmul.mubr.bf16.gmra.mrb[0].mxu0 %v1533
      %v4047 = vpop.f32.mrb[0].mxu0
      %v4048 = vpop.f32.mrb[0].mxu0
      %v4049 = vpop.f32.mrb[0].mxu0
      %v4050 = vpop.f32.mrb[0].mxu0
      %4051 = vmatprep.mubr.bf16.mxu0 0
      %4052 = vmatmul.mubr.bf16.gmra.mrb[0].mxu0 %v1536
      %v4053 = vpop.f32.mrb[0].mxu0
      %v4054 = vpop.f32.mrb[0].mxu0
      %v4055 = vpop.f32.mrb[0].mxu0
      %v4056 = vpop.f32.mrb[0].mxu0
      %4057 = vdwg.mxu0
      %v4058 = vadd.f32 %v3803, %v3909
      %v4059 = vadd.f32 %v3804, %v3916
      %v4060 = vadd.f32 %v3805, %v3923
      %v4061 = vadd.f32 %v3806, %v3960
      %v4062 = vadd.f32 %v3807, %v3967
      %v4063 = vadd.f32 %v3808, %v3974
      %v4064 = vadd.f32 %v3809, %v4011
      %v4065 = vadd.f32 %v3810, %v4018
      %v4066 = vadd.f32 %v3811, %v4025
      %v4071 = vunpack.c.l.b16 %v1404
      %v4072 = vunpack.c.l.b16 %v1405
      %v4073 = vunpack.c.l.b16 %v1406
      %v4074 = vunpack.c.l.b16 %v1407
      %v4075 = vpack.c.b16 %v4072, %v4071
      %v4076 = vpack.c.b16 %v4074, %v4073
      %4079 = vmatprep.subr.bf16.mxu0 0
      %4080 = vmatpush1.bf16.msra.mxu0 %v4075
      %4081 = vmatprep.subr.bf16.mxu0 0
      %4082 = vmatpush1.bf16.msra.mxu0 %v4076
      %4083 = vmatprep.subr.bf16.mxu0 0
      %4084 = vmatpush1.bf16.msra.mxu0 0
      %4085 = vmatprep.subr.bf16.mxu0 0
      %4086 = vmatpush1.bf16.msra.mxu0 0
      %4087 = vmatprep.subr.bf16.mxu0 0
      %4088 = vmatpush1.bf16.msra.mxu0 0
      %4089 = vmatprep.subr.bf16.mxu0 0
      %4090 = vmatpush1.bf16.msra.mxu0 0
      %4091 = vmatprep.subr.bf16.mxu0 0
      %4092 = vmatpush1.bf16.msra.mxu0 0
      %4093 = vmatprep.subr.bf16.mxu0 0
      %4094 = vmatpush1.bf16.msra.mxu0 0
      %4095 = vmatprep.subr.bf16.mxu0 0
      %4096 = vmatpush1.bf16.msra.mxu0 0
      %4097 = vmatprep.subr.bf16.mxu0 0
      %4098 = vmatpush1.bf16.msra.mxu0 0
      %4099 = vmatprep.subr.bf16.mxu0 0
      %4100 = vmatpush1.bf16.msra.mxu0 0
      %4101 = vmatprep.subr.bf16.mxu0 0
      %4102 = vmatpush1.bf16.msra.mxu0 0
      %4103 = vmatprep.subr.bf16.mxu0 0
      %4104 = vmatpush1.bf16.msra.mxu0 0
      %4105 = vmatprep.subr.bf16.mxu0 0
      %4106 = vmatpush1.bf16.msra.mxu0 0
      %4107 = vmatprep.subr.bf16.mxu0 0
      %4108 = vmatpush1.bf16.msra.mxu0 0
      %4109 = vmatprep.subr.bf16.mxu0 0
      %4110 = vmatpush1.bf16.msra.mxu0 0
      %4111 = vmatprep.mubr.bf16.mxu0 0
      %4112 = vmatmul.mubr.bf16.gmra.mrb[0].mxu0 %v1443
      %v4113 = vpop.f32.mrb[0].mxu0
      %v4114 = vpop.f32.mrb[0].mxu0
      %v4115 = vpop.f32.mrb[0].mxu0
      %v4116 = vpop.f32.mrb[0].mxu0
      %4117 = vmatprep.mubr.bf16.mxu0 0
      %4118 = vmatmul.mubr.bf16.gmra.mrb[0].mxu0 %v1446
      %v4119 = vpop.f32.mrb[0].mxu0
      %v4120 = vpop.f32.mrb[0].mxu0
      %v4121 = vpop.f32.mrb[0].mxu0
      %v4122 = vpop.f32.mrb[0].mxu0
      %4123 = vmatprep.mubr.bf16.mxu0 0
      %4124 = vmatmul.mubr.bf16.gmra.mrb[0].mxu0 %v1449
      %v4125 = vpop.f32.mrb[0].mxu0
      %v4126 = vpop.f32.mrb[0].mxu0
      %v4127 = vpop.f32.mrb[0].mxu0
      %v4128 = vpop.f32.mrb[0].mxu0
      %4129 = vmatprep.mubr.bf16.mxu0 0
      %4130 = vmatmul.mubr.bf16.gmra.mrb[0].mxu0 %v1452
      %v4131 = vpop.f32.mrb[0].mxu0
      %v4132 = vpop.f32.mrb[0].mxu0
      %v4133 = vpop.f32.mrb[0].mxu0
      %v4134 = vpop.f32.mrb[0].mxu0
      %4135 = vmatprep.mubr.bf16.mxu0 0
      %4136 = vmatmul.mubr.bf16.gmra.mrb[0].mxu0 %v1455
      %v4137 = vpop.f32.mrb[0].mxu0
      %v4138 = vpop.f32.mrb[0].mxu0
      %v4139 = vpop.f32.mrb[0].mxu0
      %v4140 = vpop.f32.mrb[0].mxu0
      %4141 = vmatprep.mubr.bf16.mxu0 0
      %4142 = vmatmul.mubr.bf16.gmra.mrb[0].mxu0 %v1458
      %v4143 = vpop.f32.mrb[0].mxu0
      %v4144 = vpop.f32.mrb[0].mxu0
      %v4145 = vpop.f32.mrb[0].mxu0
      %v4146 = vpop.f32.mrb[0].mxu0
      %4147 = vmatprep.mubr.bf16.mxu0 0
      %4148 = vmatmul.mubr.bf16.gmra.mrb[0].mxu0 %v1461
      %v4149 = vpop.f32.mrb[0].mxu0
      %v4150 = vpop.f32.mrb[0].mxu0
      %v4151 = vpop.f32.mrb[0].mxu0
      %v4152 = vpop.f32.mrb[0].mxu0
      %4153 = vmatprep.mubr.bf16.mxu0 0
      %4154 = vmatmul.mubr.bf16.gmra.mrb[0].mxu0 %v1464
      %v4155 = vpop.f32.mrb[0].mxu0
      %v4156 = vpop.f32.mrb[0].mxu0
      %v4157 = vpop.f32.mrb[0].mxu0
      %v4158 = vpop.f32.mrb[0].mxu0
      %4159 = vmatprep.mubr.bf16.mxu0 0
      %4160 = vmatmul.mubr.bf16.gmra.mrb[0].mxu0 %v1467
      %v4161 = vpop.f32.mrb[0].mxu0
      %v4162 = vpop.f32.mrb[0].mxu0
      %v4163 = vpop.f32.mrb[0].mxu0
      %v4164 = vpop.f32.mrb[0].mxu0
      %4165 = vmatprep.mubr.bf16.mxu0 0
      %4166 = vmatmul.mubr.bf16.gmra.mrb[0].mxu0 %v1470
      %v4167 = vpop.f32.mrb[0].mxu0
      %v4168 = vadd.f32 0.0, %v4167
      %v4169 = vpop.f32.mrb[0].mxu0
      %v4170 = vpop.f32.mrb[0].mxu0
      %v4171 = vpop.f32.mrb[0].mxu0
      %4172 = vmatprep.mubr.bf16.mxu0 0
      %4173 = vmatmul.mubr.bf16.gmra.mrb[0].mxu0 %v1473
      %v4174 = vpop.f32.mrb[0].mxu0
      %v4175 = vadd.f32 0.0, %v4174
      %v4176 = vpop.f32.mrb[0].mxu0
      %v4177 = vpop.f32.mrb[0].mxu0
      %v4178 = vpop.f32.mrb[0].mxu0
      %4179 = vmatprep.mubr.bf16.mxu0 0
      %4180 = vmatmul.mubr.bf16.gmra.mrb[0].mxu0 %v1476
      %v4181 = vpop.f32.mrb[0].mxu0
      %v4182 = vadd.f32 0.0, %v4181
      %v4183 = vpop.f32.mrb[0].mxu0
      %v4184 = vpop.f32.mrb[0].mxu0
      %v4185 = vpop.f32.mrb[0].mxu0
      %4186 = vmatprep.mubr.bf16.mxu0 0
      %4187 = vmatmul.mubr.bf16.gmra.mrb[0].mxu0 %v1479
      %v4188 = vpop.f32.mrb[0].mxu0
      %v4189 = vpop.f32.mrb[0].mxu0
      %v4190 = vpop.f32.mrb[0].mxu0
      %v4191 = vpop.f32.mrb[0].mxu0
      %4192 = vmatprep.mubr.bf16.mxu0 0
      %4193 = vmatmul.mubr.bf16.gmra.mrb[0].mxu0 %v1482
      %v4194 = vpop.f32.mrb[0].mxu0
      %v4195 = vpop.f32.mrb[0].mxu0
      %v4196 = vpop.f32.mrb[0].mxu0
      %v4197 = vpop.f32.mrb[0].mxu0
      %4198 = vmatprep.mubr.bf16.mxu0 0
      %4199 = vmatmul.mubr.bf16.gmra.mrb[0].mxu0 %v1485
      %v4200 = vpop.f32.mrb[0].mxu0
      %v4201 = vpop.f32.mrb[0].mxu0
      %v4202 = vpop.f32.mrb[0].mxu0
      %v4203 = vpop.f32.mrb[0].mxu0
      %4204 = vmatprep.mubr.bf16.mxu0 0
      %4205 = vmatmul.mubr.bf16.gmra.mrb[0].mxu0 %v1488
      %v4206 = vpop.f32.mrb[0].mxu0
      %v4207 = vpop.f32.mrb[0].mxu0
      %v4208 = vpop.f32.mrb[0].mxu0
      %v4209 = vpop.f32.mrb[0].mxu0
      %4210 = vmatprep.mubr.bf16.mxu0 0
      %4211 = vmatmul.mubr.bf16.gmra.mrb[0].mxu0 %v1491
      %v4212 = vpop.f32.mrb[0].mxu0
      %v4213 = vpop.f32.mrb[0].mxu0
      %v4214 = vpop.f32.mrb[0].mxu0
      %v4215 = vpop.f32.mrb[0].mxu0
      %4216 = vmatprep.mubr.bf16.mxu0 0
      %4217 = vmatmul.mubr.bf16.gmra.mrb[0].mxu0 %v1494
      %v4218 = vpop.f32.mrb[0].mxu0
      %v4219 = vadd.f32 0.0, %v4218
      %v4220 = vpop.f32.mrb[0].mxu0
      %v4221 = vpop.f32.mrb[0].mxu0
      %v4222 = vpop.f32.mrb[0].mxu0
      %4223 = vmatprep.mubr.bf16.mxu0 0
      %4224 = vmatmul.mubr.bf16.gmra.mrb[0].mxu0 %v1497
      %v4225 = vpop.f32.mrb[0].mxu0
      %v4226 = vadd.f32 0.0, %v4225
      %v4227 = vpop.f32.mrb[0].mxu0
      %v4228 = vpop.f32.mrb[0].mxu0
      %v4229 = vpop.f32.mrb[0].mxu0
      %4230 = vmatprep.mubr.bf16.mxu0 0
      %4231 = vmatmul.mubr.bf16.gmra.mrb[0].mxu0 %v1500
      %v4232 = vpop.f32.mrb[0].mxu0
      %v4233 = vadd.f32 0.0, %v4232
      %v4234 = vpop.f32.mrb[0].mxu0
      %v4235 = vpop.f32.mrb[0].mxu0
      %v4236 = vpop.f32.mrb[0].mxu0
      %4237 = vmatprep.mubr.bf16.mxu0 0
      %4238 = vmatmul.mubr.bf16.gmra.mrb[0].mxu0 %v1503
      %v4239 = vpop.f32.mrb[0].mxu0
      %v4240 = vpop.f32.mrb[0].mxu0
      %v4241 = vpop.f32.mrb[0].mxu0
      %v4242 = vpop.f32.mrb[0].mxu0
      %4243 = vmatprep.mubr.bf16.mxu0 0
      %4244 = vmatmul.mubr.bf16.gmra.mrb[0].mxu0 %v1506
      %v4245 = vpop.f32.mrb[0].mxu0
      %v4246 = vpop.f32.mrb[0].mxu0
      %v4247 = vpop.f32.mrb[0].mxu0
      %v4248 = vpop.f32.mrb[0].mxu0
      %4249 = vmatprep.mubr.bf16.mxu0 0
      %4250 = vmatmul.mubr.bf16.gmra.mrb[0].mxu0 %v1509
      %v4251 = vpop.f32.mrb[0].mxu0
      %v4252 = vpop.f32.mrb[0].mxu0
      %v4253 = vpop.f32.mrb[0].mxu0
      %v4254 = vpop.f32.mrb[0].mxu0
      %4255 = vmatprep.mubr.bf16.mxu0 0
      %4256 = vmatmul.mubr.bf16.gmra.mrb[0].mxu0 %v1512
      %v4257 = vpop.f32.mrb[0].mxu0
      %v4258 = vpop.f32.mrb[0].mxu0
      %v4259 = vpop.f32.mrb[0].mxu0
      %v4260 = vpop.f32.mrb[0].mxu0
      %4261 = vmatprep.mubr.bf16.mxu0 0
      %4262 = vmatmul.mubr.bf16.gmra.mrb[0].mxu0 %v1515
      %v4263 = vpop.f32.mrb[0].mxu0
      %v4264 = vpop.f32.mrb[0].mxu0
      %v4265 = vpop.f32.mrb[0].mxu0
      %v4266 = vpop.f32.mrb[0].mxu0
      %4267 = vmatprep.mubr.bf16.mxu0 0
      %4268 = vmatmul.mubr.bf16.gmra.mrb[0].mxu0 %v1518
      %v4269 = vpop.f32.mrb[0].mxu0
      %v4270 = vadd.f32 0.0, %v4269
      %v4271 = vpop.f32.mrb[0].mxu0
      %v4272 = vpop.f32.mrb[0].mxu0
      %v4273 = vpop.f32.mrb[0].mxu0
      %4274 = vmatprep.mubr.bf16.mxu0 0
      %4275 = vmatmul.mubr.bf16.gmra.mrb[0].mxu0 %v1521
      %v4276 = vpop.f32.mrb[0].mxu0
      %v4277 = vadd.f32 0.0, %v4276
      %v4278 = vpop.f32.mrb[0].mxu0
      %v4279 = vpop.f32.mrb[0].mxu0
      %v4280 = vpop.f32.mrb[0].mxu0
      %4281 = vmatprep.mubr.bf16.mxu0 0
      %4282 = vmatmul.mubr.bf16.gmra.mrb[0].mxu0 %v1524
      %v4283 = vpop.f32.mrb[0].mxu0
      %v4284 = vadd.f32 0.0, %v4283
      %v4285 = vpop.f32.mrb[0].mxu0
      %v4286 = vpop.f32.mrb[0].mxu0
      %v4287 = vpop.f32.mrb[0].mxu0
      %4288 = vmatprep.mubr.bf16.mxu0 0
      %4289 = vmatmul.mubr.bf16.gmra.mrb[0].mxu0 %v1527
      %v4290 = vpop.f32.mrb[0].mxu0
      %v4291 = vpop.f32.mrb[0].mxu0
      %v4292 = vpop.f32.mrb[0].mxu0
      %v4293 = vpop.f32.mrb[0].mxu0
      %4294 = vmatprep.mubr.bf16.mxu0 0
      %4295 = vmatmul.mubr.bf16.gmra.mrb[0].mxu0 %v1530
      %v4296 = vpop.f32.mrb[0].mxu0
      %v4297 = vpop.f32.mrb[0].mxu0
      %v4298 = vpop.f32.mrb[0].mxu0
      %v4299 = vpop.f32.mrb[0].mxu0
      %4300 = vmatprep.mubr.bf16.mxu0 0
      %4301 = vmatmul.mubr.bf16.gmra.mrb[0].mxu0 %v1533
      %v4302 = vpop.f32.mrb[0].mxu0
      %v4303 = vpop.f32.mrb[0].mxu0
      %v4304 = vpop.f32.mrb[0].mxu0
      %v4305 = vpop.f32.mrb[0].mxu0
      %4306 = vmatprep.mubr.bf16.mxu0 0
      %4307 = vmatmul.mubr.bf16.gmra.mrb[0].mxu0 %v1536
      %v4308 = vpop.f32.mrb[0].mxu0
      %v4309 = vpop.f32.mrb[0].mxu0
      %v4310 = vpop.f32.mrb[0].mxu0
      %v4311 = vpop.f32.mrb[0].mxu0
      %4312 = vdwg.mxu0
      %v4313 = vadd.f32 %v4058, %v4168
      %v4314 = vadd.f32 %v4059, %v4175
      %v4315 = vadd.f32 %v4060, %v4182
      %v4316 = vadd.f32 %v4061, %v4219
      %v4317 = vadd.f32 %v4062, %v4226
      %v4318 = vadd.f32 %v4063, %v4233
      %v4319 = vadd.f32 %v4064, %v4270
      %v4320 = vadd.f32 %v4065, %v4277
      %v4321 = vadd.f32 %v4066, %v4284
      %v4326 = vunpack.c.l.b16 %v1408
      %v4327 = vunpack.c.l.b16 %v1409
      %v4328 = vunpack.c.l.b16 %v1410
      %v4329 = vunpack.c.l.b16 %v1411
      %v4330 = vpack.c.b16 %v4327, %v4326
      %v4331 = vpack.c.b16 %v4329, %v4328
      %4334 = vmatprep.subr.bf16.mxu0 0
      %4335 = vmatpush1.bf16.msra.mxu0 %v4330
      %4336 = vmatprep.subr.bf16.mxu0 0
      %4337 = vmatpush1.bf16.msra.mxu0 %v4331
      %4338 = vmatprep.subr.bf16.mxu0 0
      %4339 = vmatpush1.bf16.msra.mxu0 0
      %4340 = vmatprep.subr.bf16.mxu0 0
      %4341 = vmatpush1.bf16.msra.mxu0 0
      %4342 = vmatprep.subr.bf16.mxu0 0
      %4343 = vmatpush1.bf16.msra.mxu0 0
      %4344 = vmatprep.subr.bf16.mxu0 0
      %4345 = vmatpush1.bf16.msra.mxu0 0
      %4346 = vmatprep.subr.bf16.mxu0 0
      %4347 = vmatpush1.bf16.msra.mxu0 0
      %4348 = vmatprep.subr.bf16.mxu0 0
      %4349 = vmatpush1.bf16.msra.mxu0 0
      %4350 = vmatprep.subr.bf16.mxu0 0
      %4351 = vmatpush1.bf16.msra.mxu0 0
      %4352 = vmatprep.subr.bf16.mxu0 0
      %4353 = vmatpush1.bf16.msra.mxu0 0
      %4354 = vmatprep.subr.bf16.mxu0 0
      %4355 = vmatpush1.bf16.msra.mxu0 0
      %4356 = vmatprep.subr.bf16.mxu0 0
      %4357 = vmatpush1.bf16.msra.mxu0 0
      %4358 = vmatprep.subr.bf16.mxu0 0
      %4359 = vmatpush1.bf16.msra.mxu0 0
      %4360 = vmatprep.subr.bf16.mxu0 0
      %4361 = vmatpush1.bf16.msra.mxu0 0
      %4362 = vmatprep.subr.bf16.mxu0 0
      %4363 = vmatpush1.bf16.msra.mxu0 0
      %4364 = vmatprep.subr.bf16.mxu0 0
      %4365 = vmatpush1.bf16.msra.mxu0 0
      %4366 = vmatprep.mubr.bf16.mxu0 0
      %4367 = vmatmul.mubr.bf16.gmra.mrb[0].mxu0 %v1443
      %v4368 = vpop.f32.mrb[0].mxu0
      %v4369 = vpop.f32.mrb[0].mxu0
      %v4370 = vpop.f32.mrb[0].mxu0
      %v4371 = vpop.f32.mrb[0].mxu0
      %4372 = vmatprep.mubr.bf16.mxu0 0
      %4373 = vmatmul.mubr.bf16.gmra.mrb[0].mxu0 %v1446
      %v4374 = vpop.f32.mrb[0].mxu0
      %v4375 = vpop.f32.mrb[0].mxu0
      %v4376 = vpop.f32.mrb[0].mxu0
      %v4377 = vpop.f32.mrb[0].mxu0
      %4378 = vmatprep.mubr.bf16.mxu0 0
      %4379 = vmatmul.mubr.bf16.gmra.mrb[0].mxu0 %v1449
      %v4380 = vpop.f32.mrb[0].mxu0
      %v4381 = vpop.f32.mrb[0].mxu0
      %v4382 = vpop.f32.mrb[0].mxu0
      %v4383 = vpop.f32.mrb[0].mxu0
      %4384 = vmatprep.mubr.bf16.mxu0 0
      %4385 = vmatmul.mubr.bf16.gmra.mrb[0].mxu0 %v1452
      %v4386 = vpop.f32.mrb[0].mxu0
      %v4387 = vpop.f32.mrb[0].mxu0
      %v4388 = vpop.f32.mrb[0].mxu0
      %v4389 = vpop.f32.mrb[0].mxu0
      %4390 = vmatprep.mubr.bf16.mxu0 0
      %4391 = vmatmul.mubr.bf16.gmra.mrb[0].mxu0 %v1455
      %v4392 = vpop.f32.mrb[0].mxu0
      %v4393 = vpop.f32.mrb[0].mxu0
      %v4394 = vpop.f32.mrb[0].mxu0
      %v4395 = vpop.f32.mrb[0].mxu0
      %4396 = vmatprep.mubr.bf16.mxu0 0
      %4397 = vmatmul.mubr.bf16.gmra.mrb[0].mxu0 %v1458
      %v4398 = vpop.f32.mrb[0].mxu0
      %v4399 = vpop.f32.mrb[0].mxu0
      %v4400 = vpop.f32.mrb[0].mxu0
      %v4401 = vpop.f32.mrb[0].mxu0
      %4402 = vmatprep.mubr.bf16.mxu0 0
      %4403 = vmatmul.mubr.bf16.gmra.mrb[0].mxu0 %v1461
      %v4404 = vpop.f32.mrb[0].mxu0
      %v4405 = vpop.f32.mrb[0].mxu0
      %v4406 = vpop.f32.mrb[0].mxu0
      %v4407 = vpop.f32.mrb[0].mxu0
      %4408 = vmatprep.mubr.bf16.mxu0 0
      %4409 = vmatmul.mubr.bf16.gmra.mrb[0].mxu0 %v1464
      %v4410 = vpop.f32.mrb[0].mxu0
      %v4411 = vpop.f32.mrb[0].mxu0
      %v4412 = vpop.f32.mrb[0].mxu0
      %v4413 = vpop.f32.mrb[0].mxu0
      %4414 = vmatprep.mubr.bf16.mxu0 0
      %4415 = vmatmul.mubr.bf16.gmra.mrb[0].mxu0 %v1467
      %v4416 = vpop.f32.mrb[0].mxu0
      %v4417 = vpop.f32.mrb[0].mxu0
      %v4418 = vpop.f32.mrb[0].mxu0
      %v4419 = vpop.f32.mrb[0].mxu0
      %4420 = vmatprep.mubr.bf16.mxu0 0
      %4421 = vmatmul.mubr.bf16.gmra.mrb[0].mxu0 %v1470
      %v4422 = vpop.f32.mrb[0].mxu0
      %v4423 = vpop.f32.mrb[0].mxu0
      %v4424 = vpop.f32.mrb[0].mxu0
      %v4425 = vadd.f32 0.0, %v4424
      %v4426 = vpop.f32.mrb[0].mxu0
      %4427 = vmatprep.mubr.bf16.mxu0 0
      %4428 = vmatmul.mubr.bf16.gmra.mrb[0].mxu0 %v1473
      %v4429 = vpop.f32.mrb[0].mxu0
      %v4430 = vpop.f32.mrb[0].mxu0
      %v4431 = vpop.f32.mrb[0].mxu0
      %v4432 = vadd.f32 0.0, %v4431
      %v4433 = vpop.f32.mrb[0].mxu0
      %4434 = vmatprep.mubr.bf16.mxu0 0
      %4435 = vmatmul.mubr.bf16.gmra.mrb[0].mxu0 %v1476
      %v4436 = vpop.f32.mrb[0].mxu0
      %v4437 = vpop.f32.mrb[0].mxu0
      %v4438 = vpop.f32.mrb[0].mxu0
      %v4439 = vadd.f32 0.0, %v4438
      %v4440 = vpop.f32.mrb[0].mxu0
      %4441 = vmatprep.mubr.bf16.mxu0 0
      %4442 = vmatmul.mubr.bf16.gmra.mrb[0].mxu0 %v1479
      %v4443 = vpop.f32.mrb[0].mxu0
      %v4444 = vpop.f32.mrb[0].mxu0
      %v4445 = vpop.f32.mrb[0].mxu0
      %v4446 = vpop.f32.mrb[0].mxu0
      %4447 = vmatprep.mubr.bf16.mxu0 0
      %4448 = vmatmul.mubr.bf16.gmra.mrb[0].mxu0 %v1482
      %v4449 = vpop.f32.mrb[0].mxu0
      %v4450 = vpop.f32.mrb[0].mxu0
      %v4451 = vpop.f32.mrb[0].mxu0
      %v4452 = vpop.f32.mrb[0].mxu0
      %4453 = vmatprep.mubr.bf16.mxu0 0
      %4454 = vmatmul.mubr.bf16.gmra.mrb[0].mxu0 %v1485
      %v4455 = vpop.f32.mrb[0].mxu0
      %v4456 = vpop.f32.mrb[0].mxu0
      %v4457 = vpop.f32.mrb[0].mxu0
      %v4458 = vpop.f32.mrb[0].mxu0
      %4459 = vmatprep.mubr.bf16.mxu0 0
      %4460 = vmatmul.mubr.bf16.gmra.mrb[0].mxu0 %v1488
      %v4461 = vpop.f32.mrb[0].mxu0
      %v4462 = vpop.f32.mrb[0].mxu0
      %v4463 = vpop.f32.mrb[0].mxu0
      %v4464 = vpop.f32.mrb[0].mxu0
      %4465 = vmatprep.mubr.bf16.mxu0 0
      %4466 = vmatmul.mubr.bf16.gmra.mrb[0].mxu0 %v1491
      %v4467 = vpop.f32.mrb[0].mxu0
      %v4468 = vpop.f32.mrb[0].mxu0
      %v4469 = vpop.f32.mrb[0].mxu0
      %v4470 = vpop.f32.mrb[0].mxu0
      %4471 = vmatprep.mubr.bf16.mxu0 0
      %4472 = vmatmul.mubr.bf16.gmra.mrb[0].mxu0 %v1494
      %v4473 = vpop.f32.mrb[0].mxu0
      %v4474 = vpop.f32.mrb[0].mxu0
      %v4475 = vpop.f32.mrb[0].mxu0
      %v4476 = vadd.f32 0.0, %v4475
      %v4477 = vpop.f32.mrb[0].mxu0
      %4478 = vmatprep.mubr.bf16.mxu0 0
      %4479 = vmatmul.mubr.bf16.gmra.mrb[0].mxu0 %v1497
      %v4480 = vpop.f32.mrb[0].mxu0
      %v4481 = vpop.f32.mrb[0].mxu0
      %v4482 = vpop.f32.mrb[0].mxu0
      %v4483 = vadd.f32 0.0, %v4482
      %v4484 = vpop.f32.mrb[0].mxu0
      %4485 = vmatprep.mubr.bf16.mxu0 0
      %4486 = vmatmul.mubr.bf16.gmra.mrb[0].mxu0 %v1500
      %v4487 = vpop.f32.mrb[0].mxu0
      %v4488 = vpop.f32.mrb[0].mxu0
      %v4489 = vpop.f32.mrb[0].mxu0
      %v4490 = vadd.f32 0.0, %v4489
      %v4491 = vpop.f32.mrb[0].mxu0
      %4492 = vmatprep.mubr.bf16.mxu0 0
      %4493 = vmatmul.mubr.bf16.gmra.mrb[0].mxu0 %v1503
      %v4494 = vpop.f32.mrb[0].mxu0
      %v4495 = vpop.f32.mrb[0].mxu0
      %v4496 = vpop.f32.mrb[0].mxu0
      %v4497 = vpop.f32.mrb[0].mxu0
      %4498 = vmatprep.mubr.bf16.mxu0 0
      %4499 = vmatmul.mubr.bf16.gmra.mrb[0].mxu0 %v1506
      %v4500 = vpop.f32.mrb[0].mxu0
      %v4501 = vpop.f32.mrb[0].mxu0
      %v4502 = vpop.f32.mrb[0].mxu0
      %v4503 = vpop.f32.mrb[0].mxu0
      %4504 = vmatprep.mubr.bf16.mxu0 0
      %4505 = vmatmul.mubr.bf16.gmra.mrb[0].mxu0 %v1509
      %v4506 = vpop.f32.mrb[0].mxu0
      %v4507 = vpop.f32.mrb[0].mxu0
      %v4508 = vpop.f32.mrb[0].mxu0
      %v4509 = vpop.f32.mrb[0].mxu0
      %4510 = vmatprep.mubr.bf16.mxu0 0
      %4511 = vmatmul.mubr.bf16.gmra.mrb[0].mxu0 %v1512
      %v4512 = vpop.f32.mrb[0].mxu0
      %v4513 = vpop.f32.mrb[0].mxu0
      %v4514 = vpop.f32.mrb[0].mxu0
      %v4515 = vpop.f32.mrb[0].mxu0
      %4516 = vmatprep.mubr.bf16.mxu0 0
      %4517 = vmatmul.mubr.bf16.gmra.mrb[0].mxu0 %v1515
      %v4518 = vpop.f32.mrb[0].mxu0
      %v4519 = vpop.f32.mrb[0].mxu0
      %v4520 = vpop.f32.mrb[0].mxu0
      %v4521 = vpop.f32.mrb[0].mxu0
      %4522 = vmatprep.mubr.bf16.mxu0 0
      %4523 = vmatmul.mubr.bf16.gmra.mrb[0].mxu0 %v1518
      %v4524 = vpop.f32.mrb[0].mxu0
      %v4525 = vpop.f32.mrb[0].mxu0
      %v4526 = vpop.f32.mrb[0].mxu0
      %v4527 = vadd.f32 0.0, %v4526
      %v4528 = vpop.f32.mrb[0].mxu0
      %4529 = vmatprep.mubr.bf16.mxu0 0
      %4530 = vmatmul.mubr.bf16.gmra.mrb[0].mxu0 %v1521
      %v4531 = vpop.f32.mrb[0].mxu0
      %v4532 = vpop.f32.mrb[0].mxu0
      %v4533 = vpop.f32.mrb[0].mxu0
      %v4534 = vadd.f32 0.0, %v4533
      %v4535 = vpop.f32.mrb[0].mxu0
      %4536 = vmatprep.mubr.bf16.mxu0 0
      %4537 = vmatmul.mubr.bf16.gmra.mrb[0].mxu0 %v1524
      %v4538 = vpop.f32.mrb[0].mxu0
      %v4539 = vpop.f32.mrb[0].mxu0
      %v4540 = vpop.f32.mrb[0].mxu0
      %v4541 = vadd.f32 0.0, %v4540
      %v4542 = vpop.f32.mrb[0].mxu0
      %4543 = vmatprep.mubr.bf16.mxu0 0
      %4544 = vmatmul.mubr.bf16.gmra.mrb[0].mxu0 %v1527
      %v4545 = vpop.f32.mrb[0].mxu0
      %v4546 = vpop.f32.mrb[0].mxu0
      %v4547 = vpop.f32.mrb[0].mxu0
      %v4548 = vpop.f32.mrb[0].mxu0
      %4549 = vmatprep.mubr.bf16.mxu0 0
      %4550 = vmatmul.mubr.bf16.gmra.mrb[0].mxu0 %v1530
      %v4551 = vpop.f32.mrb[0].mxu0
      %v4552 = vpop.f32.mrb[0].mxu0
      %v4553 = vpop.f32.mrb[0].mxu0
      %v4554 = vpop.f32.mrb[0].mxu0
      %4555 = vmatprep.mubr.bf16.mxu0 0
      %4556 = vmatmul.mubr.bf16.gmra.mrb[0].mxu0 %v1533
      %v4557 = vpop.f32.mrb[0].mxu0
      %v4558 = vpop.f32.mrb[0].mxu0
      %v4559 = vpop.f32.mrb[0].mxu0
      %v4560 = vpop.f32.mrb[0].mxu0
      %4561 = vmatprep.mubr.bf16.mxu0 0
      %4562 = vmatmul.mubr.bf16.gmra.mrb[0].mxu0 %v1536
      %v4563 = vpop.f32.mrb[0].mxu0
      %v4564 = vpop.f32.mrb[0].mxu0
      %v4565 = vpop.f32.mrb[0].mxu0
      %v4566 = vpop.f32.mrb[0].mxu0
      %4567 = vdwg.mxu0
      %v4568 = vadd.f32 %v4313, %v4425
      %v4569 = vadd.f32 %v4314, %v4432
      %v4570 = vadd.f32 %v4315, %v4439
      %v4571 = vadd.f32 %v4316, %v4476
      %v4572 = vadd.f32 %v4317, %v4483
      %v4573 = vadd.f32 %v4318, %v4490
      %v4574 = vadd.f32 %v4319, %v4527
      %v4575 = vadd.f32 %v4320, %v4534
      %v4576 = vadd.f32 %v4321, %v4541
      %v4581 = vunpack.c.l.b16 %v1412
      %v4582 = vunpack.c.l.b16 %v1413
      %v4583 = vunpack.c.l.b16 %v1414
      %v4584 = vunpack.c.l.b16 %v1415
      %v4585 = vpack.c.b16 %v4582, %v4581
      %v4586 = vpack.c.b16 %v4584, %v4583
      %4589 = vmatprep.subr.bf16.mxu0 0
      %4590 = vmatpush1.bf16.msra.mxu0 %v4585
      %4591 = vmatprep.subr.bf16.mxu0 0
      %4592 = vmatpush1.bf16.msra.mxu0 %v4586
      %4593 = vmatprep.subr.bf16.mxu0 0
      %4594 = vmatpush1.bf16.msra.mxu0 0
      %4595 = vmatprep.subr.bf16.mxu0 0
      %4596 = vmatpush1.bf16.msra.mxu0 0
      %4597 = vmatprep.subr.bf16.mxu0 0
      %4598 = vmatpush1.bf16.msra.mxu0 0
      %4599 = vmatprep.subr.bf16.mxu0 0
      %4600 = vmatpush1.bf16.msra.mxu0 0
      %4601 = vmatprep.subr.bf16.mxu0 0
      %4602 = vmatpush1.bf16.msra.mxu0 0
      %4603 = vmatprep.subr.bf16.mxu0 0
      %4604 = vmatpush1.bf16.msra.mxu0 0
      %4605 = vmatprep.subr.bf16.mxu0 0
      %4606 = vmatpush1.bf16.msra.mxu0 0
      %4607 = vmatprep.subr.bf16.mxu0 0
      %4608 = vmatpush1.bf16.msra.mxu0 0
      %4609 = vmatprep.subr.bf16.mxu0 0
      %4610 = vmatpush1.bf16.msra.mxu0 0
      %4611 = vmatprep.subr.bf16.mxu0 0
      %4612 = vmatpush1.bf16.msra.mxu0 0
      %4613 = vmatprep.subr.bf16.mxu0 0
      %4614 = vmatpush1.bf16.msra.mxu0 0
      %4615 = vmatprep.subr.bf16.mxu0 0
      %4616 = vmatpush1.bf16.msra.mxu0 0
      %4617 = vmatprep.subr.bf16.mxu0 0
      %4618 = vmatpush1.bf16.msra.mxu0 0
      %4619 = vmatprep.subr.bf16.mxu0 0
      %4620 = vmatpush1.bf16.msra.mxu0 0
      %4621 = vmatprep.mubr.bf16.mxu0 0
      %4622 = vmatmul.mubr.bf16.gmra.mrb[0].mxu0 %v1443
      %v4623 = vpop.f32.mrb[0].mxu0
      %v4624 = vpop.f32.mrb[0].mxu0
      %v4625 = vpop.f32.mrb[0].mxu0
      %v4626 = vpop.f32.mrb[0].mxu0
      %4627 = vmatprep.mubr.bf16.mxu0 0
      %4628 = vmatmul.mubr.bf16.gmra.mrb[0].mxu0 %v1446
      %v4629 = vpop.f32.mrb[0].mxu0
      %v4630 = vpop.f32.mrb[0].mxu0
      %v4631 = vpop.f32.mrb[0].mxu0
      %v4632 = vpop.f32.mrb[0].mxu0
      %4633 = vmatprep.mubr.bf16.mxu0 0
      %4634 = vmatmul.mubr.bf16.gmra.mrb[0].mxu0 %v1449
      %v4635 = vpop.f32.mrb[0].mxu0
      %v4636 = vpop.f32.mrb[0].mxu0
      %v4637 = vpop.f32.mrb[0].mxu0
      %v4638 = vpop.f32.mrb[0].mxu0
      %4639 = vmatprep.mubr.bf16.mxu0 0
      %4640 = vmatmul.mubr.bf16.gmra.mrb[0].mxu0 %v1452
      %v4641 = vpop.f32.mrb[0].mxu0
      %v4642 = vpop.f32.mrb[0].mxu0
      %v4643 = vpop.f32.mrb[0].mxu0
      %v4644 = vpop.f32.mrb[0].mxu0
      %4645 = vmatprep.mubr.bf16.mxu0 0
      %4646 = vmatmul.mubr.bf16.gmra.mrb[0].mxu0 %v1455
      %v4647 = vpop.f32.mrb[0].mxu0
      %v4648 = vpop.f32.mrb[0].mxu0
      %v4649 = vpop.f32.mrb[0].mxu0
      %v4650 = vpop.f32.mrb[0].mxu0
      %4651 = vmatprep.mubr.bf16.mxu0 0
      %4652 = vmatmul.mubr.bf16.gmra.mrb[0].mxu0 %v1458
      %v4653 = vpop.f32.mrb[0].mxu0
      %v4654 = vpop.f32.mrb[0].mxu0
      %v4655 = vpop.f32.mrb[0].mxu0
      %v4656 = vpop.f32.mrb[0].mxu0
      %4657 = vmatprep.mubr.bf16.mxu0 0
      %4658 = vmatmul.mubr.bf16.gmra.mrb[0].mxu0 %v1461
      %v4659 = vpop.f32.mrb[0].mxu0
      %v4660 = vpop.f32.mrb[0].mxu0
      %v4661 = vpop.f32.mrb[0].mxu0
      %v4662 = vpop.f32.mrb[0].mxu0
      %4663 = vmatprep.mubr.bf16.mxu0 0
      %4664 = vmatmul.mubr.bf16.gmra.mrb[0].mxu0 %v1464
      %v4665 = vpop.f32.mrb[0].mxu0
      %v4666 = vpop.f32.mrb[0].mxu0
      %v4667 = vpop.f32.mrb[0].mxu0
      %v4668 = vpop.f32.mrb[0].mxu0
      %4669 = vmatprep.mubr.bf16.mxu0 0
      %4670 = vmatmul.mubr.bf16.gmra.mrb[0].mxu0 %v1467
      %v4671 = vpop.f32.mrb[0].mxu0
      %v4672 = vpop.f32.mrb[0].mxu0
      %v4673 = vpop.f32.mrb[0].mxu0
      %v4674 = vpop.f32.mrb[0].mxu0
      %4675 = vmatprep.mubr.bf16.mxu0 0
      %4676 = vmatmul.mubr.bf16.gmra.mrb[0].mxu0 %v1470
      %v4677 = vpop.f32.mrb[0].mxu0
      %v4678 = vpop.f32.mrb[0].mxu0
      %v4679 = vpop.f32.mrb[0].mxu0
      %v4680 = vpop.f32.mrb[0].mxu0
      %4681 = vmatprep.mubr.bf16.mxu0 0
      %4682 = vmatmul.mubr.bf16.gmra.mrb[0].mxu0 %v1473
      %v4683 = vpop.f32.mrb[0].mxu0
      %v4684 = vpop.f32.mrb[0].mxu0
      %v4685 = vpop.f32.mrb[0].mxu0
      %v4686 = vpop.f32.mrb[0].mxu0
      %4687 = vmatprep.mubr.bf16.mxu0 0
      %4688 = vmatmul.mubr.bf16.gmra.mrb[0].mxu0 %v1476
      %v4689 = vpop.f32.mrb[0].mxu0
      %v4690 = vpop.f32.mrb[0].mxu0
      %v4691 = vpop.f32.mrb[0].mxu0
      %v4692 = vpop.f32.mrb[0].mxu0
      %4693 = vmatprep.mubr.bf16.mxu0 0
      %4694 = vmatmul.mubr.bf16.gmra.mrb[0].mxu0 %v1479
      %v4695 = vpop.f32.mrb[0].mxu0
      %v4696 = vadd.f32 0.0, %v4695
      %v4697 = vpop.f32.mrb[0].mxu0
      %v4698 = vpop.f32.mrb[0].mxu0
      %v4699 = vpop.f32.mrb[0].mxu0
      %4700 = vmatprep.mubr.bf16.mxu0 0
      %4701 = vmatmul.mubr.bf16.gmra.mrb[0].mxu0 %v1482
      %v4702 = vpop.f32.mrb[0].mxu0
      %v4703 = vadd.f32 0.0, %v4702
      %v4704 = vpop.f32.mrb[0].mxu0
      %v4705 = vpop.f32.mrb[0].mxu0
      %v4706 = vpop.f32.mrb[0].mxu0
      %4707 = vmatprep.mubr.bf16.mxu0 0
      %4708 = vmatmul.mubr.bf16.gmra.mrb[0].mxu0 %v1485
      %v4709 = vpop.f32.mrb[0].mxu0
      %v4710 = vadd.f32 0.0, %v4709
      %v4711 = vpop.f32.mrb[0].mxu0
      %v4712 = vpop.f32.mrb[0].mxu0
      %v4713 = vpop.f32.mrb[0].mxu0
      %4714 = vmatprep.mubr.bf16.mxu0 0
      %4715 = vmatmul.mubr.bf16.gmra.mrb[0].mxu0 %v1488
      %v4716 = vpop.f32.mrb[0].mxu0
      %v4717 = vpop.f32.mrb[0].mxu0
      %v4718 = vpop.f32.mrb[0].mxu0
      %v4719 = vpop.f32.mrb[0].mxu0
      %4720 = vmatprep.mubr.bf16.mxu0 0
      %4721 = vmatmul.mubr.bf16.gmra.mrb[0].mxu0 %v1491
      %v4722 = vpop.f32.mrb[0].mxu0
      %v4723 = vpop.f32.mrb[0].mxu0
      %v4724 = vpop.f32.mrb[0].mxu0
      %v4725 = vpop.f32.mrb[0].mxu0
      %4726 = vmatprep.mubr.bf16.mxu0 0
      %4727 = vmatmul.mubr.bf16.gmra.mrb[0].mxu0 %v1494
      %v4728 = vpop.f32.mrb[0].mxu0
      %v4729 = vpop.f32.mrb[0].mxu0
      %v4730 = vpop.f32.mrb[0].mxu0
      %v4731 = vpop.f32.mrb[0].mxu0
      %4732 = vmatprep.mubr.bf16.mxu0 0
      %4733 = vmatmul.mubr.bf16.gmra.mrb[0].mxu0 %v1497
      %v4734 = vpop.f32.mrb[0].mxu0
      %v4735 = vpop.f32.mrb[0].mxu0
      %v4736 = vpop.f32.mrb[0].mxu0
      %v4737 = vpop.f32.mrb[0].mxu0
      %4738 = vmatprep.mubr.bf16.mxu0 0
      %4739 = vmatmul.mubr.bf16.gmra.mrb[0].mxu0 %v1500
      %v4740 = vpop.f32.mrb[0].mxu0
      %v4741 = vpop.f32.mrb[0].mxu0
      %v4742 = vpop.f32.mrb[0].mxu0
      %v4743 = vpop.f32.mrb[0].mxu0
      %4744 = vmatprep.mubr.bf16.mxu0 0
      %4745 = vmatmul.mubr.bf16.gmra.mrb[0].mxu0 %v1503
      %v4746 = vpop.f32.mrb[0].mxu0
      %v4747 = vadd.f32 0.0, %v4746
      %v4748 = vpop.f32.mrb[0].mxu0
      %v4749 = vpop.f32.mrb[0].mxu0
      %v4750 = vpop.f32.mrb[0].mxu0
      %4751 = vmatprep.mubr.bf16.mxu0 0
      %4752 = vmatmul.mubr.bf16.gmra.mrb[0].mxu0 %v1506
      %v4753 = vpop.f32.mrb[0].mxu0
      %v4754 = vadd.f32 0.0, %v4753
      %v4755 = vpop.f32.mrb[0].mxu0
      %v4756 = vpop.f32.mrb[0].mxu0
      %v4757 = vpop.f32.mrb[0].mxu0
      %4758 = vmatprep.mubr.bf16.mxu0 0
      %4759 = vmatmul.mubr.bf16.gmra.mrb[0].mxu0 %v1509
      %v4760 = vpop.f32.mrb[0].mxu0
      %v4761 = vadd.f32 0.0, %v4760
      %v4762 = vpop.f32.mrb[0].mxu0
      %v4763 = vpop.f32.mrb[0].mxu0
      %v4764 = vpop.f32.mrb[0].mxu0
      %4765 = vmatprep.mubr.bf16.mxu0 0
      %4766 = vmatmul.mubr.bf16.gmra.mrb[0].mxu0 %v1512
      %v4767 = vpop.f32.mrb[0].mxu0
      %v4768 = vpop.f32.mrb[0].mxu0
      %v4769 = vpop.f32.mrb[0].mxu0
      %v4770 = vpop.f32.mrb[0].mxu0
      %4771 = vmatprep.mubr.bf16.mxu0 0
      %4772 = vmatmul.mubr.bf16.gmra.mrb[0].mxu0 %v1515
      %v4773 = vpop.f32.mrb[0].mxu0
      %v4774 = vpop.f32.mrb[0].mxu0
      %v4775 = vpop.f32.mrb[0].mxu0
      %v4776 = vpop.f32.mrb[0].mxu0
      %4777 = vmatprep.mubr.bf16.mxu0 0
      %4778 = vmatmul.mubr.bf16.gmra.mrb[0].mxu0 %v1518
      %v4779 = vpop.f32.mrb[0].mxu0
      %v4780 = vpop.f32.mrb[0].mxu0
      %v4781 = vpop.f32.mrb[0].mxu0
      %v4782 = vpop.f32.mrb[0].mxu0
      %4783 = vmatprep.mubr.bf16.mxu0 0
      %4784 = vmatmul.mubr.bf16.gmra.mrb[0].mxu0 %v1521
      %v4785 = vpop.f32.mrb[0].mxu0
      %v4786 = vpop.f32.mrb[0].mxu0
      %v4787 = vpop.f32.mrb[0].mxu0
      %v4788 = vpop.f32.mrb[0].mxu0
      %4789 = vmatprep.mubr.bf16.mxu0 0
      %4790 = vmatmul.mubr.bf16.gmra.mrb[0].mxu0 %v1524
      %v4791 = vpop.f32.mrb[0].mxu0
      %v4792 = vpop.f32.mrb[0].mxu0
      %v4793 = vpop.f32.mrb[0].mxu0
      %v4794 = vpop.f32.mrb[0].mxu0
      %4795 = vmatprep.mubr.bf16.mxu0 0
      %4796 = vmatmul.mubr.bf16.gmra.mrb[0].mxu0 %v1527
      %v4797 = vpop.f32.mrb[0].mxu0
      %v4798 = vadd.f32 0.0, %v4797
      %v4799 = vpop.f32.mrb[0].mxu0
      %v4800 = vpop.f32.mrb[0].mxu0
      %v4801 = vpop.f32.mrb[0].mxu0
      %4802 = vmatprep.mubr.bf16.mxu0 0
      %4803 = vmatmul.mubr.bf16.gmra.mrb[0].mxu0 %v1530
      %v4804 = vpop.f32.mrb[0].mxu0
      %v4805 = vadd.f32 0.0, %v4804
      %v4806 = vpop.f32.mrb[0].mxu0
      %v4807 = vpop.f32.mrb[0].mxu0
      %v4808 = vpop.f32.mrb[0].mxu0
      %4809 = vmatprep.mubr.bf16.mxu0 0
      %4810 = vmatmul.mubr.bf16.gmra.mrb[0].mxu0 %v1533
      %v4811 = vpop.f32.mrb[0].mxu0
      %v4812 = vadd.f32 0.0, %v4811
      %v4813 = vpop.f32.mrb[0].mxu0
      %v4814 = vpop.f32.mrb[0].mxu0
      %v4815 = vpop.f32.mrb[0].mxu0
      %4816 = vmatprep.mubr.bf16.mxu0 0
      %4817 = vmatmul.mubr.bf16.gmra.mrb[0].mxu0 %v1536
      %v4818 = vpop.f32.mrb[0].mxu0
      %v4819 = vpop.f32.mrb[0].mxu0
      %v4820 = vpop.f32.mrb[0].mxu0
      %v4821 = vpop.f32.mrb[0].mxu0
      %4822 = vdwg.mxu0
      %v4823 = vadd.f32 %v4568, %v4696
      %v4824 = vadd.f32 %v4569, %v4703
      %v4825 = vadd.f32 %v4570, %v4710
      %v4826 = vadd.f32 %v4571, %v4747
      %v4827 = vadd.f32 %v4572, %v4754
      %v4828 = vadd.f32 %v4573, %v4761
      %v4829 = vadd.f32 %v4574, %v4798
      %v4830 = vadd.f32 %v4575, %v4805
      %v4831 = vadd.f32 %v4576, %v4812
      %v4836 = vunpack.c.l.b16 %v1416
      %v4837 = vunpack.c.l.b16 %v1417
      %v4838 = vunpack.c.l.b16 %v1418
      %v4839 = vunpack.c.l.b16 %v1419
      %v4840 = vpack.c.b16 %v4837, %v4836
      %v4841 = vpack.c.b16 %v4839, %v4838
      %4844 = vmatprep.subr.bf16.mxu0 0
      %4845 = vmatpush1.bf16.msra.mxu0 %v4840
      %4846 = vmatprep.subr.bf16.mxu0 0
      %4847 = vmatpush1.bf16.msra.mxu0 %v4841
      %4848 = vmatprep.subr.bf16.mxu0 0
      %4849 = vmatpush1.bf16.msra.mxu0 0
      %4850 = vmatprep.subr.bf16.mxu0 0
      %4851 = vmatpush1.bf16.msra.mxu0 0
      %4852 = vmatprep.subr.bf16.mxu0 0
      %4853 = vmatpush1.bf16.msra.mxu0 0
      %4854 = vmatprep.subr.bf16.mxu0 0
      %4855 = vmatpush1.bf16.msra.mxu0 0
      %4856 = vmatprep.subr.bf16.mxu0 0
      %4857 = vmatpush1.bf16.msra.mxu0 0
      %4858 = vmatprep.subr.bf16.mxu0 0
      %4859 = vmatpush1.bf16.msra.mxu0 0
      %4860 = vmatprep.subr.bf16.mxu0 0
      %4861 = vmatpush1.bf16.msra.mxu0 0
      %4862 = vmatprep.subr.bf16.mxu0 0
      %4863 = vmatpush1.bf16.msra.mxu0 0
      %4864 = vmatprep.subr.bf16.mxu0 0
      %4865 = vmatpush1.bf16.msra.mxu0 0
      %4866 = vmatprep.subr.bf16.mxu0 0
      %4867 = vmatpush1.bf16.msra.mxu0 0
      %4868 = vmatprep.subr.bf16.mxu0 0
      %4869 = vmatpush1.bf16.msra.mxu0 0
      %4870 = vmatprep.subr.bf16.mxu0 0
      %4871 = vmatpush1.bf16.msra.mxu0 0
      %4872 = vmatprep.subr.bf16.mxu0 0
      %4873 = vmatpush1.bf16.msra.mxu0 0
      %4874 = vmatprep.subr.bf16.mxu0 0
      %4875 = vmatpush1.bf16.msra.mxu0 0
      %4876 = vmatprep.mubr.bf16.mxu0 0
      %4877 = vmatmul.mubr.bf16.gmra.mrb[0].mxu0 %v1443
      %v4878 = vpop.f32.mrb[0].mxu0
      %v4879 = vpop.f32.mrb[0].mxu0
      %v4880 = vpop.f32.mrb[0].mxu0
      %v4881 = vpop.f32.mrb[0].mxu0
      %4882 = vmatprep.mubr.bf16.mxu0 0
      %4883 = vmatmul.mubr.bf16.gmra.mrb[0].mxu0 %v1446
      %v4884 = vpop.f32.mrb[0].mxu0
      %v4885 = vpop.f32.mrb[0].mxu0
      %v4886 = vpop.f32.mrb[0].mxu0
      %v4887 = vpop.f32.mrb[0].mxu0
      %4888 = vmatprep.mubr.bf16.mxu0 0
      %4889 = vmatmul.mubr.bf16.gmra.mrb[0].mxu0 %v1449
      %v4890 = vpop.f32.mrb[0].mxu0
      %v4891 = vpop.f32.mrb[0].mxu0
      %v4892 = vpop.f32.mrb[0].mxu0
      %v4893 = vpop.f32.mrb[0].mxu0
      %4894 = vmatprep.mubr.bf16.mxu0 0
      %4895 = vmatmul.mubr.bf16.gmra.mrb[0].mxu0 %v1452
      %v4896 = vpop.f32.mrb[0].mxu0
      %v4897 = vpop.f32.mrb[0].mxu0
      %v4898 = vpop.f32.mrb[0].mxu0
      %v4899 = vpop.f32.mrb[0].mxu0
      %4900 = vmatprep.mubr.bf16.mxu0 0
      %4901 = vmatmul.mubr.bf16.gmra.mrb[0].mxu0 %v1455
      %v4902 = vpop.f32.mrb[0].mxu0
      %v4903 = vpop.f32.mrb[0].mxu0
      %v4904 = vpop.f32.mrb[0].mxu0
      %v4905 = vpop.f32.mrb[0].mxu0
      %4906 = vmatprep.mubr.bf16.mxu0 0
      %4907 = vmatmul.mubr.bf16.gmra.mrb[0].mxu0 %v1458
      %v4908 = vpop.f32.mrb[0].mxu0
      %v4909 = vpop.f32.mrb[0].mxu0
      %v4910 = vpop.f32.mrb[0].mxu0
      %v4911 = vpop.f32.mrb[0].mxu0
      %4912 = vmatprep.mubr.bf16.mxu0 0
      %4913 = vmatmul.mubr.bf16.gmra.mrb[0].mxu0 %v1461
      %v4914 = vpop.f32.mrb[0].mxu0
      %v4915 = vpop.f32.mrb[0].mxu0
      %v4916 = vpop.f32.mrb[0].mxu0
      %v4917 = vpop.f32.mrb[0].mxu0
      %4918 = vmatprep.mubr.bf16.mxu0 0
      %4919 = vmatmul.mubr.bf16.gmra.mrb[0].mxu0 %v1464
      %v4920 = vpop.f32.mrb[0].mxu0
      %v4921 = vpop.f32.mrb[0].mxu0
      %v4922 = vpop.f32.mrb[0].mxu0
      %v4923 = vpop.f32.mrb[0].mxu0
      %4924 = vmatprep.mubr.bf16.mxu0 0
      %4925 = vmatmul.mubr.bf16.gmra.mrb[0].mxu0 %v1467
      %v4926 = vpop.f32.mrb[0].mxu0
      %v4927 = vpop.f32.mrb[0].mxu0
      %v4928 = vpop.f32.mrb[0].mxu0
      %v4929 = vpop.f32.mrb[0].mxu0
      %4930 = vmatprep.mubr.bf16.mxu0 0
      %4931 = vmatmul.mubr.bf16.gmra.mrb[0].mxu0 %v1470
      %v4932 = vpop.f32.mrb[0].mxu0
      %v4933 = vpop.f32.mrb[0].mxu0
      %v4934 = vpop.f32.mrb[0].mxu0
      %v4935 = vpop.f32.mrb[0].mxu0
      %4936 = vmatprep.mubr.bf16.mxu0 0
      %4937 = vmatmul.mubr.bf16.gmra.mrb[0].mxu0 %v1473
      %v4938 = vpop.f32.mrb[0].mxu0
      %v4939 = vpop.f32.mrb[0].mxu0
      %v4940 = vpop.f32.mrb[0].mxu0
      %v4941 = vpop.f32.mrb[0].mxu0
      %4942 = vmatprep.mubr.bf16.mxu0 0
      %4943 = vmatmul.mubr.bf16.gmra.mrb[0].mxu0 %v1476
      %v4944 = vpop.f32.mrb[0].mxu0
      %v4945 = vpop.f32.mrb[0].mxu0
      %v4946 = vpop.f32.mrb[0].mxu0
      %v4947 = vpop.f32.mrb[0].mxu0
      %4948 = vmatprep.mubr.bf16.mxu0 0
      %4949 = vmatmul.mubr.bf16.gmra.mrb[0].mxu0 %v1479
      %v4950 = vpop.f32.mrb[0].mxu0
      %v4951 = vpop.f32.mrb[0].mxu0
      %v4952 = vpop.f32.mrb[0].mxu0
      %v4953 = vadd.f32 0.0, %v4952
      %v4954 = vpop.f32.mrb[0].mxu0
      %4955 = vmatprep.mubr.bf16.mxu0 0
      %4956 = vmatmul.mubr.bf16.gmra.mrb[0].mxu0 %v1482
      %v4957 = vpop.f32.mrb[0].mxu0
      %v4958 = vpop.f32.mrb[0].mxu0
      %v4959 = vpop.f32.mrb[0].mxu0
      %v4960 = vadd.f32 0.0, %v4959
      %v4961 = vpop.f32.mrb[0].mxu0
      %4962 = vmatprep.mubr.bf16.mxu0 0
      %4963 = vmatmul.mubr.bf16.gmra.mrb[0].mxu0 %v1485
      %v4964 = vpop.f32.mrb[0].mxu0
      %v4965 = vpop.f32.mrb[0].mxu0
      %v4966 = vpop.f32.mrb[0].mxu0
      %v4967 = vadd.f32 0.0, %v4966
      %v4968 = vpop.f32.mrb[0].mxu0
      %4969 = vmatprep.mubr.bf16.mxu0 0
      %4970 = vmatmul.mubr.bf16.gmra.mrb[0].mxu0 %v1488
      %v4971 = vpop.f32.mrb[0].mxu0
      %v4972 = vpop.f32.mrb[0].mxu0
      %v4973 = vpop.f32.mrb[0].mxu0
      %v4974 = vpop.f32.mrb[0].mxu0
      %4975 = vmatprep.mubr.bf16.mxu0 0
      %4976 = vmatmul.mubr.bf16.gmra.mrb[0].mxu0 %v1491
      %v4977 = vpop.f32.mrb[0].mxu0
      %v4978 = vpop.f32.mrb[0].mxu0
      %v4979 = vpop.f32.mrb[0].mxu0
      %v4980 = vpop.f32.mrb[0].mxu0
      %4981 = vmatprep.mubr.bf16.mxu0 0
      %4982 = vmatmul.mubr.bf16.gmra.mrb[0].mxu0 %v1494
      %v4983 = vpop.f32.mrb[0].mxu0
      %v4984 = vpop.f32.mrb[0].mxu0
      %v4985 = vpop.f32.mrb[0].mxu0
      %v4986 = vpop.f32.mrb[0].mxu0
      %4987 = vmatprep.mubr.bf16.mxu0 0
      %4988 = vmatmul.mubr.bf16.gmra.mrb[0].mxu0 %v1497
      %v4989 = vpop.f32.mrb[0].mxu0
      %v4990 = vpop.f32.mrb[0].mxu0
      %v4991 = vpop.f32.mrb[0].mxu0
      %v4992 = vpop.f32.mrb[0].mxu0
      %4993 = vmatprep.mubr.bf16.mxu0 0
      %4994 = vmatmul.mubr.bf16.gmra.mrb[0].mxu0 %v1500
      %v4995 = vpop.f32.mrb[0].mxu0
      %v4996 = vpop.f32.mrb[0].mxu0
      %v4997 = vpop.f32.mrb[0].mxu0
      %v4998 = vpop.f32.mrb[0].mxu0
      %4999 = vmatprep.mubr.bf16.mxu0 0
      %5000 = vmatmul.mubr.bf16.gmra.mrb[0].mxu0 %v1503
      %v5001 = vpop.f32.mrb[0].mxu0
      %v5002 = vpop.f32.mrb[0].mxu0
      %v5003 = vpop.f32.mrb[0].mxu0
      %v5004 = vadd.f32 0.0, %v5003
      %v5005 = vpop.f32.mrb[0].mxu0
      %5006 = vmatprep.mubr.bf16.mxu0 0
      %5007 = vmatmul.mubr.bf16.gmra.mrb[0].mxu0 %v1506
      %v5008 = vpop.f32.mrb[0].mxu0
      %v5009 = vpop.f32.mrb[0].mxu0
      %v5010 = vpop.f32.mrb[0].mxu0
      %v5011 = vadd.f32 0.0, %v5010
      %v5012 = vpop.f32.mrb[0].mxu0
      %5013 = vmatprep.mubr.bf16.mxu0 0
      %5014 = vmatmul.mubr.bf16.gmra.mrb[0].mxu0 %v1509
      %v5015 = vpop.f32.mrb[0].mxu0
      %v5016 = vpop.f32.mrb[0].mxu0
      %v5017 = vpop.f32.mrb[0].mxu0
      %v5018 = vadd.f32 0.0, %v5017
      %v5019 = vpop.f32.mrb[0].mxu0
      %5020 = vmatprep.mubr.bf16.mxu0 0
      %5021 = vmatmul.mubr.bf16.gmra.mrb[0].mxu0 %v1512
      %v5022 = vpop.f32.mrb[0].mxu0
      %v5023 = vpop.f32.mrb[0].mxu0
      %v5024 = vpop.f32.mrb[0].mxu0
      %v5025 = vpop.f32.mrb[0].mxu0
      %5026 = vmatprep.mubr.bf16.mxu0 0
      %5027 = vmatmul.mubr.bf16.gmra.mrb[0].mxu0 %v1515
      %v5028 = vpop.f32.mrb[0].mxu0
      %v5029 = vpop.f32.mrb[0].mxu0
      %v5030 = vpop.f32.mrb[0].mxu0
      %v5031 = vpop.f32.mrb[0].mxu0
      %5032 = vmatprep.mubr.bf16.mxu0 0
      %5033 = vmatmul.mubr.bf16.gmra.mrb[0].mxu0 %v1518
      %v5034 = vpop.f32.mrb[0].mxu0
      %v5035 = vpop.f32.mrb[0].mxu0
      %v5036 = vpop.f32.mrb[0].mxu0
      %v5037 = vpop.f32.mrb[0].mxu0
      %5038 = vmatprep.mubr.bf16.mxu0 0
      %5039 = vmatmul.mubr.bf16.gmra.mrb[0].mxu0 %v1521
      %v5040 = vpop.f32.mrb[0].mxu0
      %v5041 = vpop.f32.mrb[0].mxu0
      %v5042 = vpop.f32.mrb[0].mxu0
      %v5043 = vpop.f32.mrb[0].mxu0
      %5044 = vmatprep.mubr.bf16.mxu0 0
      %5045 = vmatmul.mubr.bf16.gmra.mrb[0].mxu0 %v1524
      %v5046 = vpop.f32.mrb[0].mxu0
      %v5047 = vpop.f32.mrb[0].mxu0
      %v5048 = vpop.f32.mrb[0].mxu0
      %v5049 = vpop.f32.mrb[0].mxu0
      %5050 = vmatprep.mubr.bf16.mxu0 0
      %5051 = vmatmul.mubr.bf16.gmra.mrb[0].mxu0 %v1527
      %v5052 = vpop.f32.mrb[0].mxu0
      %v5053 = vpop.f32.mrb[0].mxu0
      %v5054 = vpop.f32.mrb[0].mxu0
      %v5055 = vadd.f32 0.0, %v5054
      %v5056 = vpop.f32.mrb[0].mxu0
      %5057 = vmatprep.mubr.bf16.mxu0 0
      %5058 = vmatmul.mubr.bf16.gmra.mrb[0].mxu0 %v1530
      %v5059 = vpop.f32.mrb[0].mxu0
      %v5060 = vpop.f32.mrb[0].mxu0
      %v5061 = vpop.f32.mrb[0].mxu0
      %v5062 = vadd.f32 0.0, %v5061
      %v5063 = vpop.f32.mrb[0].mxu0
      %5064 = vmatprep.mubr.bf16.mxu0 0
      %5065 = vmatmul.mubr.bf16.gmra.mrb[0].mxu0 %v1533
      %v5066 = vpop.f32.mrb[0].mxu0
      %v5067 = vpop.f32.mrb[0].mxu0
      %v5068 = vpop.f32.mrb[0].mxu0
      %v5069 = vadd.f32 0.0, %v5068
      %v5070 = vpop.f32.mrb[0].mxu0
      %5071 = vmatprep.mubr.bf16.mxu0 0
      %5072 = vmatmul.mubr.bf16.gmra.mrb[0].mxu0 %v1536
      %v5073 = vpop.f32.mrb[0].mxu0
      %v5074 = vpop.f32.mrb[0].mxu0
      %v5075 = vpop.f32.mrb[0].mxu0
      %v5076 = vpop.f32.mrb[0].mxu0
      %5077 = vdwg.mxu0
      %v5078 = vadd.f32 %v4823, %v4953
      %v5079 = vadd.f32 %v4824, %v4960
      %v5080 = vadd.f32 %v4825, %v4967
      %v5081 = vadd.f32 %v4826, %v5004
      %v5082 = vadd.f32 %v4827, %v5011
      %v5083 = vadd.f32 %v4828, %v5018
      %v5084 = vadd.f32 %v4829, %v5055
      %v5085 = vadd.f32 %v4830, %v5062
      %v5086 = vadd.f32 %v4831, %v5069
      %v5091 = vunpack.c.l.b16 %v1420
      %v5092 = vunpack.c.l.b16 %v1421
      %v5093 = vunpack.c.l.b16 %v1422
      %v5094 = vunpack.c.l.b16 %v1423
      %v5095 = vpack.c.b16 %v5092, %v5091
      %v5096 = vpack.c.b16 %v5094, %v5093
      %5099 = vmatprep.subr.bf16.mxu0 0
      %5100 = vmatpush1.bf16.msra.mxu0 %v5095
      %5101 = vmatprep.subr.bf16.mxu0 0
      %5102 = vmatpush1.bf16.msra.mxu0 %v5096
      %5103 = vmatprep.subr.bf16.mxu0 0
      %5104 = vmatpush1.bf16.msra.mxu0 0
      %5105 = vmatprep.subr.bf16.mxu0 0
      %5106 = vmatpush1.bf16.msra.mxu0 0
      %5107 = vmatprep.subr.bf16.mxu0 0
      %5108 = vmatpush1.bf16.msra.mxu0 0
      %5109 = vmatprep.subr.bf16.mxu0 0
      %5110 = vmatpush1.bf16.msra.mxu0 0
      %5111 = vmatprep.subr.bf16.mxu0 0
      %5112 = vmatpush1.bf16.msra.mxu0 0
      %5113 = vmatprep.subr.bf16.mxu0 0
      %5114 = vmatpush1.bf16.msra.mxu0 0
      %5115 = vmatprep.subr.bf16.mxu0 0
      %5116 = vmatpush1.bf16.msra.mxu0 0
      %5117 = vmatprep.subr.bf16.mxu0 0
      %5118 = vmatpush1.bf16.msra.mxu0 0
      %5119 = vmatprep.subr.bf16.mxu0 0
      %5120 = vmatpush1.bf16.msra.mxu0 0
      %5121 = vmatprep.subr.bf16.mxu0 0
      %5122 = vmatpush1.bf16.msra.mxu0 0
      %5123 = vmatprep.subr.bf16.mxu0 0
      %5124 = vmatpush1.bf16.msra.mxu0 0
      %5125 = vmatprep.subr.bf16.mxu0 0
      %5126 = vmatpush1.bf16.msra.mxu0 0
      %5127 = vmatprep.subr.bf16.mxu0 0
      %5128 = vmatpush1.bf16.msra.mxu0 0
      %5129 = vmatprep.subr.bf16.mxu0 0
      %5130 = vmatpush1.bf16.msra.mxu0 0
      %5131 = vmatprep.mubr.bf16.mxu0 0
      %5132 = vmatmul.mubr.bf16.gmra.mrb[0].mxu0 %v1443
      %v5133 = vpop.f32.mrb[0].mxu0
      %v5134 = vpop.f32.mrb[0].mxu0
      %v5135 = vpop.f32.mrb[0].mxu0
      %v5136 = vpop.f32.mrb[0].mxu0
      %5137 = vmatprep.mubr.bf16.mxu0 0
      %5138 = vmatmul.mubr.bf16.gmra.mrb[0].mxu0 %v1446
      %v5139 = vpop.f32.mrb[0].mxu0
      %v5140 = vpop.f32.mrb[0].mxu0
      %v5141 = vpop.f32.mrb[0].mxu0
      %v5142 = vpop.f32.mrb[0].mxu0
      %5143 = vmatprep.mubr.bf16.mxu0 0
      %5144 = vmatmul.mubr.bf16.gmra.mrb[0].mxu0 %v1449
      %v5145 = vpop.f32.mrb[0].mxu0
      %v5146 = vpop.f32.mrb[0].mxu0
      %v5147 = vpop.f32.mrb[0].mxu0
      %v5148 = vpop.f32.mrb[0].mxu0
      %5149 = vmatprep.mubr.bf16.mxu0 0
      %5150 = vmatmul.mubr.bf16.gmra.mrb[0].mxu0 %v1452
      %v5151 = vpop.f32.mrb[0].mxu0
      %v5152 = vpop.f32.mrb[0].mxu0
      %v5153 = vpop.f32.mrb[0].mxu0
      %v5154 = vpop.f32.mrb[0].mxu0
      %5155 = vmatprep.mubr.bf16.mxu0 0
      %5156 = vmatmul.mubr.bf16.gmra.mrb[0].mxu0 %v1455
      %v5157 = vpop.f32.mrb[0].mxu0
      %v5158 = vpop.f32.mrb[0].mxu0
      %v5159 = vpop.f32.mrb[0].mxu0
      %v5160 = vpop.f32.mrb[0].mxu0
      %5161 = vmatprep.mubr.bf16.mxu0 0
      %5162 = vmatmul.mubr.bf16.gmra.mrb[0].mxu0 %v1458
      %v5163 = vpop.f32.mrb[0].mxu0
      %v5164 = vpop.f32.mrb[0].mxu0
      %v5165 = vpop.f32.mrb[0].mxu0
      %v5166 = vpop.f32.mrb[0].mxu0
      %5167 = vmatprep.mubr.bf16.mxu0 0
      %5168 = vmatmul.mubr.bf16.gmra.mrb[0].mxu0 %v1461
      %v5169 = vpop.f32.mrb[0].mxu0
      %v5170 = vpop.f32.mrb[0].mxu0
      %v5171 = vpop.f32.mrb[0].mxu0
      %v5172 = vpop.f32.mrb[0].mxu0
      %5173 = vmatprep.mubr.bf16.mxu0 0
      %5174 = vmatmul.mubr.bf16.gmra.mrb[0].mxu0 %v1464
      %v5175 = vpop.f32.mrb[0].mxu0
      %v5176 = vpop.f32.mrb[0].mxu0
      %v5177 = vpop.f32.mrb[0].mxu0
      %v5178 = vpop.f32.mrb[0].mxu0
      %5179 = vmatprep.mubr.bf16.mxu0 0
      %5180 = vmatmul.mubr.bf16.gmra.mrb[0].mxu0 %v1467
      %v5181 = vpop.f32.mrb[0].mxu0
      %v5182 = vpop.f32.mrb[0].mxu0
      %v5183 = vpop.f32.mrb[0].mxu0
      %v5184 = vpop.f32.mrb[0].mxu0
      %5185 = vmatprep.mubr.bf16.mxu0 0
      %5186 = vmatmul.mubr.bf16.gmra.mrb[0].mxu0 %v1470
      %v5187 = vpop.f32.mrb[0].mxu0
      %v5188 = vpop.f32.mrb[0].mxu0
      %v5189 = vpop.f32.mrb[0].mxu0
      %v5190 = vpop.f32.mrb[0].mxu0
      %5191 = vmatprep.mubr.bf16.mxu0 0
      %5192 = vmatmul.mubr.bf16.gmra.mrb[0].mxu0 %v1473
      %v5193 = vpop.f32.mrb[0].mxu0
      %v5194 = vpop.f32.mrb[0].mxu0
      %v5195 = vpop.f32.mrb[0].mxu0
      %v5196 = vpop.f32.mrb[0].mxu0
      %5197 = vmatprep.mubr.bf16.mxu0 0
      %5198 = vmatmul.mubr.bf16.gmra.mrb[0].mxu0 %v1476
      %v5199 = vpop.f32.mrb[0].mxu0
      %v5200 = vpop.f32.mrb[0].mxu0
      %v5201 = vpop.f32.mrb[0].mxu0
      %v5202 = vpop.f32.mrb[0].mxu0
      %5203 = vmatprep.mubr.bf16.mxu0 0
      %5204 = vmatmul.mubr.bf16.gmra.mrb[0].mxu0 %v1479
      %v5205 = vpop.f32.mrb[0].mxu0
      %v5206 = vpop.f32.mrb[0].mxu0
      %v5207 = vpop.f32.mrb[0].mxu0
      %v5208 = vpop.f32.mrb[0].mxu0
      %5209 = vmatprep.mubr.bf16.mxu0 0
      %5210 = vmatmul.mubr.bf16.gmra.mrb[0].mxu0 %v1482
      %v5211 = vpop.f32.mrb[0].mxu0
      %v5212 = vadd.f32 0.0, %v5211
      %v5213 = vpop.f32.mrb[0].mxu0
      %v5214 = vpop.f32.mrb[0].mxu0
      %v5215 = vpop.f32.mrb[0].mxu0
      %5216 = vmatprep.mubr.bf16.mxu0 0
      %5217 = vmatmul.mubr.bf16.gmra.mrb[0].mxu0 %v1485
      %v5218 = vpop.f32.mrb[0].mxu0
      %v5219 = vadd.f32 0.0, %v5218
      %v5220 = vpop.f32.mrb[0].mxu0
      %v5221 = vpop.f32.mrb[0].mxu0
      %v5222 = vpop.f32.mrb[0].mxu0
      %5223 = vmatprep.mubr.bf16.mxu0 0
      %5224 = vmatmul.mubr.bf16.gmra.mrb[0].mxu0 %v1488
      %v5225 = vpop.f32.mrb[0].mxu0
      %v5226 = vadd.f32 0.0, %v5225
      %v5227 = vpop.f32.mrb[0].mxu0
      %v5228 = vpop.f32.mrb[0].mxu0
      %v5229 = vpop.f32.mrb[0].mxu0
      %5230 = vmatprep.mubr.bf16.mxu0 0
      %5231 = vmatmul.mubr.bf16.gmra.mrb[0].mxu0 %v1491
      %v5232 = vpop.f32.mrb[0].mxu0
      %v5233 = vpop.f32.mrb[0].mxu0
      %v5234 = vpop.f32.mrb[0].mxu0
      %v5235 = vpop.f32.mrb[0].mxu0
      %5236 = vmatprep.mubr.bf16.mxu0 0
      %5237 = vmatmul.mubr.bf16.gmra.mrb[0].mxu0 %v1494
      %v5238 = vpop.f32.mrb[0].mxu0
      %v5239 = vpop.f32.mrb[0].mxu0
      %v5240 = vpop.f32.mrb[0].mxu0
      %v5241 = vpop.f32.mrb[0].mxu0
      %5242 = vmatprep.mubr.bf16.mxu0 0
      %5243 = vmatmul.mubr.bf16.gmra.mrb[0].mxu0 %v1497
      %v5244 = vpop.f32.mrb[0].mxu0
      %v5245 = vpop.f32.mrb[0].mxu0
      %v5246 = vpop.f32.mrb[0].mxu0
      %v5247 = vpop.f32.mrb[0].mxu0
      %5248 = vmatprep.mubr.bf16.mxu0 0
      %5249 = vmatmul.mubr.bf16.gmra.mrb[0].mxu0 %v1500
      %v5250 = vpop.f32.mrb[0].mxu0
      %v5251 = vpop.f32.mrb[0].mxu0
      %v5252 = vpop.f32.mrb[0].mxu0
      %v5253 = vpop.f32.mrb[0].mxu0
      %5254 = vmatprep.mubr.bf16.mxu0 0
      %5255 = vmatmul.mubr.bf16.gmra.mrb[0].mxu0 %v1503
      %v5256 = vpop.f32.mrb[0].mxu0
      %v5257 = vpop.f32.mrb[0].mxu0
      %v5258 = vpop.f32.mrb[0].mxu0
      %v5259 = vpop.f32.mrb[0].mxu0
      %5260 = vmatprep.mubr.bf16.mxu0 0
      %5261 = vmatmul.mubr.bf16.gmra.mrb[0].mxu0 %v1506
      %v5262 = vpop.f32.mrb[0].mxu0
      %v5263 = vadd.f32 0.0, %v5262
      %v5264 = vpop.f32.mrb[0].mxu0
      %v5265 = vpop.f32.mrb[0].mxu0
      %v5266 = vpop.f32.mrb[0].mxu0
      %5267 = vmatprep.mubr.bf16.mxu0 0
      %5268 = vmatmul.mubr.bf16.gmra.mrb[0].mxu0 %v1509
      %v5269 = vpop.f32.mrb[0].mxu0
      %v5270 = vadd.f32 0.0, %v5269
      %v5271 = vpop.f32.mrb[0].mxu0
      %v5272 = vpop.f32.mrb[0].mxu0
      %v5273 = vpop.f32.mrb[0].mxu0
      %5274 = vmatprep.mubr.bf16.mxu0 0
      %5275 = vmatmul.mubr.bf16.gmra.mrb[0].mxu0 %v1512
      %v5276 = vpop.f32.mrb[0].mxu0
      %v5277 = vadd.f32 0.0, %v5276
      %v5278 = vpop.f32.mrb[0].mxu0
      %v5279 = vpop.f32.mrb[0].mxu0
      %v5280 = vpop.f32.mrb[0].mxu0
      %5281 = vmatprep.mubr.bf16.mxu0 0
      %5282 = vmatmul.mubr.bf16.gmra.mrb[0].mxu0 %v1515
      %v5283 = vpop.f32.mrb[0].mxu0
      %v5284 = vpop.f32.mrb[0].mxu0
      %v5285 = vpop.f32.mrb[0].mxu0
      %v5286 = vpop.f32.mrb[0].mxu0
      %5287 = vmatprep.mubr.bf16.mxu0 0
      %5288 = vmatmul.mubr.bf16.gmra.mrb[0].mxu0 %v1518
      %v5289 = vpop.f32.mrb[0].mxu0
      %v5290 = vpop.f32.mrb[0].mxu0
      %v5291 = vpop.f32.mrb[0].mxu0
      %v5292 = vpop.f32.mrb[0].mxu0
      %5293 = vmatprep.mubr.bf16.mxu0 0
      %5294 = vmatmul.mubr.bf16.gmra.mrb[0].mxu0 %v1521
      %v5295 = vpop.f32.mrb[0].mxu0
      %v5296 = vpop.f32.mrb[0].mxu0
      %v5297 = vpop.f32.mrb[0].mxu0
      %v5298 = vpop.f32.mrb[0].mxu0
      %5299 = vmatprep.mubr.bf16.mxu0 0
      %5300 = vmatmul.mubr.bf16.gmra.mrb[0].mxu0 %v1524
      %v5301 = vpop.f32.mrb[0].mxu0
      %v5302 = vpop.f32.mrb[0].mxu0
      %v5303 = vpop.f32.mrb[0].mxu0
      %v5304 = vpop.f32.mrb[0].mxu0
      %5305 = vmatprep.mubr.bf16.mxu0 0
      %5306 = vmatmul.mubr.bf16.gmra.mrb[0].mxu0 %v1527
      %v5307 = vpop.f32.mrb[0].mxu0
      %v5308 = vpop.f32.mrb[0].mxu0
      %v5309 = vpop.f32.mrb[0].mxu0
      %v5310 = vpop.f32.mrb[0].mxu0
      %5311 = vmatprep.mubr.bf16.mxu0 0
      %5312 = vmatmul.mubr.bf16.gmra.mrb[0].mxu0 %v1530
      %v5313 = vpop.f32.mrb[0].mxu0
      %v5314 = vadd.f32 0.0, %v5313
      %v5315 = vpop.f32.mrb[0].mxu0
      %v5316 = vpop.f32.mrb[0].mxu0
      %v5317 = vpop.f32.mrb[0].mxu0
      %5318 = vmatprep.mubr.bf16.mxu0 0
      %5319 = vmatmul.mubr.bf16.gmra.mrb[0].mxu0 %v1533
      %v5320 = vpop.f32.mrb[0].mxu0
      %v5321 = vadd.f32 0.0, %v5320
      %v5322 = vpop.f32.mrb[0].mxu0
      %v5323 = vpop.f32.mrb[0].mxu0
      %v5324 = vpop.f32.mrb[0].mxu0
      %5325 = vmatprep.mubr.bf16.mxu0 0
      %5326 = vmatmul.mubr.bf16.gmra.mrb[0].mxu0 %v1536
      %v5327 = vpop.f32.mrb[0].mxu0
      %v5328 = vadd.f32 0.0, %v5327
      %v5329 = vpop.f32.mrb[0].mxu0
      %v5330 = vpop.f32.mrb[0].mxu0
      %v5331 = vpop.f32.mrb[0].mxu0
      %5332 = vdwg.mxu0
      %v5333 = vadd.f32 %v5078, %v5212
      %v5334 = vadd.f32 %v5079, %v5219
      %v5335 = vadd.f32 %v5080, %v5226
      %v5336 = vadd.f32 %v5081, %v5263
      %v5337 = vadd.f32 %v5082, %v5270
      %v5338 = vadd.f32 %v5083, %v5277
      %v5339 = vadd.f32 %v5084, %v5314
      %v5340 = vadd.f32 %v5085, %v5321
      %v5341 = vadd.f32 %v5086, %v5328
      %v5346 = vunpack.c.l.b16 %v1424
      %v5347 = vunpack.c.l.b16 %v1425
      %v5348 = vunpack.c.l.b16 %v1426
      %v5349 = vunpack.c.l.b16 %v1427
      %v5350 = vpack.c.b16 %v5347, %v5346
      %v5351 = vpack.c.b16 %v5349, %v5348
      %5354 = vmatprep.subr.bf16.mxu0 0
      %5355 = vmatpush1.bf16.msra.mxu0 %v5350
      %5356 = vmatprep.subr.bf16.mxu0 0
      %5357 = vmatpush1.bf16.msra.mxu0 %v5351
      %5358 = vmatprep.subr.bf16.mxu0 0
      %5359 = vmatpush1.bf16.msra.mxu0 0
      %5360 = vmatprep.subr.bf16.mxu0 0
      %5361 = vmatpush1.bf16.msra.mxu0 0
      %5362 = vmatprep.subr.bf16.mxu0 0
      %5363 = vmatpush1.bf16.msra.mxu0 0
      %5364 = vmatprep.subr.bf16.mxu0 0
      %5365 = vmatpush1.bf16.msra.mxu0 0
      %5366 = vmatprep.subr.bf16.mxu0 0
      %5367 = vmatpush1.bf16.msra.mxu0 0
      %5368 = vmatprep.subr.bf16.mxu0 0
      %5369 = vmatpush1.bf16.msra.mxu0 0
      %5370 = vmatprep.subr.bf16.mxu0 0
      %5371 = vmatpush1.bf16.msra.mxu0 0
      %5372 = vmatprep.subr.bf16.mxu0 0
      %5373 = vmatpush1.bf16.msra.mxu0 0
      %5374 = vmatprep.subr.bf16.mxu0 0
      %5375 = vmatpush1.bf16.msra.mxu0 0
      %5376 = vmatprep.subr.bf16.mxu0 0
      %5377 = vmatpush1.bf16.msra.mxu0 0
      %5378 = vmatprep.subr.bf16.mxu0 0
      %5379 = vmatpush1.bf16.msra.mxu0 0
      %5380 = vmatprep.subr.bf16.mxu0 0
      %5381 = vmatpush1.bf16.msra.mxu0 0
      %5382 = vmatprep.subr.bf16.mxu0 0
      %5383 = vmatpush1.bf16.msra.mxu0 0
      %5384 = vmatprep.subr.bf16.mxu0 0
      %5385 = vmatpush1.bf16.msra.mxu0 0
      %5386 = vmatprep.mubr.bf16.mxu0 0
      %5387 = vmatmul.mubr.bf16.gmra.mrb[0].mxu0 %v1443
      %v5388 = vpop.f32.mrb[0].mxu0
      %v5389 = vpop.f32.mrb[0].mxu0
      %v5390 = vpop.f32.mrb[0].mxu0
      %v5391 = vpop.f32.mrb[0].mxu0
      %5392 = vmatprep.mubr.bf16.mxu0 0
      %5393 = vmatmul.mubr.bf16.gmra.mrb[0].mxu0 %v1446
      %v5394 = vpop.f32.mrb[0].mxu0
      %v5395 = vpop.f32.mrb[0].mxu0
      %v5396 = vpop.f32.mrb[0].mxu0
      %v5397 = vpop.f32.mrb[0].mxu0
      %5398 = vmatprep.mubr.bf16.mxu0 0
      %5399 = vmatmul.mubr.bf16.gmra.mrb[0].mxu0 %v1449
      %v5400 = vpop.f32.mrb[0].mxu0
      %v5401 = vpop.f32.mrb[0].mxu0
      %v5402 = vpop.f32.mrb[0].mxu0
      %v5403 = vpop.f32.mrb[0].mxu0
      %5404 = vmatprep.mubr.bf16.mxu0 0
      %5405 = vmatmul.mubr.bf16.gmra.mrb[0].mxu0 %v1452
      %v5406 = vpop.f32.mrb[0].mxu0
      %v5407 = vpop.f32.mrb[0].mxu0
      %v5408 = vpop.f32.mrb[0].mxu0
      %v5409 = vpop.f32.mrb[0].mxu0
      %5410 = vmatprep.mubr.bf16.mxu0 0
      %5411 = vmatmul.mubr.bf16.gmra.mrb[0].mxu0 %v1455
      %v5412 = vpop.f32.mrb[0].mxu0
      %v5413 = vpop.f32.mrb[0].mxu0
      %v5414 = vpop.f32.mrb[0].mxu0
      %v5415 = vpop.f32.mrb[0].mxu0
      %5416 = vmatprep.mubr.bf16.mxu0 0
      %5417 = vmatmul.mubr.bf16.gmra.mrb[0].mxu0 %v1458
      %v5418 = vpop.f32.mrb[0].mxu0
      %v5419 = vpop.f32.mrb[0].mxu0
      %v5420 = vpop.f32.mrb[0].mxu0
      %v5421 = vpop.f32.mrb[0].mxu0
      %5422 = vmatprep.mubr.bf16.mxu0 0
      %5423 = vmatmul.mubr.bf16.gmra.mrb[0].mxu0 %v1461
      %v5424 = vpop.f32.mrb[0].mxu0
      %v5425 = vpop.f32.mrb[0].mxu0
      %v5426 = vpop.f32.mrb[0].mxu0
      %v5427 = vpop.f32.mrb[0].mxu0
      %5428 = vmatprep.mubr.bf16.mxu0 0
      %5429 = vmatmul.mubr.bf16.gmra.mrb[0].mxu0 %v1464
      %v5430 = vpop.f32.mrb[0].mxu0
      %v5431 = vpop.f32.mrb[0].mxu0
      %v5432 = vpop.f32.mrb[0].mxu0
      %v5433 = vpop.f32.mrb[0].mxu0
      %5434 = vmatprep.mubr.bf16.mxu0 0
      %5435 = vmatmul.mubr.bf16.gmra.mrb[0].mxu0 %v1467
      %v5436 = vpop.f32.mrb[0].mxu0
      %v5437 = vpop.f32.mrb[0].mxu0
      %v5438 = vpop.f32.mrb[0].mxu0
      %v5439 = vpop.f32.mrb[0].mxu0
      %5440 = vmatprep.mubr.bf16.mxu0 0
      %5441 = vmatmul.mubr.bf16.gmra.mrb[0].mxu0 %v1470
      %v5442 = vpop.f32.mrb[0].mxu0
      %v5443 = vpop.f32.mrb[0].mxu0
      %v5444 = vpop.f32.mrb[0].mxu0
      %v5445 = vpop.f32.mrb[0].mxu0
      %5446 = vmatprep.mubr.bf16.mxu0 0
      %5447 = vmatmul.mubr.bf16.gmra.mrb[0].mxu0 %v1473
      %v5448 = vpop.f32.mrb[0].mxu0
      %v5449 = vpop.f32.mrb[0].mxu0
      %v5450 = vpop.f32.mrb[0].mxu0
      %v5451 = vpop.f32.mrb[0].mxu0
      %5452 = vmatprep.mubr.bf16.mxu0 0
      %5453 = vmatmul.mubr.bf16.gmra.mrb[0].mxu0 %v1476
      %v5454 = vpop.f32.mrb[0].mxu0
      %v5455 = vpop.f32.mrb[0].mxu0
      %v5456 = vpop.f32.mrb[0].mxu0
      %v5457 = vpop.f32.mrb[0].mxu0
      %5458 = vmatprep.mubr.bf16.mxu0 0
      %5459 = vmatmul.mubr.bf16.gmra.mrb[0].mxu0 %v1479
      %v5460 = vpop.f32.mrb[0].mxu0
      %v5461 = vpop.f32.mrb[0].mxu0
      %v5462 = vpop.f32.mrb[0].mxu0
      %v5463 = vpop.f32.mrb[0].mxu0
      %5464 = vmatprep.mubr.bf16.mxu0 0
      %5465 = vmatmul.mubr.bf16.gmra.mrb[0].mxu0 %v1482
      %v5466 = vpop.f32.mrb[0].mxu0
      %v5467 = vpop.f32.mrb[0].mxu0
      %v5468 = vpop.f32.mrb[0].mxu0
      %v5469 = vadd.f32 0.0, %v5468
      %v5470 = vpop.f32.mrb[0].mxu0
      %5471 = vmatprep.mubr.bf16.mxu0 0
      %5472 = vmatmul.mubr.bf16.gmra.mrb[0].mxu0 %v1485
      %v5473 = vpop.f32.mrb[0].mxu0
      %v5474 = vpop.f32.mrb[0].mxu0
      %v5475 = vpop.f32.mrb[0].mxu0
      %v5476 = vadd.f32 0.0, %v5475
      %v5477 = vpop.f32.mrb[0].mxu0
      %5478 = vmatprep.mubr.bf16.mxu0 0
      %5479 = vmatmul.mubr.bf16.gmra.mrb[0].mxu0 %v1488
      %v5480 = vpop.f32.mrb[0].mxu0
      %v5481 = vpop.f32.mrb[0].mxu0
      %v5482 = vpop.f32.mrb[0].mxu0
      %v5483 = vadd.f32 0.0, %v5482
      %v5484 = vpop.f32.mrb[0].mxu0
      %5485 = vmatprep.mubr.bf16.mxu0 0
      %5486 = vmatmul.mubr.bf16.gmra.mrb[0].mxu0 %v1491
      %v5487 = vpop.f32.mrb[0].mxu0
      %v5488 = vpop.f32.mrb[0].mxu0
      %v5489 = vpop.f32.mrb[0].mxu0
      %v5490 = vpop.f32.mrb[0].mxu0
      %5491 = vmatprep.mubr.bf16.mxu0 0
      %5492 = vmatmul.mubr.bf16.gmra.mrb[0].mxu0 %v1494
      %v5493 = vpop.f32.mrb[0].mxu0
      %v5494 = vpop.f32.mrb[0].mxu0
      %v5495 = vpop.f32.mrb[0].mxu0
      %v5496 = vpop.f32.mrb[0].mxu0
      %5497 = vmatprep.mubr.bf16.mxu0 0
      %5498 = vmatmul.mubr.bf16.gmra.mrb[0].mxu0 %v1497
      %v5499 = vpop.f32.mrb[0].mxu0
      %v5500 = vpop.f32.mrb[0].mxu0
      %v5501 = vpop.f32.mrb[0].mxu0
      %v5502 = vpop.f32.mrb[0].mxu0
      %5503 = vmatprep.mubr.bf16.mxu0 0
      %5504 = vmatmul.mubr.bf16.gmra.mrb[0].mxu0 %v1500
      %v5505 = vpop.f32.mrb[0].mxu0
      %v5506 = vpop.f32.mrb[0].mxu0
      %v5507 = vpop.f32.mrb[0].mxu0
      %v5508 = vpop.f32.mrb[0].mxu0
      %5509 = vmatprep.mubr.bf16.mxu0 0
      %5510 = vmatmul.mubr.bf16.gmra.mrb[0].mxu0 %v1503
      %v5511 = vpop.f32.mrb[0].mxu0
      %v5512 = vpop.f32.mrb[0].mxu0
      %v5513 = vpop.f32.mrb[0].mxu0
      %v5514 = vpop.f32.mrb[0].mxu0
      %5515 = vmatprep.mubr.bf16.mxu0 0
      %5516 = vmatmul.mubr.bf16.gmra.mrb[0].mxu0 %v1506
      %v5517 = vpop.f32.mrb[0].mxu0
      %v5518 = vpop.f32.mrb[0].mxu0
      %v5519 = vpop.f32.mrb[0].mxu0
      %v5520 = vadd.f32 0.0, %v5519
      %v5521 = vpop.f32.mrb[0].mxu0
      %5522 = vmatprep.mubr.bf16.mxu0 0
      %5523 = vmatmul.mubr.bf16.gmra.mrb[0].mxu0 %v1509
      %v5524 = vpop.f32.mrb[0].mxu0
      %v5525 = vpop.f32.mrb[0].mxu0
      %v5526 = vpop.f32.mrb[0].mxu0
      %v5527 = vadd.f32 0.0, %v5526
      %v5528 = vpop.f32.mrb[0].mxu0
      %5529 = vmatprep.mubr.bf16.mxu0 0
      %5530 = vmatmul.mubr.bf16.gmra.mrb[0].mxu0 %v1512
      %v5531 = vpop.f32.mrb[0].mxu0
      %v5532 = vpop.f32.mrb[0].mxu0
      %v5533 = vpop.f32.mrb[0].mxu0
      %v5534 = vadd.f32 0.0, %v5533
      %v5535 = vpop.f32.mrb[0].mxu0
      %5536 = vmatprep.mubr.bf16.mxu0 0
      %5537 = vmatmul.mubr.bf16.gmra.mrb[0].mxu0 %v1515
      %v5538 = vpop.f32.mrb[0].mxu0
      %v5539 = vpop.f32.mrb[0].mxu0
      %v5540 = vpop.f32.mrb[0].mxu0
      %v5541 = vpop.f32.mrb[0].mxu0
      %5542 = vmatprep.mubr.bf16.mxu0 0
      %5543 = vmatmul.mubr.bf16.gmra.mrb[0].mxu0 %v1518
      %v5544 = vpop.f32.mrb[0].mxu0
      %v5545 = vpop.f32.mrb[0].mxu0
      %v5546 = vpop.f32.mrb[0].mxu0
      %v5547 = vpop.f32.mrb[0].mxu0
      %5548 = vmatprep.mubr.bf16.mxu0 0
      %5549 = vmatmul.mubr.bf16.gmra.mrb[0].mxu0 %v1521
      %v5550 = vpop.f32.mrb[0].mxu0
      %v5551 = vpop.f32.mrb[0].mxu0
      %v5552 = vpop.f32.mrb[0].mxu0
      %v5553 = vpop.f32.mrb[0].mxu0
      %5554 = vmatprep.mubr.bf16.mxu0 0
      %5555 = vmatmul.mubr.bf16.gmra.mrb[0].mxu0 %v1524
      %v5556 = vpop.f32.mrb[0].mxu0
      %v5557 = vpop.f32.mrb[0].mxu0
      %v5558 = vpop.f32.mrb[0].mxu0
      %v5559 = vpop.f32.mrb[0].mxu0
      %5560 = vmatprep.mubr.bf16.mxu0 0
      %5561 = vmatmul.mubr.bf16.gmra.mrb[0].mxu0 %v1527
      %v5562 = vpop.f32.mrb[0].mxu0
      %v5563 = vpop.f32.mrb[0].mxu0
      %v5564 = vpop.f32.mrb[0].mxu0
      %v5565 = vpop.f32.mrb[0].mxu0
      %5566 = vmatprep.mubr.bf16.mxu0 0
      %5567 = vmatmul.mubr.bf16.gmra.mrb[0].mxu0 %v1530
      %v5568 = vpop.f32.mrb[0].mxu0
      %v5569 = vpop.f32.mrb[0].mxu0
      %v5570 = vpop.f32.mrb[0].mxu0
      %v5571 = vadd.f32 0.0, %v5570
      %v5572 = vpop.f32.mrb[0].mxu0
      %5573 = vmatprep.mubr.bf16.mxu0 0
      %5574 = vmatmul.mubr.bf16.gmra.mrb[0].mxu0 %v1533
      %v5575 = vpop.f32.mrb[0].mxu0
      %v5576 = vpop.f32.mrb[0].mxu0
      %v5577 = vpop.f32.mrb[0].mxu0
      %v5578 = vadd.f32 0.0, %v5577
      %v5579 = vpop.f32.mrb[0].mxu0
      %5580 = vmatprep.mubr.bf16.mxu0 0
      %5581 = vmatmul.mubr.bf16.gmra.mrb[0].mxu0 %v1536
      %v5582 = vpop.f32.mrb[0].mxu0
      %v5583 = vpop.f32.mrb[0].mxu0
      %v5584 = vpop.f32.mrb[0].mxu0
      %v5585 = vadd.f32 0.0, %v5584
      %v5586 = vpop.f32.mrb[0].mxu0
      %5587 = vdwg.mxu0
      %v5588 = vadd.f32 %v5333, %v5469
      %v5589 = vadd.f32 %v5334, %v5476
      %v5590 = vadd.f32 %v5335, %v5483
      %v5591 = vadd.f32 %v5336, %v5520
      %v5592 = vadd.f32 %v5337, %v5527
      %v5593 = vadd.f32 %v5338, %v5534
      %v5594 = vadd.f32 %v5339, %v5571
      %v5595 = vadd.f32 %v5340, %v5578
      %v5596 = vadd.f32 %v5341, %v5585
      %v5598 = vlaneseq
      %v5599 = vshrl.u32 %v5598, 7
      %v5600 = vsub.s32 0, %v5599
      %v5601 = vrot.slane %v1428, %v5600
      %v5603 = vadd.f32 %v5588, %v5601
      %v5604 = vmax.f32 %v5603, 0.0
      %v5605 = vpack.c.bf16 %v5604, %v5604
      %v5606 = vadd.f32 %v5589, %v5601
      %v5607 = vmax.f32 %v5606, 0.0
      %v5608 = vpack.c.bf16 %v5607, %v5607
      %v5609 = vadd.f32 %v5590, %v5601
      %v5610 = vmax.f32 %v5609, 0.0
      %v5611 = vpack.c.bf16 %v5610, %v5610
      %v5612 = vadd.f32 %v5591, %v5601
      %v5613 = vmax.f32 %v5612, 0.0
      %v5614 = vpack.c.bf16 %v5613, %v5613
      %v5615 = vadd.f32 %v5592, %v5601
      %v5616 = vmax.f32 %v5615, 0.0
      %v5617 = vpack.c.bf16 %v5616, %v5616
      %v5618 = vadd.f32 %v5593, %v5601
      %v5619 = vmax.f32 %v5618, 0.0
      %v5620 = vpack.c.bf16 %v5619, %v5619
      %v5621 = vadd.f32 %v5594, %v5601
      %v5622 = vmax.f32 %v5621, 0.0
      %v5623 = vpack.c.bf16 %v5622, %v5622
      %v5624 = vadd.f32 %v5595, %v5601
      %v5625 = vmax.f32 %v5624, 0.0
      %v5626 = vpack.c.bf16 %v5625, %v5625
      %v5627 = vadd.f32 %v5596, %v5601
      %v5628 = vmax.f32 %v5627, 0.0
      %v5629 = vpack.c.bf16 %v5628, %v5628
      %v5630 = vld [vmem:[%s6] sm:$0xf]
      %v5631 = vld [vmem:[%s6 + $0x4] sm:$0xf]
      %v5632 = vld [vmem:[%s6 + $0x8] sm:$0xf]
      %v5633 = vld [vmem:[%s6 + $0xc] sm:$0xf]
      %v5634 = vld [vmem:[%s6 + $0x10] sm:$0xf]
      %v5635 = vld [vmem:[%s6 + $0x14] sm:$0xf]
      %v5636 = vld [vmem:[%s6 + $0x18] sm:$0xf]
      %v5637 = vld [vmem:[%s6 + $0x1c] sm:$0xf]
      %v5638 = vld [vmem:[%s6 + $0x20] sm:$0xf]
      %v5639 = vld [vmem:[%s6 + $0x24] sm:$0xf]
      %v5640 = vld [vmem:[%s6 + $0x28] sm:$0xf]
      %v5641 = vld [vmem:[%s6 + $0x2c] sm:$0xf]
      %v5642 = vld [vmem:[%s6 + $0x30] sm:$0xf]
      %v5643 = vld [vmem:[%s6 + $0x34] sm:$0xf]
      %v5644 = vld [vmem:[%s6 + $0x38] sm:$0xf]
      %v5645 = vld [vmem:[%s6 + $0x3c] sm:$0xf]
      %v5646 = vld [vmem:[%s6 + $0x40] sm:$0xf]
      %v5647 = vld [vmem:[%s6 + $0x44] sm:$0xf]
      %v5648 = vld [vmem:[%s6 + $0x48] sm:$0xf]
      %v5649 = vld [vmem:[%s6 + $0x4c] sm:$0xf]
      %v5650 = vld [vmem:[%s6 + $0x50] sm:$0xf]
      %v5651 = vld [vmem:[%s6 + $0x54] sm:$0xf]
      %v5652 = vld [vmem:[%s6 + $0x58] sm:$0xf]
      %v5653 = vld [vmem:[%s6 + $0x5c] sm:$0xf]
      %v5654 = vld [vmem:[%s6 + $0x60] sm:$0xf]
      %v5655 = vld [vmem:[%s6 + $0x64] sm:$0xf]
      %v5656 = vld [vmem:[%s6 + $0x68] sm:$0xf]
      %v5657 = vld [vmem:[%s6 + $0x6c] sm:$0xf]
      %v5658 = vld [vmem:[%s6 + $0x70] sm:$0xf]
      %v5659 = vld [vmem:[%s6 + $0x74] sm:$0xf]
      %v5660 = vld [vmem:[%s6 + $0x78] sm:$0xf]
      %v5661 = vld [vmem:[%s6 + $0x7c] sm:$0xf]
      %v5662 = vld [vmem:[%s6 + $0x80] sm:$0xf]
      %v5663 = vld [vmem:[%s6 + $0x84] sm:$0xf]
      %v5664 = vld [vmem:[%s6 + $0x88] sm:$0xf]
      %v5665 = vld [vmem:[%s6 + $0x8c] sm:$0xf]
      %v5666 = vld [vmem:[%s6 + $0x90] sm:$0xf]
      %v5667 = vld [vmem:[%s6 + $0x94] sm:$0xf]
      %v5668 = vld [vmem:[%s6 + $0x98] sm:$0xf]
      %v5669 = vld [vmem:[%s6 + $0x9c] sm:$0xf]
      %v5670 = vld [vmem:[%s6 + $0xa0] sm:$0xf]
      %v5671 = vld [vmem:[%s6 + $0xa4] sm:$0xf]
      %v5672 = vld [vmem:[%s6 + $0xa8] sm:$0xf]
      %v5673 = vld [vmem:[%s6 + $0xac] sm:$0xf]
      %v5674 = vld [vmem:[%s6 + $0xb0] sm:$0xf]
      %v5675 = vld [vmem:[%s6 + $0xb4] sm:$0xf]
      %v5676 = vld [vmem:[%s6 + $0xb8] sm:$0xf]
      %v5677 = vld [vmem:[%s6 + $0xbc] sm:$0xf]
      %v5678 = vld [vmem:[%s6 + $0xc0] sm:$0xf]
      %v5679 = vld [vmem:[%s6 + $0xc4] sm:$0xf]
      %v5680 = vld [vmem:[%s6 + $0xc8] sm:$0xf]
      %v5681 = vld [vmem:[%s6 + $0xcc] sm:$0xf]
      %v5682 = vld [vmem:[%s6 + $0xd0] sm:$0xf]
      %v5683 = vld [vmem:[%s6 + $0xd4] sm:$0xf]
      %v5684 = vld [vmem:[%s6 + $0xd8] sm:$0xf]
      %v5685 = vld [vmem:[%s6 + $0xdc] sm:$0xf]
      %v5686 = vld [vmem:[%s6 + $0xe0] sm:$0xf]
      %v5687 = vld [vmem:[%s6 + $0xe4] sm:$0xf]
      %v5688 = vld [vmem:[%s6 + $0xe8] sm:$0xf]
      %v5689 = vld [vmem:[%s6 + $0xec] sm:$0xf]
      %v5690 = vld [vmem:[%s6 + $0xf0] sm:$0xf]
      %v5691 = vld [vmem:[%s6 + $0xf4] sm:$0xf]
      %v5692 = vld [vmem:[%s6 + $0xf8] sm:$0xf]
      %v5693 = vld [vmem:[%s6 + $0xfc] sm:$0xf]
      %v5694 = vld [vmem:[%s6 + $0x100] sm:$0xf]
      %v5695 = vld [vmem:[%s6 + $0x104] sm:$0xf]
      %v5696 = vld [vmem:[%s6 + $0x108] sm:$0xf]
      %v5697 = vld [vmem:[%s6 + $0x10c] sm:$0xf]
      %v5698 = vld [vmem:[%s6 + $0x110] sm:$0xf]
      %v5699 = vld [vmem:[%s6 + $0x114] sm:$0xf]
      %v5700 = vld [vmem:[%s6 + $0x118] sm:$0xf]
      %v5701 = vld [vmem:[%s6 + $0x11c] sm:$0xf]
      %v5710 = vunpack.c.l.b16 %v5638
      %v5711 = vunpack.c.l.b16 %v5639
      %v5712 = vunpack.c.l.b16 %v5640
      %v5713 = vunpack.c.l.b16 %v5641
      %v5714 = vunpack.c.l.b16 %v5642
      %v5715 = vunpack.c.l.b16 %v5643
      %v5716 = vunpack.c.l.b16 %v5644
      %v5717 = vunpack.c.l.b16 %v5645
      %v5718 = vpack.c.b16 %v5711, %v5710
      %v5719 = vpack.c.b16 %v5713, %v5712
      %v5720 = vpack.c.b16 %v5715, %v5714
      %v5721 = vpack.c.b16 %v5717, %v5716
      %v5727 = vsel %vm882, %v5608, 0
      %5729 = vmatprep.subr.bf16.mxu0 0
      %5730 = vmatpush1.bf16.msra.mxu0 %v5718
      %5731 = vmatprep.subr.bf16.mxu0 0
      %5732 = vmatpush1.bf16.msra.mxu0 %v5719
      %5733 = vmatprep.subr.bf16.mxu0 0
      %5734 = vmatpush1.bf16.msra.mxu0 %v5720
      %5735 = vmatprep.subr.bf16.mxu0 0
      %5736 = vmatpush1.bf16.msra.mxu0 %v5721
      %5737 = vmatprep.subr.bf16.mxu0 0
      %5738 = vmatpush1.bf16.msra.mxu0 0
      %5739 = vmatprep.subr.bf16.mxu0 0
      %5740 = vmatpush1.bf16.msra.mxu0 0
      %5741 = vmatprep.subr.bf16.mxu0 0
      %5742 = vmatpush1.bf16.msra.mxu0 0
      %5743 = vmatprep.subr.bf16.mxu0 0
      %5744 = vmatpush1.bf16.msra.mxu0 0
      %5745 = vmatprep.subr.bf16.mxu0 0
      %5746 = vmatpush1.bf16.msra.mxu0 0
      %5747 = vmatprep.subr.bf16.mxu0 0
      %5748 = vmatpush1.bf16.msra.mxu0 0
      %5749 = vmatprep.subr.bf16.mxu0 0
      %5750 = vmatpush1.bf16.msra.mxu0 0
      %5751 = vmatprep.subr.bf16.mxu0 0
      %5752 = vmatpush1.bf16.msra.mxu0 0
      %5753 = vmatprep.subr.bf16.mxu0 0
      %5754 = vmatpush1.bf16.msra.mxu0 0
      %5755 = vmatprep.subr.bf16.mxu0 0
      %5756 = vmatpush1.bf16.msra.mxu0 0
      %5757 = vmatprep.subr.bf16.mxu0 0
      %5758 = vmatpush1.bf16.msra.mxu0 0
      %5759 = vmatprep.subr.bf16.mxu0 0
      %5760 = vmatpush1.bf16.msra.mxu0 0
      %5761 = vmatprep.mubr.bf16.mxu0 0
      %5762 = vmatmul.mubr.bf16.gmra.mrb[0].mxu0 %v5727
      %v5763 = vpop.f32.mrb[0].mxu0
      %v5764 = vadd.f32 0.0, %v5763
      %v5765 = vpop.f32.mrb[0].mxu0
      %v5766 = vpop.f32.mrb[0].mxu0
      %v5767 = vpop.f32.mrb[0].mxu0
      %5768 = vdwg.mxu0
      %v5777 = vunpack.c.l.b16 %v5630
      %v5778 = vunpack.c.l.b16 %v5631
      %v5779 = vunpack.c.l.b16 %v5632
      %v5780 = vunpack.c.l.b16 %v5633
      %v5781 = vunpack.c.l.b16 %v5634
      %v5782 = vunpack.c.l.b16 %v5635
      %v5783 = vunpack.c.l.b16 %v5636
      %v5784 = vunpack.c.l.b16 %v5637
      %v5785 = vpack.c.b16 %v5778, %v5777
      %v5786 = vpack.c.b16 %v5780, %v5779
      %v5787 = vpack.c.b16 %v5782, %v5781
      %v5788 = vpack.c.b16 %v5784, %v5783
      %v5794 = vsel %vm882, %v5605, 0
      %5796 = vmatprep.subr.bf16.mxu0 0
      %5797 = vmatpush1.bf16.msra.mxu0 %v5785
      %5798 = vmatprep.subr.bf16.mxu0 0
      %5799 = vmatpush1.bf16.msra.mxu0 %v5786
      %5800 = vmatprep.subr.bf16.mxu0 0
      %5801 = vmatpush1.bf16.msra.mxu0 %v5787
      %5802 = vmatprep.subr.bf16.mxu0 0
      %5803 = vmatpush1.bf16.msra.mxu0 %v5788
      %5804 = vmatprep.subr.bf16.mxu0 0
      %5805 = vmatpush1.bf16.msra.mxu0 0
      %5806 = vmatprep.subr.bf16.mxu0 0
      %5807 = vmatpush1.bf16.msra.mxu0 0
      %5808 = vmatprep.subr.bf16.mxu0 0
      %5809 = vmatpush1.bf16.msra.mxu0 0
      %5810 = vmatprep.subr.bf16.mxu0 0
      %5811 = vmatpush1.bf16.msra.mxu0 0
      %5812 = vmatprep.subr.bf16.mxu0 0
      %5813 = vmatpush1.bf16.msra.mxu0 0
      %5814 = vmatprep.subr.bf16.mxu0 0
      %5815 = vmatpush1.bf16.msra.mxu0 0
      %5816 = vmatprep.subr.bf16.mxu0 0
      %5817 = vmatpush1.bf16.msra.mxu0 0
      %5818 = vmatprep.subr.bf16.mxu0 0
      %5819 = vmatpush1.bf16.msra.mxu0 0
      %5820 = vmatprep.subr.bf16.mxu0 0
      %5821 = vmatpush1.bf16.msra.mxu0 0
      %5822 = vmatprep.subr.bf16.mxu0 0
      %5823 = vmatpush1.bf16.msra.mxu0 0
      %5824 = vmatprep.subr.bf16.mxu0 0
      %5825 = vmatpush1.bf16.msra.mxu0 0
      %5826 = vmatprep.subr.bf16.mxu0 0
      %5827 = vmatpush1.bf16.msra.mxu0 0
      %5828 = vmatprep.mubr.bf16.mxu0 0
      %5829 = vmatmul.mubr.bf16.gmra.mrb[0].mxu0 %v5794
      %v5830 = vpop.f32.mrb[0].mxu0
      %v5831 = vadd.f32 %v5764, %v5830
      %v5832 = vpop.f32.mrb[0].mxu0
      %v5833 = vpop.f32.mrb[0].mxu0
      %v5834 = vpop.f32.mrb[0].mxu0
      %5835 = vdwg.mxu0
      %v5844 = vunpack.c.l.b16 %v5646
      %v5845 = vunpack.c.l.b16 %v5647
      %v5846 = vunpack.c.l.b16 %v5648
      %v5847 = vunpack.c.l.b16 %v5649
      %v5848 = vunpack.c.l.b16 %v5650
      %v5849 = vunpack.c.l.b16 %v5651
      %v5850 = vunpack.c.l.b16 %v5652
      %v5851 = vunpack.c.l.b16 %v5653
      %v5852 = vpack.c.b16 %v5845, %v5844
      %v5853 = vpack.c.b16 %v5847, %v5846
      %v5854 = vpack.c.b16 %v5849, %v5848
      %v5855 = vpack.c.b16 %v5851, %v5850
      %v5861 = vsel %vm882, %v5611, 0
      %5863 = vmatprep.subr.bf16.mxu0 0
      %5864 = vmatpush1.bf16.msra.mxu0 %v5852
      %5865 = vmatprep.subr.bf16.mxu0 0
      %5866 = vmatpush1.bf16.msra.mxu0 %v5853
      %5867 = vmatprep.subr.bf16.mxu0 0
      %5868 = vmatpush1.bf16.msra.mxu0 %v5854
      %5869 = vmatprep.subr.bf16.mxu0 0
      %5870 = vmatpush1.bf16.msra.mxu0 %v5855
      %5871 = vmatprep.subr.bf16.mxu0 0
      %5872 = vmatpush1.bf16.msra.mxu0 0
      %5873 = vmatprep.subr.bf16.mxu0 0
      %5874 = vmatpush1.bf16.msra.mxu0 0
      %5875 = vmatprep.subr.bf16.mxu0 0
      %5876 = vmatpush1.bf16.msra.mxu0 0
      %5877 = vmatprep.subr.bf16.mxu0 0
      %5878 = vmatpush1.bf16.msra.mxu0 0
      %5879 = vmatprep.subr.bf16.mxu0 0
      %5880 = vmatpush1.bf16.msra.mxu0 0
      %5881 = vmatprep.subr.bf16.mxu0 0
      %5882 = vmatpush1.bf16.msra.mxu0 0
      %5883 = vmatprep.subr.bf16.mxu0 0
      %5884 = vmatpush1.bf16.msra.mxu0 0
      %5885 = vmatprep.subr.bf16.mxu0 0
      %5886 = vmatpush1.bf16.msra.mxu0 0
      %5887 = vmatprep.subr.bf16.mxu0 0
      %5888 = vmatpush1.bf16.msra.mxu0 0
      %5889 = vmatprep.subr.bf16.mxu0 0
      %5890 = vmatpush1.bf16.msra.mxu0 0
      %5891 = vmatprep.subr.bf16.mxu0 0
      %5892 = vmatpush1.bf16.msra.mxu0 0
      %5893 = vmatprep.subr.bf16.mxu0 0
      %5894 = vmatpush1.bf16.msra.mxu0 0
      %5895 = vmatprep.mubr.bf16.mxu0 0
      %5896 = vmatmul.mubr.bf16.gmra.mrb[0].mxu0 %v5861
      %v5897 = vpop.f32.mrb[0].mxu0
      %v5898 = vadd.f32 0.0, %v5897
      %v5899 = vpop.f32.mrb[0].mxu0
      %v5900 = vpop.f32.mrb[0].mxu0
      %v5901 = vpop.f32.mrb[0].mxu0
      %5902 = vdwg.mxu0
      %v5903 = vadd.f32 %v5831, %v5898
      %v5912 = vunpack.c.l.b16 %v5654
      %v5913 = vunpack.c.l.b16 %v5655
      %v5914 = vunpack.c.l.b16 %v5656
      %v5915 = vunpack.c.l.b16 %v5657
      %v5916 = vunpack.c.l.b16 %v5658
      %v5917 = vunpack.c.l.b16 %v5659
      %v5918 = vunpack.c.l.b16 %v5660
      %v5919 = vunpack.c.l.b16 %v5661
      %v5920 = vpack.c.b16 %v5913, %v5912
      %v5921 = vpack.c.b16 %v5915, %v5914
      %v5922 = vpack.c.b16 %v5917, %v5916
      %v5923 = vpack.c.b16 %v5919, %v5918
      %v5929 = vsel %vm882, %v5614, 0
      %5931 = vmatprep.subr.bf16.mxu0 0
      %5932 = vmatpush1.bf16.msra.mxu0 %v5920
      %5933 = vmatprep.subr.bf16.mxu0 0
      %5934 = vmatpush1.bf16.msra.mxu0 %v5921
      %5935 = vmatprep.subr.bf16.mxu0 0
      %5936 = vmatpush1.bf16.msra.mxu0 %v5922
      %5937 = vmatprep.subr.bf16.mxu0 0
      %5938 = vmatpush1.bf16.msra.mxu0 %v5923
      %5939 = vmatprep.subr.bf16.mxu0 0
      %5940 = vmatpush1.bf16.msra.mxu0 0
      %5941 = vmatprep.subr.bf16.mxu0 0
      %5942 = vmatpush1.bf16.msra.mxu0 0
      %5943 = vmatprep.subr.bf16.mxu0 0
      %5944 = vmatpush1.bf16.msra.mxu0 0
      %5945 = vmatprep.subr.bf16.mxu0 0
      %5946 = vmatpush1.bf16.msra.mxu0 0
      %5947 = vmatprep.subr.bf16.mxu0 0
      %5948 = vmatpush1.bf16.msra.mxu0 0
      %5949 = vmatprep.subr.bf16.mxu0 0
      %5950 = vmatpush1.bf16.msra.mxu0 0
      %5951 = vmatprep.subr.bf16.mxu0 0
      %5952 = vmatpush1.bf16.msra.mxu0 0
      %5953 = vmatprep.subr.bf16.mxu0 0
      %5954 = vmatpush1.bf16.msra.mxu0 0
      %5955 = vmatprep.subr.bf16.mxu0 0
      %5956 = vmatpush1.bf16.msra.mxu0 0
      %5957 = vmatprep.subr.bf16.mxu0 0
      %5958 = vmatpush1.bf16.msra.mxu0 0
      %5959 = vmatprep.subr.bf16.mxu0 0
      %5960 = vmatpush1.bf16.msra.mxu0 0
      %5961 = vmatprep.subr.bf16.mxu0 0
      %5962 = vmatpush1.bf16.msra.mxu0 0
      %5963 = vmatprep.mubr.bf16.mxu0 0
      %5964 = vmatmul.mubr.bf16.gmra.mrb[0].mxu0 %v5929
      %v5965 = vpop.f32.mrb[0].mxu0
      %v5966 = vadd.f32 0.0, %v5965
      %v5967 = vpop.f32.mrb[0].mxu0
      %v5968 = vpop.f32.mrb[0].mxu0
      %v5969 = vpop.f32.mrb[0].mxu0
      %5970 = vdwg.mxu0
      %v5971 = vadd.f32 %v5903, %v5966
      %v5980 = vunpack.c.l.b16 %v5662
      %v5981 = vunpack.c.l.b16 %v5663
      %v5982 = vunpack.c.l.b16 %v5664
      %v5983 = vunpack.c.l.b16 %v5665
      %v5984 = vunpack.c.l.b16 %v5666
      %v5985 = vunpack.c.l.b16 %v5667
      %v5986 = vunpack.c.l.b16 %v5668
      %v5987 = vunpack.c.l.b16 %v5669
      %v5988 = vpack.c.b16 %v5981, %v5980
      %v5989 = vpack.c.b16 %v5983, %v5982
      %v5990 = vpack.c.b16 %v5985, %v5984
      %v5991 = vpack.c.b16 %v5987, %v5986
      %v5997 = vsel %vm882, %v5617, 0
      %5999 = vmatprep.subr.bf16.mxu0 0
      %6000 = vmatpush1.bf16.msra.mxu0 %v5988
      %6001 = vmatprep.subr.bf16.mxu0 0
      %6002 = vmatpush1.bf16.msra.mxu0 %v5989
      %6003 = vmatprep.subr.bf16.mxu0 0
      %6004 = vmatpush1.bf16.msra.mxu0 %v5990
      %6005 = vmatprep.subr.bf16.mxu0 0
      %6006 = vmatpush1.bf16.msra.mxu0 %v5991
      %6007 = vmatprep.subr.bf16.mxu0 0
      %6008 = vmatpush1.bf16.msra.mxu0 0
      %6009 = vmatprep.subr.bf16.mxu0 0
      %6010 = vmatpush1.bf16.msra.mxu0 0
      %6011 = vmatprep.subr.bf16.mxu0 0
      %6012 = vmatpush1.bf16.msra.mxu0 0
      %6013 = vmatprep.subr.bf16.mxu0 0
      %6014 = vmatpush1.bf16.msra.mxu0 0
      %6015 = vmatprep.subr.bf16.mxu0 0
      %6016 = vmatpush1.bf16.msra.mxu0 0
      %6017 = vmatprep.subr.bf16.mxu0 0
      %6018 = vmatpush1.bf16.msra.mxu0 0
      %6019 = vmatprep.subr.bf16.mxu0 0
      %6020 = vmatpush1.bf16.msra.mxu0 0
      %6021 = vmatprep.subr.bf16.mxu0 0
      %6022 = vmatpush1.bf16.msra.mxu0 0
      %6023 = vmatprep.subr.bf16.mxu0 0
      %6024 = vmatpush1.bf16.msra.mxu0 0
      %6025 = vmatprep.subr.bf16.mxu0 0
      %6026 = vmatpush1.bf16.msra.mxu0 0
      %6027 = vmatprep.subr.bf16.mxu0 0
      %6028 = vmatpush1.bf16.msra.mxu0 0
      %6029 = vmatprep.subr.bf16.mxu0 0
      %6030 = vmatpush1.bf16.msra.mxu0 0
      %6031 = vmatprep.mubr.bf16.mxu0 0
      %6032 = vmatmul.mubr.bf16.gmra.mrb[0].mxu0 %v5997
      %v6033 = vpop.f32.mrb[0].mxu0
      %v6034 = vadd.f32 0.0, %v6033
      %v6035 = vpop.f32.mrb[0].mxu0
      %v6036 = vpop.f32.mrb[0].mxu0
      %v6037 = vpop.f32.mrb[0].mxu0
      %6038 = vdwg.mxu0
      %v6039 = vadd.f32 %v5971, %v6034
      %v6048 = vunpack.c.l.b16 %v5670
      %v6049 = vunpack.c.l.b16 %v5671
      %v6050 = vunpack.c.l.b16 %v5672
      %v6051 = vunpack.c.l.b16 %v5673
      %v6052 = vunpack.c.l.b16 %v5674
      %v6053 = vunpack.c.l.b16 %v5675
      %v6054 = vunpack.c.l.b16 %v5676
      %v6055 = vunpack.c.l.b16 %v5677
      %v6056 = vpack.c.b16 %v6049, %v6048
      %v6057 = vpack.c.b16 %v6051, %v6050
      %v6058 = vpack.c.b16 %v6053, %v6052
      %v6059 = vpack.c.b16 %v6055, %v6054
      %v6065 = vsel %vm882, %v5620, 0
      %6067 = vmatprep.subr.bf16.mxu0 0
      %6068 = vmatpush1.bf16.msra.mxu0 %v6056
      %6069 = vmatprep.subr.bf16.mxu0 0
      %6070 = vmatpush1.bf16.msra.mxu0 %v6057
      %6071 = vmatprep.subr.bf16.mxu0 0
      %6072 = vmatpush1.bf16.msra.mxu0 %v6058
      %6073 = vmatprep.subr.bf16.mxu0 0
      %6074 = vmatpush1.bf16.msra.mxu0 %v6059
      %6075 = vmatprep.subr.bf16.mxu0 0
      %6076 = vmatpush1.bf16.msra.mxu0 0
      %6077 = vmatprep.subr.bf16.mxu0 0
      %6078 = vmatpush1.bf16.msra.mxu0 0
      %6079 = vmatprep.subr.bf16.mxu0 0
      %6080 = vmatpush1.bf16.msra.mxu0 0
      %6081 = vmatprep.subr.bf16.mxu0 0
      %6082 = vmatpush1.bf16.msra.mxu0 0
      %6083 = vmatprep.subr.bf16.mxu0 0
      %6084 = vmatpush1.bf16.msra.mxu0 0
      %6085 = vmatprep.subr.bf16.mxu0 0
      %6086 = vmatpush1.bf16.msra.mxu0 0
      %6087 = vmatprep.subr.bf16.mxu0 0
      %6088 = vmatpush1.bf16.msra.mxu0 0
      %6089 = vmatprep.subr.bf16.mxu0 0
      %6090 = vmatpush1.bf16.msra.mxu0 0
      %6091 = vmatprep.subr.bf16.mxu0 0
      %6092 = vmatpush1.bf16.msra.mxu0 0
      %6093 = vmatprep.subr.bf16.mxu0 0
      %6094 = vmatpush1.bf16.msra.mxu0 0
      %6095 = vmatprep.subr.bf16.mxu0 0
      %6096 = vmatpush1.bf16.msra.mxu0 0
      %6097 = vmatprep.subr.bf16.mxu0 0
      %6098 = vmatpush1.bf16.msra.mxu0 0
      %6099 = vmatprep.mubr.bf16.mxu0 0
      %6100 = vmatmul.mubr.bf16.gmra.mrb[0].mxu0 %v6065
      %v6101 = vpop.f32.mrb[0].mxu0
      %v6102 = vadd.f32 0.0, %v6101
      %v6103 = vpop.f32.mrb[0].mxu0
      %v6104 = vpop.f32.mrb[0].mxu0
      %v6105 = vpop.f32.mrb[0].mxu0
      %6106 = vdwg.mxu0
      %v6107 = vadd.f32 %v6039, %v6102
      %v6116 = vunpack.c.l.b16 %v5678
      %v6117 = vunpack.c.l.b16 %v5679
      %v6118 = vunpack.c.l.b16 %v5680
      %v6119 = vunpack.c.l.b16 %v5681
      %v6120 = vunpack.c.l.b16 %v5682
      %v6121 = vunpack.c.l.b16 %v5683
      %v6122 = vunpack.c.l.b16 %v5684
      %v6123 = vunpack.c.l.b16 %v5685
      %v6124 = vpack.c.b16 %v6117, %v6116
      %v6125 = vpack.c.b16 %v6119, %v6118
      %v6126 = vpack.c.b16 %v6121, %v6120
      %v6127 = vpack.c.b16 %v6123, %v6122
      %v6133 = vsel %vm882, %v5623, 0
      %6135 = vmatprep.subr.bf16.mxu0 0
      %6136 = vmatpush1.bf16.msra.mxu0 %v6124
      %6137 = vmatprep.subr.bf16.mxu0 0
      %6138 = vmatpush1.bf16.msra.mxu0 %v6125
      %6139 = vmatprep.subr.bf16.mxu0 0
      %6140 = vmatpush1.bf16.msra.mxu0 %v6126
      %6141 = vmatprep.subr.bf16.mxu0 0
      %6142 = vmatpush1.bf16.msra.mxu0 %v6127
      %6143 = vmatprep.subr.bf16.mxu0 0
      %6144 = vmatpush1.bf16.msra.mxu0 0
      %6145 = vmatprep.subr.bf16.mxu0 0
      %6146 = vmatpush1.bf16.msra.mxu0 0
      %6147 = vmatprep.subr.bf16.mxu0 0
      %6148 = vmatpush1.bf16.msra.mxu0 0
      %6149 = vmatprep.subr.bf16.mxu0 0
      %6150 = vmatpush1.bf16.msra.mxu0 0
      %6151 = vmatprep.subr.bf16.mxu0 0
      %6152 = vmatpush1.bf16.msra.mxu0 0
      %6153 = vmatprep.subr.bf16.mxu0 0
      %6154 = vmatpush1.bf16.msra.mxu0 0
      %6155 = vmatprep.subr.bf16.mxu0 0
      %6156 = vmatpush1.bf16.msra.mxu0 0
      %6157 = vmatprep.subr.bf16.mxu0 0
      %6158 = vmatpush1.bf16.msra.mxu0 0
      %6159 = vmatprep.subr.bf16.mxu0 0
      %6160 = vmatpush1.bf16.msra.mxu0 0
      %6161 = vmatprep.subr.bf16.mxu0 0
      %6162 = vmatpush1.bf16.msra.mxu0 0
      %6163 = vmatprep.subr.bf16.mxu0 0
      %6164 = vmatpush1.bf16.msra.mxu0 0
      %6165 = vmatprep.subr.bf16.mxu0 0
      %6166 = vmatpush1.bf16.msra.mxu0 0
      %6167 = vmatprep.mubr.bf16.mxu0 0
      %6168 = vmatmul.mubr.bf16.gmra.mrb[0].mxu0 %v6133
      %v6169 = vpop.f32.mrb[0].mxu0
      %v6170 = vadd.f32 0.0, %v6169
      %v6171 = vpop.f32.mrb[0].mxu0
      %v6172 = vpop.f32.mrb[0].mxu0
      %v6173 = vpop.f32.mrb[0].mxu0
      %6174 = vdwg.mxu0
      %v6175 = vadd.f32 %v6107, %v6170
      %v6184 = vunpack.c.l.b16 %v5686
      %v6185 = vunpack.c.l.b16 %v5687
      %v6186 = vunpack.c.l.b16 %v5688
      %v6187 = vunpack.c.l.b16 %v5689
      %v6188 = vunpack.c.l.b16 %v5690
      %v6189 = vunpack.c.l.b16 %v5691
      %v6190 = vunpack.c.l.b16 %v5692
      %v6191 = vunpack.c.l.b16 %v5693
      %v6192 = vpack.c.b16 %v6185, %v6184
      %v6193 = vpack.c.b16 %v6187, %v6186
      %v6194 = vpack.c.b16 %v6189, %v6188
      %v6195 = vpack.c.b16 %v6191, %v6190
      %v6201 = vsel %vm882, %v5626, 0
      %6203 = vmatprep.subr.bf16.mxu0 0
      %6204 = vmatpush1.bf16.msra.mxu0 %v6192
      %6205 = vmatprep.subr.bf16.mxu0 0
      %6206 = vmatpush1.bf16.msra.mxu0 %v6193
      %6207 = vmatprep.subr.bf16.mxu0 0
      %6208 = vmatpush1.bf16.msra.mxu0 %v6194
      %6209 = vmatprep.subr.bf16.mxu0 0
      %6210 = vmatpush1.bf16.msra.mxu0 %v6195
      %6211 = vmatprep.subr.bf16.mxu0 0
      %6212 = vmatpush1.bf16.msra.mxu0 0
      %6213 = vmatprep.subr.bf16.mxu0 0
      %6214 = vmatpush1.bf16.msra.mxu0 0
      %6215 = vmatprep.subr.bf16.mxu0 0
      %6216 = vmatpush1.bf16.msra.mxu0 0
      %6217 = vmatprep.subr.bf16.mxu0 0
      %6218 = vmatpush1.bf16.msra.mxu0 0
      %6219 = vmatprep.subr.bf16.mxu0 0
      %6220 = vmatpush1.bf16.msra.mxu0 0
      %6221 = vmatprep.subr.bf16.mxu0 0
      %6222 = vmatpush1.bf16.msra.mxu0 0
      %6223 = vmatprep.subr.bf16.mxu0 0
      %6224 = vmatpush1.bf16.msra.mxu0 0
      %6225 = vmatprep.subr.bf16.mxu0 0
      %6226 = vmatpush1.bf16.msra.mxu0 0
      %6227 = vmatprep.subr.bf16.mxu0 0
      %6228 = vmatpush1.bf16.msra.mxu0 0
      %6229 = vmatprep.subr.bf16.mxu0 0
      %6230 = vmatpush1.bf16.msra.mxu0 0
      %6231 = vmatprep.subr.bf16.mxu0 0
      %6232 = vmatpush1.bf16.msra.mxu0 0
      %6233 = vmatprep.subr.bf16.mxu0 0
      %6234 = vmatpush1.bf16.msra.mxu0 0
      %6235 = vmatprep.mubr.bf16.mxu0 0
      %6236 = vmatmul.mubr.bf16.gmra.mrb[0].mxu0 %v6201
      %v6237 = vpop.f32.mrb[0].mxu0
      %v6238 = vadd.f32 0.0, %v6237
      %v6239 = vpop.f32.mrb[0].mxu0
      %v6240 = vpop.f32.mrb[0].mxu0
      %v6241 = vpop.f32.mrb[0].mxu0
      %6242 = vdwg.mxu0
      %v6243 = vadd.f32 %v6175, %v6238
      %v6252 = vunpack.c.l.b16 %v5694
      %v6253 = vunpack.c.l.b16 %v5695
      %v6254 = vunpack.c.l.b16 %v5696
      %v6255 = vunpack.c.l.b16 %v5697
      %v6256 = vunpack.c.l.b16 %v5698
      %v6257 = vunpack.c.l.b16 %v5699
      %v6258 = vunpack.c.l.b16 %v5700
      %v6259 = vunpack.c.l.b16 %v5701
      %v6260 = vpack.c.b16 %v6253, %v6252
      %v6261 = vpack.c.b16 %v6255, %v6254
      %v6262 = vpack.c.b16 %v6257, %v6256
      %v6263 = vpack.c.b16 %v6259, %v6258
      %v6269 = vsel %vm882, %v5629, 0
      %6271 = vmatprep.subr.bf16.mxu0 0
      %6272 = vmatpush1.bf16.msra.mxu0 %v6260
      %6273 = vmatprep.subr.bf16.mxu0 0
      %6274 = vmatpush1.bf16.msra.mxu0 %v6261
      %6275 = vmatprep.subr.bf16.mxu0 0
      %6276 = vmatpush1.bf16.msra.mxu0 %v6262
      %6277 = vmatprep.subr.bf16.mxu0 0
      %6278 = vmatpush1.bf16.msra.mxu0 %v6263
      %6279 = vmatprep.subr.bf16.mxu0 0
      %6280 = vmatpush1.bf16.msra.mxu0 0
      %6281 = vmatprep.subr.bf16.mxu0 0
      %6282 = vmatpush1.bf16.msra.mxu0 0
      %6283 = vmatprep.subr.bf16.mxu0 0
      %6284 = vmatpush1.bf16.msra.mxu0 0
      %6285 = vmatprep.subr.bf16.mxu0 0
      %6286 = vmatpush1.bf16.msra.mxu0 0
      %6287 = vmatprep.subr.bf16.mxu0 0
      %6288 = vmatpush1.bf16.msra.mxu0 0
      %6289 = vmatprep.subr.bf16.mxu0 0
      %6290 = vmatpush1.bf16.msra.mxu0 0
      %6291 = vmatprep.subr.bf16.mxu0 0
      %6292 = vmatpush1.bf16.msra.mxu0 0
      %6293 = vmatprep.subr.bf16.mxu0 0
      %6294 = vmatpush1.bf16.msra.mxu0 0
      %6295 = vmatprep.subr.bf16.mxu0 0
      %6296 = vmatpush1.bf16.msra.mxu0 0
      %6297 = vmatprep.subr.bf16.mxu0 0
      %6298 = vmatpush1.bf16.msra.mxu0 0
      %6299 = vmatprep.subr.bf16.mxu0 0
      %6300 = vmatpush1.bf16.msra.mxu0 0
      %6301 = vmatprep.subr.bf16.mxu0 0
      %6302 = vmatpush1.bf16.msra.mxu0 0
      %6303 = vmatprep.mubr.bf16.mxu0 0
      %6304 = vmatmul.mubr.bf16.gmra.mrb[0].mxu0 %v6269
      %v6305 = vpop.f32.mrb[0].mxu0
      %v6306 = vadd.f32 0.0, %v6305
      %v6307 = vpop.f32.mrb[0].mxu0
      %v6308 = vpop.f32.mrb[0].mxu0
      %v6309 = vpop.f32.mrb[0].mxu0
      %6310 = vdwg.mxu0
      %v6311 = vadd.f32 %v6243, %v6306
      %v6312 = vld [vmem:[%s7] sm:$0x1]
      %v6314 = vlaneseq
      %v6315 = vshrl.u32 %v6314, 7
      %v6316 = vsub.s32 0, %v6315
      %v6317 = vrot.slane %v6312, %v6316
      %v6319 = vadd.f32 %v6311, %v6317
      %v6320 = vmax.f32 %v6319, 0.0
      %v6321 = vpack.c.bf16 %v6320, %v6320
      %v6322 = vld [vmem:[%s8] sm:$0xf]
      %v6323 = vld [vmem:[%s8 + $0x4] sm:$0xf]
      %v6324 = vld [vmem:[%s8 + $0x8] sm:$0xf]
      %v6325 = vld [vmem:[%s8 + $0xc] sm:$0xf]
      %v6326 = vld [vmem:[%s8 + $0x10] sm:$0xf]
      %v6327 = vld [vmem:[%s8 + $0x14] sm:$0xf]
      %v6328 = vld [vmem:[%s8 + $0x18] sm:$0xf]
      %v6329 = vld [vmem:[%s8 + $0x1c] sm:$0xf]
      %v6330 = vld [vmem:[%s9] sm:$0x1]
      %v6332 = vlaneseq
      %v6333 = vshrl.u32 %v6332, 7
      %v6334 = vsub.s32 0, %v6333
      %v6335 = vrot.slane %v6330, %v6334
      %v6345 = vunpack.c.l.b16 %v6322
      %v6346 = vunpack.c.l.b16 %v6323
      %v6347 = vunpack.c.l.b16 %v6324
      %v6348 = vunpack.c.l.b16 %v6325
      %v6349 = vunpack.c.l.b16 %v6326
      %v6350 = vunpack.c.l.b16 %v6327
      %v6351 = vunpack.c.l.b16 %v6328
      %v6352 = vunpack.c.l.b16 %v6329
      %v6353 = vpack.c.b16 %v6346, %v6345
      %v6354 = vpack.c.b16 %v6348, %v6347
      %v6355 = vpack.c.b16 %v6350, %v6349
      %v6356 = vpack.c.b16 %v6352, %v6351
      %v6362 = vsel %vm882, %v6321, 0
      %6364 = vmatprep.subr.bf16.mxu0 0
      %6365 = vmatpush1.bf16.msra.mxu0 %v6353
      %6366 = vmatprep.subr.bf16.mxu0 0
      %6367 = vmatpush1.bf16.msra.mxu0 %v6354
      %6368 = vmatprep.subr.bf16.mxu0 0
      %6369 = vmatpush1.bf16.msra.mxu0 %v6355
      %6370 = vmatprep.subr.bf16.mxu0 0
      %6371 = vmatpush1.bf16.msra.mxu0 %v6356
      %6372 = vmatprep.subr.bf16.mxu0 0
      %6373 = vmatpush1.bf16.msra.mxu0 0
      %6374 = vmatprep.subr.bf16.mxu0 0
      %6375 = vmatpush1.bf16.msra.mxu0 0
      %6376 = vmatprep.subr.bf16.mxu0 0
      %6377 = vmatpush1.bf16.msra.mxu0 0
      %6378 = vmatprep.subr.bf16.mxu0 0
      %6379 = vmatpush1.bf16.msra.mxu0 0
      %6380 = vmatprep.subr.bf16.mxu0 0
      %6381 = vmatpush1.bf16.msra.mxu0 0
      %6382 = vmatprep.subr.bf16.mxu0 0
      %6383 = vmatpush1.bf16.msra.mxu0 0
      %6384 = vmatprep.subr.bf16.mxu0 0
      %6385 = vmatpush1.bf16.msra.mxu0 0
      %6386 = vmatprep.subr.bf16.mxu0 0
      %6387 = vmatpush1.bf16.msra.mxu0 0
      %6388 = vmatprep.subr.bf16.mxu0 0
      %6389 = vmatpush1.bf16.msra.mxu0 0
      %6390 = vmatprep.subr.bf16.mxu0 0
      %6391 = vmatpush1.bf16.msra.mxu0 0
      %6392 = vmatprep.subr.bf16.mxu0 0
      %6393 = vmatpush1.bf16.msra.mxu0 0
      %6394 = vmatprep.subr.bf16.mxu0 0
      %6395 = vmatpush1.bf16.msra.mxu0 0
      %6396 = vmatprep.mubr.bf16.mxu0 0
      %6397 = vmatmul.mubr.bf16.gmra.mrb[0].mxu0 %v6362
      %v6398 = vpop.f32.mrb[0].mxu0
      %v6399 = vadd.f32 %v6335, %v6398
      %v6400 = vpop.f32.mrb[0].mxu0
      %v6401 = vpop.f32.mrb[0].mxu0
      %v6402 = vpop.f32.mrb[0].mxu0
      %6403 = vdwg.mxu0
      %v6404 = vmax.f32 %v6399, 0.0
      %v6405 = vpack.c.bf16 %v6404, %v6404
      %v6406 = vld [vmem:[%s613] sm:$0xff]
      %v6407 = vpack.c.bf16 %v6406, %v6406
      %v6408 = vld [vmem:[%s10] sm:$0xf]
      %v6409 = vld [vmem:[%s11] sm:$0x1]
      %v6411 = vlaneseq
      %v6412 = vshrl.u32 %v6411, 7
      %v6413 = vsub.s32 0, %v6412
      %v6414 = vrot.slane %v6409, %v6413
      %vm6416 = vcmask 64512
      %v6418 = vsel %vm6416, %v6407, 0
      %vm6420 = vcmask 1043456
      %v6422 = vsel %vm6420, %v6408, 0
      %6424 = vmatprep.subr.bf16.mxu0 0
      %6425 = vmatpush1.bf16.msra.mxu0 %v6422
      %6426 = vmatprep.subr.bf16.mxu0 0
      %6427 = vmatpush1.bf16.msra.mxu0 0
      %6428 = vmatprep.subr.bf16.mxu0 0
      %6429 = vmatpush1.bf16.msra.mxu0 0
      %6430 = vmatprep.subr.bf16.mxu0 0
      %6431 = vmatpush1.bf16.msra.mxu0 0
      %6432 = vmatprep.subr.bf16.mxu0 0
      %6433 = vmatpush1.bf16.msra.mxu0 0
      %6434 = vmatprep.subr.bf16.mxu0 0
      %6435 = vmatpush1.bf16.msra.mxu0 0
      %6436 = vmatprep.subr.bf16.mxu0 0
      %6437 = vmatpush1.bf16.msra.mxu0 0
      %6438 = vmatprep.subr.bf16.mxu0 0
      %6439 = vmatpush1.bf16.msra.mxu0 0
      %6440 = vmatprep.subr.bf16.mxu0 0
      %6441 = vmatpush1.bf16.msra.mxu0 0
      %6442 = vmatprep.subr.bf16.mxu0 0
      %6443 = vmatpush1.bf16.msra.mxu0 0
      %6444 = vmatprep.subr.bf16.mxu0 0
      %6445 = vmatpush1.bf16.msra.mxu0 0
      %6446 = vmatprep.subr.bf16.mxu0 0
      %6447 = vmatpush1.bf16.msra.mxu0 0
      %6448 = vmatprep.subr.bf16.mxu0 0
      %6449 = vmatpush1.bf16.msra.mxu0 0
      %6450 = vmatprep.subr.bf16.mxu0 0
      %6451 = vmatpush1.bf16.msra.mxu0 0
      %6452 = vmatprep.subr.bf16.mxu0 0
      %6453 = vmatpush1.bf16.msra.mxu0 0
      %6454 = vmatprep.subr.bf16.mxu0 0
      %6455 = vmatpush1.bf16.msra.mxu0 0
      %6456 = vmatprep.mubr.bf16.mxu0 0
      %6457 = vmatmul.mubr.bf16.gmra.mrb[0].mxu0 %v6418
      %v6458 = vpop.f32.mrb[0].mxu0
      %v6459 = vadd.f32 %v6414, %v6458
      %v6460 = vpop.f32.mrb[0].mxu0
      %v6461 = vpop.f32.mrb[0].mxu0
      %v6462 = vpop.f32.mrb[0].mxu0
      %6463 = vdwg.mxu0
      %v6464 = vmax.f32 %v6459, 0.0
      %v6465 = vpack.c.bf16 %v6464, %v6464
      %v6466 = vld [vmem:[%s12] sm:$0xf]
      %v6467 = vld [vmem:[%s12 + $0x4] sm:$0xf]
      %v6468 = vld [vmem:[%s12 + $0x8] sm:$0xf]
      %v6469 = vld [vmem:[%s12 + $0xc] sm:$0xf]
      %v6470 = vld [vmem:[%s12 + $0x10] sm:$0xf]
      %v6471 = vld [vmem:[%s12 + $0x14] sm:$0xf]
      %v6472 = vld [vmem:[%s12 + $0x18] sm:$0xf]
      %v6473 = vld [vmem:[%s12 + $0x1c] sm:$0xf]
      %v6474 = vld [vmem:[%s12 + $0x20] sm:$0xf]
      %v6475 = vld [vmem:[%s12 + $0x24] sm:$0xf]
      %v6476 = vld [vmem:[%s12 + $0x28] sm:$0xf]
      %v6477 = vld [vmem:[%s12 + $0x2c] sm:$0xf]
      %v6478 = vld [vmem:[%s12 + $0x30] sm:$0xf]
      %v6479 = vld [vmem:[%s12 + $0x34] sm:$0xf]
      %v6480 = vld [vmem:[%s12 + $0x38] sm:$0xf]
      %v6481 = vld [vmem:[%s12 + $0x3c] sm:$0xf]
      %v6482 = vld [vmem:[%s13] sm:$0xf]
      %v6483 = vld [vmem:[%s13 + $0x4] sm:$0xf]
      %v6484 = vld [vmem:[%s13 + $0x8] sm:$0xf]
      %v6485 = vld [vmem:[%s13 + $0xc] sm:$0xf]
      %v6486 = vld [vmem:[%s13 + $0x10] sm:$0xf]
      %v6487 = vld [vmem:[%s13 + $0x14] sm:$0xf]
      %v6488 = vld [vmem:[%s13 + $0x18] sm:$0xf]
      %v6489 = vld [vmem:[%s13 + $0x1c] sm:$0xf]
      %v6490 = vld [vmem:[%s13 + $0x20] sm:$0xf]
      %v6491 = vld [vmem:[%s13 + $0x24] sm:$0xf]
      %v6492 = vld [vmem:[%s13 + $0x28] sm:$0xf]
      %v6493 = vld [vmem:[%s13 + $0x2c] sm:$0xf]
      %v6494 = vld [vmem:[%s13 + $0x30] sm:$0xf]
      %v6495 = vld [vmem:[%s13 + $0x34] sm:$0xf]
      %v6496 = vld [vmem:[%s13 + $0x38] sm:$0xf]
      %v6497 = vld [vmem:[%s13 + $0x3c] sm:$0xf]
      %v6514 = vunpack.c.l.b16 %v6482
      %v6515 = vunpack.c.l.b16 %v6483
      %v6516 = vunpack.c.l.b16 %v6484
      %v6517 = vunpack.c.l.b16 %v6485
      %v6518 = vunpack.c.l.b16 %v6486
      %v6519 = vunpack.c.l.b16 %v6487
      %v6520 = vunpack.c.l.b16 %v6488
      %v6521 = vunpack.c.l.b16 %v6489
      %v6522 = vunpack.c.l.b16 %v6490
      %v6523 = vunpack.c.l.b16 %v6491
      %v6524 = vunpack.c.l.b16 %v6492
      %v6525 = vunpack.c.l.b16 %v6493
      %v6526 = vunpack.c.l.b16 %v6494
      %v6527 = vunpack.c.l.b16 %v6495
      %v6528 = vunpack.c.l.b16 %v6496
      %v6529 = vunpack.c.l.b16 %v6497
      %v6530 = vpack.c.b16 %v6515, %v6514
      %v6531 = vpack.c.b16 %v6517, %v6516
      %v6532 = vpack.c.b16 %v6519, %v6518
      %v6533 = vpack.c.b16 %v6521, %v6520
      %v6534 = vpack.c.b16 %v6523, %v6522
      %v6535 = vpack.c.b16 %v6525, %v6524
      %v6536 = vpack.c.b16 %v6527, %v6526
      %v6537 = vpack.c.b16 %v6529, %v6528
      %6546 = vmatprep.subr.bf16.mxu0 0
      %6547 = vmatpush1.bf16.msra.mxu0 %v6530
      %6548 = vmatprep.subr.bf16.mxu0 0
      %6549 = vmatpush1.bf16.msra.mxu0 %v6531
      %6550 = vmatprep.subr.bf16.mxu0 0
      %6551 = vmatpush1.bf16.msra.mxu0 %v6532
      %6552 = vmatprep.subr.bf16.mxu0 0
      %6553 = vmatpush1.bf16.msra.mxu0 %v6533
      %6554 = vmatprep.subr.bf16.mxu0 0
      %6555 = vmatpush1.bf16.msra.mxu0 %v6534
      %6556 = vmatprep.subr.bf16.mxu0 0
      %6557 = vmatpush1.bf16.msra.mxu0 %v6535
      %6558 = vmatprep.subr.bf16.mxu0 0
      %6559 = vmatpush1.bf16.msra.mxu0 %v6536
      %6560 = vmatprep.subr.bf16.mxu0 0
      %6561 = vmatpush1.bf16.msra.mxu0 %v6537
      %6562 = vmatprep.subr.bf16.mxu0 0
      %6563 = vmatpush1.bf16.msra.mxu0 0
      %6564 = vmatprep.subr.bf16.mxu0 0
      %6565 = vmatpush1.bf16.msra.mxu0 0
      %6566 = vmatprep.subr.bf16.mxu0 0
      %6567 = vmatpush1.bf16.msra.mxu0 0
      %6568 = vmatprep.subr.bf16.mxu0 0
      %6569 = vmatpush1.bf16.msra.mxu0 0
      %6570 = vmatprep.subr.bf16.mxu0 0
      %6571 = vmatpush1.bf16.msra.mxu0 0
      %6572 = vmatprep.subr.bf16.mxu0 0
      %6573 = vmatpush1.bf16.msra.mxu0 0
      %6574 = vmatprep.subr.bf16.mxu0 0
      %6575 = vmatpush1.bf16.msra.mxu0 0
      %6576 = vmatprep.subr.bf16.mxu0 0
      %6577 = vmatpush1.bf16.msra.mxu0 0
      %6578 = vmatprep.mubr.bf16.mxu0 0
      %6579 = vmatmul.mubr.bf16.gmra.mrb[0].mxu0 %v6465
      %v6580 = vpop.f32.mrb[0].mxu0
      %v6581 = vadd.f32 0.0, %v6580
      %v6582 = vpop.f32.mrb[0].mxu0
      %v6583 = vpop.f32.mrb[0].mxu0
      %v6584 = vpop.f32.mrb[0].mxu0
      %6585 = vdwg.mxu0
      %v6602 = vunpack.c.l.b16 %v6466
      %v6603 = vunpack.c.l.b16 %v6467
      %v6604 = vunpack.c.l.b16 %v6468
      %v6605 = vunpack.c.l.b16 %v6469
      %v6606 = vunpack.c.l.b16 %v6470
      %v6607 = vunpack.c.l.b16 %v6471
      %v6608 = vunpack.c.l.b16 %v6472
      %v6609 = vunpack.c.l.b16 %v6473
      %v6610 = vunpack.c.l.b16 %v6474
      %v6611 = vunpack.c.l.b16 %v6475
      %v6612 = vunpack.c.l.b16 %v6476
      %v6613 = vunpack.c.l.b16 %v6477
      %v6614 = vunpack.c.l.b16 %v6478
      %v6615 = vunpack.c.l.b16 %v6479
      %v6616 = vunpack.c.l.b16 %v6480
      %v6617 = vunpack.c.l.b16 %v6481
      %v6618 = vpack.c.b16 %v6603, %v6602
      %v6619 = vpack.c.b16 %v6605, %v6604
      %v6620 = vpack.c.b16 %v6607, %v6606
      %v6621 = vpack.c.b16 %v6609, %v6608
      %v6622 = vpack.c.b16 %v6611, %v6610
      %v6623 = vpack.c.b16 %v6613, %v6612
      %v6624 = vpack.c.b16 %v6615, %v6614
      %v6625 = vpack.c.b16 %v6617, %v6616
      %6634 = vmatprep.subr.bf16.mxu0 0
      %6635 = vmatpush1.bf16.msra.mxu0 %v6618
      %6636 = vmatprep.subr.bf16.mxu0 0
      %6637 = vmatpush1.bf16.msra.mxu0 %v6619
      %6638 = vmatprep.subr.bf16.mxu0 0
      %6639 = vmatpush1.bf16.msra.mxu0 %v6620
      %6640 = vmatprep.subr.bf16.mxu0 0
      %6641 = vmatpush1.bf16.msra.mxu0 %v6621
      %6642 = vmatprep.subr.bf16.mxu0 0
      %6643 = vmatpush1.bf16.msra.mxu0 %v6622
      %6644 = vmatprep.subr.bf16.mxu0 0
      %6645 = vmatpush1.bf16.msra.mxu0 %v6623
      %6646 = vmatprep.subr.bf16.mxu0 0
      %6647 = vmatpush1.bf16.msra.mxu0 %v6624
      %6648 = vmatprep.subr.bf16.mxu0 0
      %6649 = vmatpush1.bf16.msra.mxu0 %v6625
      %6650 = vmatprep.subr.bf16.mxu0 0
      %6651 = vmatpush1.bf16.msra.mxu0 0
      %6652 = vmatprep.subr.bf16.mxu0 0
      %6653 = vmatpush1.bf16.msra.mxu0 0
      %6654 = vmatprep.subr.bf16.mxu0 0
      %6655 = vmatpush1.bf16.msra.mxu0 0
      %6656 = vmatprep.subr.bf16.mxu0 0
      %6657 = vmatpush1.bf16.msra.mxu0 0
      %6658 = vmatprep.subr.bf16.mxu0 0
      %6659 = vmatpush1.bf16.msra.mxu0 0
      %6660 = vmatprep.subr.bf16.mxu0 0
      %6661 = vmatpush1.bf16.msra.mxu0 0
      %6662 = vmatprep.subr.bf16.mxu0 0
      %6663 = vmatpush1.bf16.msra.mxu0 0
      %6664 = vmatprep.subr.bf16.mxu0 0
      %6665 = vmatpush1.bf16.msra.mxu0 0
      %6666 = vmatprep.mubr.bf16.mxu0 0
      %6667 = vmatmul.mubr.bf16.gmra.mrb[0].mxu0 %v6405
      %v6668 = vpop.f32.mrb[0].mxu0
      %v6669 = vadd.f32 %v6581, %v6668
      %v6670 = vpop.f32.mrb[0].mxu0
      %v6671 = vpop.f32.mrb[0].mxu0
      %v6672 = vpop.f32.mrb[0].mxu0
      %6673 = vdwg.mxu0
      %v6674 = vld [vmem:[%s14] sm:$0x1]
      %v6676 = vlaneseq
      %v6677 = vshrl.u32 %v6676, 7
      %v6678 = vsub.s32 0, %v6677
      %v6679 = vrot.slane %v6674, %v6678
      %v6681 = vadd.f32 %v6669, %v6679
      %v6682 = vmax.f32 %v6681, 0.0
      %v6683 = vpack.c.bf16 %v6682, %v6682
      %v6684 = vld [vmem:[%s15] sm:$0xf]
      %v6685 = vld [vmem:[%s15 + $0x4] sm:$0xf]
      %v6686 = vld [vmem:[%s15 + $0x8] sm:$0xf]
      %v6687 = vld [vmem:[%s15 + $0xc] sm:$0xf]
      %v6688 = vld [vmem:[%s15 + $0x10] sm:$0xf]
      %v6689 = vld [vmem:[%s15 + $0x14] sm:$0xf]
      %v6690 = vld [vmem:[%s15 + $0x18] sm:$0xf]
      %v6691 = vld [vmem:[%s15 + $0x1c] sm:$0xf]
      %v6692 = vld [vmem:[%s15 + $0x20] sm:$0xf]
      %v6693 = vld [vmem:[%s15 + $0x24] sm:$0xf]
      %v6694 = vld [vmem:[%s15 + $0x28] sm:$0xf]
      %v6695 = vld [vmem:[%s15 + $0x2c] sm:$0xf]
      %v6696 = vld [vmem:[%s15 + $0x30] sm:$0xf]
      %v6697 = vld [vmem:[%s15 + $0x34] sm:$0xf]
      %v6698 = vld [vmem:[%s15 + $0x38] sm:$0xf]
      %v6699 = vld [vmem:[%s15 + $0x3c] sm:$0xf]
      %v6700 = vld [vmem:[%s16] sm:$0x1]
      %v6702 = vlaneseq
      %v6703 = vshrl.u32 %v6702, 7
      %v6704 = vsub.s32 0, %v6703
      %v6705 = vrot.slane %v6700, %v6704
      %v6723 = vunpack.c.l.b16 %v6684
      %v6724 = vunpack.c.l.b16 %v6685
      %v6725 = vunpack.c.l.b16 %v6686
      %v6726 = vunpack.c.l.b16 %v6687
      %v6727 = vunpack.c.l.b16 %v6688
      %v6728 = vunpack.c.l.b16 %v6689
      %v6729 = vunpack.c.l.b16 %v6690
      %v6730 = vunpack.c.l.b16 %v6691
      %v6731 = vunpack.c.l.b16 %v6692
      %v6732 = vunpack.c.l.b16 %v6693
      %v6733 = vunpack.c.l.b16 %v6694
      %v6734 = vunpack.c.l.b16 %v6695
      %v6735 = vunpack.c.l.b16 %v6696
      %v6736 = vunpack.c.l.b16 %v6697
      %v6737 = vunpack.c.l.b16 %v6698
      %v6738 = vunpack.c.l.b16 %v6699
      %v6739 = vpack.c.b16 %v6724, %v6723
      %v6740 = vpack.c.b16 %v6726, %v6725
      %v6741 = vpack.c.b16 %v6728, %v6727
      %v6742 = vpack.c.b16 %v6730, %v6729
      %v6743 = vpack.c.b16 %v6732, %v6731
      %v6744 = vpack.c.b16 %v6734, %v6733
      %v6745 = vpack.c.b16 %v6736, %v6735
      %v6746 = vpack.c.b16 %v6738, %v6737
      %6755 = vmatprep.subr.bf16.mxu0 0
      %6756 = vmatpush1.bf16.msra.mxu0 %v6739
      %6757 = vmatprep.subr.bf16.mxu0 0
      %6758 = vmatpush1.bf16.msra.mxu0 %v6740
      %6759 = vmatprep.subr.bf16.mxu0 0
      %6760 = vmatpush1.bf16.msra.mxu0 %v6741
      %6761 = vmatprep.subr.bf16.mxu0 0
      %6762 = vmatpush1.bf16.msra.mxu0 %v6742
      %6763 = vmatprep.subr.bf16.mxu0 0
      %6764 = vmatpush1.bf16.msra.mxu0 %v6743
      %6765 = vmatprep.subr.bf16.mxu0 0
      %6766 = vmatpush1.bf16.msra.mxu0 %v6744
      %6767 = vmatprep.subr.bf16.mxu0 0
      %6768 = vmatpush1.bf16.msra.mxu0 %v6745
      %6769 = vmatprep.subr.bf16.mxu0 0
      %6770 = vmatpush1.bf16.msra.mxu0 %v6746
      %6771 = vmatprep.subr.bf16.mxu0 0
      %6772 = vmatpush1.bf16.msra.mxu0 0
      %6773 = vmatprep.subr.bf16.mxu0 0
      %6774 = vmatpush1.bf16.msra.mxu0 0
      %6775 = vmatprep.subr.bf16.mxu0 0
      %6776 = vmatpush1.bf16.msra.mxu0 0
      %6777 = vmatprep.subr.bf16.mxu0 0
      %6778 = vmatpush1.bf16.msra.mxu0 0
      %6779 = vmatprep.subr.bf16.mxu0 0
      %6780 = vmatpush1.bf16.msra.mxu0 0
      %6781 = vmatprep.subr.bf16.mxu0 0
      %6782 = vmatpush1.bf16.msra.mxu0 0
      %6783 = vmatprep.subr.bf16.mxu0 0
      %6784 = vmatpush1.bf16.msra.mxu0 0
      %6785 = vmatprep.subr.bf16.mxu0 0
      %6786 = vmatpush1.bf16.msra.mxu0 0
      %6787 = vmatprep.mubr.bf16.mxu0 0
      %6788 = vmatmul.mubr.bf16.gmra.mrb[0].mxu0 %v6683
      %v6789 = vpop.f32.mrb[0].mxu0
      %v6790 = vadd.f32 %v6705, %v6789
      %v6791 = vpop.f32.mrb[0].mxu0
      %v6792 = vpop.f32.mrb[0].mxu0
      %v6793 = vpop.f32.mrb[0].mxu0
      %6794 = vdwg.mxu0
      %v6795 = vmax.f32 %v6790, 0.0
      %v6796 = vpack.c.bf16 %v6795, %v6795
      %v6797 = vld [vmem:[%s17] sm:$0xf]
      %v6798 = vld [vmem:[%s17 + $0x4] sm:$0xf]
      %v6799 = vld [vmem:[%s17 + $0x8] sm:$0xf]
      %v6800 = vld [vmem:[%s17 + $0xc] sm:$0xf]
      %v6801 = vld [vmem:[%s17 + $0x10] sm:$0xf]
      %v6802 = vld [vmem:[%s17 + $0x14] sm:$0xf]
      %v6803 = vld [vmem:[%s17 + $0x18] sm:$0xf]
      %v6804 = vld [vmem:[%s17 + $0x1c] sm:$0xf]
      %v6805 = vld [vmem:[%s17 + $0x20] sm:$0xf]
      %v6806 = vld [vmem:[%s17 + $0x24] sm:$0xf]
      %v6807 = vld [vmem:[%s17 + $0x28] sm:$0xf]
      %v6808 = vld [vmem:[%s17 + $0x2c] sm:$0xf]
      %v6809 = vld [vmem:[%s17 + $0x30] sm:$0xf]
      %v6810 = vld [vmem:[%s17 + $0x34] sm:$0xf]
      %v6811 = vld [vmem:[%s17 + $0x38] sm:$0xf]
      %v6812 = vld [vmem:[%s17 + $0x3c] sm:$0xf]
      %v6813 = vld [vmem:[%s18] sm:$0x1]
      %v6815 = vlaneseq
      %v6816 = vshrl.u32 %v6815, 7
      %v6817 = vsub.s32 0, %v6816
      %v6818 = vrot.slane %v6813, %v6817
      %v6836 = vunpack.c.l.b16 %v6797
      %v6837 = vunpack.c.l.b16 %v6798
      %v6838 = vunpack.c.l.b16 %v6799
      %v6839 = vunpack.c.l.b16 %v6800
      %v6840 = vunpack.c.l.b16 %v6801
      %v6841 = vunpack.c.l.b16 %v6802
      %v6842 = vunpack.c.l.b16 %v6803
      %v6843 = vunpack.c.l.b16 %v6804
      %v6844 = vunpack.c.l.b16 %v6805
      %v6845 = vunpack.c.l.b16 %v6806
      %v6846 = vunpack.c.l.b16 %v6807
      %v6847 = vunpack.c.l.b16 %v6808
      %v6848 = vunpack.c.l.b16 %v6809
      %v6849 = vunpack.c.l.b16 %v6810
      %v6850 = vunpack.c.l.b16 %v6811
      %v6851 = vunpack.c.l.b16 %v6812
      %v6852 = vpack.c.b16 %v6837, %v6836
      %v6853 = vpack.c.b16 %v6839, %v6838
      %v6854 = vpack.c.b16 %v6841, %v6840
      %v6855 = vpack.c.b16 %v6843, %v6842
      %v6856 = vpack.c.b16 %v6845, %v6844
      %v6857 = vpack.c.b16 %v6847, %v6846
      %v6858 = vpack.c.b16 %v6849, %v6848
      %v6859 = vpack.c.b16 %v6851, %v6850
      %6868 = vmatprep.subr.bf16.mxu0 0
      %6869 = vmatpush1.bf16.msra.mxu0 %v6852
      %6870 = vmatprep.subr.bf16.mxu0 0
      %6871 = vmatpush1.bf16.msra.mxu0 %v6853
      %6872 = vmatprep.subr.bf16.mxu0 0
      %6873 = vmatpush1.bf16.msra.mxu0 %v6854
      %6874 = vmatprep.subr.bf16.mxu0 0
      %6875 = vmatpush1.bf16.msra.mxu0 %v6855
      %6876 = vmatprep.subr.bf16.mxu0 0
      %6877 = vmatpush1.bf16.msra.mxu0 %v6856
      %6878 = vmatprep.subr.bf16.mxu0 0
      %6879 = vmatpush1.bf16.msra.mxu0 %v6857
      %6880 = vmatprep.subr.bf16.mxu0 0
      %6881 = vmatpush1.bf16.msra.mxu0 %v6858
      %6882 = vmatprep.subr.bf16.mxu0 0
      %6883 = vmatpush1.bf16.msra.mxu0 %v6859
      %6884 = vmatprep.subr.bf16.mxu0 0
      %6885 = vmatpush1.bf16.msra.mxu0 0
      %6886 = vmatprep.subr.bf16.mxu0 0
      %6887 = vmatpush1.bf16.msra.mxu0 0
      %6888 = vmatprep.subr.bf16.mxu0 0
      %6889 = vmatpush1.bf16.msra.mxu0 0
      %6890 = vmatprep.subr.bf16.mxu0 0
      %6891 = vmatpush1.bf16.msra.mxu0 0
      %6892 = vmatprep.subr.bf16.mxu0 0
      %6893 = vmatpush1.bf16.msra.mxu0 0
      %6894 = vmatprep.subr.bf16.mxu0 0
      %6895 = vmatpush1.bf16.msra.mxu0 0
      %6896 = vmatprep.subr.bf16.mxu0 0
      %6897 = vmatpush1.bf16.msra.mxu0 0
      %6898 = vmatprep.subr.bf16.mxu0 0
      %6899 = vmatpush1.bf16.msra.mxu0 0
      %6900 = vmatprep.mubr.bf16.mxu0 0
      %6901 = vmatmul.mubr.bf16.gmra.mrb[0].mxu0 %v6796
      %v6902 = vpop.f32.mrb[0].mxu0
      %v6903 = vadd.f32 %v6818, %v6902
      %v6904 = vpop.f32.mrb[0].mxu0
      %v6905 = vpop.f32.mrb[0].mxu0
      %v6906 = vpop.f32.mrb[0].mxu0
      %6907 = vdwg.mxu0
      %v6908 = vtanh.pop %v6903
      %vm6909 = vcmask 31744
      %6910 = vst.msk [vmem:[%s617] sm:$0xff] %vm6909, %v6908
      %p6911 = scmp.lt.s32.totalorder %s30, 1
      %s6912 = scalar_select %p6911, %s30, 1
      %s6913 = smul.addr %s6912, 8
      %s6914 = scalar_lea.vmem %s19, %s6913
      // Predicated region
      $region97: #{actor_forward.1} parent=95 // pred_check
        %p6915 = pneg %p457
      $region98: #{actor_forward.1} parent=95 // pred_check_branch
        %6917 = sbr.rel (%p6915) target = $region100
      $region99: #{actor_forward.1} parent=95 // pred_region
        _
      $region100: #{actor_forward.1} parent=95 // pred_fallthru
        _
    $region96: #{actor_forward.1} parent=5 // pred_fallthru
      _
    %p6918 = scmp.le.s32.totalorder 2, %s25
    // Predicated region
    $region101: #{actor_forward.1} parent=5 // pred_check
      %p6919 = pneg %p6918
    $region102: #{actor_forward.1} parent=5 // pred_check_branch
      %6921 = sbr.rel (%p6919) target = $region104
    $region103: #{actor_forward.1} parent=5 // pred_region
      %s6922 = ssub.s32 %s25, 2
      // Predicated region
      $region105: #{actor_forward.1} parent=103 // pred_check
        %p6923 = pneg %p463
      $region106: #{actor_forward.1} parent=103 // pred_check_branch
        %6925 = sbr.rel (%p6923) target = $region108
      $region107: #{actor_forward.1} parent=103 // pred_region
        %p6926 = scmp.lt.s32.totalorder %s31, 1
        %s6927 = scalar_select %p6926, %s31, 1
        %s6928 = smul.addr %s6927, 8
        %s6929 = scalar_lea.vmem %s19, %s6928
      $region108: #{actor_forward.1} parent=103 // pred_fallthru
        _
    $region104: #{actor_forward.1} parent=5 // pred_fallthru
      _
  $region6: #{actor_forward.1} parent=0 // loop_footer
    %s29 = sadd.s32 1, %s25
  $region7: #{actor_forward.1} parent=0 // loop_footer_branch
    %24 = sbr.rel target = $region3
  $region8: #{actor_forward.1} parent=0 // loop_exit
    _

</llo_original>
